<compile_context>
chip_gen: v6e
topology: v6e:2x2x1
jax: 0.10.0
libtpu: 0.0.40
codegen_flags: <defaults>
</compile_context>

<pallas_src>
import functools

import jax
import jax.numpy as jnp
from jax import lax
from jax.experimental import pallas as pl
from jax.experimental.pallas import tpu as pltpu


_STATS_WIDTH = 128   # lane-dense per-row stats block: columns [l2, l1, l0, 0..]
_PEEL_MAX_K = 16     # peel for small k; bit-exact binary search beyond


# ------------------------------ small helpers ------------------------------

def _round_up(n, m):
    return ((n + m - 1) // m) * m


def _pad2(a, rows, cols):
    pr, pc = rows - a.shape[0], cols - a.shape[1]
    if pr == 0 and pc == 0:
        return a
    return jnp.pad(a, ((0, pr), (0, pc)))


def _resident_spec(block_shape):
    """BlockSpec for a grid-constant block (weights / bias).

    Single-buffered (pl.Buffered(1)) when supported: the index_map is constant
    so double-buffering buys no overlap but doubles the largest VMEM term.
    """
    idx = lambda i: tuple(0 for _ in block_shape)
    if hasattr(pl, "Buffered"):
        try:
            return pl.BlockSpec(block_shape, idx, pipeline_mode=pl.Buffered(1))
        except (TypeError, ValueError):
            pass
    return pl.BlockSpec(block_shape, idx)


# ------------------------------ top-k threshold -----------------------------

def _topk_threshold(acts, top_k):
    """Per-row value t such that `acts >= t` keeps the top-k entries.

    top_k <= _PEEL_MAX_K : peel the row max k times (O(k) passes).
    larger k             : exact k-th-largest value via a 31-step binary search
                           over the IEEE-754 bit pattern (monotone for the
                           non-negative post-ReLU acts); cost independent of k.
    Ties at the k-th value keep every tied element (torch.topk keeps exactly
    k); exact ties do not occur on continuous activations.
    """
    bt = acts.shape[0]
    if top_k <= _PEEL_MAX_K:
        thr = jnp.full((bt, 1), jnp.inf, dtype=jnp.float32)
        for _ in range(top_k):
            thr = jnp.max(jnp.where(acts < thr, acts, -jnp.inf),
                          axis=-1, keepdims=True)
        return jnp.maximum(thr, 0.0)

    bits = pltpu.bitcast(acts, jnp.int32)        # acts >= 0 -> order-preserving
    prefix = jnp.zeros((bt, 1), jnp.int32)
    kf = jnp.float32(top_k)
    for b in range(30, -1, -1):                  # greedy MSB-first max T with
        cand = prefix | (1 << b)                 # count(bits >= T) >= k
        cnt = jnp.sum(jnp.where(bits >= cand, 1.0, 0.0),
                      axis=-1, keepdims=True)
        prefix = jnp.where(cnt >= kf, cand, prefix)
    return pltpu.bitcast(prefix, jnp.float32)


# ------------------------------ Pallas kernel ------------------------------

def _topk_sae_kernel(x_ref, wenc_ref, wdec_ref, bdec_ref,
                     recon_ref, topk_ref, stats_ref, colmax_ref,
                     *, top_k: int, batch: int, batch_tile: int):
    x = x_ref[...]                                   # (bt, Ap), caller dtype
    b_dec = bdec_ref[...]                            # (1, Ap), float32

    # ---- encoder: relu((x - b_dec) @ W_enc), f32 MXU accumulator ----------
    # MXU operands stay in the caller dtype; b_dec is cast down only for the
    # cheap (1, Ap) centering operand and kept f32 for the decoder bias.
    x_cent = x - b_dec.astype(x.dtype)
    acts = jnp.maximum(
        jnp.dot(x_cent, wenc_ref[...], preferred_element_type=jnp.float32),
        0.0)                                         # (bt, Dp) f32

    # ---- top-k threshold along the dict axis ------------------------------
    thr = _topk_threshold(acts, top_k)
    acts_topk = jnp.where(acts >= thr, acts, 0.0)    # (bt, Dp) f32

    # ---- decoder: acts_topk @ W_dec + b_dec --------------------------------
    acts_topk_lp = acts_topk.astype(topk_ref.dtype)  # single down-cast, reused
    recon = jnp.dot(acts_topk_lp, wdec_ref[...],
                    preferred_element_type=jnp.float32) + b_dec  # (bt, Ap) f32

    recon_ref[...] = recon.astype(recon_ref.dtype)
    topk_ref[...] = acts_topk_lp

    # ---- per-tile per-feature "active" max (dead-feature bookkeeping) -----
    bt = batch_tile
    if batch % bt != 0:   # zero out padded batch rows in the last tile
        row = lax.broadcasted_iota(jnp.int32, (bt, 1), 0)
        valid = (pl.program_id(0) * bt + row) < batch
        col_src = jnp.where(valid, acts_topk, 0.0)
    else:
        col_src = acts_topk
    col_max = jnp.max(col_src, axis=0, keepdims=True)              # (1, Dp)
    colmax_ref[...] = jnp.broadcast_to(col_max, (8, col_max.shape[1]))

    # ---- per-row loss reductions, packed into one lane-dense block --------
    diff = recon - x.astype(jnp.float32)
    l2 = jnp.sum(diff * diff, axis=-1, keepdims=True)
    l1 = jnp.sum(acts_topk, axis=-1, keepdims=True)        # >= 0 -> no abs
    l0 = jnp.sum(jnp.where(acts_topk > 0.0, 1.0, 0.0), axis=-1, keepdims=True)
    col = lax.broadcasted_iota(jnp.int32, (bt, _STATS_WIDTH), 1)
    stats_ref[...] = (jnp.where(col == 0, l2, 0.0)
                      + jnp.where(col == 1, l1, 0.0)
                      + jnp.where(col == 2, l0, 0.0))


# ------------------------------ param prep (hoisted) ------------------------

def prepare_params(params, dtype):
    """Pad to lane multiples and cast ONCE; cache and reuse across steps
    (per-call padding of realistic SAE weights moves 100s of MiB per step)."""
    A, D = params["W_enc"].shape
    A_pad, D_pad = _round_up(A, 128), _round_up(D, 128)
    return {
        "W_enc_p": _pad2(params["W_enc"].astype(dtype), A_pad, D_pad),
        "W_dec_p": _pad2(params["W_dec"].astype(dtype), D_pad, A_pad),
        # b_dec stays f32 so the decoder bias is exact even on the bf16 path.
        "b_dec_p": jnp.pad(params["b_dec"].astype(jnp.float32),
                           (0, A_pad - A)).reshape(1, A_pad),
        "act_size": A,
        "dict_size": D,
    }


# ------------------------------ Pallas wrapper ------------------------------

def topk_sae_forward_pallas(x, prepared, *, top_k, batch_tile=256):
    """Fused SAE forward.  Returns (recon, acts_topk, stats, col_max)."""
    wenc_p = prepared["W_enc_p"]
    wdec_p = prepared["W_dec_p"]
    bdec_p = prepared["b_dec_p"]
    A, D = prepared["act_size"], prepared["dict_size"]
    A_pad, D_pad = wenc_p.shape
    dtype = wenc_p.dtype
    itm = jnp.dtype(dtype).itemsize
    B = x.shape[0]

    # --- VMEM budget: sized from the actual part with ~20% headroom --------
    try:
        vmem_cap = int(pltpu.get_tpu_info().vmem_capacity_bytes)
    except Exception:
        vmem_cap = 64 * 1024 * 1024          # safe fallback (v7x physical)
    budget = int(vmem_cap * 0.8)

    def est_bytes(bt):
        w = (A_pad * D_pad + D_pad * A_pad) * itm + A_pad * 4     # single-buffered
        io = 2 * bt * (2 * A_pad * itm + D_pad * itm)             # x, recon, topk
        io += 2 * (bt * _STATS_WIDTH * 4 + 8 * D_pad * 4)         # stats, colmax
        tmp = 3 * bt * D_pad * 4 + 2 * bt * A_pad * 4             # f32 temporaries
        return w + io + tmp

    # batch tile: 256 fills the v6e/v7x 256-wide MXU M dim; pass 128 on v5e.
    bt = max(8, _round_up(min(batch_tile, _round_up(B, 8)), 8))
    while bt > 8 and est_bytes(bt) > budget:
        bt = max(8, _round_up(bt // 2, 8))
    if est_bytes(bt) > budget:
        # TODO(synk): tile the dict axis (two-pass top-k: streamed per-row
        # threshold over D tiles, then masked decode accumulated across D
        # tiles) so resident weights are not required — needed for realistic
        # SAE sizes on v7x (64 MiB VMEM).
        raise ValueError(
            f"TopKSAE weights need ~{est_bytes(8) / 2**20:.1f} MiB VMEM but the "
            f"budget is {budget / 2**20:.1f} MiB; dict-axis tiling required.")

    B_pad = _round_up(B, bt)        # pad the batch instead of a full-batch tile
    num_tiles = B_pad // bt
    x_p = _pad2(x.astype(dtype), B_pad, A_pad)

    kernel = functools.partial(_topk_sae_kernel, top_k=top_k, batch=B,
                               batch_tile=bt)

    out_shapes = (
        jax.ShapeDtypeStruct((B_pad, A_pad), dtype),                # recon
        jax.ShapeDtypeStruct((B_pad, D_pad), dtype),                # acts_topk
        jax.ShapeDtypeStruct((B_pad, _STATS_WIDTH), jnp.float32),   # [l2|l1|l0|0..]
        jax.ShapeDtypeStruct((num_tiles * 8, D_pad), jnp.float32),  # colmax partials
    )

    recon, topk, stats, colmax = pl.pallas_call(
        kernel,
        out_shape=out_shapes,
        grid_spec=pltpu.PrefetchScalarGridSpec(
            num_scalar_prefetch=0,
            grid=(num_tiles,),
            in_specs=[
                pl.BlockSpec((bt, A_pad), lambda i: (i, 0)),    # x tile
                _resident_spec((A_pad, D_pad)),                 # W_enc (resident)
                _resident_spec((D_pad, A_pad)),                 # W_dec (resident)
                _resident_spec((1, A_pad)),                     # b_dec (f32)
            ],
            out_specs=[
                pl.BlockSpec((bt, A_pad), lambda i: (i, 0)),
                pl.BlockSpec((bt, D_pad), lambda i: (i, 0)),
                pl.BlockSpec((bt, _STATS_WIDTH), lambda i: (i, 0)),
                pl.BlockSpec((8, D_pad), lambda i: (i, 0)),
            ],
        ),
        compiler_params=pltpu.CompilerParams(
            # "parallel": batch-tile axis shards across the 2 TCs on v7x.
            dimension_semantics=("parallel",),
            vmem_limit_bytes=budget,
        ),
    )(x_p, wenc_p, wdec_p, bdec_p)

    col_max = colmax.reshape(num_tiles, 8, D_pad)[:, 0, :].max(axis=0)[:D]
    return recon[:B, :A], topk[:B, :D], stats[:B], col_max


# --------------------------- full forward (glue) ---------------------------

def topk_sae_forward(x, prepared, cfg, num_batches_not_active, batch_tile=256):
    """Mirrors TopKSAE.forward with cfg['input_unit_norm'] == False."""
    B, A = x.shape

    # preprocess_input: identity (input_unit_norm=False)
    x_reconstruct, acts_topk, stats, col_max = topk_sae_forward_pallas(
        x, prepared, top_k=cfg["top_k"], batch_tile=batch_tile)

    l2_row, l1_row, l0_row = stats[:, 0], stats[:, 1], stats[:, 2]

    # update_inactive_features (stateful counter in PyTorch -> explicit carry)
    active = col_max > 0
    nbna = jnp.where(active, 0.0, num_batches_not_active + 1.0)

    # get_loss_dict
    l2_loss = l2_row.sum() / (B * A)
    l1_norm = l1_row.mean()
    l1_loss = cfg["l1_coeff"] * l1_norm
    l0_norm = l0_row.mean()
    # TODO(synk): dead-feature auxiliary reconstruction (dynamic boolean
    # indexing of W_dec) is not implemented in-kernel; from a fresh counter it
    # is exactly 0, matching the PyTorch `else` branch.
    aux_loss = jnp.asarray(0.0, dtype=jnp.float32)
    loss = l2_loss + l1_loss + aux_loss
    num_dead_features = (nbna > cfg["n_batches_to_dead"]).sum()

    # postprocess_output: identity (input_unit_norm=False)
    sae_out = x_reconstruct

    return {
        "sae_out": sae_out,
        "feature_acts": acts_topk,
        "num_dead_features": num_dead_features,
        "loss": loss,
        "l1_loss": l1_loss,
        "l2_loss": l2_loss,
        "l0_norm": l0_norm,
        "l1_norm": l1_norm,
        "aux_loss": aux_loss,
    }, nbna


# ------------------------------ param init ---------------------------------

def init_params(key, act_size, dict_size):
    # Stand-in for torch.nn.init.kaiming_uniform_ on W_enc (act_size, dict_size):
    # bound = sqrt(6 / fan_in), fan_in = dict_size for 2-D tensors.
    bound = (6.0 / dict_size) ** 0.5
    W_enc = jax.random.uniform(key, (act_size, dict_size), jnp.float32,
                               minval=-bound, maxval=bound)
    W_dec = W_enc.T
    W_dec = W_dec / jnp.linalg.norm(W_dec, axis=-1, keepdims=True)
    return {
        "W_enc": W_enc,
        "W_dec": W_dec,
        "b_dec": jnp.zeros((act_size,), jnp.float32),
        "b_enc": jnp.zeros((dict_size,), jnp.float32),  # unused in forward
    }


# ------------------------------ reference ----------------------------------

def reference_forward(x, params, top_k):
    hp = lax.Precision.HIGHEST
    x32 = x.astype(jnp.float32)
    w_enc = params["W_enc"].astype(jnp.float32)
    w_dec = params["W_dec"].astype(jnp.float32)
    b_dec = params["b_dec"].astype(jnp.float32)
    acts = jax.nn.relu(jnp.dot(x32 - b_dec, w_enc, precision=hp))
    vals, idx = lax.top_k(acts, top_k)
    acts_topk = jnp.zeros_like(acts).at[
        jnp.arange(x.shape[0])[:, None], idx].set(vals)
    recon = jnp.dot(acts_topk, w_dec, precision=hp) + b_dec
    return acts, acts_topk, recon


def check_outputs(out, x, params, cfg, *, atol, rtol):
    """Tie-robust checks (near-threshold flips across precisions can't trip them)."""
    k = cfg["top_k"]
    hp = lax.Precision.HIGHEST
    x32 = x.astype(jnp.float32)
    acts_ref, topk_ref, _ = reference_forward(x, params, k)

    kt = out["feature_acts"].astype(jnp.float32)
    kr = out["sae_out"].astype(jnp.float32)
    kept = kt > 0

    # exactly k features kept per row
    assert bool(jnp.all(kept.sum(axis=-1) == k)), "top-k count mismatch"
    # kept values equal the reference encoder activations at those positions
    assert jnp.allclose(kt, jnp.where(kept, acts_ref, 0.0),
                        atol=atol, rtol=rtol), "kept activation values mismatch"
    # per-row kept mass matches the reference top-k mass
    assert jnp.allclose(kt.sum(axis=-1), topk_ref.sum(axis=-1),
                        atol=10 * atol, rtol=rtol), "top-k mass mismatch"
    # decoder path: reconstruct from the kernel's own codes
    recon_chk = jnp.dot(kt, params["W_dec"].astype(jnp.float32),
                        precision=hp) + params["b_dec"].astype(jnp.float32)
    assert jnp.allclose(kr, recon_chk, atol=atol, rtol=rtol), "decoder mismatch"
    # fused loss reductions
    assert jnp.allclose(out["l2_loss"], jnp.mean((kr - x32) ** 2),
                        atol=atol, rtol=rtol), "l2 mismatch"
    assert jnp.allclose(out["l1_norm"], jnp.abs(kt).sum(axis=-1).mean(),
                        atol=10 * atol, rtol=rtol), "l1 mismatch"
    assert jnp.allclose(out["l0_norm"], float(k), atol=1e-3), "l0 mismatch"


# --------------------------------- main -------------------------------------

if __name__ == "__main__":
    cfg = {
        "seed": 0,
        "act_size": 192,      # deliberately unaligned; wrapper pads to 256 lanes
        "dict_size": 512,
        "top_k": 8,
        "l1_coeff": 1e-3,
        "top_k_aux": 32,
        "aux_penalty": 1.0 / 32.0,
        "n_batches_to_dead": 5,
        "input_unit_norm": False,
    }
    key = jax.random.PRNGKey(0)
    kp, kx = jax.random.split(key)

    params = init_params(kp, cfg["act_size"], cfg["dict_size"])
    x = jax.random.normal(kx, (512, cfg["act_size"]), jnp.float32)
    nbna0 = jnp.zeros((cfg["dict_size"],), jnp.float32)

    # --- float32 run, small k (peel path) -----------------------------------
    prepared32 = prepare_params(params, jnp.float32)
    out32, nbna32 = topk_sae_forward(x, prepared32, cfg, nbna0)
    jax.block_until_ready(out32["sae_out"])
    check_outputs(out32, x, params, cfg, atol=1e-3, rtol=1e-3)
    assert int(out32["num_dead_features"]) == 0

    # --- float32 run, large k (bit-exact binary-search threshold path) ------
    cfg_k32 = dict(cfg, top_k=32)
    out_k32, _ = topk_sae_forward(x, prepared32, cfg_k32, nbna0)
    jax.block_until_ready(out_k32["sae_out"])
    check_outputs(out_k32, x, params, cfg_k32, atol=1e-3, rtol=1e-3)

    # --- bfloat16 run: MXU operands + weight DMA at half cost ---------------
    prepared_bf = prepare_params(params, jnp.bfloat16)
    out_bf, _ = topk_sae_forward(x.astype(jnp.bfloat16), prepared_bf, cfg, nbna0)
    jax.block_until_ready(out_bf["sae_out"])
    check_outputs(out_bf, x, params, cfg, atol=5e-2, rtol=5e-2)

    print("KERNEL_OK")
</pallas_src>

<mosaic_0001>
module attributes {stable_mosaic.version = 11 : i64} {
  func.func @_topk_sae_kernel(%arg0: i32, %arg1: memref<256x256xf32, #tpu.memory_space<vmem>>, %arg2: memref<256x512xf32, #tpu.memory_space<vmem>>, %arg3: memref<512x256xf32, #tpu.memory_space<vmem>>, %arg4: memref<1x256xf32, #tpu.memory_space<vmem>>, %arg5: memref<256x256xf32, #tpu.memory_space<vmem>>, %arg6: memref<256x512xf32, #tpu.memory_space<vmem>>, %arg7: memref<256x128xf32, #tpu.memory_space<vmem>>, %arg8: memref<8x512xf32, #tpu.memory_space<vmem>>) attributes {dimension_semantics = [#tpu.dimension_semantics<parallel>], iteration_bounds = array<i64: 2>, scalar_prefetch = 0 : i64, scratch_operands = 0 : i64, tpu.core_type = #tpu.core_type<tc>, window_params = [{transform_indices = @transform_0, window_bounds = array<i64: 256, 256>}, {pipeline_mode = #tpu.pipeline_mode<synchronous>, transform_indices = @transform_1, window_bounds = array<i64: 256, 512>}, {pipeline_mode = #tpu.pipeline_mode<synchronous>, transform_indices = @transform_2, window_bounds = array<i64: 512, 256>}, {pipeline_mode = #tpu.pipeline_mode<synchronous>, transform_indices = @transform_3, window_bounds = array<i64: 1, 256>}, {transform_indices = @transform_4, window_bounds = array<i64: 256, 256>}, {transform_indices = @transform_5, window_bounds = array<i64: 256, 512>}, {transform_indices = @transform_6, window_bounds = array<i64: 256, 128>}, {transform_indices = @transform_7, window_bounds = array<i64: 8, 512>}]} {
    %c0 = arith.constant 0 : index
    %c0_0 = arith.constant 0 : index
    %0 = vector.load %arg1[%c0, %c0_0] : memref<256x256xf32, #tpu.memory_space<vmem>>, vector<256x256xf32>
    %c0_1 = arith.constant 0 : index
    %c0_2 = arith.constant 0 : index
    %1 = vector.load %arg4[%c0_1, %c0_2] : memref<1x256xf32, #tpu.memory_space<vmem>>, vector<1x256xf32>
    %2 = vector.broadcast %1 : vector<1x256xf32> to vector<256x256xf32>
    %3 = arith.subf %0, %2 : vector<256x256xf32>
    %c0_3 = arith.constant 0 : index
    %c0_4 = arith.constant 0 : index
    %4 = vector.load %arg2[%c0_3, %c0_4] : memref<256x512xf32, #tpu.memory_space<vmem>>, vector<256x512xf32>
    %cst = arith.constant dense<0.000000e+00> : vector<256x512xf32>
    %5 = tpu.matmul %3, %4, %cst {dimension_numbers = #tpu.dot_dimension_numbers<[1], [0], [0], [1], [0, 0, 1, 1], [], []>} : vector<256x256xf32>, vector<256x512xf32>, vector<256x512xf32> -> vector<256x512xf32>
    %cst_5 = arith.constant 0.000000e+00 : f32
    %6 = vector.broadcast %cst_5 : f32 to vector<256x512xf32>
    %7 = arith.maximumf %5, %6 : vector<256x512xf32>
    %cst_6 = arith.constant 0x7F800000 : f32
    %8 = vector.broadcast %cst_6 : f32 to vector<256x1xf32>
    %9 = vector.broadcast %8 : vector<256x1xf32> to vector<256x512xf32>
    %10 = arith.cmpf olt, %7, %9 : vector<256x512xf32>
    %cst_7 = arith.constant 0xFF800000 : f32
    %11 = vector.broadcast %cst_7 : f32 to vector<256x512xf32>
    %12 = arith.select %10, %7, %11 : vector<256x512xi1>, vector<256x512xf32>
    %cst_8 = arith.constant dense<0xFF800000> : vector<256xf32>
    %13 = vector.multi_reduction <maximumf>, %12, %cst_8 [1] : vector<256x512xf32> to vector<256xf32>
    %14 = vector.shape_cast %13 : vector<256xf32> to vector<256x1xf32>
    %15 = vector.broadcast %14 : vector<256x1xf32> to vector<256x512xf32>
    %16 = arith.cmpf olt, %7, %15 : vector<256x512xf32>
    %cst_9 = arith.constant 0xFF800000 : f32
    %17 = vector.broadcast %cst_9 : f32 to vector<256x512xf32>
    %18 = arith.select %16, %7, %17 : vector<256x512xi1>, vector<256x512xf32>
    %cst_10 = arith.constant dense<0xFF800000> : vector<256xf32>
    %19 = vector.multi_reduction <maximumf>, %18, %cst_10 [1] : vector<256x512xf32> to vector<256xf32>
    %20 = vector.shape_cast %19 : vector<256xf32> to vector<256x1xf32>
    %21 = vector.broadcast %20 : vector<256x1xf32> to vector<256x512xf32>
    %22 = arith.cmpf olt, %7, %21 : vector<256x512xf32>
    %cst_11 = arith.constant 0xFF800000 : f32
    %23 = vector.broadcast %cst_11 : f32 to vector<256x512xf32>
    %24 = arith.select %22, %7, %23 : vector<256x512xi1>, vector<256x512xf32>
    %cst_12 = arith.constant dense<0xFF800000> : vector<256xf32>
    %25 = vector.multi_reduction <maximumf>, %24, %cst_12 [1] : vector<256x512xf32> to vector<256xf32>
    %26 = vector.shape_cast %25 : vector<256xf32> to vector<256x1xf32>
    %27 = vector.broadcast %26 : vector<256x1xf32> to vector<256x512xf32>
    %28 = arith.cmpf olt, %7, %27 : vector<256x512xf32>
    %cst_13 = arith.constant 0xFF800000 : f32
    %29 = vector.broadcast %cst_13 : f32 to vector<256x512xf32>
    %30 = arith.select %28, %7, %29 : vector<256x512xi1>, vector<256x512xf32>
    %cst_14 = arith.constant dense<0xFF800000> : vector<256xf32>
    %31 = vector.multi_reduction <maximumf>, %30, %cst_14 [1] : vector<256x512xf32> to vector<256xf32>
    %32 = vector.shape_cast %31 : vector<256xf32> to vector<256x1xf32>
    %33 = vector.broadcast %32 : vector<256x1xf32> to vector<256x512xf32>
    %34 = arith.cmpf olt, %7, %33 : vector<256x512xf32>
    %cst_15 = arith.constant 0xFF800000 : f32
    %35 = vector.broadcast %cst_15 : f32 to vector<256x512xf32>
    %36 = arith.select %34, %7, %35 : vector<256x512xi1>, vector<256x512xf32>
    %cst_16 = arith.constant dense<0xFF800000> : vector<256xf32>
    %37 = vector.multi_reduction <maximumf>, %36, %cst_16 [1] : vector<256x512xf32> to vector<256xf32>
    %38 = vector.shape_cast %37 : vector<256xf32> to vector<256x1xf32>
    %39 = vector.broadcast %38 : vector<256x1xf32> to vector<256x512xf32>
    %40 = arith.cmpf olt, %7, %39 : vector<256x512xf32>
    %cst_17 = arith.constant 0xFF800000 : f32
    %41 = vector.broadcast %cst_17 : f32 to vector<256x512xf32>
    %42 = arith.select %40, %7, %41 : vector<256x512xi1>, vector<256x512xf32>
    %cst_18 = arith.constant dense<0xFF800000> : vector<256xf32>
    %43 = vector.multi_reduction <maximumf>, %42, %cst_18 [1] : vector<256x512xf32> to vector<256xf32>
    %44 = vector.shape_cast %43 : vector<256xf32> to vector<256x1xf32>
    %45 = vector.broadcast %44 : vector<256x1xf32> to vector<256x512xf32>
    %46 = arith.cmpf olt, %7, %45 : vector<256x512xf32>
    %cst_19 = arith.constant 0xFF800000 : f32
    %47 = vector.broadcast %cst_19 : f32 to vector<256x512xf32>
    %48 = arith.select %46, %7, %47 : vector<256x512xi1>, vector<256x512xf32>
    %cst_20 = arith.constant dense<0xFF800000> : vector<256xf32>
    %49 = vector.multi_reduction <maximumf>, %48, %cst_20 [1] : vector<256x512xf32> to vector<256xf32>
    %50 = vector.shape_cast %49 : vector<256xf32> to vector<256x1xf32>
    %51 = vector.broadcast %50 : vector<256x1xf32> to vector<256x512xf32>
    %52 = arith.cmpf olt, %7, %51 : vector<256x512xf32>
    %cst_21 = arith.constant 0xFF800000 : f32
    %53 = vector.broadcast %cst_21 : f32 to vector<256x512xf32>
    %54 = arith.select %52, %7, %53 : vector<256x512xi1>, vector<256x512xf32>
    %cst_22 = arith.constant dense<0xFF800000> : vector<256xf32>
    %55 = vector.multi_reduction <maximumf>, %54, %cst_22 [1] : vector<256x512xf32> to vector<256xf32>
    %56 = vector.shape_cast %55 : vector<256xf32> to vector<256x1xf32>
    %cst_23 = arith.constant 0.000000e+00 : f32
    %57 = vector.broadcast %cst_23 : f32 to vector<256x1xf32>
    %58 = arith.maximumf %56, %57 : vector<256x1xf32>
    %59 = vector.broadcast %58 : vector<256x1xf32> to vector<256x512xf32>
    %60 = arith.cmpf oge, %7, %59 : vector<256x512xf32>
    %cst_24 = arith.constant 0.000000e+00 : f32
    %61 = vector.broadcast %cst_24 : f32 to vector<256x512xf32>
    %62 = arith.select %60, %7, %61 : vector<256x512xi1>, vector<256x512xf32>
    %c0_25 = arith.constant 0 : index
    %c0_26 = arith.constant 0 : index
    %63 = vector.load %arg3[%c0_25, %c0_26] : memref<512x256xf32, #tpu.memory_space<vmem>>, vector<512x256xf32>
    %cst_27 = arith.constant dense<0.000000e+00> : vector<256x256xf32>
    %64 = tpu.matmul %62, %63, %cst_27 {dimension_numbers = #tpu.dot_dimension_numbers<[1], [0], [0], [1], [0, 0, 1, 1], [], []>} : vector<256x512xf32>, vector<512x256xf32>, vector<256x256xf32> -> vector<256x256xf32>
    %65 = vector.broadcast %1 : vector<1x256xf32> to vector<256x256xf32>
    %66 = arith.addf %64, %65 : vector<256x256xf32>
    %c0_28 = arith.constant 0 : index
    %c0_29 = arith.constant 0 : index
    %67 = vector.load %arg5[%c0_28, %c0_29] : memref<256x256xf32, #tpu.memory_space<vmem>>, vector<256x256xf32>
    tpu.vector_store %arg5[%c0_28, %c0_29], %66 {strides = array<i32>} : memref<256x256xf32, #tpu.memory_space<vmem>>, vector<256x256xf32>,
    %c0_30 = arith.constant 0 : index
    %c0_31 = arith.constant 0 : index
    %68 = vector.load %arg6[%c0_30, %c0_31] : memref<256x512xf32, #tpu.memory_space<vmem>>, vector<256x512xf32>
    tpu.vector_store %arg6[%c0_30, %c0_31], %62 {strides = array<i32>} : memref<256x512xf32, #tpu.memory_space<vmem>>, vector<256x512xf32>,
    %cst_32 = arith.constant dense<0xFF800000> : vector<512xf32>
    %69 = vector.multi_reduction <maximumf>, %62, %cst_32 [0] : vector<256x512xf32> to vector<512xf32>
    %70 = vector.shape_cast %69 : vector<512xf32> to vector<1x512xf32>
    %71 = vector.shape_cast %70 : vector<1x512xf32> to vector<1x512xf32>
    %72 = vector.broadcast %71 : vector<1x512xf32> to vector<8x512xf32>
    %c0_33 = arith.constant 0 : index
    %c0_34 = arith.constant 0 : index
    %73 = vector.load %arg8[%c0_33, %c0_34] : memref<8x512xf32, #tpu.memory_space<vmem>>, vector<8x512xf32>
    tpu.vector_store %arg8[%c0_33, %c0_34], %72 {strides = array<i32>} : memref<8x512xf32, #tpu.memory_space<vmem>>, vector<8x512xf32>,
    %74 = arith.subf %66, %0 : vector<256x256xf32>
    %75 = arith.mulf %74, %74 : vector<256x256xf32>
    %cst_35 = arith.constant dense<0.000000e+00> : vector<256xf32>
    %76 = vector.multi_reduction <add>, %75, %cst_35 [1] : vector<256x256xf32> to vector<256xf32>
    %77 = vector.shape_cast %76 : vector<256xf32> to vector<256x1xf32>
    %cst_36 = arith.constant dense<0.000000e+00> : vector<256xf32>
    %78 = vector.multi_reduction <add>, %62, %cst_36 [1] : vector<256x512xf32> to vector<256xf32>
    %79 = vector.shape_cast %78 : vector<256xf32> to vector<256x1xf32>
    %cst_37 = arith.constant 0.000000e+00 : f32
    %80 = vector.broadcast %cst_37 : f32 to vector<256x512xf32>
    %81 = arith.cmpf ogt, %62, %80 : vector<256x512xf32>
    %cst_38 = arith.constant 1.000000e+00 : f32
    %cst_39 = arith.constant 0.000000e+00 : f32
    %82 = vector.broadcast %cst_38 : f32 to vector<256x512xf32>
    %83 = vector.broadcast %cst_39 : f32 to vector<256x512xf32>
    %84 = arith.select %81, %82, %83 : vector<256x512xi1>, vector<256x512xf32>
    %cst_40 = arith.constant dense<0.000000e+00> : vector<256xf32>
    %85 = vector.multi_reduction <add>, %84, %cst_40 [1] : vector<256x512xf32> to vector<256xf32>
    %86 = vector.shape_cast %85 : vector<256xf32> to vector<256x1xf32>
    %87 = tpu.iota {dimensions = array<i32: 1>} : vector<256x128xi32>
    %c0_i32 = arith.constant 0 : i32
    %88 = vector.broadcast %c0_i32 : i32 to vector<256x128xi32>
    %89 = arith.cmpi eq, %87, %88 : vector<256x128xi32>
    %cst_41 = arith.constant 0.000000e+00 : f32
    %90 = vector.shape_cast %77 : vector<256x1xf32> to vector<256x1xf32>
    %91 = vector.broadcast %90 : vector<256x1xf32> to vector<256x128xf32>
    %92 = vector.broadcast %cst_41 : f32 to vector<256x128xf32>
    %93 = arith.select %89, %91, %92 : vector<256x128xi1>, vector<256x128xf32>
    %c1_i32 = arith.constant 1 : i32
    %94 = vector.broadcast %c1_i32 : i32 to vector<256x128xi32>
    %95 = arith.cmpi eq, %87, %94 : vector<256x128xi32>
    %cst_42 = arith.constant 0.000000e+00 : f32
    %96 = vector.shape_cast %79 : vector<256x1xf32> to vector<256x1xf32>
    %97 = vector.broadcast %96 : vector<256x1xf32> to vector<256x128xf32>
    %98 = vector.broadcast %cst_42 : f32 to vector<256x128xf32>
    %99 = arith.select %95, %97, %98 : vector<256x128xi1>, vector<256x128xf32>
    %100 = arith.addf %93, %99 : vector<256x128xf32>
    %c2_i32 = arith.constant 2 : i32
    %101 = vector.broadcast %c2_i32 : i32 to vector<256x128xi32>
    %102 = arith.cmpi eq, %87, %101 : vector<256x128xi32>
    %cst_43 = arith.constant 0.000000e+00 : f32
    %103 = vector.shape_cast %86 : vector<256x1xf32> to vector<256x1xf32>
    %104 = vector.broadcast %103 : vector<256x1xf32> to vector<256x128xf32>
    %105 = vector.broadcast %cst_43 : f32 to vector<256x128xf32>
    %106 = arith.select %102, %104, %105 : vector<256x128xi1>, vector<256x128xf32>
    %107 = arith.addf %100, %106 : vector<256x128xf32>
    %c0_44 = arith.constant 0 : index
    %c0_45 = arith.constant 0 : index
    %108 = vector.load %arg7[%c0_44, %c0_45] : memref<256x128xf32, #tpu.memory_space<vmem>>, vector<256x128xf32>
    tpu.vector_store %arg7[%c0_44, %c0_45], %107 {strides = array<i32>} : memref<256x128xf32, #tpu.memory_space<vmem>>, vector<256x128xf32>,
    return
  }
  func.func @transform_0(%arg0: i32) -> (i32, i32) {
    %c0_i32 = arith.constant 0 : i32
    %c0_i32_0 = arith.constant 0 : i32
    return %arg0, %c0_i32 : i32, i32
  }
  func.func @transform_1(%arg0: i32) -> (i32, i32) {
    %c0_i32 = arith.constant 0 : i32
    %c0_i32_0 = arith.constant 0 : i32
    %c0_i32_1 = arith.constant 0 : i32
    return %c0_i32, %c0_i32_0 : i32, i32
  }
  func.func @transform_2(%arg0: i32) -> (i32, i32) {
    %c0_i32 = arith.constant 0 : i32
    %c0_i32_0 = arith.constant 0 : i32
    %c0_i32_1 = arith.constant 0 : i32
    return %c0_i32, %c0_i32_0 : i32, i32
  }
  func.func @transform_3(%arg0: i32) -> (i32, i32) {
    %c0_i32 = arith.constant 0 : i32
    %c0_i32_0 = arith.constant 0 : i32
    %c0_i32_1 = arith.constant 0 : i32
    return %c0_i32, %c0_i32_0 : i32, i32
  }
  func.func @transform_4(%arg0: i32) -> (i32, i32) {
    %c0_i32 = arith.constant 0 : i32
    %c0_i32_0 = arith.constant 0 : i32
    return %arg0, %c0_i32 : i32, i32
  }
  func.func @transform_5(%arg0: i32) -> (i32, i32) {
    %c0_i32 = arith.constant 0 : i32
    %c0_i32_0 = arith.constant 0 : i32
    return %arg0, %c0_i32 : i32, i32
  }
  func.func @transform_6(%arg0: i32) -> (i32, i32) {
    %c0_i32 = arith.constant 0 : i32
    %c0_i32_0 = arith.constant 0 : i32
    return %arg0, %c0_i32 : i32, i32
  }
  func.func @transform_7(%arg0: i32) -> (i32, i32) {
    %c0_i32 = arith.constant 0 : i32
    %c0_i32_0 = arith.constant 0 : i32
    return %arg0, %c0_i32 : i32, i32
  }
}

</mosaic_0001>

<llo_original>
// kernel: tpu_custom_call.1
$region0: #{tpu_custom_call.1}
  #allocation0 [shape = 'u32[]', space=smem, size = 0x4, offset = 0x4, fixed_abs, tag = 'smem constant byte address 0x4 - core index']
  #allocation1 [shape = 'u32[144,128]{1,0:T(1,128)}', space=vmem, size = 0x12000, scoped, tag = 'internal scratch']
  %s0 = inlined_call_operand.hbm [shape: f32[512,256], index: 0, kind: input, shape index: {}]
  %s1 = inlined_call_operand.hbm [shape: f32[256,512], index: 1, kind: input, shape index: {}]
  %s2 = inlined_call_operand.hbm [shape: f32[512,256], index: 2, kind: input, shape index: {}]
  %s3 = inlined_call_operand.vmem [shape: f32[1,256], index: 3, kind: input, shape index: {}]
  %s4 = inlined_call_operand.hbm [shape: f32[512,256], index: 4, kind: output, shape index: {0}]
  %s5 = inlined_call_operand.hbm [shape: f32[512,512], index: 5, kind: output, shape index: {1}]
  %s6 = inlined_call_operand.hbm [shape: f32[512,128], index: 6, kind: output, shape index: {2}]
  %s7 = inlined_call_operand.hbm [shape: f32[16,512], index: 7, kind: output, shape index: {3}]
  %8 = xla_tuple %s4, %s5, %s6, %s7
  %s9 = sld [smem:[#allocation0]]
  $region85: #{tpu_custom_call.1} parent=0
    _
  %s11 = ssub.s32 1, %s9
  %s12 = scalar_select 0, %s11, %s9
  $region1: #{tpu_custom_call.1} parent=0
    #allocation2 [shape = 'u8[524288]{0}', space=vmem, size = 0x80000, scoped, tag = 'input window, operand 0']
    #allocation3 [shape = 's32[2]{0}', space=sflag, size = 0x8, scoped, tag = 'scoped memory for tpu_custom_call.1']
    #allocation4 [shape = 's32[2]{0}', space=sflag, size = 0x8, scoped, tag = 'scoped memory for tpu_custom_call.1']
    #allocation5 [shape = 'u8[524288]{0}', space=vmem, size = 0x80000, scoped, tag = 'input window, operand 1, single buffered']
    #allocation6 [shape = 's32[1]{0}', space=sflag, size = 0x4, scoped, tag = 'scoped memory for tpu_custom_call.1']
    #allocation7 [shape = 'u8[524288]{0}', space=vmem, size = 0x80000, scoped, tag = 'input window, operand 2, single buffered']
    #allocation8 [shape = 'u8[524288]{0}', space=vmem, size = 0x80000, scoped, tag = 'output window, operand 0']
    #allocation9 [shape = 'u8[1048576]{0}', space=vmem, size = 0x100000, scoped, tag = 'output window, operand 1']
    #allocation10 [shape = 's32[2]{0}', space=sflag, size = 0x8, scoped, tag = 'scoped memory for tpu_custom_call.1']
    #allocation11 [shape = 'u8[262144]{0}', space=vmem, size = 0x40000, scoped, tag = 'output window, operand 2']
    #allocation12 [shape = 'u8[32768]{0}', space=vmem, size = 0x8000, scoped, tag = 'output window, operand 3']
    #allocation13 [shape = 's32[2]{0}', space=sflag, size = 0x8, scoped, tag = 'scoped memory for tpu_custom_call.1']
    %13 = vsyncpa [#allocation3], 0
    %s14 = scalar_lea.sflag [#allocation3], 1
    %15 = vsyncpa %s14, 0
    %16 = vsyncpa [#allocation6], 0
    %17 = vsyncpa [#allocation4], 0
    %s18 = scalar_lea.sflag [#allocation4], 1
    %19 = vsyncpa %s18, 0
    %20 = vsyncpa [#allocation10], 0
    %s21 = scalar_lea.sflag [#allocation10], 1
    %22 = vsyncpa %s21, 0
    %23 = vsyncpa [#allocation13], 0
    %s24 = scalar_lea.sflag [#allocation13], 1
    %25 = vsyncpa %s24, 0
    loop: start=0, step=1, limit=4
    $region2: #{tpu_custom_call.1} parent=1 // loop_pre_header
      _
    $region3: #{tpu_custom_call.1} parent=1 // loop_header
      %s27 = sphi 0, %s31
      %p28 = scmp.ge.s32.totalorder %s27, 4
      %s37 = sphi 0, %s39
      %s40 = sphi 0, %s37
      %s41 = sphi 0, %s40
      %s57 = sphi 0, %s41
      %s61 = sphi 0, %s61
      %s63 = sphi 0, %s61
      %s64 = sphi 0, %s63
      %s78 = sphi 0, %s64
      %s82 = sphi 0, %s82
      %s84 = sphi 0, %s82
      %s85 = sphi 0, %s84
      %s99 = sphi 0, %s85
      %s103 = sphi 0, %s103
      %s105 = sphi 0, %s103
      %s106 = sphi 0, %s105
      %s120 = sphi 0, %s106
      %s126 = sphi 0, %s128
      %s129 = sphi 0, %s126
      %s130 = sphi 0, %s129
      %s146 = sphi 0, %s130
      %s152 = sphi 0, %s154
      %s155 = sphi 0, %s152
      %s156 = sphi 0, %s155
      %s172 = sphi 0, %s156
      %s178 = sphi 0, %s180
      %s181 = sphi 0, %s178
      %s182 = sphi 0, %s181
      %s198 = sphi 0, %s182
      %s204 = sphi 0, %s206
      %s207 = sphi 0, %s204
      %s208 = sphi 0, %s207
      %s224 = sphi 0, %s208
    $region4: #{tpu_custom_call.1} parent=1 // loop_header_branch
      %30 = sbr.rel (%p28) target = $region8
    $region5: #{tpu_custom_call.1} parent=1 // loop_body
      %s32 = ssub.s32 %s27, 1
      %s33 = ssub.s32 %s27, 2
      %s34 = sadd.s32 %s27, 1
      %s35 = ssub.s32 %s27, %s34
      %p36 = scmp.eq.s32.totalorder %s35, 0
      %s38 = sadd.s32 %s37, 1
      %s39 = scalar_select %p36, %s37, %s38
      %p42 = pneg %p36
      %p43 = scmp.eq.s32.totalorder %s27, 1
      %p44 = por %p42, %p43
      %p45 = scmp.ne.s32.totalorder %s37, %s40
      %p46 = scmp.eq.s32.totalorder %s27, 0
      %p47 = por %p45, %p46
      %p48 = scmp.ne.s32.totalorder %s37, %s40
      %p49 = scmp.eq.s32.totalorder %s32, 1
      %p50 = por %p48, %p49
      %p51 = scmp.ne.s32.totalorder %s40, %s41
      %p52 = scmp.eq.s32.totalorder %s32, 0
      %p53 = por %p51, %p52
      %p54 = scmp.ne.s32.totalorder %s40, %s41
      %p55 = scmp.eq.s32.totalorder %s33, 1
      %p56 = por %p54, %p55
      %p58 = scmp.ne.s32.totalorder %s41, %s57
      %p59 = scmp.eq.s32.totalorder %s33, 0
      %p60 = por %p58, %p59
      %s62 = sadd.s32 %s61, 1
      %p65 = scmp.eq.s32.totalorder %s27, 1
      %p66 = scmp.ne.s32.totalorder %s61, %s63
      %p67 = scmp.eq.s32.totalorder %s27, 0
      %p68 = por %p66, %p67
      %p69 = scmp.ne.s32.totalorder %s61, %s63
      %p70 = scmp.eq.s32.totalorder %s32, 1
      %p71 = por %p69, %p70
      %p72 = scmp.ne.s32.totalorder %s63, %s64
      %p73 = scmp.eq.s32.totalorder %s32, 0
      %p74 = por %p72, %p73
      %p75 = scmp.ne.s32.totalorder %s63, %s64
      %p76 = scmp.eq.s32.totalorder %s33, 1
      %p77 = por %p75, %p76
      %p79 = scmp.ne.s32.totalorder %s64, %s78
      %p80 = scmp.eq.s32.totalorder %s33, 0
      %p81 = por %p79, %p80
      %s83 = sadd.s32 %s82, 1
      %p86 = scmp.eq.s32.totalorder %s27, 1
      %p87 = scmp.ne.s32.totalorder %s82, %s84
      %p88 = scmp.eq.s32.totalorder %s27, 0
      %p89 = por %p87, %p88
      %p90 = scmp.ne.s32.totalorder %s82, %s84
      %p91 = scmp.eq.s32.totalorder %s32, 1
      %p92 = por %p90, %p91
      %p93 = scmp.ne.s32.totalorder %s84, %s85
      %p94 = scmp.eq.s32.totalorder %s32, 0
      %p95 = por %p93, %p94
      %p96 = scmp.ne.s32.totalorder %s84, %s85
      %p97 = scmp.eq.s32.totalorder %s33, 1
      %p98 = por %p96, %p97
      %p100 = scmp.ne.s32.totalorder %s85, %s99
      %p101 = scmp.eq.s32.totalorder %s33, 0
      %p102 = por %p100, %p101
      %s104 = sadd.s32 %s103, 1
      %p107 = scmp.eq.s32.totalorder %s27, 1
      %p108 = scmp.ne.s32.totalorder %s103, %s105
      %p109 = scmp.eq.s32.totalorder %s27, 0
      %p110 = por %p108, %p109
      %p111 = scmp.ne.s32.totalorder %s103, %s105
      %p112 = scmp.eq.s32.totalorder %s32, 1
      %p113 = por %p111, %p112
      %p114 = scmp.ne.s32.totalorder %s105, %s106
      %p115 = scmp.eq.s32.totalorder %s32, 0
      %p116 = por %p114, %p115
      %p117 = scmp.ne.s32.totalorder %s105, %s106
      %p118 = scmp.eq.s32.totalorder %s33, 1
      %p119 = por %p117, %p118
      %p121 = scmp.ne.s32.totalorder %s106, %s120
      %p122 = scmp.eq.s32.totalorder %s33, 0
      %p123 = por %p121, %p122
      %s124 = ssub.s32 %s27, %s34
      %p125 = scmp.eq.s32.totalorder %s124, 0
      %s127 = sadd.s32 %s126, 1
      %s128 = scalar_select %p125, %s126, %s127
      %p131 = pneg %p125
      %p132 = scmp.eq.s32.totalorder %s27, 1
      %p133 = por %p131, %p132
      %p134 = scmp.ne.s32.totalorder %s126, %s129
      %p135 = scmp.eq.s32.totalorder %s27, 0
      %p136 = por %p134, %p135
      %p137 = scmp.ne.s32.totalorder %s126, %s129
      %p138 = scmp.eq.s32.totalorder %s32, 1
      %p139 = por %p137, %p138
      %p140 = scmp.ne.s32.totalorder %s129, %s130
      %p141 = scmp.eq.s32.totalorder %s32, 0
      %p142 = por %p140, %p141
      %p143 = scmp.ne.s32.totalorder %s129, %s130
      %p144 = scmp.eq.s32.totalorder %s33, 1
      %p145 = por %p143, %p144
      %p147 = scmp.ne.s32.totalorder %s130, %s146
      %p148 = scmp.eq.s32.totalorder %s33, 0
      %p149 = por %p147, %p148
      %s150 = ssub.s32 %s27, %s34
      %p151 = scmp.eq.s32.totalorder %s150, 0
      %s153 = sadd.s32 %s152, 1
      %s154 = scalar_select %p151, %s152, %s153
      %p157 = pneg %p151
      %p158 = scmp.eq.s32.totalorder %s27, 1
      %p159 = por %p157, %p158
      %p160 = scmp.ne.s32.totalorder %s152, %s155
      %p161 = scmp.eq.s32.totalorder %s27, 0
      %p162 = por %p160, %p161
      %p163 = scmp.ne.s32.totalorder %s152, %s155
      %p164 = scmp.eq.s32.totalorder %s32, 1
      %p165 = por %p163, %p164
      %p166 = scmp.ne.s32.totalorder %s155, %s156
      %p167 = scmp.eq.s32.totalorder %s32, 0
      %p168 = por %p166, %p167
      %p169 = scmp.ne.s32.totalorder %s155, %s156
      %p170 = scmp.eq.s32.totalorder %s33, 1
      %p171 = por %p169, %p170
      %p173 = scmp.ne.s32.totalorder %s156, %s172
      %p174 = scmp.eq.s32.totalorder %s33, 0
      %p175 = por %p173, %p174
      %s176 = ssub.s32 %s27, %s34
      %p177 = scmp.eq.s32.totalorder %s176, 0
      %s179 = sadd.s32 %s178, 1
      %s180 = scalar_select %p177, %s178, %s179
      %p183 = pneg %p177
      %p184 = scmp.eq.s32.totalorder %s27, 1
      %p185 = por %p183, %p184
      %p186 = scmp.ne.s32.totalorder %s178, %s181
      %p187 = scmp.eq.s32.totalorder %s27, 0
      %p188 = por %p186, %p187
      %p189 = scmp.ne.s32.totalorder %s178, %s181
      %p190 = scmp.eq.s32.totalorder %s32, 1
      %p191 = por %p189, %p190
      %p192 = scmp.ne.s32.totalorder %s181, %s182
      %p193 = scmp.eq.s32.totalorder %s32, 0
      %p194 = por %p192, %p193
      %p195 = scmp.ne.s32.totalorder %s181, %s182
      %p196 = scmp.eq.s32.totalorder %s33, 1
      %p197 = por %p195, %p196
      %p199 = scmp.ne.s32.totalorder %s182, %s198
      %p200 = scmp.eq.s32.totalorder %s33, 0
      %p201 = por %p199, %p200
      %s202 = ssub.s32 %s27, %s34
      %p203 = scmp.eq.s32.totalorder %s202, 0
      %s205 = sadd.s32 %s204, 1
      %s206 = scalar_select %p203, %s204, %s205
      %p209 = pneg %p203
      %p210 = scmp.eq.s32.totalorder %s27, 1
      %p211 = por %p209, %p210
      %p212 = scmp.ne.s32.totalorder %s204, %s207
      %p213 = scmp.eq.s32.totalorder %s27, 0
      %p214 = por %p212, %p213
      %p215 = scmp.ne.s32.totalorder %s204, %s207
      %p216 = scmp.eq.s32.totalorder %s32, 1
      %p217 = por %p215, %p216
      %p218 = scmp.ne.s32.totalorder %s207, %s208
      %p219 = scmp.eq.s32.totalorder %s32, 0
      %p220 = por %p218, %p219
      %p221 = scmp.ne.s32.totalorder %s207, %s208
      %p222 = scmp.eq.s32.totalorder %s33, 1
      %p223 = por %p221, %p222
      %p225 = scmp.ne.s32.totalorder %s208, %s224
      %p226 = scmp.eq.s32.totalorder %s33, 0
      %p227 = por %p225, %p226
      %p228 = scmp.le.s32.totalorder 1, %s27
      %p229 = scmp.lt.s32.totalorder %s27, 3
      %p230 = pnand %p228, %p229
      %p231 = pneg %p230
      // Predicated region
      $region9: #{tpu_custom_call.1} parent=5 // pred_check
        _
      $region10: #{tpu_custom_call.1} parent=5 // pred_check_branch
        %233 = sbr.rel (%p230) target = $region12
      $region11: #{tpu_custom_call.1} parent=5 // pred_region
        %s234 = ssub.s32 %s27, 1
        // Predicated region
        $region13: #{tpu_custom_call.1} parent=11 // pred_check
          %p235 = pneg %p74
        $region14: #{tpu_custom_call.1} parent=11 // pred_check_branch
          %237 = sbr.rel (%p235) target = $region16
        $region15: #{tpu_custom_call.1} parent=11 // pred_region
          %s239 = ssub.s32 16384, 16384
          %240 = vsyncadd [#allocation6], %s239
          %s241 = sshll.u32 [#allocation5], 4
          %s242 = int_to_ptr.vmem [resolvable:$true] %s241
          %247 = dma.hbm_to_vmem [thread:$0]  %s1, 16384, %s242, [#allocation6], 512, 512, 32
        $region16: #{tpu_custom_call.1} parent=11 // pred_fallthru
          _
        // Predicated region
        $region17: #{tpu_custom_call.1} parent=11 // pred_check
          %p248 = pneg %p95
        $region18: #{tpu_custom_call.1} parent=11 // pred_check_branch
          %250 = sbr.rel (%p248) target = $region20
        $region19: #{tpu_custom_call.1} parent=11 // pred_region
          %s252 = ssub.s32 16384, 16384
          %253 = vsyncadd [#allocation6], %s252
          %s254 = sshll.u32 [#allocation7], 4
          %s255 = int_to_ptr.vmem [resolvable:$true] %s254
          %260 = dma.hbm_to_vmem [thread:$0]  %s2, 16384, %s255, [#allocation6], 256, 256, 16
        $region20: #{tpu_custom_call.1} parent=11 // pred_fallthru
          _
        // Predicated region
        $region21: #{tpu_custom_call.1} parent=11 // pred_check
          %p261 = pneg %p116
        $region22: #{tpu_custom_call.1} parent=11 // pred_check_branch
          %263 = sbr.rel (%p261) target = $region24
        $region23: #{tpu_custom_call.1} parent=11 // pred_region
          _
        $region24: #{tpu_custom_call.1} parent=11 // pred_fallthru
          _
      $region12: #{tpu_custom_call.1} parent=5 // pred_fallthru
        _
      %p264 = scmp.lt.s32.totalorder %s27, 2
      // Predicated region
      $region25: #{tpu_custom_call.1} parent=5 // pred_check
        %p265 = pneg %p264
      $region26: #{tpu_custom_call.1} parent=5 // pred_check_branch
        %267 = sbr.rel (%p265) target = $region28
      $region27: #{tpu_custom_call.1} parent=5 // pred_region
        // Predicated region
        $region29: #{tpu_custom_call.1} parent=27 // pred_check
          %p268 = pneg %p47
        $region30: #{tpu_custom_call.1} parent=27 // pred_check_branch
          %270 = sbr.rel (%p268) target = $region32
        $region31: #{tpu_custom_call.1} parent=27 // pred_region
          %s271 = sand.u32 %s37, 1
          %s272 = scalar_lea.sflag [#allocation3], %s271
          %s273 = sand.u32 %s37, 1
          %s274 = smul.addr %s273, 512
          %s275 = scalar_lea.vmem [#allocation2], %s274
          %s276 = smul.u32 32, %s27
          %s278 = ssub.s32 8192, 8192
          %279 = vsyncadd %s272, %s278
          %s280 = smul.addr %s276, 2
          %s281 = smul.addr %s280, 128
          %s282 = scalar_lea.hbm %s0, %s281
          %s283 = sshll.u32 %s275, 4
          %s284 = int_to_ptr.vmem [resolvable:$true] %s283
          %289 = dma.hbm_to_vmem [thread:$0]  %s282, 8192, %s284, %s272, 256, 256, 16
        $region32: #{tpu_custom_call.1} parent=27 // pred_fallthru
          _
      $region28: #{tpu_custom_call.1} parent=5 // pred_fallthru
        _
      %p290 = scmp.le.s32.totalorder 1, %s27
      %p291 = scmp.lt.s32.totalorder %s27, 3
      %p292 = pnand %p290, %p291
      %p293 = pneg %p292
      // Predicated region
      $region33: #{tpu_custom_call.1} parent=5 // pred_check
        _
      $region34: #{tpu_custom_call.1} parent=5 // pred_check_branch
        %295 = sbr.rel (%p292) target = $region36
      $region35: #{tpu_custom_call.1} parent=5 // pred_region
        %s296 = ssub.s32 %s27, 1
        %s297 = sand.u32 %s40, 1
        %s298 = scalar_lea.sflag [#allocation3], %s297
        %s299 = sand.u32 %s40, 1
        %s300 = smul.addr %s299, 512
        %s301 = scalar_lea.vmem [#allocation2], %s300
        // Predicated region
        $region37: #{tpu_custom_call.1} parent=35 // pred_check
          %p302 = pneg %p53
        $region38: #{tpu_custom_call.1} parent=35 // pred_check_branch
          %304 = sbr.rel (%p302) target = $region40
        $region39: #{tpu_custom_call.1} parent=35 // pred_region
          %305 = dma.done %s298, 8192
        $region40: #{tpu_custom_call.1} parent=35 // pred_fallthru
          _
        // Predicated region
        $region41: #{tpu_custom_call.1} parent=35 // pred_check
          %p306 = pneg %p74
        $region42: #{tpu_custom_call.1} parent=35 // pred_check_branch
          %308 = sbr.rel (%p306) target = $region44
        $region43: #{tpu_custom_call.1} parent=35 // pred_region
          %309 = dma.done [#allocation6], 16384
        $region44: #{tpu_custom_call.1} parent=35 // pred_fallthru
          _
        // Predicated region
        $region45: #{tpu_custom_call.1} parent=35 // pred_check
          %p310 = pneg %p95
        $region46: #{tpu_custom_call.1} parent=35 // pred_check_branch
          %312 = sbr.rel (%p310) target = $region48
        $region47: #{tpu_custom_call.1} parent=35 // pred_region
          %313 = dma.done [#allocation6], 16384
        $region48: #{tpu_custom_call.1} parent=35 // pred_fallthru
          _
        %s314 = sand.u32 %s40, 1
        %s315 = scalar_lea.sflag [#allocation3], %s314
        %s316 = sand.u32 %s40, 1
        %s317 = smul.addr %s316, 512
        %s318 = scalar_lea.vmem [#allocation2], %s317
        %p319 = pneg %p53
        %p320 = pneg %p50
        %p321 = pneg %p74
        %p322 = pneg %p71
        %p323 = pneg %p95
        %p324 = pneg %p92
        %p325 = pneg %p116
        %p326 = pneg %p113
        %p327 = pneg %p142
        %p328 = pneg %p139
        %s329 = sand.u32 %s129, 1
        %s330 = scalar_lea.sflag [#allocation4], %s329
        %s331 = sand.u32 %s129, 1
        %s332 = smul.addr %s331, 512
        %s333 = scalar_lea.vmem [#allocation8], %s332
        %p334 = pneg %p168
        %p335 = pneg %p165
        %s336 = sand.u32 %s32, 1
        %s337 = scalar_lea.sflag [#allocation10], %s336
        %s338 = sand.u32 %s155, 1
        %s339 = smul.addr %s338, 1024
        %s340 = scalar_lea.vmem [#allocation9], %s339
        %p341 = pneg %p194
        %p342 = pneg %p191
        %s343 = sand.u32 %s32, 1
        %s344 = scalar_lea.sflag [#allocation10], %s343
        %s345 = sand.u32 %s181, 1
        %s346 = smul.addr %s345, 256
        %s347 = scalar_lea.vmem [#allocation11], %s346
        %p348 = pneg %p220
        %p349 = pneg %p217
        %s350 = sand.u32 %s207, 1
        %s351 = scalar_lea.sflag [#allocation13], %s350
        %s352 = sand.u32 %s207, 1
        %s353 = smul.addr %s352, 32
        %s354 = scalar_lea.vmem [#allocation12], %s353
        %s355 = smul.u32 32, %s32
        %s356 = smul.u32 32, %s32
        %s357 = smul.u32 32, %s32
        %s358 = smul.u32 32, %s32
        %v359 = vld [vmem:[%s301] sm:$0xff]
        %v360 = vld [vmem:[%s301 + $0x8] sm:$0xff]
        %v361 = vld [vmem:[%s301 + $0x10] sm:$0xff]
        %v362 = vld [vmem:[%s301 + $0x18] sm:$0xff]
        %v363 = vld [vmem:[%s301 + $0x20] sm:$0xff]
        %v364 = vld [vmem:[%s301 + $0x28] sm:$0xff]
        %v365 = vld [vmem:[%s301 + $0x30] sm:$0xff]
        %v366 = vld [vmem:[%s301 + $0x38] sm:$0xff]
        %v367 = vld [vmem:[%s301 + $0x40] sm:$0xff]
        %v368 = vld [vmem:[%s301 + $0x48] sm:$0xff]
        %v369 = vld [vmem:[%s301 + $0x50] sm:$0xff]
        %v370 = vld [vmem:[%s301 + $0x58] sm:$0xff]
        %v371 = vld [vmem:[%s301 + $0x60] sm:$0xff]
        %v372 = vld [vmem:[%s301 + $0x68] sm:$0xff]
        %v373 = vld [vmem:[%s301 + $0x70] sm:$0xff]
        %v374 = vld [vmem:[%s301 + $0x78] sm:$0xff]
        %v375 = vld [vmem:[%s301 + $0x80] sm:$0xff]
        %v376 = vld [vmem:[%s301 + $0x88] sm:$0xff]
        %v377 = vld [vmem:[%s301 + $0x90] sm:$0xff]
        %v378 = vld [vmem:[%s301 + $0x98] sm:$0xff]
        %v379 = vld [vmem:[%s301 + $0xa0] sm:$0xff]
        %v380 = vld [vmem:[%s301 + $0xa8] sm:$0xff]
        %v381 = vld [vmem:[%s301 + $0xb0] sm:$0xff]
        %v382 = vld [vmem:[%s301 + $0xb8] sm:$0xff]
        %v383 = vld [vmem:[%s301 + $0xc0] sm:$0xff]
        %v384 = vld [vmem:[%s301 + $0xc8] sm:$0xff]
        %v385 = vld [vmem:[%s301 + $0xd0] sm:$0xff]
        %v386 = vld [vmem:[%s301 + $0xd8] sm:$0xff]
        %v387 = vld [vmem:[%s301 + $0xe0] sm:$0xff]
        %v388 = vld [vmem:[%s301 + $0xe8] sm:$0xff]
        %v389 = vld [vmem:[%s301 + $0xf0] sm:$0xff]
        %v390 = vld [vmem:[%s301 + $0xf8] sm:$0xff]
        %v391 = vld [vmem:[%s301 + $0x100] sm:$0xff]
        %v392 = vld [vmem:[%s301 + $0x108] sm:$0xff]
        %v393 = vld [vmem:[%s301 + $0x110] sm:$0xff]
        %v394 = vld [vmem:[%s301 + $0x118] sm:$0xff]
        %v395 = vld [vmem:[%s301 + $0x120] sm:$0xff]
        %v396 = vld [vmem:[%s301 + $0x128] sm:$0xff]
        %v397 = vld [vmem:[%s301 + $0x130] sm:$0xff]
        %v398 = vld [vmem:[%s301 + $0x138] sm:$0xff]
        %v399 = vld [vmem:[%s301 + $0x140] sm:$0xff]
        %v400 = vld [vmem:[%s301 + $0x148] sm:$0xff]
        %v401 = vld [vmem:[%s301 + $0x150] sm:$0xff]
        %v402 = vld [vmem:[%s301 + $0x158] sm:$0xff]
        %v403 = vld [vmem:[%s301 + $0x160] sm:$0xff]
        %v404 = vld [vmem:[%s301 + $0x168] sm:$0xff]
        %v405 = vld [vmem:[%s301 + $0x170] sm:$0xff]
        %v406 = vld [vmem:[%s301 + $0x178] sm:$0xff]
        %v407 = vld [vmem:[%s301 + $0x180] sm:$0xff]
        %v408 = vld [vmem:[%s301 + $0x188] sm:$0xff]
        %v409 = vld [vmem:[%s301 + $0x190] sm:$0xff]
        %v410 = vld [vmem:[%s301 + $0x198] sm:$0xff]
        %v411 = vld [vmem:[%s301 + $0x1a0] sm:$0xff]
        %v412 = vld [vmem:[%s301 + $0x1a8] sm:$0xff]
        %v413 = vld [vmem:[%s301 + $0x1b0] sm:$0xff]
        %v414 = vld [vmem:[%s301 + $0x1b8] sm:$0xff]
        %v415 = vld [vmem:[%s301 + $0x1c0] sm:$0xff]
        %v416 = vld [vmem:[%s301 + $0x1c8] sm:$0xff]
        %v417 = vld [vmem:[%s301 + $0x1d0] sm:$0xff]
        %v418 = vld [vmem:[%s301 + $0x1d8] sm:$0xff]
        %v419 = vld [vmem:[%s301 + $0x1e0] sm:$0xff]
        %v420 = vld [vmem:[%s301 + $0x1e8] sm:$0xff]
        %v421 = vld [vmem:[%s301 + $0x1f0] sm:$0xff]
        %v422 = vld [vmem:[%s301 + $0x1f8] sm:$0xff]
        %v423 = vld [vmem:[%s3] sm:$0x3]
        %v425 = vlaneseq
        %v426 = vshrl.u32 %v425, 7
        %v427 = vsub.s32 0, %v426
        %v428 = vrot.slane %v423, %v427
        %v429 = vlaneseq
        %v430 = vshrl.u32 %v429, 7
        %v431 = vsub.s32 1, %v430
        %v432 = vrot.slane %v423, %v431
        %v435 = vsub.f32 %v359, %v428
        %v436 = vsub.f32 %v360, %v432
        %v437 = vsub.f32 %v361, %v428
        %v438 = vsub.f32 %v362, %v432
        %v439 = vsub.f32 %v363, %v428
        %v440 = vsub.f32 %v364, %v432
        %v441 = vsub.f32 %v365, %v428
        %v442 = vsub.f32 %v366, %v432
        %v443 = vsub.f32 %v367, %v428
        %v444 = vsub.f32 %v368, %v432
        %v445 = vsub.f32 %v369, %v428
        %v446 = vsub.f32 %v370, %v432
        %v447 = vsub.f32 %v371, %v428
        %v448 = vsub.f32 %v372, %v432
        %v449 = vsub.f32 %v373, %v428
        %v450 = vsub.f32 %v374, %v432
        %v451 = vsub.f32 %v375, %v428
        %v452 = vsub.f32 %v376, %v432
        %v453 = vsub.f32 %v377, %v428
        %v454 = vsub.f32 %v378, %v432
        %v455 = vsub.f32 %v379, %v428
        %v456 = vsub.f32 %v380, %v432
        %v457 = vsub.f32 %v381, %v428
        %v458 = vsub.f32 %v382, %v432
        %v459 = vsub.f32 %v383, %v428
        %v460 = vsub.f32 %v384, %v432
        %v461 = vsub.f32 %v385, %v428
        %v462 = vsub.f32 %v386, %v432
        %v463 = vsub.f32 %v387, %v428
        %v464 = vsub.f32 %v388, %v432
        %v465 = vsub.f32 %v389, %v428
        %v466 = vsub.f32 %v390, %v432
        %v467 = vsub.f32 %v391, %v428
        %v468 = vsub.f32 %v392, %v432
        %v469 = vsub.f32 %v393, %v428
        %v470 = vsub.f32 %v394, %v432
        %v471 = vsub.f32 %v395, %v428
        %v472 = vsub.f32 %v396, %v432
        %v473 = vsub.f32 %v397, %v428
        %v474 = vsub.f32 %v398, %v432
        %v475 = vsub.f32 %v399, %v428
        %v476 = vsub.f32 %v400, %v432
        %v477 = vsub.f32 %v401, %v428
        %v478 = vsub.f32 %v402, %v432
        %v479 = vsub.f32 %v403, %v428
        %v480 = vsub.f32 %v404, %v432
        %v481 = vsub.f32 %v405, %v428
        %v482 = vsub.f32 %v406, %v432
        %v483 = vsub.f32 %v407, %v428
        %v484 = vsub.f32 %v408, %v432
        %v485 = vsub.f32 %v409, %v428
        %v486 = vsub.f32 %v410, %v432
        %v487 = vsub.f32 %v411, %v428
        %v488 = vsub.f32 %v412, %v432
        %v489 = vsub.f32 %v413, %v428
        %v490 = vsub.f32 %v414, %v432
        %v491 = vsub.f32 %v415, %v428
        %v492 = vsub.f32 %v416, %v432
        %v493 = vsub.f32 %v417, %v428
        %v494 = vsub.f32 %v418, %v432
        %v495 = vsub.f32 %v419, %v428
        %v496 = vsub.f32 %v420, %v432
        %v497 = vsub.f32 %v421, %v428
        %v498 = vsub.f32 %v422, %v432
        %v499 = vld [vmem:[#allocation5] sm:$0xff]
        %v500 = vld [vmem:[#allocation5 + $0x8] sm:$0xff]
        %v501 = vld [vmem:[#allocation5 + $0x10] sm:$0xff]
        %v502 = vld [vmem:[#allocation5 + $0x18] sm:$0xff]
        %v503 = vld [vmem:[#allocation5 + $0x20] sm:$0xff]
        %v504 = vld [vmem:[#allocation5 + $0x28] sm:$0xff]
        %v505 = vld [vmem:[#allocation5 + $0x30] sm:$0xff]
        %v506 = vld [vmem:[#allocation5 + $0x38] sm:$0xff]
        %v507 = vld [vmem:[#allocation5 + $0x40] sm:$0xff]
        %v508 = vld [vmem:[#allocation5 + $0x48] sm:$0xff]
        %v509 = vld [vmem:[#allocation5 + $0x50] sm:$0xff]
        %v510 = vld [vmem:[#allocation5 + $0x58] sm:$0xff]
        %v511 = vld [vmem:[#allocation5 + $0x60] sm:$0xff]
        %v512 = vld [vmem:[#allocation5 + $0x68] sm:$0xff]
        %v513 = vld [vmem:[#allocation5 + $0x70] sm:$0xff]
        %v514 = vld [vmem:[#allocation5 + $0x78] sm:$0xff]
        %v515 = vld [vmem:[#allocation5 + $0x80] sm:$0xff]
        %v516 = vld [vmem:[#allocation5 + $0x88] sm:$0xff]
        %v517 = vld [vmem:[#allocation5 + $0x90] sm:$0xff]
        %v518 = vld [vmem:[#allocation5 + $0x98] sm:$0xff]
        %v519 = vld [vmem:[#allocation5 + $0xa0] sm:$0xff]
        %v520 = vld [vmem:[#allocation5 + $0xa8] sm:$0xff]
        %v521 = vld [vmem:[#allocation5 + $0xb0] sm:$0xff]
        %v522 = vld [vmem:[#allocation5 + $0xb8] sm:$0xff]
        %v523 = vld [vmem:[#allocation5 + $0xc0] sm:$0xff]
        %v524 = vld [vmem:[#allocation5 + $0xc8] sm:$0xff]
        %v525 = vld [vmem:[#allocation5 + $0xd0] sm:$0xff]
        %v526 = vld [vmem:[#allocation5 + $0xd8] sm:$0xff]
        %v527 = vld [vmem:[#allocation5 + $0xe0] sm:$0xff]
        %v528 = vld [vmem:[#allocation5 + $0xe8] sm:$0xff]
        %v529 = vld [vmem:[#allocation5 + $0xf0] sm:$0xff]
        %v530 = vld [vmem:[#allocation5 + $0xf8] sm:$0xff]
        %v531 = vld [vmem:[#allocation5 + $0x100] sm:$0xff]
        %v532 = vld [vmem:[#allocation5 + $0x108] sm:$0xff]
        %v533 = vld [vmem:[#allocation5 + $0x110] sm:$0xff]
        %v534 = vld [vmem:[#allocation5 + $0x118] sm:$0xff]
        %v535 = vld [vmem:[#allocation5 + $0x120] sm:$0xff]
        %v536 = vld [vmem:[#allocation5 + $0x128] sm:$0xff]
        %v537 = vld [vmem:[#allocation5 + $0x130] sm:$0xff]
        %v538 = vld [vmem:[#allocation5 + $0x138] sm:$0xff]
        %v539 = vld [vmem:[#allocation5 + $0x140] sm:$0xff]
        %v540 = vld [vmem:[#allocation5 + $0x148] sm:$0xff]
        %v541 = vld [vmem:[#allocation5 + $0x150] sm:$0xff]
        %v542 = vld [vmem:[#allocation5 + $0x158] sm:$0xff]
        %v543 = vld [vmem:[#allocation5 + $0x160] sm:$0xff]
        %v544 = vld [vmem:[#allocation5 + $0x168] sm:$0xff]
        %v545 = vld [vmem:[#allocation5 + $0x170] sm:$0xff]
        %v546 = vld [vmem:[#allocation5 + $0x178] sm:$0xff]
        %v547 = vld [vmem:[#allocation5 + $0x180] sm:$0xff]
        %v548 = vld [vmem:[#allocation5 + $0x188] sm:$0xff]
        %v549 = vld [vmem:[#allocation5 + $0x190] sm:$0xff]
        %v550 = vld [vmem:[#allocation5 + $0x198] sm:$0xff]
        %v551 = vld [vmem:[#allocation5 + $0x1a0] sm:$0xff]
        %v552 = vld [vmem:[#allocation5 + $0x1a8] sm:$0xff]
        %v553 = vld [vmem:[#allocation5 + $0x1b0] sm:$0xff]
        %v554 = vld [vmem:[#allocation5 + $0x1b8] sm:$0xff]
        %v555 = vld [vmem:[#allocation5 + $0x1c0] sm:$0xff]
        %v556 = vld [vmem:[#allocation5 + $0x1c8] sm:$0xff]
        %v557 = vld [vmem:[#allocation5 + $0x1d0] sm:$0xff]
        %v558 = vld [vmem:[#allocation5 + $0x1d8] sm:$0xff]
        %v559 = vld [vmem:[#allocation5 + $0x1e0] sm:$0xff]
        %v560 = vld [vmem:[#allocation5 + $0x1e8] sm:$0xff]
        %v561 = vld [vmem:[#allocation5 + $0x1f0] sm:$0xff]
        %v562 = vld [vmem:[#allocation5 + $0x1f8] sm:$0xff]
        %v563 = vld [vmem:[#allocation5 + $0x200] sm:$0xff]
        %v564 = vld [vmem:[#allocation5 + $0x208] sm:$0xff]
        %v565 = vld [vmem:[#allocation5 + $0x210] sm:$0xff]
        %v566 = vld [vmem:[#allocation5 + $0x218] sm:$0xff]
        %v567 = vld [vmem:[#allocation5 + $0x220] sm:$0xff]
        %v568 = vld [vmem:[#allocation5 + $0x228] sm:$0xff]
        %v569 = vld [vmem:[#allocation5 + $0x230] sm:$0xff]
        %v570 = vld [vmem:[#allocation5 + $0x238] sm:$0xff]
        %v571 = vld [vmem:[#allocation5 + $0x240] sm:$0xff]
        %v572 = vld [vmem:[#allocation5 + $0x248] sm:$0xff]
        %v573 = vld [vmem:[#allocation5 + $0x250] sm:$0xff]
        %v574 = vld [vmem:[#allocation5 + $0x258] sm:$0xff]
        %v575 = vld [vmem:[#allocation5 + $0x260] sm:$0xff]
        %v576 = vld [vmem:[#allocation5 + $0x268] sm:$0xff]
        %v577 = vld [vmem:[#allocation5 + $0x270] sm:$0xff]
        %v578 = vld [vmem:[#allocation5 + $0x278] sm:$0xff]
        %v579 = vld [vmem:[#allocation5 + $0x280] sm:$0xff]
        %v580 = vld [vmem:[#allocation5 + $0x288] sm:$0xff]
        %v581 = vld [vmem:[#allocation5 + $0x290] sm:$0xff]
        %v582 = vld [vmem:[#allocation5 + $0x298] sm:$0xff]
        %v583 = vld [vmem:[#allocation5 + $0x2a0] sm:$0xff]
        %v584 = vld [vmem:[#allocation5 + $0x2a8] sm:$0xff]
        %v585 = vld [vmem:[#allocation5 + $0x2b0] sm:$0xff]
        %v586 = vld [vmem:[#allocation5 + $0x2b8] sm:$0xff]
        %v587 = vld [vmem:[#allocation5 + $0x2c0] sm:$0xff]
        %v588 = vld [vmem:[#allocation5 + $0x2c8] sm:$0xff]
        %v589 = vld [vmem:[#allocation5 + $0x2d0] sm:$0xff]
        %v590 = vld [vmem:[#allocation5 + $0x2d8] sm:$0xff]
        %v591 = vld [vmem:[#allocation5 + $0x2e0] sm:$0xff]
        %v592 = vld [vmem:[#allocation5 + $0x2e8] sm:$0xff]
        %v593 = vld [vmem:[#allocation5 + $0x2f0] sm:$0xff]
        %v594 = vld [vmem:[#allocation5 + $0x2f8] sm:$0xff]
        %v595 = vld [vmem:[#allocation5 + $0x300] sm:$0xff]
        %v596 = vld [vmem:[#allocation5 + $0x308] sm:$0xff]
        %v597 = vld [vmem:[#allocation5 + $0x310] sm:$0xff]
        %v598 = vld [vmem:[#allocation5 + $0x318] sm:$0xff]
        %v599 = vld [vmem:[#allocation5 + $0x320] sm:$0xff]
        %v600 = vld [vmem:[#allocation5 + $0x328] sm:$0xff]
        %v601 = vld [vmem:[#allocation5 + $0x330] sm:$0xff]
        %v602 = vld [vmem:[#allocation5 + $0x338] sm:$0xff]
        %v603 = vld [vmem:[#allocation5 + $0x340] sm:$0xff]
        %v604 = vld [vmem:[#allocation5 + $0x348] sm:$0xff]
        %v605 = vld [vmem:[#allocation5 + $0x350] sm:$0xff]
        %v606 = vld [vmem:[#allocation5 + $0x358] sm:$0xff]
        %v607 = vld [vmem:[#allocation5 + $0x360] sm:$0xff]
        %v608 = vld [vmem:[#allocation5 + $0x368] sm:$0xff]
        %v609 = vld [vmem:[#allocation5 + $0x370] sm:$0xff]
        %v610 = vld [vmem:[#allocation5 + $0x378] sm:$0xff]
        %v611 = vld [vmem:[#allocation5 + $0x380] sm:$0xff]
        %v612 = vld [vmem:[#allocation5 + $0x388] sm:$0xff]
        %v613 = vld [vmem:[#allocation5 + $0x390] sm:$0xff]
        %v614 = vld [vmem:[#allocation5 + $0x398] sm:$0xff]
        %v615 = vld [vmem:[#allocation5 + $0x3a0] sm:$0xff]
        %v616 = vld [vmem:[#allocation5 + $0x3a8] sm:$0xff]
        %v617 = vld [vmem:[#allocation5 + $0x3b0] sm:$0xff]
        %v618 = vld [vmem:[#allocation5 + $0x3b8] sm:$0xff]
        %v619 = vld [vmem:[#allocation5 + $0x3c0] sm:$0xff]
        %v620 = vld [vmem:[#allocation5 + $0x3c8] sm:$0xff]
        %v621 = vld [vmem:[#allocation5 + $0x3d0] sm:$0xff]
        %v622 = vld [vmem:[#allocation5 + $0x3d8] sm:$0xff]
        %v623 = vld [vmem:[#allocation5 + $0x3e0] sm:$0xff]
        %v624 = vld [vmem:[#allocation5 + $0x3e8] sm:$0xff]
        %v625 = vld [vmem:[#allocation5 + $0x3f0] sm:$0xff]
        %v626 = vld [vmem:[#allocation5 + $0x3f8] sm:$0xff]
        %627 = vmatprep.subr.mxu0 %v560
        %628 = vmatpush1.msra.mxu0 %v559
        %629 = vmatprep.subr.mxu0 %v556
        %630 = vmatpush1.msra.mxu0 %v555
        %631 = vmatprep.subr.mxu0 %v552
        %632 = vmatpush1.msra.mxu0 %v551
        %633 = vmatprep.subr.mxu0 %v548
        %634 = vmatpush1.msra.mxu0 %v547
        %635 = vmatprep.subr.mxu0 %v544
        %636 = vmatpush1.msra.mxu0 %v543
        %637 = vmatprep.subr.mxu0 %v540
        %638 = vmatpush1.msra.mxu0 %v539
        %639 = vmatprep.subr.mxu0 %v536
        %640 = vmatpush1.msra.mxu0 %v535
        %641 = vmatprep.subr.mxu0 %v532
        %642 = vmatpush1.msra.mxu0 %v531
        %643 = vmatprep.subr.mxu0 %v528
        %644 = vmatpush1.msra.mxu0 %v527
        %645 = vmatprep.subr.mxu0 %v524
        %646 = vmatpush1.msra.mxu0 %v523
        %647 = vmatprep.subr.mxu0 %v520
        %648 = vmatpush1.msra.mxu0 %v519
        %649 = vmatprep.subr.mxu0 %v516
        %650 = vmatpush1.msra.mxu0 %v515
        %651 = vmatprep.subr.mxu0 %v512
        %652 = vmatpush1.msra.mxu0 %v511
        %653 = vmatprep.subr.mxu0 %v508
        %654 = vmatpush1.msra.mxu0 %v507
        %655 = vmatprep.subr.mxu0 %v504
        %656 = vmatpush1.msra.mxu0 %v503
        %657 = vmatprep.subr.mxu0 %v500
        %658 = vmatpush1.msra.mxu0 %v499
        %659 = vmatprep.subr.mxu0 %v624
        %660 = vmatpush2.msra.mxu0 %v623
        %661 = vmatprep.subr.mxu0 %v620
        %662 = vmatpush2.msra.mxu0 %v619
        %663 = vmatprep.subr.mxu0 %v616
        %664 = vmatpush2.msra.mxu0 %v615
        %665 = vmatprep.subr.mxu0 %v612
        %666 = vmatpush2.msra.mxu0 %v611
        %667 = vmatprep.subr.mxu0 %v608
        %668 = vmatpush2.msra.mxu0 %v607
        %669 = vmatprep.subr.mxu0 %v604
        %670 = vmatpush2.msra.mxu0 %v603
        %671 = vmatprep.subr.mxu0 %v600
        %672 = vmatpush2.msra.mxu0 %v599
        %673 = vmatprep.subr.mxu0 %v596
        %674 = vmatpush2.msra.mxu0 %v595
        %675 = vmatprep.subr.mxu0 %v592
        %676 = vmatpush2.msra.mxu0 %v591
        %677 = vmatprep.subr.mxu0 %v588
        %678 = vmatpush2.msra.mxu0 %v587
        %679 = vmatprep.subr.mxu0 %v584
        %680 = vmatpush2.msra.mxu0 %v583
        %681 = vmatprep.subr.mxu0 %v580
        %682 = vmatpush2.msra.mxu0 %v579
        %683 = vmatprep.subr.mxu0 %v576
        %684 = vmatpush2.msra.mxu0 %v575
        %685 = vmatprep.subr.mxu0 %v572
        %686 = vmatpush2.msra.mxu0 %v571
        %687 = vmatprep.subr.mxu0 %v568
        %688 = vmatpush2.msra.mxu0 %v567
        %689 = vmatprep.subr.mxu0 %v564
        %690 = vmatpush2.msra.mxu0 %v563
        %691 = vmatprep.mubr.f32.mxu0 %v436
        %692 = vmatmul.mubr.f32.gmra.mxu0 %v435
        %v693 = vpop.f32.mrf.mxu0
        %v694 = vadd.f32 0.0, %v693
        %v695 = vpop.f32.mrf.mxu0
        %v696 = vadd.f32 0.0, %v695
        %697 = vmatprep.mubr.f32.mxu0 %v438
        %698 = vmatmul.mubr.f32.gmra.mxu0 %v437
        %v699 = vpop.f32.mrf.mxu0
        %v700 = vadd.f32 0.0, %v699
        %v701 = vpop.f32.mrf.mxu0
        %v702 = vadd.f32 0.0, %v701
        %703 = vmatprep.mubr.f32.mxu0 %v440
        %704 = vmatmul.mubr.f32.gmra.mxu0 %v439
        %v705 = vpop.f32.mrf.mxu0
        %v706 = vadd.f32 0.0, %v705
        %v707 = vpop.f32.mrf.mxu0
        %v708 = vadd.f32 0.0, %v707
        %709 = vmatprep.mubr.f32.mxu0 %v442
        %710 = vmatmul.mubr.f32.gmra.mxu0 %v441
        %v711 = vpop.f32.mrf.mxu0
        %v712 = vadd.f32 0.0, %v711
        %v713 = vpop.f32.mrf.mxu0
        %v714 = vadd.f32 0.0, %v713
        %715 = vmatprep.mubr.f32.mxu0 %v444
        %716 = vmatmul.mubr.f32.gmra.mxu0 %v443
        %v717 = vpop.f32.mrf.mxu0
        %v718 = vadd.f32 0.0, %v717
        %v719 = vpop.f32.mrf.mxu0
        %v720 = vadd.f32 0.0, %v719
        %721 = vmatprep.mubr.f32.mxu0 %v446
        %722 = vmatmul.mubr.f32.gmra.mxu0 %v445
        %v723 = vpop.f32.mrf.mxu0
        %v724 = vadd.f32 0.0, %v723
        %v725 = vpop.f32.mrf.mxu0
        %v726 = vadd.f32 0.0, %v725
        %727 = vmatprep.mubr.f32.mxu0 %v448
        %728 = vmatmul.mubr.f32.gmra.mxu0 %v447
        %v729 = vpop.f32.mrf.mxu0
        %v730 = vadd.f32 0.0, %v729
        %v731 = vpop.f32.mrf.mxu0
        %v732 = vadd.f32 0.0, %v731
        %733 = vmatprep.mubr.f32.mxu0 %v450
        %734 = vmatmul.mubr.f32.gmra.mxu0 %v449
        %v735 = vpop.f32.mrf.mxu0
        %v736 = vadd.f32 0.0, %v735
        %v737 = vpop.f32.mrf.mxu0
        %v738 = vadd.f32 0.0, %v737
        %739 = vmatprep.mubr.f32.mxu0 %v452
        %740 = vmatmul.mubr.f32.gmra.mxu0 %v451
        %v741 = vpop.f32.mrf.mxu0
        %v742 = vadd.f32 0.0, %v741
        %v743 = vpop.f32.mrf.mxu0
        %v744 = vadd.f32 0.0, %v743
        %745 = vmatprep.mubr.f32.mxu0 %v454
        %746 = vmatmul.mubr.f32.gmra.mxu0 %v453
        %v747 = vpop.f32.mrf.mxu0
        %v748 = vadd.f32 0.0, %v747
        %v749 = vpop.f32.mrf.mxu0
        %v750 = vadd.f32 0.0, %v749
        %751 = vmatprep.mubr.f32.mxu0 %v456
        %752 = vmatmul.mubr.f32.gmra.mxu0 %v455
        %v753 = vpop.f32.mrf.mxu0
        %v754 = vadd.f32 0.0, %v753
        %v755 = vpop.f32.mrf.mxu0
        %v756 = vadd.f32 0.0, %v755
        %757 = vmatprep.mubr.f32.mxu0 %v458
        %758 = vmatmul.mubr.f32.gmra.mxu0 %v457
        %v759 = vpop.f32.mrf.mxu0
        %v760 = vadd.f32 0.0, %v759
        %v761 = vpop.f32.mrf.mxu0
        %v762 = vadd.f32 0.0, %v761
        %763 = vmatprep.mubr.f32.mxu0 %v460
        %764 = vmatmul.mubr.f32.gmra.mxu0 %v459
        %v765 = vpop.f32.mrf.mxu0
        %v766 = vadd.f32 0.0, %v765
        %v767 = vpop.f32.mrf.mxu0
        %v768 = vadd.f32 0.0, %v767
        %769 = vmatprep.mubr.f32.mxu0 %v462
        %770 = vmatmul.mubr.f32.gmra.mxu0 %v461
        %v771 = vpop.f32.mrf.mxu0
        %v772 = vadd.f32 0.0, %v771
        %v773 = vpop.f32.mrf.mxu0
        %v774 = vadd.f32 0.0, %v773
        %775 = vmatprep.mubr.f32.mxu0 %v464
        %776 = vmatmul.mubr.f32.gmra.mxu0 %v463
        %v777 = vpop.f32.mrf.mxu0
        %v778 = vadd.f32 0.0, %v777
        %v779 = vpop.f32.mrf.mxu0
        %v780 = vadd.f32 0.0, %v779
        %781 = vmatprep.mubr.f32.mxu0 %v466
        %782 = vmatmul.mubr.f32.gmra.mxu0 %v465
        %v783 = vpop.f32.mrf.mxu0
        %v784 = vadd.f32 0.0, %v783
        %v785 = vpop.f32.mrf.mxu0
        %v786 = vadd.f32 0.0, %v785
        %787 = vmatprep.mubr.f32.mxu0 %v468
        %788 = vmatmul.mubr.f32.gmra.mxu0 %v467
        %v789 = vpop.f32.mrf.mxu0
        %v790 = vadd.f32 0.0, %v789
        %v791 = vpop.f32.mrf.mxu0
        %v792 = vadd.f32 0.0, %v791
        %793 = vmatprep.mubr.f32.mxu0 %v470
        %794 = vmatmul.mubr.f32.gmra.mxu0 %v469
        %v795 = vpop.f32.mrf.mxu0
        %v796 = vadd.f32 0.0, %v795
        %v797 = vpop.f32.mrf.mxu0
        %v798 = vadd.f32 0.0, %v797
        %799 = vmatprep.mubr.f32.mxu0 %v472
        %800 = vmatmul.mubr.f32.gmra.mxu0 %v471
        %v801 = vpop.f32.mrf.mxu0
        %v802 = vadd.f32 0.0, %v801
        %v803 = vpop.f32.mrf.mxu0
        %v804 = vadd.f32 0.0, %v803
        %805 = vmatprep.mubr.f32.mxu0 %v474
        %806 = vmatmul.mubr.f32.gmra.mxu0 %v473
        %v807 = vpop.f32.mrf.mxu0
        %v808 = vadd.f32 0.0, %v807
        %v809 = vpop.f32.mrf.mxu0
        %v810 = vadd.f32 0.0, %v809
        %811 = vmatprep.mubr.f32.mxu0 %v476
        %812 = vmatmul.mubr.f32.gmra.mxu0 %v475
        %v813 = vpop.f32.mrf.mxu0
        %v814 = vadd.f32 0.0, %v813
        %v815 = vpop.f32.mrf.mxu0
        %v816 = vadd.f32 0.0, %v815
        %817 = vmatprep.mubr.f32.mxu0 %v478
        %818 = vmatmul.mubr.f32.gmra.mxu0 %v477
        %v819 = vpop.f32.mrf.mxu0
        %v820 = vadd.f32 0.0, %v819
        %v821 = vpop.f32.mrf.mxu0
        %v822 = vadd.f32 0.0, %v821
        %823 = vmatprep.mubr.f32.mxu0 %v480
        %824 = vmatmul.mubr.f32.gmra.mxu0 %v479
        %v825 = vpop.f32.mrf.mxu0
        %v826 = vadd.f32 0.0, %v825
        %v827 = vpop.f32.mrf.mxu0
        %v828 = vadd.f32 0.0, %v827
        %829 = vmatprep.mubr.f32.mxu0 %v482
        %830 = vmatmul.mubr.f32.gmra.mxu0 %v481
        %v831 = vpop.f32.mrf.mxu0
        %v832 = vadd.f32 0.0, %v831
        %v833 = vpop.f32.mrf.mxu0
        %v834 = vadd.f32 0.0, %v833
        %835 = vmatprep.mubr.f32.mxu0 %v484
        %836 = vmatmul.mubr.f32.gmra.mxu0 %v483
        %v837 = vpop.f32.mrf.mxu0
        %v838 = vadd.f32 0.0, %v837
        %v839 = vpop.f32.mrf.mxu0
        %v840 = vadd.f32 0.0, %v839
        %841 = vmatprep.mubr.f32.mxu0 %v486
        %842 = vmatmul.mubr.f32.gmra.mxu0 %v485
        %v843 = vpop.f32.mrf.mxu0
        %v844 = vadd.f32 0.0, %v843
        %v845 = vpop.f32.mrf.mxu0
        %v846 = vadd.f32 0.0, %v845
        %847 = vmatprep.mubr.f32.mxu0 %v488
        %848 = vmatmul.mubr.f32.gmra.mxu0 %v487
        %v849 = vpop.f32.mrf.mxu0
        %v850 = vadd.f32 0.0, %v849
        %v851 = vpop.f32.mrf.mxu0
        %v852 = vadd.f32 0.0, %v851
        %853 = vmatprep.mubr.f32.mxu0 %v490
        %854 = vmatmul.mubr.f32.gmra.mxu0 %v489
        %v855 = vpop.f32.mrf.mxu0
        %v856 = vadd.f32 0.0, %v855
        %v857 = vpop.f32.mrf.mxu0
        %v858 = vadd.f32 0.0, %v857
        %859 = vmatprep.mubr.f32.mxu0 %v492
        %860 = vmatmul.mubr.f32.gmra.mxu0 %v491
        %v861 = vpop.f32.mrf.mxu0
        %v862 = vadd.f32 0.0, %v861
        %v863 = vpop.f32.mrf.mxu0
        %v864 = vadd.f32 0.0, %v863
        %865 = vmatprep.mubr.f32.mxu0 %v494
        %866 = vmatmul.mubr.f32.gmra.mxu0 %v493
        %v867 = vpop.f32.mrf.mxu0
        %v868 = vadd.f32 0.0, %v867
        %v869 = vpop.f32.mrf.mxu0
        %v870 = vadd.f32 0.0, %v869
        %871 = vmatprep.mubr.f32.mxu0 %v496
        %872 = vmatmul.mubr.f32.gmra.mxu0 %v495
        %v873 = vpop.f32.mrf.mxu0
        %v874 = vadd.f32 0.0, %v873
        %v875 = vpop.f32.mrf.mxu0
        %v876 = vadd.f32 0.0, %v875
        %877 = vmatprep.mubr.f32.mxu0 %v498
        %878 = vmatmul.mubr.f32.gmra.mxu0 %v497
        %v879 = vpop.f32.mrf.mxu0
        %v880 = vadd.f32 0.0, %v879
        %v881 = vpop.f32.mrf.mxu0
        %v882 = vadd.f32 0.0, %v881
        %883 = vdwg.mxu0
        %884 = vmatprep.subr.mxu0 %v562
        %885 = vmatpush1.msra.mxu0 %v561
        %886 = vmatprep.subr.mxu0 %v558
        %887 = vmatpush1.msra.mxu0 %v557
        %888 = vmatprep.subr.mxu0 %v554
        %889 = vmatpush1.msra.mxu0 %v553
        %890 = vmatprep.subr.mxu0 %v550
        %891 = vmatpush1.msra.mxu0 %v549
        %892 = vmatprep.subr.mxu0 %v546
        %893 = vmatpush1.msra.mxu0 %v545
        %894 = vmatprep.subr.mxu0 %v542
        %895 = vmatpush1.msra.mxu0 %v541
        %896 = vmatprep.subr.mxu0 %v538
        %897 = vmatpush1.msra.mxu0 %v537
        %898 = vmatprep.subr.mxu0 %v534
        %899 = vmatpush1.msra.mxu0 %v533
        %900 = vmatprep.subr.mxu0 %v530
        %901 = vmatpush1.msra.mxu0 %v529
        %902 = vmatprep.subr.mxu0 %v526
        %903 = vmatpush1.msra.mxu0 %v525
        %904 = vmatprep.subr.mxu0 %v522
        %905 = vmatpush1.msra.mxu0 %v521
        %906 = vmatprep.subr.mxu0 %v518
        %907 = vmatpush1.msra.mxu0 %v517
        %908 = vmatprep.subr.mxu0 %v514
        %909 = vmatpush1.msra.mxu0 %v513
        %910 = vmatprep.subr.mxu0 %v510
        %911 = vmatpush1.msra.mxu0 %v509
        %912 = vmatprep.subr.mxu0 %v506
        %913 = vmatpush1.msra.mxu0 %v505
        %914 = vmatprep.subr.mxu0 %v502
        %915 = vmatpush1.msra.mxu0 %v501
        %916 = vmatprep.subr.mxu0 %v626
        %917 = vmatpush2.msra.mxu0 %v625
        %918 = vmatprep.subr.mxu0 %v622
        %919 = vmatpush2.msra.mxu0 %v621
        %920 = vmatprep.subr.mxu0 %v618
        %921 = vmatpush2.msra.mxu0 %v617
        %922 = vmatprep.subr.mxu0 %v614
        %923 = vmatpush2.msra.mxu0 %v613
        %924 = vmatprep.subr.mxu0 %v610
        %925 = vmatpush2.msra.mxu0 %v609
        %926 = vmatprep.subr.mxu0 %v606
        %927 = vmatpush2.msra.mxu0 %v605
        %928 = vmatprep.subr.mxu0 %v602
        %929 = vmatpush2.msra.mxu0 %v601
        %930 = vmatprep.subr.mxu0 %v598
        %931 = vmatpush2.msra.mxu0 %v597
        %932 = vmatprep.subr.mxu0 %v594
        %933 = vmatpush2.msra.mxu0 %v593
        %934 = vmatprep.subr.mxu0 %v590
        %935 = vmatpush2.msra.mxu0 %v589
        %936 = vmatprep.subr.mxu0 %v586
        %937 = vmatpush2.msra.mxu0 %v585
        %938 = vmatprep.subr.mxu0 %v582
        %939 = vmatpush2.msra.mxu0 %v581
        %940 = vmatprep.subr.mxu0 %v578
        %941 = vmatpush2.msra.mxu0 %v577
        %942 = vmatprep.subr.mxu0 %v574
        %943 = vmatpush2.msra.mxu0 %v573
        %944 = vmatprep.subr.mxu0 %v570
        %945 = vmatpush2.msra.mxu0 %v569
        %946 = vmatprep.subr.mxu0 %v566
        %947 = vmatpush2.msra.mxu0 %v565
        %948 = vmatprep.mubr.f32.mxu0 %v436
        %949 = vmatmul.mubr.f32.gmra.mxu0 %v435
        %v950 = vpop.f32.mrf.mxu0
        %v951 = vadd.f32 0.0, %v950
        %v952 = vpop.f32.mrf.mxu0
        %v953 = vadd.f32 0.0, %v952
        %954 = vmatprep.mubr.f32.mxu0 %v438
        %955 = vmatmul.mubr.f32.gmra.mxu0 %v437
        %v956 = vpop.f32.mrf.mxu0
        %v957 = vadd.f32 0.0, %v956
        %v958 = vpop.f32.mrf.mxu0
        %v959 = vadd.f32 0.0, %v958
        %960 = vmatprep.mubr.f32.mxu0 %v440
        %961 = vmatmul.mubr.f32.gmra.mxu0 %v439
        %v962 = vpop.f32.mrf.mxu0
        %v963 = vadd.f32 0.0, %v962
        %v964 = vpop.f32.mrf.mxu0
        %v965 = vadd.f32 0.0, %v964
        %966 = vmatprep.mubr.f32.mxu0 %v442
        %967 = vmatmul.mubr.f32.gmra.mxu0 %v441
        %v968 = vpop.f32.mrf.mxu0
        %v969 = vadd.f32 0.0, %v968
        %v970 = vpop.f32.mrf.mxu0
        %v971 = vadd.f32 0.0, %v970
        %972 = vmatprep.mubr.f32.mxu0 %v444
        %973 = vmatmul.mubr.f32.gmra.mxu0 %v443
        %v974 = vpop.f32.mrf.mxu0
        %v975 = vadd.f32 0.0, %v974
        %v976 = vpop.f32.mrf.mxu0
        %v977 = vadd.f32 0.0, %v976
        %978 = vmatprep.mubr.f32.mxu0 %v446
        %979 = vmatmul.mubr.f32.gmra.mxu0 %v445
        %v980 = vpop.f32.mrf.mxu0
        %v981 = vadd.f32 0.0, %v980
        %v982 = vpop.f32.mrf.mxu0
        %v983 = vadd.f32 0.0, %v982
        %984 = vmatprep.mubr.f32.mxu0 %v448
        %985 = vmatmul.mubr.f32.gmra.mxu0 %v447
        %v986 = vpop.f32.mrf.mxu0
        %v987 = vadd.f32 0.0, %v986
        %v988 = vpop.f32.mrf.mxu0
        %v989 = vadd.f32 0.0, %v988
        %990 = vmatprep.mubr.f32.mxu0 %v450
        %991 = vmatmul.mubr.f32.gmra.mxu0 %v449
        %v992 = vpop.f32.mrf.mxu0
        %v993 = vadd.f32 0.0, %v992
        %v994 = vpop.f32.mrf.mxu0
        %v995 = vadd.f32 0.0, %v994
        %996 = vmatprep.mubr.f32.mxu0 %v452
        %997 = vmatmul.mubr.f32.gmra.mxu0 %v451
        %v998 = vpop.f32.mrf.mxu0
        %v999 = vadd.f32 0.0, %v998
        %v1000 = vpop.f32.mrf.mxu0
        %v1001 = vadd.f32 0.0, %v1000
        %1002 = vmatprep.mubr.f32.mxu0 %v454
        %1003 = vmatmul.mubr.f32.gmra.mxu0 %v453
        %v1004 = vpop.f32.mrf.mxu0
        %v1005 = vadd.f32 0.0, %v1004
        %v1006 = vpop.f32.mrf.mxu0
        %v1007 = vadd.f32 0.0, %v1006
        %1008 = vmatprep.mubr.f32.mxu0 %v456
        %1009 = vmatmul.mubr.f32.gmra.mxu0 %v455
        %v1010 = vpop.f32.mrf.mxu0
        %v1011 = vadd.f32 0.0, %v1010
        %v1012 = vpop.f32.mrf.mxu0
        %v1013 = vadd.f32 0.0, %v1012
        %1014 = vmatprep.mubr.f32.mxu0 %v458
        %1015 = vmatmul.mubr.f32.gmra.mxu0 %v457
        %v1016 = vpop.f32.mrf.mxu0
        %v1017 = vadd.f32 0.0, %v1016
        %v1018 = vpop.f32.mrf.mxu0
        %v1019 = vadd.f32 0.0, %v1018
        %1020 = vmatprep.mubr.f32.mxu0 %v460
        %1021 = vmatmul.mubr.f32.gmra.mxu0 %v459
        %v1022 = vpop.f32.mrf.mxu0
        %v1023 = vadd.f32 0.0, %v1022
        %v1024 = vpop.f32.mrf.mxu0
        %v1025 = vadd.f32 0.0, %v1024
        %1026 = vmatprep.mubr.f32.mxu0 %v462
        %1027 = vmatmul.mubr.f32.gmra.mxu0 %v461
        %v1028 = vpop.f32.mrf.mxu0
        %v1029 = vadd.f32 0.0, %v1028
        %v1030 = vpop.f32.mrf.mxu0
        %v1031 = vadd.f32 0.0, %v1030
        %1032 = vmatprep.mubr.f32.mxu0 %v464
        %1033 = vmatmul.mubr.f32.gmra.mxu0 %v463
        %v1034 = vpop.f32.mrf.mxu0
        %v1035 = vadd.f32 0.0, %v1034
        %v1036 = vpop.f32.mrf.mxu0
        %v1037 = vadd.f32 0.0, %v1036
        %1038 = vmatprep.mubr.f32.mxu0 %v466
        %1039 = vmatmul.mubr.f32.gmra.mxu0 %v465
        %v1040 = vpop.f32.mrf.mxu0
        %v1041 = vadd.f32 0.0, %v1040
        %v1042 = vpop.f32.mrf.mxu0
        %v1043 = vadd.f32 0.0, %v1042
        %1044 = vmatprep.mubr.f32.mxu0 %v468
        %1045 = vmatmul.mubr.f32.gmra.mxu0 %v467
        %v1046 = vpop.f32.mrf.mxu0
        %v1047 = vadd.f32 0.0, %v1046
        %v1048 = vpop.f32.mrf.mxu0
        %v1049 = vadd.f32 0.0, %v1048
        %1050 = vmatprep.mubr.f32.mxu0 %v470
        %1051 = vmatmul.mubr.f32.gmra.mxu0 %v469
        %v1052 = vpop.f32.mrf.mxu0
        %v1053 = vadd.f32 0.0, %v1052
        %v1054 = vpop.f32.mrf.mxu0
        %v1055 = vadd.f32 0.0, %v1054
        %1056 = vmatprep.mubr.f32.mxu0 %v472
        %1057 = vmatmul.mubr.f32.gmra.mxu0 %v471
        %v1058 = vpop.f32.mrf.mxu0
        %v1059 = vadd.f32 0.0, %v1058
        %v1060 = vpop.f32.mrf.mxu0
        %v1061 = vadd.f32 0.0, %v1060
        %1062 = vmatprep.mubr.f32.mxu0 %v474
        %1063 = vmatmul.mubr.f32.gmra.mxu0 %v473
        %v1064 = vpop.f32.mrf.mxu0
        %v1065 = vadd.f32 0.0, %v1064
        %v1066 = vpop.f32.mrf.mxu0
        %v1067 = vadd.f32 0.0, %v1066
        %1068 = vmatprep.mubr.f32.mxu0 %v476
        %1069 = vmatmul.mubr.f32.gmra.mxu0 %v475
        %v1070 = vpop.f32.mrf.mxu0
        %v1071 = vadd.f32 0.0, %v1070
        %v1072 = vpop.f32.mrf.mxu0
        %v1073 = vadd.f32 0.0, %v1072
        %1074 = vmatprep.mubr.f32.mxu0 %v478
        %1075 = vmatmul.mubr.f32.gmra.mxu0 %v477
        %v1076 = vpop.f32.mrf.mxu0
        %v1077 = vadd.f32 0.0, %v1076
        %v1078 = vpop.f32.mrf.mxu0
        %v1079 = vadd.f32 0.0, %v1078
        %1080 = vmatprep.mubr.f32.mxu0 %v480
        %1081 = vmatmul.mubr.f32.gmra.mxu0 %v479
        %v1082 = vpop.f32.mrf.mxu0
        %v1083 = vadd.f32 0.0, %v1082
        %v1084 = vpop.f32.mrf.mxu0
        %v1085 = vadd.f32 0.0, %v1084
        %1086 = vmatprep.mubr.f32.mxu0 %v482
        %1087 = vmatmul.mubr.f32.gmra.mxu0 %v481
        %v1088 = vpop.f32.mrf.mxu0
        %v1089 = vadd.f32 0.0, %v1088
        %v1090 = vpop.f32.mrf.mxu0
        %v1091 = vadd.f32 0.0, %v1090
        %1092 = vmatprep.mubr.f32.mxu0 %v484
        %1093 = vmatmul.mubr.f32.gmra.mxu0 %v483
        %v1094 = vpop.f32.mrf.mxu0
        %v1095 = vadd.f32 0.0, %v1094
        %v1096 = vpop.f32.mrf.mxu0
        %v1097 = vadd.f32 0.0, %v1096
        %1098 = vmatprep.mubr.f32.mxu0 %v486
        %1099 = vmatmul.mubr.f32.gmra.mxu0 %v485
        %v1100 = vpop.f32.mrf.mxu0
        %v1101 = vadd.f32 0.0, %v1100
        %v1102 = vpop.f32.mrf.mxu0
        %v1103 = vadd.f32 0.0, %v1102
        %1104 = vmatprep.mubr.f32.mxu0 %v488
        %1105 = vmatmul.mubr.f32.gmra.mxu0 %v487
        %v1106 = vpop.f32.mrf.mxu0
        %v1107 = vadd.f32 0.0, %v1106
        %v1108 = vpop.f32.mrf.mxu0
        %v1109 = vadd.f32 0.0, %v1108
        %1110 = vmatprep.mubr.f32.mxu0 %v490
        %1111 = vmatmul.mubr.f32.gmra.mxu0 %v489
        %v1112 = vpop.f32.mrf.mxu0
        %v1113 = vadd.f32 0.0, %v1112
        %v1114 = vpop.f32.mrf.mxu0
        %v1115 = vadd.f32 0.0, %v1114
        %1116 = vmatprep.mubr.f32.mxu0 %v492
        %1117 = vmatmul.mubr.f32.gmra.mxu0 %v491
        %v1118 = vpop.f32.mrf.mxu0
        %v1119 = vadd.f32 0.0, %v1118
        %v1120 = vpop.f32.mrf.mxu0
        %v1121 = vadd.f32 0.0, %v1120
        %1122 = vmatprep.mubr.f32.mxu0 %v494
        %1123 = vmatmul.mubr.f32.gmra.mxu0 %v493
        %v1124 = vpop.f32.mrf.mxu0
        %v1125 = vadd.f32 0.0, %v1124
        %v1126 = vpop.f32.mrf.mxu0
        %v1127 = vadd.f32 0.0, %v1126
        %1128 = vmatprep.mubr.f32.mxu0 %v496
        %1129 = vmatmul.mubr.f32.gmra.mxu0 %v495
        %v1130 = vpop.f32.mrf.mxu0
        %v1131 = vadd.f32 0.0, %v1130
        %v1132 = vpop.f32.mrf.mxu0
        %v1133 = vadd.f32 0.0, %v1132
        %1134 = vmatprep.mubr.f32.mxu0 %v498
        %1135 = vmatmul.mubr.f32.gmra.mxu0 %v497
        %v1136 = vpop.f32.mrf.mxu0
        %v1137 = vadd.f32 0.0, %v1136
        %v1138 = vpop.f32.mrf.mxu0
        %v1139 = vadd.f32 0.0, %v1138
        %1140 = vdwg.mxu0
        %v1141 = vmax.f32 %v694, 0.0
        %v1142 = vmax.f32 %v696, 0.0
        %v1143 = vmax.f32 %v951, 0.0
        %v1144 = vmax.f32 %v953, 0.0
        %v1145 = vmax.f32 %v700, 0.0
        %v1146 = vmax.f32 %v702, 0.0
        %v1147 = vmax.f32 %v957, 0.0
        %v1148 = vmax.f32 %v959, 0.0
        %v1149 = vmax.f32 %v706, 0.0
        %v1150 = vmax.f32 %v708, 0.0
        %v1151 = vmax.f32 %v963, 0.0
        %v1152 = vmax.f32 %v965, 0.0
        %v1153 = vmax.f32 %v712, 0.0
        %v1154 = vmax.f32 %v714, 0.0
        %v1155 = vmax.f32 %v969, 0.0
        %v1156 = vmax.f32 %v971, 0.0
        %v1157 = vmax.f32 %v718, 0.0
        %v1158 = vmax.f32 %v720, 0.0
        %v1159 = vmax.f32 %v975, 0.0
        %v1160 = vmax.f32 %v977, 0.0
        %v1161 = vmax.f32 %v724, 0.0
        %v1162 = vmax.f32 %v726, 0.0
        %v1163 = vmax.f32 %v981, 0.0
        %v1164 = vmax.f32 %v983, 0.0
        %v1165 = vmax.f32 %v730, 0.0
        %v1166 = vmax.f32 %v732, 0.0
        %v1167 = vmax.f32 %v987, 0.0
        %v1168 = vmax.f32 %v989, 0.0
        %v1169 = vmax.f32 %v736, 0.0
        %v1170 = vmax.f32 %v738, 0.0
        %v1171 = vmax.f32 %v993, 0.0
        %v1172 = vmax.f32 %v995, 0.0
        %v1173 = vmax.f32 %v742, 0.0
        %v1174 = vmax.f32 %v744, 0.0
        %v1175 = vmax.f32 %v999, 0.0
        %v1176 = vmax.f32 %v1001, 0.0
        %v1177 = vmax.f32 %v748, 0.0
        %v1178 = vmax.f32 %v750, 0.0
        %v1179 = vmax.f32 %v1005, 0.0
        %v1180 = vmax.f32 %v1007, 0.0
        %v1181 = vmax.f32 %v754, 0.0
        %v1182 = vmax.f32 %v756, 0.0
        %v1183 = vmax.f32 %v1011, 0.0
        %v1184 = vmax.f32 %v1013, 0.0
        %v1185 = vmax.f32 %v760, 0.0
        %v1186 = vmax.f32 %v762, 0.0
        %v1187 = vmax.f32 %v1017, 0.0
        %v1188 = vmax.f32 %v1019, 0.0
        %v1189 = vmax.f32 %v766, 0.0
        %v1190 = vmax.f32 %v768, 0.0
        %v1191 = vmax.f32 %v1023, 0.0
        %v1192 = vmax.f32 %v1025, 0.0
        %v1193 = vmax.f32 %v772, 0.0
        %v1194 = vmax.f32 %v774, 0.0
        %v1195 = vmax.f32 %v1029, 0.0
        %v1196 = vmax.f32 %v1031, 0.0
        %v1197 = vmax.f32 %v778, 0.0
        %v1198 = vmax.f32 %v780, 0.0
        %v1199 = vmax.f32 %v1035, 0.0
        %v1200 = vmax.f32 %v1037, 0.0
        %v1201 = vmax.f32 %v784, 0.0
        %v1202 = vmax.f32 %v786, 0.0
        %v1203 = vmax.f32 %v1041, 0.0
        %v1204 = vmax.f32 %v1043, 0.0
        %v1205 = vmax.f32 %v790, 0.0
        %v1206 = vmax.f32 %v792, 0.0
        %v1207 = vmax.f32 %v1047, 0.0
        %v1208 = vmax.f32 %v1049, 0.0
        %v1209 = vmax.f32 %v796, 0.0
        %v1210 = vmax.f32 %v798, 0.0
        %v1211 = vmax.f32 %v1053, 0.0
        %v1212 = vmax.f32 %v1055, 0.0
        %v1213 = vmax.f32 %v802, 0.0
        %v1214 = vmax.f32 %v804, 0.0
        %v1215 = vmax.f32 %v1059, 0.0
        %v1216 = vmax.f32 %v1061, 0.0
        %v1217 = vmax.f32 %v808, 0.0
        %v1218 = vmax.f32 %v810, 0.0
        %v1219 = vmax.f32 %v1065, 0.0
        %v1220 = vmax.f32 %v1067, 0.0
        %v1221 = vmax.f32 %v814, 0.0
        %v1222 = vmax.f32 %v816, 0.0
        %v1223 = vmax.f32 %v1071, 0.0
        %v1224 = vmax.f32 %v1073, 0.0
        %v1225 = vmax.f32 %v820, 0.0
        %v1226 = vmax.f32 %v822, 0.0
        %v1227 = vmax.f32 %v1077, 0.0
        %v1228 = vmax.f32 %v1079, 0.0
        %v1229 = vmax.f32 %v826, 0.0
        %v1230 = vmax.f32 %v828, 0.0
        %v1231 = vmax.f32 %v1083, 0.0
        %v1232 = vmax.f32 %v1085, 0.0
        %v1233 = vmax.f32 %v832, 0.0
        %v1234 = vmax.f32 %v834, 0.0
        %v1235 = vmax.f32 %v1089, 0.0
        %v1236 = vmax.f32 %v1091, 0.0
        %v1237 = vmax.f32 %v838, 0.0
        %v1238 = vmax.f32 %v840, 0.0
        %v1239 = vmax.f32 %v1095, 0.0
        %v1240 = vmax.f32 %v1097, 0.0
        %v1241 = vmax.f32 %v844, 0.0
        %v1242 = vmax.f32 %v846, 0.0
        %v1243 = vmax.f32 %v1101, 0.0
        %v1244 = vmax.f32 %v1103, 0.0
        %v1245 = vmax.f32 %v850, 0.0
        %v1246 = vmax.f32 %v852, 0.0
        %v1247 = vmax.f32 %v1107, 0.0
        %v1248 = vmax.f32 %v1109, 0.0
        %v1249 = vmax.f32 %v856, 0.0
        %v1250 = vmax.f32 %v858, 0.0
        %v1251 = vmax.f32 %v1113, 0.0
        %v1252 = vmax.f32 %v1115, 0.0
        %v1253 = vmax.f32 %v862, 0.0
        %v1254 = vmax.f32 %v864, 0.0
        %v1255 = vmax.f32 %v1119, 0.0
        %v1256 = vmax.f32 %v1121, 0.0
        %v1257 = vmax.f32 %v868, 0.0
        %v1258 = vmax.f32 %v870, 0.0
        %v1259 = vmax.f32 %v1125, 0.0
        %v1260 = vmax.f32 %v1127, 0.0
        %v1261 = vmax.f32 %v874, 0.0
        %v1262 = vmax.f32 %v876, 0.0
        %v1263 = vmax.f32 %v1131, 0.0
        %v1264 = vmax.f32 %v1133, 0.0
        %v1265 = vmax.f32 %v880, 0.0
        %v1266 = vmax.f32 %v882, 0.0
        %v1267 = vmax.f32 %v1137, 0.0
        %v1268 = vmax.f32 %v1139, 0.0
        %vm1269 = vcmp.lt.f32.partialorder %v1141, inf
        %vm1270 = vcmp.lt.f32.partialorder %v1142, inf
        %vm1271 = vcmp.lt.f32.partialorder %v1143, inf
        %vm1272 = vcmp.lt.f32.partialorder %v1144, inf
        %vm1273 = vcmp.lt.f32.partialorder %v1145, inf
        %vm1274 = vcmp.lt.f32.partialorder %v1146, inf
        %vm1275 = vcmp.lt.f32.partialorder %v1147, inf
        %vm1276 = vcmp.lt.f32.partialorder %v1148, inf
        %vm1277 = vcmp.lt.f32.partialorder %v1149, inf
        %vm1278 = vcmp.lt.f32.partialorder %v1150, inf
        %vm1279 = vcmp.lt.f32.partialorder %v1151, inf
        %vm1280 = vcmp.lt.f32.partialorder %v1152, inf
        %vm1281 = vcmp.lt.f32.partialorder %v1153, inf
        %vm1282 = vcmp.lt.f32.partialorder %v1154, inf
        %vm1283 = vcmp.lt.f32.partialorder %v1155, inf
        %vm1284 = vcmp.lt.f32.partialorder %v1156, inf
        %vm1285 = vcmp.lt.f32.partialorder %v1157, inf
        %vm1286 = vcmp.lt.f32.partialorder %v1158, inf
        %vm1287 = vcmp.lt.f32.partialorder %v1159, inf
        %vm1288 = vcmp.lt.f32.partialorder %v1160, inf
        %vm1289 = vcmp.lt.f32.partialorder %v1161, inf
        %vm1290 = vcmp.lt.f32.partialorder %v1162, inf
        %vm1291 = vcmp.lt.f32.partialorder %v1163, inf
        %vm1292 = vcmp.lt.f32.partialorder %v1164, inf
        %vm1293 = vcmp.lt.f32.partialorder %v1165, inf
        %vm1294 = vcmp.lt.f32.partialorder %v1166, inf
        %vm1295 = vcmp.lt.f32.partialorder %v1167, inf
        %vm1296 = vcmp.lt.f32.partialorder %v1168, inf
        %vm1297 = vcmp.lt.f32.partialorder %v1169, inf
        %vm1298 = vcmp.lt.f32.partialorder %v1170, inf
        %vm1299 = vcmp.lt.f32.partialorder %v1171, inf
        %vm1300 = vcmp.lt.f32.partialorder %v1172, inf
        %vm1301 = vcmp.lt.f32.partialorder %v1173, inf
        %vm1302 = vcmp.lt.f32.partialorder %v1174, inf
        %vm1303 = vcmp.lt.f32.partialorder %v1175, inf
        %vm1304 = vcmp.lt.f32.partialorder %v1176, inf
        %vm1305 = vcmp.lt.f32.partialorder %v1177, inf
        %vm1306 = vcmp.lt.f32.partialorder %v1178, inf
        %vm1307 = vcmp.lt.f32.partialorder %v1179, inf
        %vm1308 = vcmp.lt.f32.partialorder %v1180, inf
        %vm1309 = vcmp.lt.f32.partialorder %v1181, inf
        %vm1310 = vcmp.lt.f32.partialorder %v1182, inf
        %vm1311 = vcmp.lt.f32.partialorder %v1183, inf
        %vm1312 = vcmp.lt.f32.partialorder %v1184, inf
        %vm1313 = vcmp.lt.f32.partialorder %v1185, inf
        %vm1314 = vcmp.lt.f32.partialorder %v1186, inf
        %vm1315 = vcmp.lt.f32.partialorder %v1187, inf
        %vm1316 = vcmp.lt.f32.partialorder %v1188, inf
        %vm1317 = vcmp.lt.f32.partialorder %v1189, inf
        %vm1318 = vcmp.lt.f32.partialorder %v1190, inf
        %vm1319 = vcmp.lt.f32.partialorder %v1191, inf
        %vm1320 = vcmp.lt.f32.partialorder %v1192, inf
        %vm1321 = vcmp.lt.f32.partialorder %v1193, inf
        %vm1322 = vcmp.lt.f32.partialorder %v1194, inf
        %vm1323 = vcmp.lt.f32.partialorder %v1195, inf
        %vm1324 = vcmp.lt.f32.partialorder %v1196, inf
        %vm1325 = vcmp.lt.f32.partialorder %v1197, inf
        %vm1326 = vcmp.lt.f32.partialorder %v1198, inf
        %vm1327 = vcmp.lt.f32.partialorder %v1199, inf
        %vm1328 = vcmp.lt.f32.partialorder %v1200, inf
        %vm1329 = vcmp.lt.f32.partialorder %v1201, inf
        %vm1330 = vcmp.lt.f32.partialorder %v1202, inf
        %vm1331 = vcmp.lt.f32.partialorder %v1203, inf
        %vm1332 = vcmp.lt.f32.partialorder %v1204, inf
        %vm1333 = vcmp.lt.f32.partialorder %v1205, inf
        %vm1334 = vcmp.lt.f32.partialorder %v1206, inf
        %vm1335 = vcmp.lt.f32.partialorder %v1207, inf
        %vm1336 = vcmp.lt.f32.partialorder %v1208, inf
        %vm1337 = vcmp.lt.f32.partialorder %v1209, inf
        %vm1338 = vcmp.lt.f32.partialorder %v1210, inf
        %vm1339 = vcmp.lt.f32.partialorder %v1211, inf
        %vm1340 = vcmp.lt.f32.partialorder %v1212, inf
        %vm1341 = vcmp.lt.f32.partialorder %v1213, inf
        %vm1342 = vcmp.lt.f32.partialorder %v1214, inf
        %vm1343 = vcmp.lt.f32.partialorder %v1215, inf
        %vm1344 = vcmp.lt.f32.partialorder %v1216, inf
        %vm1345 = vcmp.lt.f32.partialorder %v1217, inf
        %vm1346 = vcmp.lt.f32.partialorder %v1218, inf
        %vm1347 = vcmp.lt.f32.partialorder %v1219, inf
        %vm1348 = vcmp.lt.f32.partialorder %v1220, inf
        %vm1349 = vcmp.lt.f32.partialorder %v1221, inf
        %vm1350 = vcmp.lt.f32.partialorder %v1222, inf
        %vm1351 = vcmp.lt.f32.partialorder %v1223, inf
        %vm1352 = vcmp.lt.f32.partialorder %v1224, inf
        %vm1353 = vcmp.lt.f32.partialorder %v1225, inf
        %vm1354 = vcmp.lt.f32.partialorder %v1226, inf
        %vm1355 = vcmp.lt.f32.partialorder %v1227, inf
        %vm1356 = vcmp.lt.f32.partialorder %v1228, inf
        %vm1357 = vcmp.lt.f32.partialorder %v1229, inf
        %vm1358 = vcmp.lt.f32.partialorder %v1230, inf
        %vm1359 = vcmp.lt.f32.partialorder %v1231, inf
        %vm1360 = vcmp.lt.f32.partialorder %v1232, inf
        %vm1361 = vcmp.lt.f32.partialorder %v1233, inf
        %vm1362 = vcmp.lt.f32.partialorder %v1234, inf
        %vm1363 = vcmp.lt.f32.partialorder %v1235, inf
        %vm1364 = vcmp.lt.f32.partialorder %v1236, inf
        %vm1365 = vcmp.lt.f32.partialorder %v1237, inf
        %vm1366 = vcmp.lt.f32.partialorder %v1238, inf
        %vm1367 = vcmp.lt.f32.partialorder %v1239, inf
        %vm1368 = vcmp.lt.f32.partialorder %v1240, inf
        %vm1369 = vcmp.lt.f32.partialorder %v1241, inf
        %vm1370 = vcmp.lt.f32.partialorder %v1242, inf
        %vm1371 = vcmp.lt.f32.partialorder %v1243, inf
        %vm1372 = vcmp.lt.f32.partialorder %v1244, inf
        %vm1373 = vcmp.lt.f32.partialorder %v1245, inf
        %vm1374 = vcmp.lt.f32.partialorder %v1246, inf
        %vm1375 = vcmp.lt.f32.partialorder %v1247, inf
        %vm1376 = vcmp.lt.f32.partialorder %v1248, inf
        %vm1377 = vcmp.lt.f32.partialorder %v1249, inf
        %vm1378 = vcmp.lt.f32.partialorder %v1250, inf
        %vm1379 = vcmp.lt.f32.partialorder %v1251, inf
        %vm1380 = vcmp.lt.f32.partialorder %v1252, inf
        %vm1381 = vcmp.lt.f32.partialorder %v1253, inf
        %vm1382 = vcmp.lt.f32.partialorder %v1254, inf
        %vm1383 = vcmp.lt.f32.partialorder %v1255, inf
        %vm1384 = vcmp.lt.f32.partialorder %v1256, inf
        %vm1385 = vcmp.lt.f32.partialorder %v1257, inf
        %vm1386 = vcmp.lt.f32.partialorder %v1258, inf
        %vm1387 = vcmp.lt.f32.partialorder %v1259, inf
        %vm1388 = vcmp.lt.f32.partialorder %v1260, inf
        %vm1389 = vcmp.lt.f32.partialorder %v1261, inf
        %vm1390 = vcmp.lt.f32.partialorder %v1262, inf
        %vm1391 = vcmp.lt.f32.partialorder %v1263, inf
        %vm1392 = vcmp.lt.f32.partialorder %v1264, inf
        %vm1393 = vcmp.lt.f32.partialorder %v1265, inf
        %vm1394 = vcmp.lt.f32.partialorder %v1266, inf
        %vm1395 = vcmp.lt.f32.partialorder %v1267, inf
        %vm1396 = vcmp.lt.f32.partialorder %v1268, inf
        %v1397 = vsel %vm1269, %v1141, -inf
        %v1398 = vsel %vm1270, %v1142, -inf
        %v1399 = vsel %vm1271, %v1143, -inf
        %v1400 = vsel %vm1272, %v1144, -inf
        %v1401 = vsel %vm1273, %v1145, -inf
        %v1402 = vsel %vm1274, %v1146, -inf
        %v1403 = vsel %vm1275, %v1147, -inf
        %v1404 = vsel %vm1276, %v1148, -inf
        %v1405 = vsel %vm1277, %v1149, -inf
        %v1406 = vsel %vm1278, %v1150, -inf
        %v1407 = vsel %vm1279, %v1151, -inf
        %v1408 = vsel %vm1280, %v1152, -inf
        %v1409 = vsel %vm1281, %v1153, -inf
        %v1410 = vsel %vm1282, %v1154, -inf
        %v1411 = vsel %vm1283, %v1155, -inf
        %v1412 = vsel %vm1284, %v1156, -inf
        %v1413 = vsel %vm1285, %v1157, -inf
        %v1414 = vsel %vm1286, %v1158, -inf
        %v1415 = vsel %vm1287, %v1159, -inf
        %v1416 = vsel %vm1288, %v1160, -inf
        %v1417 = vsel %vm1289, %v1161, -inf
        %v1418 = vsel %vm1290, %v1162, -inf
        %v1419 = vsel %vm1291, %v1163, -inf
        %v1420 = vsel %vm1292, %v1164, -inf
        %v1421 = vsel %vm1293, %v1165, -inf
        %v1422 = vsel %vm1294, %v1166, -inf
        %v1423 = vsel %vm1295, %v1167, -inf
        %v1424 = vsel %vm1296, %v1168, -inf
        %v1425 = vsel %vm1297, %v1169, -inf
        %v1426 = vsel %vm1298, %v1170, -inf
        %v1427 = vsel %vm1299, %v1171, -inf
        %v1428 = vsel %vm1300, %v1172, -inf
        %v1429 = vsel %vm1301, %v1173, -inf
        %v1430 = vsel %vm1302, %v1174, -inf
        %v1431 = vsel %vm1303, %v1175, -inf
        %v1432 = vsel %vm1304, %v1176, -inf
        %v1433 = vsel %vm1305, %v1177, -inf
        %v1434 = vsel %vm1306, %v1178, -inf
        %v1435 = vsel %vm1307, %v1179, -inf
        %v1436 = vsel %vm1308, %v1180, -inf
        %v1437 = vsel %vm1309, %v1181, -inf
        %v1438 = vsel %vm1310, %v1182, -inf
        %v1439 = vsel %vm1311, %v1183, -inf
        %v1440 = vsel %vm1312, %v1184, -inf
        %v1441 = vsel %vm1313, %v1185, -inf
        %v1442 = vsel %vm1314, %v1186, -inf
        %v1443 = vsel %vm1315, %v1187, -inf
        %v1444 = vsel %vm1316, %v1188, -inf
        %v1445 = vsel %vm1317, %v1189, -inf
        %v1446 = vsel %vm1318, %v1190, -inf
        %v1447 = vsel %vm1319, %v1191, -inf
        %v1448 = vsel %vm1320, %v1192, -inf
        %v1449 = vsel %vm1321, %v1193, -inf
        %v1450 = vsel %vm1322, %v1194, -inf
        %v1451 = vsel %vm1323, %v1195, -inf
        %v1452 = vsel %vm1324, %v1196, -inf
        %v1453 = vsel %vm1325, %v1197, -inf
        %v1454 = vsel %vm1326, %v1198, -inf
        %v1455 = vsel %vm1327, %v1199, -inf
        %v1456 = vsel %vm1328, %v1200, -inf
        %v1457 = vsel %vm1329, %v1201, -inf
        %v1458 = vsel %vm1330, %v1202, -inf
        %v1459 = vsel %vm1331, %v1203, -inf
        %v1460 = vsel %vm1332, %v1204, -inf
        %v1461 = vsel %vm1333, %v1205, -inf
        %v1462 = vsel %vm1334, %v1206, -inf
        %v1463 = vsel %vm1335, %v1207, -inf
        %v1464 = vsel %vm1336, %v1208, -inf
        %v1465 = vsel %vm1337, %v1209, -inf
        %v1466 = vsel %vm1338, %v1210, -inf
        %v1467 = vsel %vm1339, %v1211, -inf
        %v1468 = vsel %vm1340, %v1212, -inf
        %v1469 = vsel %vm1341, %v1213, -inf
        %v1470 = vsel %vm1342, %v1214, -inf
        %v1471 = vsel %vm1343, %v1215, -inf
        %v1472 = vsel %vm1344, %v1216, -inf
        %v1473 = vsel %vm1345, %v1217, -inf
        %v1474 = vsel %vm1346, %v1218, -inf
        %v1475 = vsel %vm1347, %v1219, -inf
        %v1476 = vsel %vm1348, %v1220, -inf
        %v1477 = vsel %vm1349, %v1221, -inf
        %v1478 = vsel %vm1350, %v1222, -inf
        %v1479 = vsel %vm1351, %v1223, -inf
        %v1480 = vsel %vm1352, %v1224, -inf
        %v1481 = vsel %vm1353, %v1225, -inf
        %v1482 = vsel %vm1354, %v1226, -inf
        %v1483 = vsel %vm1355, %v1227, -inf
        %v1484 = vsel %vm1356, %v1228, -inf
        %v1485 = vsel %vm1357, %v1229, -inf
        %v1486 = vsel %vm1358, %v1230, -inf
        %v1487 = vsel %vm1359, %v1231, -inf
        %v1488 = vsel %vm1360, %v1232, -inf
        %v1489 = vsel %vm1361, %v1233, -inf
        %v1490 = vsel %vm1362, %v1234, -inf
        %v1491 = vsel %vm1363, %v1235, -inf
        %v1492 = vsel %vm1364, %v1236, -inf
        %v1493 = vsel %vm1365, %v1237, -inf
        %v1494 = vsel %vm1366, %v1238, -inf
        %v1495 = vsel %vm1367, %v1239, -inf
        %v1496 = vsel %vm1368, %v1240, -inf
        %v1497 = vsel %vm1369, %v1241, -inf
        %v1498 = vsel %vm1370, %v1242, -inf
        %v1499 = vsel %vm1371, %v1243, -inf
        %v1500 = vsel %vm1372, %v1244, -inf
        %v1501 = vsel %vm1373, %v1245, -inf
        %v1502 = vsel %vm1374, %v1246, -inf
        %v1503 = vsel %vm1375, %v1247, -inf
        %v1504 = vsel %vm1376, %v1248, -inf
        %v1505 = vsel %vm1377, %v1249, -inf
        %v1506 = vsel %vm1378, %v1250, -inf
        %v1507 = vsel %vm1379, %v1251, -inf
        %v1508 = vsel %vm1380, %v1252, -inf
        %v1509 = vsel %vm1381, %v1253, -inf
        %v1510 = vsel %vm1382, %v1254, -inf
        %v1511 = vsel %vm1383, %v1255, -inf
        %v1512 = vsel %vm1384, %v1256, -inf
        %v1513 = vsel %vm1385, %v1257, -inf
        %v1514 = vsel %vm1386, %v1258, -inf
        %v1515 = vsel %vm1387, %v1259, -inf
        %v1516 = vsel %vm1388, %v1260, -inf
        %v1517 = vsel %vm1389, %v1261, -inf
        %v1518 = vsel %vm1390, %v1262, -inf
        %v1519 = vsel %vm1391, %v1263, -inf
        %v1520 = vsel %vm1392, %v1264, -inf
        %v1521 = vsel %vm1393, %v1265, -inf
        %v1522 = vsel %vm1394, %v1266, -inf
        %v1523 = vsel %vm1395, %v1267, -inf
        %v1524 = vsel %vm1396, %v1268, -inf
        %v1525 = vmax.f32 %v1397, %v1398
        %v1526 = vmax.f32 %v1525, %v1399
        %v1527 = vmax.f32 %v1526, %v1400
        %1528 = vmax.xlane.f32.xlu0 %v1527
        %v1529 = vpop.xlane.xlu0 %1528
        %v1530 = vmax.f32 %v1401, %v1402
        %v1531 = vmax.f32 %v1530, %v1403
        %v1532 = vmax.f32 %v1531, %v1404
        %1533 = vmax.xlane.f32.xlu0 %v1532
        %v1534 = vpop.xlane.xlu0 %1533
        %v1535 = vmax.f32 %v1405, %v1406
        %v1536 = vmax.f32 %v1535, %v1407
        %v1537 = vmax.f32 %v1536, %v1408
        %1538 = vmax.xlane.f32.xlu0 %v1537
        %v1539 = vpop.xlane.xlu0 %1538
        %v1540 = vmax.f32 %v1409, %v1410
        %v1541 = vmax.f32 %v1540, %v1411
        %v1542 = vmax.f32 %v1541, %v1412
        %1543 = vmax.xlane.f32.xlu0 %v1542
        %v1544 = vpop.xlane.xlu0 %1543
        %v1545 = vmax.f32 %v1413, %v1414
        %v1546 = vmax.f32 %v1545, %v1415
        %v1547 = vmax.f32 %v1546, %v1416
        %1548 = vmax.xlane.f32.xlu0 %v1547
        %v1549 = vpop.xlane.xlu0 %1548
        %v1550 = vmax.f32 %v1417, %v1418
        %v1551 = vmax.f32 %v1550, %v1419
        %v1552 = vmax.f32 %v1551, %v1420
        %1553 = vmax.xlane.f32.xlu0 %v1552
        %v1554 = vpop.xlane.xlu0 %1553
        %v1555 = vmax.f32 %v1421, %v1422
        %v1556 = vmax.f32 %v1555, %v1423
        %v1557 = vmax.f32 %v1556, %v1424
        %1558 = vmax.xlane.f32.xlu0 %v1557
        %v1559 = vpop.xlane.xlu0 %1558
        %v1560 = vmax.f32 %v1425, %v1426
        %v1561 = vmax.f32 %v1560, %v1427
        %v1562 = vmax.f32 %v1561, %v1428
        %1563 = vmax.xlane.f32.xlu0 %v1562
        %v1564 = vpop.xlane.xlu0 %1563
        %v1565 = vmax.f32 %v1429, %v1430
        %v1566 = vmax.f32 %v1565, %v1431
        %v1567 = vmax.f32 %v1566, %v1432
        %1568 = vmax.xlane.f32.xlu0 %v1567
        %v1569 = vpop.xlane.xlu0 %1568
        %v1570 = vmax.f32 %v1433, %v1434
        %v1571 = vmax.f32 %v1570, %v1435
        %v1572 = vmax.f32 %v1571, %v1436
        %1573 = vmax.xlane.f32.xlu0 %v1572
        %v1574 = vpop.xlane.xlu0 %1573
        %v1575 = vmax.f32 %v1437, %v1438
        %v1576 = vmax.f32 %v1575, %v1439
        %v1577 = vmax.f32 %v1576, %v1440
        %1578 = vmax.xlane.f32.xlu0 %v1577
        %v1579 = vpop.xlane.xlu0 %1578
        %v1580 = vmax.f32 %v1441, %v1442
        %v1581 = vmax.f32 %v1580, %v1443
        %v1582 = vmax.f32 %v1581, %v1444
        %1583 = vmax.xlane.f32.xlu0 %v1582
        %v1584 = vpop.xlane.xlu0 %1583
        %v1585 = vmax.f32 %v1445, %v1446
        %v1586 = vmax.f32 %v1585, %v1447
        %v1587 = vmax.f32 %v1586, %v1448
        %1588 = vmax.xlane.f32.xlu0 %v1587
        %v1589 = vpop.xlane.xlu0 %1588
        %v1590 = vmax.f32 %v1449, %v1450
        %v1591 = vmax.f32 %v1590, %v1451
        %v1592 = vmax.f32 %v1591, %v1452
        %1593 = vmax.xlane.f32.xlu0 %v1592
        %v1594 = vpop.xlane.xlu0 %1593
        %v1595 = vmax.f32 %v1453, %v1454
        %v1596 = vmax.f32 %v1595, %v1455
        %v1597 = vmax.f32 %v1596, %v1456
        %1598 = vmax.xlane.f32.xlu0 %v1597
        %v1599 = vpop.xlane.xlu0 %1598
        %v1600 = vmax.f32 %v1457, %v1458
        %v1601 = vmax.f32 %v1600, %v1459
        %v1602 = vmax.f32 %v1601, %v1460
        %1603 = vmax.xlane.f32.xlu0 %v1602
        %v1604 = vpop.xlane.xlu0 %1603
        %v1605 = vmax.f32 %v1461, %v1462
        %v1606 = vmax.f32 %v1605, %v1463
        %v1607 = vmax.f32 %v1606, %v1464
        %1608 = vmax.xlane.f32.xlu0 %v1607
        %v1609 = vpop.xlane.xlu0 %1608
        %v1610 = vmax.f32 %v1465, %v1466
        %v1611 = vmax.f32 %v1610, %v1467
        %v1612 = vmax.f32 %v1611, %v1468
        %1613 = vmax.xlane.f32.xlu0 %v1612
        %v1614 = vpop.xlane.xlu0 %1613
        %v1615 = vmax.f32 %v1469, %v1470
        %v1616 = vmax.f32 %v1615, %v1471
        %v1617 = vmax.f32 %v1616, %v1472
        %1618 = vmax.xlane.f32.xlu0 %v1617
        %v1619 = vpop.xlane.xlu0 %1618
        %v1620 = vmax.f32 %v1473, %v1474
        %v1621 = vmax.f32 %v1620, %v1475
        %v1622 = vmax.f32 %v1621, %v1476
        %1623 = vmax.xlane.f32.xlu0 %v1622
        %v1624 = vpop.xlane.xlu0 %1623
        %v1625 = vmax.f32 %v1477, %v1478
        %v1626 = vmax.f32 %v1625, %v1479
        %v1627 = vmax.f32 %v1626, %v1480
        %1628 = vmax.xlane.f32.xlu0 %v1627
        %v1629 = vpop.xlane.xlu0 %1628
        %v1630 = vmax.f32 %v1481, %v1482
        %v1631 = vmax.f32 %v1630, %v1483
        %v1632 = vmax.f32 %v1631, %v1484
        %1633 = vmax.xlane.f32.xlu0 %v1632
        %v1634 = vpop.xlane.xlu0 %1633
        %v1635 = vmax.f32 %v1485, %v1486
        %v1636 = vmax.f32 %v1635, %v1487
        %v1637 = vmax.f32 %v1636, %v1488
        %1638 = vmax.xlane.f32.xlu0 %v1637
        %v1639 = vpop.xlane.xlu0 %1638
        %v1640 = vmax.f32 %v1489, %v1490
        %v1641 = vmax.f32 %v1640, %v1491
        %v1642 = vmax.f32 %v1641, %v1492
        %1643 = vmax.xlane.f32.xlu0 %v1642
        %v1644 = vpop.xlane.xlu0 %1643
        %v1645 = vmax.f32 %v1493, %v1494
        %v1646 = vmax.f32 %v1645, %v1495
        %v1647 = vmax.f32 %v1646, %v1496
        %1648 = vmax.xlane.f32.xlu0 %v1647
        %v1649 = vpop.xlane.xlu0 %1648
        %v1650 = vmax.f32 %v1497, %v1498
        %v1651 = vmax.f32 %v1650, %v1499
        %v1652 = vmax.f32 %v1651, %v1500
        %1653 = vmax.xlane.f32.xlu0 %v1652
        %v1654 = vpop.xlane.xlu0 %1653
        %v1655 = vmax.f32 %v1501, %v1502
        %v1656 = vmax.f32 %v1655, %v1503
        %v1657 = vmax.f32 %v1656, %v1504
        %1658 = vmax.xlane.f32.xlu0 %v1657
        %v1659 = vpop.xlane.xlu0 %1658
        %v1660 = vmax.f32 %v1505, %v1506
        %v1661 = vmax.f32 %v1660, %v1507
        %v1662 = vmax.f32 %v1661, %v1508
        %1663 = vmax.xlane.f32.xlu0 %v1662
        %v1664 = vpop.xlane.xlu0 %1663
        %v1665 = vmax.f32 %v1509, %v1510
        %v1666 = vmax.f32 %v1665, %v1511
        %v1667 = vmax.f32 %v1666, %v1512
        %1668 = vmax.xlane.f32.xlu0 %v1667
        %v1669 = vpop.xlane.xlu0 %1668
        %v1670 = vmax.f32 %v1513, %v1514
        %v1671 = vmax.f32 %v1670, %v1515
        %v1672 = vmax.f32 %v1671, %v1516
        %1673 = vmax.xlane.f32.xlu0 %v1672
        %v1674 = vpop.xlane.xlu0 %1673
        %v1675 = vmax.f32 %v1517, %v1518
        %v1676 = vmax.f32 %v1675, %v1519
        %v1677 = vmax.f32 %v1676, %v1520
        %1678 = vmax.xlane.f32.xlu0 %v1677
        %v1679 = vpop.xlane.xlu0 %1678
        %v1680 = vmax.f32 %v1521, %v1522
        %v1681 = vmax.f32 %v1680, %v1523
        %v1682 = vmax.f32 %v1681, %v1524
        %1683 = vmax.xlane.f32.xlu0 %v1682
        %v1684 = vpop.xlane.xlu0 %1683
        %vm1685 = vcmp.lt.f32.partialorder %v1141, %v1529
        %vm1686 = vcmp.lt.f32.partialorder %v1142, %v1529
        %vm1687 = vcmp.lt.f32.partialorder %v1143, %v1529
        %vm1688 = vcmp.lt.f32.partialorder %v1144, %v1529
        %vm1689 = vcmp.lt.f32.partialorder %v1145, %v1534
        %vm1690 = vcmp.lt.f32.partialorder %v1146, %v1534
        %vm1691 = vcmp.lt.f32.partialorder %v1147, %v1534
        %vm1692 = vcmp.lt.f32.partialorder %v1148, %v1534
        %vm1693 = vcmp.lt.f32.partialorder %v1149, %v1539
        %vm1694 = vcmp.lt.f32.partialorder %v1150, %v1539
        %vm1695 = vcmp.lt.f32.partialorder %v1151, %v1539
        %vm1696 = vcmp.lt.f32.partialorder %v1152, %v1539
        %vm1697 = vcmp.lt.f32.partialorder %v1153, %v1544
        %vm1698 = vcmp.lt.f32.partialorder %v1154, %v1544
        %vm1699 = vcmp.lt.f32.partialorder %v1155, %v1544
        %vm1700 = vcmp.lt.f32.partialorder %v1156, %v1544
        %vm1701 = vcmp.lt.f32.partialorder %v1157, %v1549
        %vm1702 = vcmp.lt.f32.partialorder %v1158, %v1549
        %vm1703 = vcmp.lt.f32.partialorder %v1159, %v1549
        %vm1704 = vcmp.lt.f32.partialorder %v1160, %v1549
        %vm1705 = vcmp.lt.f32.partialorder %v1161, %v1554
        %vm1706 = vcmp.lt.f32.partialorder %v1162, %v1554
        %vm1707 = vcmp.lt.f32.partialorder %v1163, %v1554
        %vm1708 = vcmp.lt.f32.partialorder %v1164, %v1554
        %vm1709 = vcmp.lt.f32.partialorder %v1165, %v1559
        %vm1710 = vcmp.lt.f32.partialorder %v1166, %v1559
        %vm1711 = vcmp.lt.f32.partialorder %v1167, %v1559
        %vm1712 = vcmp.lt.f32.partialorder %v1168, %v1559
        %vm1713 = vcmp.lt.f32.partialorder %v1169, %v1564
        %vm1714 = vcmp.lt.f32.partialorder %v1170, %v1564
        %vm1715 = vcmp.lt.f32.partialorder %v1171, %v1564
        %vm1716 = vcmp.lt.f32.partialorder %v1172, %v1564
        %vm1717 = vcmp.lt.f32.partialorder %v1173, %v1569
        %vm1718 = vcmp.lt.f32.partialorder %v1174, %v1569
        %vm1719 = vcmp.lt.f32.partialorder %v1175, %v1569
        %vm1720 = vcmp.lt.f32.partialorder %v1176, %v1569
        %vm1721 = vcmp.lt.f32.partialorder %v1177, %v1574
        %vm1722 = vcmp.lt.f32.partialorder %v1178, %v1574
        %vm1723 = vcmp.lt.f32.partialorder %v1179, %v1574
        %vm1724 = vcmp.lt.f32.partialorder %v1180, %v1574
        %vm1725 = vcmp.lt.f32.partialorder %v1181, %v1579
        %vm1726 = vcmp.lt.f32.partialorder %v1182, %v1579
        %vm1727 = vcmp.lt.f32.partialorder %v1183, %v1579
        %vm1728 = vcmp.lt.f32.partialorder %v1184, %v1579
        %vm1729 = vcmp.lt.f32.partialorder %v1185, %v1584
        %vm1730 = vcmp.lt.f32.partialorder %v1186, %v1584
        %vm1731 = vcmp.lt.f32.partialorder %v1187, %v1584
        %vm1732 = vcmp.lt.f32.partialorder %v1188, %v1584
        %vm1733 = vcmp.lt.f32.partialorder %v1189, %v1589
        %vm1734 = vcmp.lt.f32.partialorder %v1190, %v1589
        %vm1735 = vcmp.lt.f32.partialorder %v1191, %v1589
        %vm1736 = vcmp.lt.f32.partialorder %v1192, %v1589
        %vm1737 = vcmp.lt.f32.partialorder %v1193, %v1594
        %vm1738 = vcmp.lt.f32.partialorder %v1194, %v1594
        %vm1739 = vcmp.lt.f32.partialorder %v1195, %v1594
        %vm1740 = vcmp.lt.f32.partialorder %v1196, %v1594
        %vm1741 = vcmp.lt.f32.partialorder %v1197, %v1599
        %vm1742 = vcmp.lt.f32.partialorder %v1198, %v1599
        %vm1743 = vcmp.lt.f32.partialorder %v1199, %v1599
        %vm1744 = vcmp.lt.f32.partialorder %v1200, %v1599
        %vm1745 = vcmp.lt.f32.partialorder %v1201, %v1604
        %vm1746 = vcmp.lt.f32.partialorder %v1202, %v1604
        %vm1747 = vcmp.lt.f32.partialorder %v1203, %v1604
        %vm1748 = vcmp.lt.f32.partialorder %v1204, %v1604
        %vm1749 = vcmp.lt.f32.partialorder %v1205, %v1609
        %vm1750 = vcmp.lt.f32.partialorder %v1206, %v1609
        %vm1751 = vcmp.lt.f32.partialorder %v1207, %v1609
        %vm1752 = vcmp.lt.f32.partialorder %v1208, %v1609
        %vm1753 = vcmp.lt.f32.partialorder %v1209, %v1614
        %vm1754 = vcmp.lt.f32.partialorder %v1210, %v1614
        %vm1755 = vcmp.lt.f32.partialorder %v1211, %v1614
        %vm1756 = vcmp.lt.f32.partialorder %v1212, %v1614
        %vm1757 = vcmp.lt.f32.partialorder %v1213, %v1619
        %vm1758 = vcmp.lt.f32.partialorder %v1214, %v1619
        %vm1759 = vcmp.lt.f32.partialorder %v1215, %v1619
        %vm1760 = vcmp.lt.f32.partialorder %v1216, %v1619
        %vm1761 = vcmp.lt.f32.partialorder %v1217, %v1624
        %vm1762 = vcmp.lt.f32.partialorder %v1218, %v1624
        %vm1763 = vcmp.lt.f32.partialorder %v1219, %v1624
        %vm1764 = vcmp.lt.f32.partialorder %v1220, %v1624
        %vm1765 = vcmp.lt.f32.partialorder %v1221, %v1629
        %vm1766 = vcmp.lt.f32.partialorder %v1222, %v1629
        %vm1767 = vcmp.lt.f32.partialorder %v1223, %v1629
        %vm1768 = vcmp.lt.f32.partialorder %v1224, %v1629
        %vm1769 = vcmp.lt.f32.partialorder %v1225, %v1634
        %vm1770 = vcmp.lt.f32.partialorder %v1226, %v1634
        %vm1771 = vcmp.lt.f32.partialorder %v1227, %v1634
        %vm1772 = vcmp.lt.f32.partialorder %v1228, %v1634
        %vm1773 = vcmp.lt.f32.partialorder %v1229, %v1639
        %vm1774 = vcmp.lt.f32.partialorder %v1230, %v1639
        %vm1775 = vcmp.lt.f32.partialorder %v1231, %v1639
        %vm1776 = vcmp.lt.f32.partialorder %v1232, %v1639
        %vm1777 = vcmp.lt.f32.partialorder %v1233, %v1644
        %vm1778 = vcmp.lt.f32.partialorder %v1234, %v1644
        %vm1779 = vcmp.lt.f32.partialorder %v1235, %v1644
        %vm1780 = vcmp.lt.f32.partialorder %v1236, %v1644
        %vm1781 = vcmp.lt.f32.partialorder %v1237, %v1649
        %vm1782 = vcmp.lt.f32.partialorder %v1238, %v1649
        %vm1783 = vcmp.lt.f32.partialorder %v1239, %v1649
        %vm1784 = vcmp.lt.f32.partialorder %v1240, %v1649
        %vm1785 = vcmp.lt.f32.partialorder %v1241, %v1654
        %vm1786 = vcmp.lt.f32.partialorder %v1242, %v1654
        %vm1787 = vcmp.lt.f32.partialorder %v1243, %v1654
        %vm1788 = vcmp.lt.f32.partialorder %v1244, %v1654
        %vm1789 = vcmp.lt.f32.partialorder %v1245, %v1659
        %vm1790 = vcmp.lt.f32.partialorder %v1246, %v1659
        %vm1791 = vcmp.lt.f32.partialorder %v1247, %v1659
        %vm1792 = vcmp.lt.f32.partialorder %v1248, %v1659
        %vm1793 = vcmp.lt.f32.partialorder %v1249, %v1664
        %vm1794 = vcmp.lt.f32.partialorder %v1250, %v1664
        %vm1795 = vcmp.lt.f32.partialorder %v1251, %v1664
        %vm1796 = vcmp.lt.f32.partialorder %v1252, %v1664
        %vm1797 = vcmp.lt.f32.partialorder %v1253, %v1669
        %vm1798 = vcmp.lt.f32.partialorder %v1254, %v1669
        %vm1799 = vcmp.lt.f32.partialorder %v1255, %v1669
        %vm1800 = vcmp.lt.f32.partialorder %v1256, %v1669
        %vm1801 = vcmp.lt.f32.partialorder %v1257, %v1674
        %vm1802 = vcmp.lt.f32.partialorder %v1258, %v1674
        %vm1803 = vcmp.lt.f32.partialorder %v1259, %v1674
        %vm1804 = vcmp.lt.f32.partialorder %v1260, %v1674
        %vm1805 = vcmp.lt.f32.partialorder %v1261, %v1679
        %vm1806 = vcmp.lt.f32.partialorder %v1262, %v1679
        %vm1807 = vcmp.lt.f32.partialorder %v1263, %v1679
        %vm1808 = vcmp.lt.f32.partialorder %v1264, %v1679
        %vm1809 = vcmp.lt.f32.partialorder %v1265, %v1684
        %vm1810 = vcmp.lt.f32.partialorder %v1266, %v1684
        %vm1811 = vcmp.lt.f32.partialorder %v1267, %v1684
        %vm1812 = vcmp.lt.f32.partialorder %v1268, %v1684
        %v1813 = vsel %vm1685, %v1141, -inf
        %v1814 = vsel %vm1686, %v1142, -inf
        %v1815 = vsel %vm1687, %v1143, -inf
        %v1816 = vsel %vm1688, %v1144, -inf
        %v1817 = vsel %vm1689, %v1145, -inf
        %v1818 = vsel %vm1690, %v1146, -inf
        %v1819 = vsel %vm1691, %v1147, -inf
        %v1820 = vsel %vm1692, %v1148, -inf
        %v1821 = vsel %vm1693, %v1149, -inf
        %v1822 = vsel %vm1694, %v1150, -inf
        %v1823 = vsel %vm1695, %v1151, -inf
        %v1824 = vsel %vm1696, %v1152, -inf
        %v1825 = vsel %vm1697, %v1153, -inf
        %v1826 = vsel %vm1698, %v1154, -inf
        %v1827 = vsel %vm1699, %v1155, -inf
        %v1828 = vsel %vm1700, %v1156, -inf
        %v1829 = vsel %vm1701, %v1157, -inf
        %v1830 = vsel %vm1702, %v1158, -inf
        %v1831 = vsel %vm1703, %v1159, -inf
        %v1832 = vsel %vm1704, %v1160, -inf
        %v1833 = vsel %vm1705, %v1161, -inf
        %v1834 = vsel %vm1706, %v1162, -inf
        %v1835 = vsel %vm1707, %v1163, -inf
        %v1836 = vsel %vm1708, %v1164, -inf
        %v1837 = vsel %vm1709, %v1165, -inf
        %v1838 = vsel %vm1710, %v1166, -inf
        %v1839 = vsel %vm1711, %v1167, -inf
        %v1840 = vsel %vm1712, %v1168, -inf
        %v1841 = vsel %vm1713, %v1169, -inf
        %v1842 = vsel %vm1714, %v1170, -inf
        %v1843 = vsel %vm1715, %v1171, -inf
        %v1844 = vsel %vm1716, %v1172, -inf
        %v1845 = vsel %vm1717, %v1173, -inf
        %v1846 = vsel %vm1718, %v1174, -inf
        %v1847 = vsel %vm1719, %v1175, -inf
        %v1848 = vsel %vm1720, %v1176, -inf
        %v1849 = vsel %vm1721, %v1177, -inf
        %v1850 = vsel %vm1722, %v1178, -inf
        %v1851 = vsel %vm1723, %v1179, -inf
        %v1852 = vsel %vm1724, %v1180, -inf
        %v1853 = vsel %vm1725, %v1181, -inf
        %v1854 = vsel %vm1726, %v1182, -inf
        %v1855 = vsel %vm1727, %v1183, -inf
        %v1856 = vsel %vm1728, %v1184, -inf
        %v1857 = vsel %vm1729, %v1185, -inf
        %v1858 = vsel %vm1730, %v1186, -inf
        %v1859 = vsel %vm1731, %v1187, -inf
        %v1860 = vsel %vm1732, %v1188, -inf
        %v1861 = vsel %vm1733, %v1189, -inf
        %v1862 = vsel %vm1734, %v1190, -inf
        %v1863 = vsel %vm1735, %v1191, -inf
        %v1864 = vsel %vm1736, %v1192, -inf
        %v1865 = vsel %vm1737, %v1193, -inf
        %v1866 = vsel %vm1738, %v1194, -inf
        %v1867 = vsel %vm1739, %v1195, -inf
        %v1868 = vsel %vm1740, %v1196, -inf
        %v1869 = vsel %vm1741, %v1197, -inf
        %v1870 = vsel %vm1742, %v1198, -inf
        %v1871 = vsel %vm1743, %v1199, -inf
        %v1872 = vsel %vm1744, %v1200, -inf
        %v1873 = vsel %vm1745, %v1201, -inf
        %v1874 = vsel %vm1746, %v1202, -inf
        %v1875 = vsel %vm1747, %v1203, -inf
        %v1876 = vsel %vm1748, %v1204, -inf
        %v1877 = vsel %vm1749, %v1205, -inf
        %v1878 = vsel %vm1750, %v1206, -inf
        %v1879 = vsel %vm1751, %v1207, -inf
        %v1880 = vsel %vm1752, %v1208, -inf
        %v1881 = vsel %vm1753, %v1209, -inf
        %v1882 = vsel %vm1754, %v1210, -inf
        %v1883 = vsel %vm1755, %v1211, -inf
        %v1884 = vsel %vm1756, %v1212, -inf
        %v1885 = vsel %vm1757, %v1213, -inf
        %v1886 = vsel %vm1758, %v1214, -inf
        %v1887 = vsel %vm1759, %v1215, -inf
        %v1888 = vsel %vm1760, %v1216, -inf
        %v1889 = vsel %vm1761, %v1217, -inf
        %v1890 = vsel %vm1762, %v1218, -inf
        %v1891 = vsel %vm1763, %v1219, -inf
        %v1892 = vsel %vm1764, %v1220, -inf
        %v1893 = vsel %vm1765, %v1221, -inf
        %v1894 = vsel %vm1766, %v1222, -inf
        %v1895 = vsel %vm1767, %v1223, -inf
        %v1896 = vsel %vm1768, %v1224, -inf
        %v1897 = vsel %vm1769, %v1225, -inf
        %v1898 = vsel %vm1770, %v1226, -inf
        %v1899 = vsel %vm1771, %v1227, -inf
        %v1900 = vsel %vm1772, %v1228, -inf
        %v1901 = vsel %vm1773, %v1229, -inf
        %v1902 = vsel %vm1774, %v1230, -inf
        %v1903 = vsel %vm1775, %v1231, -inf
        %v1904 = vsel %vm1776, %v1232, -inf
        %v1905 = vsel %vm1777, %v1233, -inf
        %v1906 = vsel %vm1778, %v1234, -inf
        %v1907 = vsel %vm1779, %v1235, -inf
        %v1908 = vsel %vm1780, %v1236, -inf
        %v1909 = vsel %vm1781, %v1237, -inf
        %v1910 = vsel %vm1782, %v1238, -inf
        %v1911 = vsel %vm1783, %v1239, -inf
        %v1912 = vsel %vm1784, %v1240, -inf
        %v1913 = vsel %vm1785, %v1241, -inf
        %v1914 = vsel %vm1786, %v1242, -inf
        %v1915 = vsel %vm1787, %v1243, -inf
        %v1916 = vsel %vm1788, %v1244, -inf
        %v1917 = vsel %vm1789, %v1245, -inf
        %v1918 = vsel %vm1790, %v1246, -inf
        %v1919 = vsel %vm1791, %v1247, -inf
        %v1920 = vsel %vm1792, %v1248, -inf
        %v1921 = vsel %vm1793, %v1249, -inf
        %v1922 = vsel %vm1794, %v1250, -inf
        %v1923 = vsel %vm1795, %v1251, -inf
        %v1924 = vsel %vm1796, %v1252, -inf
        %v1925 = vsel %vm1797, %v1253, -inf
        %v1926 = vsel %vm1798, %v1254, -inf
        %v1927 = vsel %vm1799, %v1255, -inf
        %v1928 = vsel %vm1800, %v1256, -inf
        %v1929 = vsel %vm1801, %v1257, -inf
        %v1930 = vsel %vm1802, %v1258, -inf
        %v1931 = vsel %vm1803, %v1259, -inf
        %v1932 = vsel %vm1804, %v1260, -inf
        %v1933 = vsel %vm1805, %v1261, -inf
        %v1934 = vsel %vm1806, %v1262, -inf
        %v1935 = vsel %vm1807, %v1263, -inf
        %v1936 = vsel %vm1808, %v1264, -inf
        %v1937 = vsel %vm1809, %v1265, -inf
        %v1938 = vsel %vm1810, %v1266, -inf
        %v1939 = vsel %vm1811, %v1267, -inf
        %v1940 = vsel %vm1812, %v1268, -inf
        %v1941 = vmax.f32 %v1813, %v1814
        %v1942 = vmax.f32 %v1941, %v1815
        %v1943 = vmax.f32 %v1942, %v1816
        %1944 = vmax.xlane.f32.xlu0 %v1943
        %v1945 = vpop.xlane.xlu0 %1944
        %v1946 = vmax.f32 %v1817, %v1818
        %v1947 = vmax.f32 %v1946, %v1819
        %v1948 = vmax.f32 %v1947, %v1820
        %1949 = vmax.xlane.f32.xlu0 %v1948
        %v1950 = vpop.xlane.xlu0 %1949
        %v1951 = vmax.f32 %v1821, %v1822
        %v1952 = vmax.f32 %v1951, %v1823
        %v1953 = vmax.f32 %v1952, %v1824
        %1954 = vmax.xlane.f32.xlu0 %v1953
        %v1955 = vpop.xlane.xlu0 %1954
        %v1956 = vmax.f32 %v1825, %v1826
        %v1957 = vmax.f32 %v1956, %v1827
        %v1958 = vmax.f32 %v1957, %v1828
        %1959 = vmax.xlane.f32.xlu0 %v1958
        %v1960 = vpop.xlane.xlu0 %1959
        %v1961 = vmax.f32 %v1829, %v1830
        %v1962 = vmax.f32 %v1961, %v1831
        %v1963 = vmax.f32 %v1962, %v1832
        %1964 = vmax.xlane.f32.xlu0 %v1963
        %v1965 = vpop.xlane.xlu0 %1964
        %v1966 = vmax.f32 %v1833, %v1834
        %v1967 = vmax.f32 %v1966, %v1835
        %v1968 = vmax.f32 %v1967, %v1836
        %1969 = vmax.xlane.f32.xlu0 %v1968
        %v1970 = vpop.xlane.xlu0 %1969
        %v1971 = vmax.f32 %v1837, %v1838
        %v1972 = vmax.f32 %v1971, %v1839
        %v1973 = vmax.f32 %v1972, %v1840
        %1974 = vmax.xlane.f32.xlu0 %v1973
        %v1975 = vpop.xlane.xlu0 %1974
        %v1976 = vmax.f32 %v1841, %v1842
        %v1977 = vmax.f32 %v1976, %v1843
        %v1978 = vmax.f32 %v1977, %v1844
        %1979 = vmax.xlane.f32.xlu0 %v1978
        %v1980 = vpop.xlane.xlu0 %1979
        %v1981 = vmax.f32 %v1845, %v1846
        %v1982 = vmax.f32 %v1981, %v1847
        %v1983 = vmax.f32 %v1982, %v1848
        %1984 = vmax.xlane.f32.xlu0 %v1983
        %v1985 = vpop.xlane.xlu0 %1984
        %v1986 = vmax.f32 %v1849, %v1850
        %v1987 = vmax.f32 %v1986, %v1851
        %v1988 = vmax.f32 %v1987, %v1852
        %1989 = vmax.xlane.f32.xlu0 %v1988
        %v1990 = vpop.xlane.xlu0 %1989
        %v1991 = vmax.f32 %v1853, %v1854
        %v1992 = vmax.f32 %v1991, %v1855
        %v1993 = vmax.f32 %v1992, %v1856
        %1994 = vmax.xlane.f32.xlu0 %v1993
        %v1995 = vpop.xlane.xlu0 %1994
        %v1996 = vmax.f32 %v1857, %v1858
        %v1997 = vmax.f32 %v1996, %v1859
        %v1998 = vmax.f32 %v1997, %v1860
        %1999 = vmax.xlane.f32.xlu0 %v1998
        %v2000 = vpop.xlane.xlu0 %1999
        %v2001 = vmax.f32 %v1861, %v1862
        %v2002 = vmax.f32 %v2001, %v1863
        %v2003 = vmax.f32 %v2002, %v1864
        %2004 = vmax.xlane.f32.xlu0 %v2003
        %v2005 = vpop.xlane.xlu0 %2004
        %v2006 = vmax.f32 %v1865, %v1866
        %v2007 = vmax.f32 %v2006, %v1867
        %v2008 = vmax.f32 %v2007, %v1868
        %2009 = vmax.xlane.f32.xlu0 %v2008
        %v2010 = vpop.xlane.xlu0 %2009
        %v2011 = vmax.f32 %v1869, %v1870
        %v2012 = vmax.f32 %v2011, %v1871
        %v2013 = vmax.f32 %v2012, %v1872
        %2014 = vmax.xlane.f32.xlu0 %v2013
        %v2015 = vpop.xlane.xlu0 %2014
        %v2016 = vmax.f32 %v1873, %v1874
        %v2017 = vmax.f32 %v2016, %v1875
        %v2018 = vmax.f32 %v2017, %v1876
        %2019 = vmax.xlane.f32.xlu0 %v2018
        %v2020 = vpop.xlane.xlu0 %2019
        %v2021 = vmax.f32 %v1877, %v1878
        %v2022 = vmax.f32 %v2021, %v1879
        %v2023 = vmax.f32 %v2022, %v1880
        %2024 = vmax.xlane.f32.xlu0 %v2023
        %v2025 = vpop.xlane.xlu0 %2024
        %v2026 = vmax.f32 %v1881, %v1882
        %v2027 = vmax.f32 %v2026, %v1883
        %v2028 = vmax.f32 %v2027, %v1884
        %2029 = vmax.xlane.f32.xlu0 %v2028
        %v2030 = vpop.xlane.xlu0 %2029
        %v2031 = vmax.f32 %v1885, %v1886
        %v2032 = vmax.f32 %v2031, %v1887
        %v2033 = vmax.f32 %v2032, %v1888
        %2034 = vmax.xlane.f32.xlu0 %v2033
        %v2035 = vpop.xlane.xlu0 %2034
        %v2036 = vmax.f32 %v1889, %v1890
        %v2037 = vmax.f32 %v2036, %v1891
        %v2038 = vmax.f32 %v2037, %v1892
        %2039 = vmax.xlane.f32.xlu0 %v2038
        %v2040 = vpop.xlane.xlu0 %2039
        %v2041 = vmax.f32 %v1893, %v1894
        %v2042 = vmax.f32 %v2041, %v1895
        %v2043 = vmax.f32 %v2042, %v1896
        %2044 = vmax.xlane.f32.xlu0 %v2043
        %v2045 = vpop.xlane.xlu0 %2044
        %v2046 = vmax.f32 %v1897, %v1898
        %v2047 = vmax.f32 %v2046, %v1899
        %v2048 = vmax.f32 %v2047, %v1900
        %2049 = vmax.xlane.f32.xlu0 %v2048
        %v2050 = vpop.xlane.xlu0 %2049
        %v2051 = vmax.f32 %v1901, %v1902
        %v2052 = vmax.f32 %v2051, %v1903
        %v2053 = vmax.f32 %v2052, %v1904
        %2054 = vmax.xlane.f32.xlu0 %v2053
        %v2055 = vpop.xlane.xlu0 %2054
        %v2056 = vmax.f32 %v1905, %v1906
        %v2057 = vmax.f32 %v2056, %v1907
        %v2058 = vmax.f32 %v2057, %v1908
        %2059 = vmax.xlane.f32.xlu0 %v2058
        %v2060 = vpop.xlane.xlu0 %2059
        %v2061 = vmax.f32 %v1909, %v1910
        %v2062 = vmax.f32 %v2061, %v1911
        %v2063 = vmax.f32 %v2062, %v1912
        %2064 = vmax.xlane.f32.xlu0 %v2063
        %v2065 = vpop.xlane.xlu0 %2064
        %v2066 = vmax.f32 %v1913, %v1914
        %v2067 = vmax.f32 %v2066, %v1915
        %v2068 = vmax.f32 %v2067, %v1916
        %2069 = vmax.xlane.f32.xlu0 %v2068
        %v2070 = vpop.xlane.xlu0 %2069
        %v2071 = vmax.f32 %v1917, %v1918
        %v2072 = vmax.f32 %v2071, %v1919
        %v2073 = vmax.f32 %v2072, %v1920
        %2074 = vmax.xlane.f32.xlu0 %v2073
        %v2075 = vpop.xlane.xlu0 %2074
        %v2076 = vmax.f32 %v1921, %v1922
        %v2077 = vmax.f32 %v2076, %v1923
        %v2078 = vmax.f32 %v2077, %v1924
        %2079 = vmax.xlane.f32.xlu0 %v2078
        %v2080 = vpop.xlane.xlu0 %2079
        %v2081 = vmax.f32 %v1925, %v1926
        %v2082 = vmax.f32 %v2081, %v1927
        %v2083 = vmax.f32 %v2082, %v1928
        %2084 = vmax.xlane.f32.xlu0 %v2083
        %v2085 = vpop.xlane.xlu0 %2084
        %v2086 = vmax.f32 %v1929, %v1930
        %v2087 = vmax.f32 %v2086, %v1931
        %v2088 = vmax.f32 %v2087, %v1932
        %2089 = vmax.xlane.f32.xlu0 %v2088
        %v2090 = vpop.xlane.xlu0 %2089
        %v2091 = vmax.f32 %v1933, %v1934
        %v2092 = vmax.f32 %v2091, %v1935
        %v2093 = vmax.f32 %v2092, %v1936
        %2094 = vmax.xlane.f32.xlu0 %v2093
        %v2095 = vpop.xlane.xlu0 %2094
        %v2096 = vmax.f32 %v1937, %v1938
        %v2097 = vmax.f32 %v2096, %v1939
        %v2098 = vmax.f32 %v2097, %v1940
        %2099 = vmax.xlane.f32.xlu0 %v2098
        %v2100 = vpop.xlane.xlu0 %2099
        %vm2101 = vcmp.lt.f32.partialorder %v1141, %v1945
        %vm2102 = vcmp.lt.f32.partialorder %v1142, %v1945
        %vm2103 = vcmp.lt.f32.partialorder %v1143, %v1945
        %vm2104 = vcmp.lt.f32.partialorder %v1144, %v1945
        %vm2105 = vcmp.lt.f32.partialorder %v1145, %v1950
        %vm2106 = vcmp.lt.f32.partialorder %v1146, %v1950
        %vm2107 = vcmp.lt.f32.partialorder %v1147, %v1950
        %vm2108 = vcmp.lt.f32.partialorder %v1148, %v1950
        %vm2109 = vcmp.lt.f32.partialorder %v1149, %v1955
        %vm2110 = vcmp.lt.f32.partialorder %v1150, %v1955
        %vm2111 = vcmp.lt.f32.partialorder %v1151, %v1955
        %vm2112 = vcmp.lt.f32.partialorder %v1152, %v1955
        %vm2113 = vcmp.lt.f32.partialorder %v1153, %v1960
        %vm2114 = vcmp.lt.f32.partialorder %v1154, %v1960
        %vm2115 = vcmp.lt.f32.partialorder %v1155, %v1960
        %vm2116 = vcmp.lt.f32.partialorder %v1156, %v1960
        %vm2117 = vcmp.lt.f32.partialorder %v1157, %v1965
        %vm2118 = vcmp.lt.f32.partialorder %v1158, %v1965
        %vm2119 = vcmp.lt.f32.partialorder %v1159, %v1965
        %vm2120 = vcmp.lt.f32.partialorder %v1160, %v1965
        %vm2121 = vcmp.lt.f32.partialorder %v1161, %v1970
        %vm2122 = vcmp.lt.f32.partialorder %v1162, %v1970
        %vm2123 = vcmp.lt.f32.partialorder %v1163, %v1970
        %vm2124 = vcmp.lt.f32.partialorder %v1164, %v1970
        %vm2125 = vcmp.lt.f32.partialorder %v1165, %v1975
        %vm2126 = vcmp.lt.f32.partialorder %v1166, %v1975
        %vm2127 = vcmp.lt.f32.partialorder %v1167, %v1975
        %vm2128 = vcmp.lt.f32.partialorder %v1168, %v1975
        %vm2129 = vcmp.lt.f32.partialorder %v1169, %v1980
        %vm2130 = vcmp.lt.f32.partialorder %v1170, %v1980
        %vm2131 = vcmp.lt.f32.partialorder %v1171, %v1980
        %vm2132 = vcmp.lt.f32.partialorder %v1172, %v1980
        %vm2133 = vcmp.lt.f32.partialorder %v1173, %v1985
        %vm2134 = vcmp.lt.f32.partialorder %v1174, %v1985
        %vm2135 = vcmp.lt.f32.partialorder %v1175, %v1985
        %vm2136 = vcmp.lt.f32.partialorder %v1176, %v1985
        %vm2137 = vcmp.lt.f32.partialorder %v1177, %v1990
        %vm2138 = vcmp.lt.f32.partialorder %v1178, %v1990
        %vm2139 = vcmp.lt.f32.partialorder %v1179, %v1990
        %vm2140 = vcmp.lt.f32.partialorder %v1180, %v1990
        %vm2141 = vcmp.lt.f32.partialorder %v1181, %v1995
        %vm2142 = vcmp.lt.f32.partialorder %v1182, %v1995
        %vm2143 = vcmp.lt.f32.partialorder %v1183, %v1995
        %vm2144 = vcmp.lt.f32.partialorder %v1184, %v1995
        %vm2145 = vcmp.lt.f32.partialorder %v1185, %v2000
        %vm2146 = vcmp.lt.f32.partialorder %v1186, %v2000
        %vm2147 = vcmp.lt.f32.partialorder %v1187, %v2000
        %vm2148 = vcmp.lt.f32.partialorder %v1188, %v2000
        %vm2149 = vcmp.lt.f32.partialorder %v1189, %v2005
        %vm2150 = vcmp.lt.f32.partialorder %v1190, %v2005
        %vm2151 = vcmp.lt.f32.partialorder %v1191, %v2005
        %vm2152 = vcmp.lt.f32.partialorder %v1192, %v2005
        %vm2153 = vcmp.lt.f32.partialorder %v1193, %v2010
        %vm2154 = vcmp.lt.f32.partialorder %v1194, %v2010
        %vm2155 = vcmp.lt.f32.partialorder %v1195, %v2010
        %vm2156 = vcmp.lt.f32.partialorder %v1196, %v2010
        %vm2157 = vcmp.lt.f32.partialorder %v1197, %v2015
        %vm2158 = vcmp.lt.f32.partialorder %v1198, %v2015
        %vm2159 = vcmp.lt.f32.partialorder %v1199, %v2015
        %vm2160 = vcmp.lt.f32.partialorder %v1200, %v2015
        %vm2161 = vcmp.lt.f32.partialorder %v1201, %v2020
        %vm2162 = vcmp.lt.f32.partialorder %v1202, %v2020
        %vm2163 = vcmp.lt.f32.partialorder %v1203, %v2020
        %vm2164 = vcmp.lt.f32.partialorder %v1204, %v2020
        %vm2165 = vcmp.lt.f32.partialorder %v1205, %v2025
        %vm2166 = vcmp.lt.f32.partialorder %v1206, %v2025
        %vm2167 = vcmp.lt.f32.partialorder %v1207, %v2025
        %vm2168 = vcmp.lt.f32.partialorder %v1208, %v2025
        %vm2169 = vcmp.lt.f32.partialorder %v1209, %v2030
        %vm2170 = vcmp.lt.f32.partialorder %v1210, %v2030
        %vm2171 = vcmp.lt.f32.partialorder %v1211, %v2030
        %vm2172 = vcmp.lt.f32.partialorder %v1212, %v2030
        %vm2173 = vcmp.lt.f32.partialorder %v1213, %v2035
        %vm2174 = vcmp.lt.f32.partialorder %v1214, %v2035
        %vm2175 = vcmp.lt.f32.partialorder %v1215, %v2035
        %vm2176 = vcmp.lt.f32.partialorder %v1216, %v2035
        %vm2177 = vcmp.lt.f32.partialorder %v1217, %v2040
        %vm2178 = vcmp.lt.f32.partialorder %v1218, %v2040
        %vm2179 = vcmp.lt.f32.partialorder %v1219, %v2040
        %vm2180 = vcmp.lt.f32.partialorder %v1220, %v2040
        %vm2181 = vcmp.lt.f32.partialorder %v1221, %v2045
        %vm2182 = vcmp.lt.f32.partialorder %v1222, %v2045
        %vm2183 = vcmp.lt.f32.partialorder %v1223, %v2045
        %vm2184 = vcmp.lt.f32.partialorder %v1224, %v2045
        %vm2185 = vcmp.lt.f32.partialorder %v1225, %v2050
        %vm2186 = vcmp.lt.f32.partialorder %v1226, %v2050
        %vm2187 = vcmp.lt.f32.partialorder %v1227, %v2050
        %vm2188 = vcmp.lt.f32.partialorder %v1228, %v2050
        %vm2189 = vcmp.lt.f32.partialorder %v1229, %v2055
        %vm2190 = vcmp.lt.f32.partialorder %v1230, %v2055
        %vm2191 = vcmp.lt.f32.partialorder %v1231, %v2055
        %vm2192 = vcmp.lt.f32.partialorder %v1232, %v2055
        %vm2193 = vcmp.lt.f32.partialorder %v1233, %v2060
        %vm2194 = vcmp.lt.f32.partialorder %v1234, %v2060
        %vm2195 = vcmp.lt.f32.partialorder %v1235, %v2060
        %vm2196 = vcmp.lt.f32.partialorder %v1236, %v2060
        %vm2197 = vcmp.lt.f32.partialorder %v1237, %v2065
        %vm2198 = vcmp.lt.f32.partialorder %v1238, %v2065
        %vm2199 = vcmp.lt.f32.partialorder %v1239, %v2065
        %vm2200 = vcmp.lt.f32.partialorder %v1240, %v2065
        %vm2201 = vcmp.lt.f32.partialorder %v1241, %v2070
        %vm2202 = vcmp.lt.f32.partialorder %v1242, %v2070
        %vm2203 = vcmp.lt.f32.partialorder %v1243, %v2070
        %vm2204 = vcmp.lt.f32.partialorder %v1244, %v2070
        %vm2205 = vcmp.lt.f32.partialorder %v1245, %v2075
        %vm2206 = vcmp.lt.f32.partialorder %v1246, %v2075
        %vm2207 = vcmp.lt.f32.partialorder %v1247, %v2075
        %vm2208 = vcmp.lt.f32.partialorder %v1248, %v2075
        %vm2209 = vcmp.lt.f32.partialorder %v1249, %v2080
        %vm2210 = vcmp.lt.f32.partialorder %v1250, %v2080
        %vm2211 = vcmp.lt.f32.partialorder %v1251, %v2080
        %vm2212 = vcmp.lt.f32.partialorder %v1252, %v2080
        %vm2213 = vcmp.lt.f32.partialorder %v1253, %v2085
        %vm2214 = vcmp.lt.f32.partialorder %v1254, %v2085
        %vm2215 = vcmp.lt.f32.partialorder %v1255, %v2085
        %vm2216 = vcmp.lt.f32.partialorder %v1256, %v2085
        %vm2217 = vcmp.lt.f32.partialorder %v1257, %v2090
        %vm2218 = vcmp.lt.f32.partialorder %v1258, %v2090
        %vm2219 = vcmp.lt.f32.partialorder %v1259, %v2090
        %vm2220 = vcmp.lt.f32.partialorder %v1260, %v2090
        %vm2221 = vcmp.lt.f32.partialorder %v1261, %v2095
        %vm2222 = vcmp.lt.f32.partialorder %v1262, %v2095
        %vm2223 = vcmp.lt.f32.partialorder %v1263, %v2095
        %vm2224 = vcmp.lt.f32.partialorder %v1264, %v2095
        %vm2225 = vcmp.lt.f32.partialorder %v1265, %v2100
        %vm2226 = vcmp.lt.f32.partialorder %v1266, %v2100
        %vm2227 = vcmp.lt.f32.partialorder %v1267, %v2100
        %vm2228 = vcmp.lt.f32.partialorder %v1268, %v2100
        %v2229 = vsel %vm2101, %v1141, -inf
        %v2230 = vsel %vm2102, %v1142, -inf
        %v2231 = vsel %vm2103, %v1143, -inf
        %v2232 = vsel %vm2104, %v1144, -inf
        %v2233 = vsel %vm2105, %v1145, -inf
        %v2234 = vsel %vm2106, %v1146, -inf
        %v2235 = vsel %vm2107, %v1147, -inf
        %v2236 = vsel %vm2108, %v1148, -inf
        %v2237 = vsel %vm2109, %v1149, -inf
        %v2238 = vsel %vm2110, %v1150, -inf
        %v2239 = vsel %vm2111, %v1151, -inf
        %v2240 = vsel %vm2112, %v1152, -inf
        %v2241 = vsel %vm2113, %v1153, -inf
        %v2242 = vsel %vm2114, %v1154, -inf
        %v2243 = vsel %vm2115, %v1155, -inf
        %v2244 = vsel %vm2116, %v1156, -inf
        %v2245 = vsel %vm2117, %v1157, -inf
        %v2246 = vsel %vm2118, %v1158, -inf
        %v2247 = vsel %vm2119, %v1159, -inf
        %v2248 = vsel %vm2120, %v1160, -inf
        %v2249 = vsel %vm2121, %v1161, -inf
        %v2250 = vsel %vm2122, %v1162, -inf
        %v2251 = vsel %vm2123, %v1163, -inf
        %v2252 = vsel %vm2124, %v1164, -inf
        %v2253 = vsel %vm2125, %v1165, -inf
        %v2254 = vsel %vm2126, %v1166, -inf
        %v2255 = vsel %vm2127, %v1167, -inf
        %v2256 = vsel %vm2128, %v1168, -inf
        %v2257 = vsel %vm2129, %v1169, -inf
        %v2258 = vsel %vm2130, %v1170, -inf
        %v2259 = vsel %vm2131, %v1171, -inf
        %v2260 = vsel %vm2132, %v1172, -inf
        %v2261 = vsel %vm2133, %v1173, -inf
        %v2262 = vsel %vm2134, %v1174, -inf
        %v2263 = vsel %vm2135, %v1175, -inf
        %v2264 = vsel %vm2136, %v1176, -inf
        %v2265 = vsel %vm2137, %v1177, -inf
        %v2266 = vsel %vm2138, %v1178, -inf
        %v2267 = vsel %vm2139, %v1179, -inf
        %v2268 = vsel %vm2140, %v1180, -inf
        %v2269 = vsel %vm2141, %v1181, -inf
        %v2270 = vsel %vm2142, %v1182, -inf
        %v2271 = vsel %vm2143, %v1183, -inf
        %v2272 = vsel %vm2144, %v1184, -inf
        %v2273 = vsel %vm2145, %v1185, -inf
        %v2274 = vsel %vm2146, %v1186, -inf
        %v2275 = vsel %vm2147, %v1187, -inf
        %v2276 = vsel %vm2148, %v1188, -inf
        %v2277 = vsel %vm2149, %v1189, -inf
        %v2278 = vsel %vm2150, %v1190, -inf
        %v2279 = vsel %vm2151, %v1191, -inf
        %v2280 = vsel %vm2152, %v1192, -inf
        %v2281 = vsel %vm2153, %v1193, -inf
        %v2282 = vsel %vm2154, %v1194, -inf
        %v2283 = vsel %vm2155, %v1195, -inf
        %v2284 = vsel %vm2156, %v1196, -inf
        %v2285 = vsel %vm2157, %v1197, -inf
        %v2286 = vsel %vm2158, %v1198, -inf
        %v2287 = vsel %vm2159, %v1199, -inf
        %v2288 = vsel %vm2160, %v1200, -inf
        %v2289 = vsel %vm2161, %v1201, -inf
        %v2290 = vsel %vm2162, %v1202, -inf
        %v2291 = vsel %vm2163, %v1203, -inf
        %v2292 = vsel %vm2164, %v1204, -inf
        %v2293 = vsel %vm2165, %v1205, -inf
        %v2294 = vsel %vm2166, %v1206, -inf
        %v2295 = vsel %vm2167, %v1207, -inf
        %v2296 = vsel %vm2168, %v1208, -inf
        %v2297 = vsel %vm2169, %v1209, -inf
        %v2298 = vsel %vm2170, %v1210, -inf
        %v2299 = vsel %vm2171, %v1211, -inf
        %v2300 = vsel %vm2172, %v1212, -inf
        %v2301 = vsel %vm2173, %v1213, -inf
        %v2302 = vsel %vm2174, %v1214, -inf
        %v2303 = vsel %vm2175, %v1215, -inf
        %v2304 = vsel %vm2176, %v1216, -inf
        %v2305 = vsel %vm2177, %v1217, -inf
        %v2306 = vsel %vm2178, %v1218, -inf
        %v2307 = vsel %vm2179, %v1219, -inf
        %v2308 = vsel %vm2180, %v1220, -inf
        %v2309 = vsel %vm2181, %v1221, -inf
        %v2310 = vsel %vm2182, %v1222, -inf
        %v2311 = vsel %vm2183, %v1223, -inf
        %v2312 = vsel %vm2184, %v1224, -inf
        %v2313 = vsel %vm2185, %v1225, -inf
        %v2314 = vsel %vm2186, %v1226, -inf
        %v2315 = vsel %vm2187, %v1227, -inf
        %v2316 = vsel %vm2188, %v1228, -inf
        %v2317 = vsel %vm2189, %v1229, -inf
        %v2318 = vsel %vm2190, %v1230, -inf
        %v2319 = vsel %vm2191, %v1231, -inf
        %v2320 = vsel %vm2192, %v1232, -inf
        %v2321 = vsel %vm2193, %v1233, -inf
        %v2322 = vsel %vm2194, %v1234, -inf
        %v2323 = vsel %vm2195, %v1235, -inf
        %v2324 = vsel %vm2196, %v1236, -inf
        %v2325 = vsel %vm2197, %v1237, -inf
        %v2326 = vsel %vm2198, %v1238, -inf
        %v2327 = vsel %vm2199, %v1239, -inf
        %v2328 = vsel %vm2200, %v1240, -inf
        %v2329 = vsel %vm2201, %v1241, -inf
        %v2330 = vsel %vm2202, %v1242, -inf
        %v2331 = vsel %vm2203, %v1243, -inf
        %v2332 = vsel %vm2204, %v1244, -inf
        %v2333 = vsel %vm2205, %v1245, -inf
        %v2334 = vsel %vm2206, %v1246, -inf
        %v2335 = vsel %vm2207, %v1247, -inf
        %v2336 = vsel %vm2208, %v1248, -inf
        %v2337 = vsel %vm2209, %v1249, -inf
        %v2338 = vsel %vm2210, %v1250, -inf
        %v2339 = vsel %vm2211, %v1251, -inf
        %v2340 = vsel %vm2212, %v1252, -inf
        %v2341 = vsel %vm2213, %v1253, -inf
        %v2342 = vsel %vm2214, %v1254, -inf
        %v2343 = vsel %vm2215, %v1255, -inf
        %v2344 = vsel %vm2216, %v1256, -inf
        %v2345 = vsel %vm2217, %v1257, -inf
        %v2346 = vsel %vm2218, %v1258, -inf
        %v2347 = vsel %vm2219, %v1259, -inf
        %v2348 = vsel %vm2220, %v1260, -inf
        %v2349 = vsel %vm2221, %v1261, -inf
        %v2350 = vsel %vm2222, %v1262, -inf
        %v2351 = vsel %vm2223, %v1263, -inf
        %v2352 = vsel %vm2224, %v1264, -inf
        %v2353 = vsel %vm2225, %v1265, -inf
        %v2354 = vsel %vm2226, %v1266, -inf
        %v2355 = vsel %vm2227, %v1267, -inf
        %v2356 = vsel %vm2228, %v1268, -inf
        %v2357 = vmax.f32 %v2229, %v2230
        %v2358 = vmax.f32 %v2357, %v2231
        %v2359 = vmax.f32 %v2358, %v2232
        %2360 = vmax.xlane.f32.xlu0 %v2359
        %v2361 = vpop.xlane.xlu0 %2360
        %v2362 = vmax.f32 %v2233, %v2234
        %v2363 = vmax.f32 %v2362, %v2235
        %v2364 = vmax.f32 %v2363, %v2236
        %2365 = vmax.xlane.f32.xlu0 %v2364
        %v2366 = vpop.xlane.xlu0 %2365
        %v2367 = vmax.f32 %v2237, %v2238
        %v2368 = vmax.f32 %v2367, %v2239
        %v2369 = vmax.f32 %v2368, %v2240
        %2370 = vmax.xlane.f32.xlu0 %v2369
        %v2371 = vpop.xlane.xlu0 %2370
        %v2372 = vmax.f32 %v2241, %v2242
        %v2373 = vmax.f32 %v2372, %v2243
        %v2374 = vmax.f32 %v2373, %v2244
        %2375 = vmax.xlane.f32.xlu0 %v2374
        %v2376 = vpop.xlane.xlu0 %2375
        %v2377 = vmax.f32 %v2245, %v2246
        %v2378 = vmax.f32 %v2377, %v2247
        %v2379 = vmax.f32 %v2378, %v2248
        %2380 = vmax.xlane.f32.xlu0 %v2379
        %v2381 = vpop.xlane.xlu0 %2380
        %v2382 = vmax.f32 %v2249, %v2250
        %v2383 = vmax.f32 %v2382, %v2251
        %v2384 = vmax.f32 %v2383, %v2252
        %2385 = vmax.xlane.f32.xlu0 %v2384
        %v2386 = vpop.xlane.xlu0 %2385
        %v2387 = vmax.f32 %v2253, %v2254
        %v2388 = vmax.f32 %v2387, %v2255
        %v2389 = vmax.f32 %v2388, %v2256
        %2390 = vmax.xlane.f32.xlu0 %v2389
        %v2391 = vpop.xlane.xlu0 %2390
        %v2392 = vmax.f32 %v2257, %v2258
        %v2393 = vmax.f32 %v2392, %v2259
        %v2394 = vmax.f32 %v2393, %v2260
        %2395 = vmax.xlane.f32.xlu0 %v2394
        %v2396 = vpop.xlane.xlu0 %2395
        %v2397 = vmax.f32 %v2261, %v2262
        %v2398 = vmax.f32 %v2397, %v2263
        %v2399 = vmax.f32 %v2398, %v2264
        %2400 = vmax.xlane.f32.xlu0 %v2399
        %v2401 = vpop.xlane.xlu0 %2400
        %v2402 = vmax.f32 %v2265, %v2266
        %v2403 = vmax.f32 %v2402, %v2267
        %v2404 = vmax.f32 %v2403, %v2268
        %2405 = vmax.xlane.f32.xlu0 %v2404
        %v2406 = vpop.xlane.xlu0 %2405
        %v2407 = vmax.f32 %v2269, %v2270
        %v2408 = vmax.f32 %v2407, %v2271
        %v2409 = vmax.f32 %v2408, %v2272
        %2410 = vmax.xlane.f32.xlu0 %v2409
        %v2411 = vpop.xlane.xlu0 %2410
        %v2412 = vmax.f32 %v2273, %v2274
        %v2413 = vmax.f32 %v2412, %v2275
        %v2414 = vmax.f32 %v2413, %v2276
        %2415 = vmax.xlane.f32.xlu0 %v2414
        %v2416 = vpop.xlane.xlu0 %2415
        %v2417 = vmax.f32 %v2277, %v2278
        %v2418 = vmax.f32 %v2417, %v2279
        %v2419 = vmax.f32 %v2418, %v2280
        %2420 = vmax.xlane.f32.xlu0 %v2419
        %v2421 = vpop.xlane.xlu0 %2420
        %v2422 = vmax.f32 %v2281, %v2282
        %v2423 = vmax.f32 %v2422, %v2283
        %v2424 = vmax.f32 %v2423, %v2284
        %2425 = vmax.xlane.f32.xlu0 %v2424
        %v2426 = vpop.xlane.xlu0 %2425
        %v2427 = vmax.f32 %v2285, %v2286
        %v2428 = vmax.f32 %v2427, %v2287
        %v2429 = vmax.f32 %v2428, %v2288
        %2430 = vmax.xlane.f32.xlu0 %v2429
        %v2431 = vpop.xlane.xlu0 %2430
        %v2432 = vmax.f32 %v2289, %v2290
        %v2433 = vmax.f32 %v2432, %v2291
        %v2434 = vmax.f32 %v2433, %v2292
        %2435 = vmax.xlane.f32.xlu0 %v2434
        %v2436 = vpop.xlane.xlu0 %2435
        %v2437 = vmax.f32 %v2293, %v2294
        %v2438 = vmax.f32 %v2437, %v2295
        %v2439 = vmax.f32 %v2438, %v2296
        %2440 = vmax.xlane.f32.xlu0 %v2439
        %v2441 = vpop.xlane.xlu0 %2440
        %v2442 = vmax.f32 %v2297, %v2298
        %v2443 = vmax.f32 %v2442, %v2299
        %v2444 = vmax.f32 %v2443, %v2300
        %2445 = vmax.xlane.f32.xlu0 %v2444
        %v2446 = vpop.xlane.xlu0 %2445
        %v2447 = vmax.f32 %v2301, %v2302
        %v2448 = vmax.f32 %v2447, %v2303
        %v2449 = vmax.f32 %v2448, %v2304
        %2450 = vmax.xlane.f32.xlu0 %v2449
        %v2451 = vpop.xlane.xlu0 %2450
        %v2452 = vmax.f32 %v2305, %v2306
        %v2453 = vmax.f32 %v2452, %v2307
        %v2454 = vmax.f32 %v2453, %v2308
        %2455 = vmax.xlane.f32.xlu0 %v2454
        %v2456 = vpop.xlane.xlu0 %2455
        %v2457 = vmax.f32 %v2309, %v2310
        %v2458 = vmax.f32 %v2457, %v2311
        %v2459 = vmax.f32 %v2458, %v2312
        %2460 = vmax.xlane.f32.xlu0 %v2459
        %v2461 = vpop.xlane.xlu0 %2460
        %v2462 = vmax.f32 %v2313, %v2314
        %v2463 = vmax.f32 %v2462, %v2315
        %v2464 = vmax.f32 %v2463, %v2316
        %2465 = vmax.xlane.f32.xlu0 %v2464
        %v2466 = vpop.xlane.xlu0 %2465
        %v2467 = vmax.f32 %v2317, %v2318
        %v2468 = vmax.f32 %v2467, %v2319
        %v2469 = vmax.f32 %v2468, %v2320
        %2470 = vmax.xlane.f32.xlu0 %v2469
        %v2471 = vpop.xlane.xlu0 %2470
        %v2472 = vmax.f32 %v2321, %v2322
        %v2473 = vmax.f32 %v2472, %v2323
        %v2474 = vmax.f32 %v2473, %v2324
        %2475 = vmax.xlane.f32.xlu0 %v2474
        %v2476 = vpop.xlane.xlu0 %2475
        %v2477 = vmax.f32 %v2325, %v2326
        %v2478 = vmax.f32 %v2477, %v2327
        %v2479 = vmax.f32 %v2478, %v2328
        %2480 = vmax.xlane.f32.xlu0 %v2479
        %v2481 = vpop.xlane.xlu0 %2480
        %v2482 = vmax.f32 %v2329, %v2330
        %v2483 = vmax.f32 %v2482, %v2331
        %v2484 = vmax.f32 %v2483, %v2332
        %2485 = vmax.xlane.f32.xlu0 %v2484
        %v2486 = vpop.xlane.xlu0 %2485
        %v2487 = vmax.f32 %v2333, %v2334
        %v2488 = vmax.f32 %v2487, %v2335
        %v2489 = vmax.f32 %v2488, %v2336
        %2490 = vmax.xlane.f32.xlu0 %v2489
        %v2491 = vpop.xlane.xlu0 %2490
        %v2492 = vmax.f32 %v2337, %v2338
        %v2493 = vmax.f32 %v2492, %v2339
        %v2494 = vmax.f32 %v2493, %v2340
        %2495 = vmax.xlane.f32.xlu0 %v2494
        %v2496 = vpop.xlane.xlu0 %2495
        %v2497 = vmax.f32 %v2341, %v2342
        %v2498 = vmax.f32 %v2497, %v2343
        %v2499 = vmax.f32 %v2498, %v2344
        %2500 = vmax.xlane.f32.xlu0 %v2499
        %v2501 = vpop.xlane.xlu0 %2500
        %v2502 = vmax.f32 %v2345, %v2346
        %v2503 = vmax.f32 %v2502, %v2347
        %v2504 = vmax.f32 %v2503, %v2348
        %2505 = vmax.xlane.f32.xlu0 %v2504
        %v2506 = vpop.xlane.xlu0 %2505
        %v2507 = vmax.f32 %v2349, %v2350
        %v2508 = vmax.f32 %v2507, %v2351
        %v2509 = vmax.f32 %v2508, %v2352
        %2510 = vmax.xlane.f32.xlu0 %v2509
        %v2511 = vpop.xlane.xlu0 %2510
        %v2512 = vmax.f32 %v2353, %v2354
        %v2513 = vmax.f32 %v2512, %v2355
        %v2514 = vmax.f32 %v2513, %v2356
        %2515 = vmax.xlane.f32.xlu0 %v2514
        %v2516 = vpop.xlane.xlu0 %2515
        %vm2517 = vcmp.lt.f32.partialorder %v1141, %v2361
        %vm2518 = vcmp.lt.f32.partialorder %v1142, %v2361
        %vm2519 = vcmp.lt.f32.partialorder %v1143, %v2361
        %vm2520 = vcmp.lt.f32.partialorder %v1144, %v2361
        %vm2521 = vcmp.lt.f32.partialorder %v1145, %v2366
        %vm2522 = vcmp.lt.f32.partialorder %v1146, %v2366
        %vm2523 = vcmp.lt.f32.partialorder %v1147, %v2366
        %vm2524 = vcmp.lt.f32.partialorder %v1148, %v2366
        %vm2525 = vcmp.lt.f32.partialorder %v1149, %v2371
        %vm2526 = vcmp.lt.f32.partialorder %v1150, %v2371
        %vm2527 = vcmp.lt.f32.partialorder %v1151, %v2371
        %vm2528 = vcmp.lt.f32.partialorder %v1152, %v2371
        %vm2529 = vcmp.lt.f32.partialorder %v1153, %v2376
        %vm2530 = vcmp.lt.f32.partialorder %v1154, %v2376
        %vm2531 = vcmp.lt.f32.partialorder %v1155, %v2376
        %vm2532 = vcmp.lt.f32.partialorder %v1156, %v2376
        %vm2533 = vcmp.lt.f32.partialorder %v1157, %v2381
        %vm2534 = vcmp.lt.f32.partialorder %v1158, %v2381
        %vm2535 = vcmp.lt.f32.partialorder %v1159, %v2381
        %vm2536 = vcmp.lt.f32.partialorder %v1160, %v2381
        %vm2537 = vcmp.lt.f32.partialorder %v1161, %v2386
        %vm2538 = vcmp.lt.f32.partialorder %v1162, %v2386
        %vm2539 = vcmp.lt.f32.partialorder %v1163, %v2386
        %vm2540 = vcmp.lt.f32.partialorder %v1164, %v2386
        %vm2541 = vcmp.lt.f32.partialorder %v1165, %v2391
        %vm2542 = vcmp.lt.f32.partialorder %v1166, %v2391
        %vm2543 = vcmp.lt.f32.partialorder %v1167, %v2391
        %vm2544 = vcmp.lt.f32.partialorder %v1168, %v2391
        %vm2545 = vcmp.lt.f32.partialorder %v1169, %v2396
        %vm2546 = vcmp.lt.f32.partialorder %v1170, %v2396
        %vm2547 = vcmp.lt.f32.partialorder %v1171, %v2396
        %vm2548 = vcmp.lt.f32.partialorder %v1172, %v2396
        %vm2549 = vcmp.lt.f32.partialorder %v1173, %v2401
        %vm2550 = vcmp.lt.f32.partialorder %v1174, %v2401
        %vm2551 = vcmp.lt.f32.partialorder %v1175, %v2401
        %vm2552 = vcmp.lt.f32.partialorder %v1176, %v2401
        %vm2553 = vcmp.lt.f32.partialorder %v1177, %v2406
        %vm2554 = vcmp.lt.f32.partialorder %v1178, %v2406
        %vm2555 = vcmp.lt.f32.partialorder %v1179, %v2406
        %vm2556 = vcmp.lt.f32.partialorder %v1180, %v2406
        %vm2557 = vcmp.lt.f32.partialorder %v1181, %v2411
        %vm2558 = vcmp.lt.f32.partialorder %v1182, %v2411
        %vm2559 = vcmp.lt.f32.partialorder %v1183, %v2411
        %vm2560 = vcmp.lt.f32.partialorder %v1184, %v2411
        %vm2561 = vcmp.lt.f32.partialorder %v1185, %v2416
        %vm2562 = vcmp.lt.f32.partialorder %v1186, %v2416
        %vm2563 = vcmp.lt.f32.partialorder %v1187, %v2416
        %vm2564 = vcmp.lt.f32.partialorder %v1188, %v2416
        %vm2565 = vcmp.lt.f32.partialorder %v1189, %v2421
        %vm2566 = vcmp.lt.f32.partialorder %v1190, %v2421
        %vm2567 = vcmp.lt.f32.partialorder %v1191, %v2421
        %vm2568 = vcmp.lt.f32.partialorder %v1192, %v2421
        %vm2569 = vcmp.lt.f32.partialorder %v1193, %v2426
        %vm2570 = vcmp.lt.f32.partialorder %v1194, %v2426
        %vm2571 = vcmp.lt.f32.partialorder %v1195, %v2426
        %vm2572 = vcmp.lt.f32.partialorder %v1196, %v2426
        %vm2573 = vcmp.lt.f32.partialorder %v1197, %v2431
        %vm2574 = vcmp.lt.f32.partialorder %v1198, %v2431
        %vm2575 = vcmp.lt.f32.partialorder %v1199, %v2431
        %vm2576 = vcmp.lt.f32.partialorder %v1200, %v2431
        %vm2577 = vcmp.lt.f32.partialorder %v1201, %v2436
        %vm2578 = vcmp.lt.f32.partialorder %v1202, %v2436
        %vm2579 = vcmp.lt.f32.partialorder %v1203, %v2436
        %vm2580 = vcmp.lt.f32.partialorder %v1204, %v2436
        %vm2581 = vcmp.lt.f32.partialorder %v1205, %v2441
        %vm2582 = vcmp.lt.f32.partialorder %v1206, %v2441
        %vm2583 = vcmp.lt.f32.partialorder %v1207, %v2441
        %vm2584 = vcmp.lt.f32.partialorder %v1208, %v2441
        %vm2585 = vcmp.lt.f32.partialorder %v1209, %v2446
        %vm2586 = vcmp.lt.f32.partialorder %v1210, %v2446
        %vm2587 = vcmp.lt.f32.partialorder %v1211, %v2446
        %vm2588 = vcmp.lt.f32.partialorder %v1212, %v2446
        %vm2589 = vcmp.lt.f32.partialorder %v1213, %v2451
        %vm2590 = vcmp.lt.f32.partialorder %v1214, %v2451
        %vm2591 = vcmp.lt.f32.partialorder %v1215, %v2451
        %vm2592 = vcmp.lt.f32.partialorder %v1216, %v2451
        %vm2593 = vcmp.lt.f32.partialorder %v1217, %v2456
        %vm2594 = vcmp.lt.f32.partialorder %v1218, %v2456
        %vm2595 = vcmp.lt.f32.partialorder %v1219, %v2456
        %vm2596 = vcmp.lt.f32.partialorder %v1220, %v2456
        %vm2597 = vcmp.lt.f32.partialorder %v1221, %v2461
        %vm2598 = vcmp.lt.f32.partialorder %v1222, %v2461
        %vm2599 = vcmp.lt.f32.partialorder %v1223, %v2461
        %vm2600 = vcmp.lt.f32.partialorder %v1224, %v2461
        %vm2601 = vcmp.lt.f32.partialorder %v1225, %v2466
        %vm2602 = vcmp.lt.f32.partialorder %v1226, %v2466
        %vm2603 = vcmp.lt.f32.partialorder %v1227, %v2466
        %vm2604 = vcmp.lt.f32.partialorder %v1228, %v2466
        %vm2605 = vcmp.lt.f32.partialorder %v1229, %v2471
        %vm2606 = vcmp.lt.f32.partialorder %v1230, %v2471
        %vm2607 = vcmp.lt.f32.partialorder %v1231, %v2471
        %vm2608 = vcmp.lt.f32.partialorder %v1232, %v2471
        %vm2609 = vcmp.lt.f32.partialorder %v1233, %v2476
        %vm2610 = vcmp.lt.f32.partialorder %v1234, %v2476
        %vm2611 = vcmp.lt.f32.partialorder %v1235, %v2476
        %vm2612 = vcmp.lt.f32.partialorder %v1236, %v2476
        %vm2613 = vcmp.lt.f32.partialorder %v1237, %v2481
        %vm2614 = vcmp.lt.f32.partialorder %v1238, %v2481
        %vm2615 = vcmp.lt.f32.partialorder %v1239, %v2481
        %vm2616 = vcmp.lt.f32.partialorder %v1240, %v2481
        %vm2617 = vcmp.lt.f32.partialorder %v1241, %v2486
        %vm2618 = vcmp.lt.f32.partialorder %v1242, %v2486
        %vm2619 = vcmp.lt.f32.partialorder %v1243, %v2486
        %vm2620 = vcmp.lt.f32.partialorder %v1244, %v2486
        %vm2621 = vcmp.lt.f32.partialorder %v1245, %v2491
        %vm2622 = vcmp.lt.f32.partialorder %v1246, %v2491
        %vm2623 = vcmp.lt.f32.partialorder %v1247, %v2491
        %vm2624 = vcmp.lt.f32.partialorder %v1248, %v2491
        %vm2625 = vcmp.lt.f32.partialorder %v1249, %v2496
        %vm2626 = vcmp.lt.f32.partialorder %v1250, %v2496
        %vm2627 = vcmp.lt.f32.partialorder %v1251, %v2496
        %vm2628 = vcmp.lt.f32.partialorder %v1252, %v2496
        %vm2629 = vcmp.lt.f32.partialorder %v1253, %v2501
        %vm2630 = vcmp.lt.f32.partialorder %v1254, %v2501
        %vm2631 = vcmp.lt.f32.partialorder %v1255, %v2501
        %vm2632 = vcmp.lt.f32.partialorder %v1256, %v2501
        %vm2633 = vcmp.lt.f32.partialorder %v1257, %v2506
        %vm2634 = vcmp.lt.f32.partialorder %v1258, %v2506
        %vm2635 = vcmp.lt.f32.partialorder %v1259, %v2506
        %vm2636 = vcmp.lt.f32.partialorder %v1260, %v2506
        %vm2637 = vcmp.lt.f32.partialorder %v1261, %v2511
        %vm2638 = vcmp.lt.f32.partialorder %v1262, %v2511
        %vm2639 = vcmp.lt.f32.partialorder %v1263, %v2511
        %vm2640 = vcmp.lt.f32.partialorder %v1264, %v2511
        %vm2641 = vcmp.lt.f32.partialorder %v1265, %v2516
        %vm2642 = vcmp.lt.f32.partialorder %v1266, %v2516
        %vm2643 = vcmp.lt.f32.partialorder %v1267, %v2516
        %vm2644 = vcmp.lt.f32.partialorder %v1268, %v2516
        %v2645 = vsel %vm2517, %v1141, -inf
        %v2646 = vsel %vm2518, %v1142, -inf
        %v2647 = vsel %vm2519, %v1143, -inf
        %v2648 = vsel %vm2520, %v1144, -inf
        %v2649 = vsel %vm2521, %v1145, -inf
        %v2650 = vsel %vm2522, %v1146, -inf
        %v2651 = vsel %vm2523, %v1147, -inf
        %v2652 = vsel %vm2524, %v1148, -inf
        %v2653 = vsel %vm2525, %v1149, -inf
        %v2654 = vsel %vm2526, %v1150, -inf
        %v2655 = vsel %vm2527, %v1151, -inf
        %v2656 = vsel %vm2528, %v1152, -inf
        %v2657 = vsel %vm2529, %v1153, -inf
        %v2658 = vsel %vm2530, %v1154, -inf
        %v2659 = vsel %vm2531, %v1155, -inf
        %v2660 = vsel %vm2532, %v1156, -inf
        %v2661 = vsel %vm2533, %v1157, -inf
        %v2662 = vsel %vm2534, %v1158, -inf
        %v2663 = vsel %vm2535, %v1159, -inf
        %v2664 = vsel %vm2536, %v1160, -inf
        %v2665 = vsel %vm2537, %v1161, -inf
        %v2666 = vsel %vm2538, %v1162, -inf
        %v2667 = vsel %vm2539, %v1163, -inf
        %v2668 = vsel %vm2540, %v1164, -inf
        %v2669 = vsel %vm2541, %v1165, -inf
        %v2670 = vsel %vm2542, %v1166, -inf
        %v2671 = vsel %vm2543, %v1167, -inf
        %v2672 = vsel %vm2544, %v1168, -inf
        %v2673 = vsel %vm2545, %v1169, -inf
        %v2674 = vsel %vm2546, %v1170, -inf
        %v2675 = vsel %vm2547, %v1171, -inf
        %v2676 = vsel %vm2548, %v1172, -inf
        %v2677 = vsel %vm2549, %v1173, -inf
        %v2678 = vsel %vm2550, %v1174, -inf
        %v2679 = vsel %vm2551, %v1175, -inf
        %v2680 = vsel %vm2552, %v1176, -inf
        %v2681 = vsel %vm2553, %v1177, -inf
        %v2682 = vsel %vm2554, %v1178, -inf
        %v2683 = vsel %vm2555, %v1179, -inf
        %v2684 = vsel %vm2556, %v1180, -inf
        %v2685 = vsel %vm2557, %v1181, -inf
        %v2686 = vsel %vm2558, %v1182, -inf
        %v2687 = vsel %vm2559, %v1183, -inf
        %v2688 = vsel %vm2560, %v1184, -inf
        %v2689 = vsel %vm2561, %v1185, -inf
        %v2690 = vsel %vm2562, %v1186, -inf
        %v2691 = vsel %vm2563, %v1187, -inf
        %v2692 = vsel %vm2564, %v1188, -inf
        %v2693 = vsel %vm2565, %v1189, -inf
        %v2694 = vsel %vm2566, %v1190, -inf
        %v2695 = vsel %vm2567, %v1191, -inf
        %v2696 = vsel %vm2568, %v1192, -inf
        %v2697 = vsel %vm2569, %v1193, -inf
        %v2698 = vsel %vm2570, %v1194, -inf
        %v2699 = vsel %vm2571, %v1195, -inf
        %v2700 = vsel %vm2572, %v1196, -inf
        %v2701 = vsel %vm2573, %v1197, -inf
        %v2702 = vsel %vm2574, %v1198, -inf
        %v2703 = vsel %vm2575, %v1199, -inf
        %v2704 = vsel %vm2576, %v1200, -inf
        %v2705 = vsel %vm2577, %v1201, -inf
        %v2706 = vsel %vm2578, %v1202, -inf
        %v2707 = vsel %vm2579, %v1203, -inf
        %v2708 = vsel %vm2580, %v1204, -inf
        %v2709 = vsel %vm2581, %v1205, -inf
        %v2710 = vsel %vm2582, %v1206, -inf
        %v2711 = vsel %vm2583, %v1207, -inf
        %v2712 = vsel %vm2584, %v1208, -inf
        %v2713 = vsel %vm2585, %v1209, -inf
        %v2714 = vsel %vm2586, %v1210, -inf
        %v2715 = vsel %vm2587, %v1211, -inf
        %v2716 = vsel %vm2588, %v1212, -inf
        %v2717 = vsel %vm2589, %v1213, -inf
        %v2718 = vsel %vm2590, %v1214, -inf
        %v2719 = vsel %vm2591, %v1215, -inf
        %v2720 = vsel %vm2592, %v1216, -inf
        %v2721 = vsel %vm2593, %v1217, -inf
        %v2722 = vsel %vm2594, %v1218, -inf
        %v2723 = vsel %vm2595, %v1219, -inf
        %v2724 = vsel %vm2596, %v1220, -inf
        %v2725 = vsel %vm2597, %v1221, -inf
        %v2726 = vsel %vm2598, %v1222, -inf
        %v2727 = vsel %vm2599, %v1223, -inf
        %v2728 = vsel %vm2600, %v1224, -inf
        %v2729 = vsel %vm2601, %v1225, -inf
        %v2730 = vsel %vm2602, %v1226, -inf
        %v2731 = vsel %vm2603, %v1227, -inf
        %v2732 = vsel %vm2604, %v1228, -inf
        %v2733 = vsel %vm2605, %v1229, -inf
        %v2734 = vsel %vm2606, %v1230, -inf
        %v2735 = vsel %vm2607, %v1231, -inf
        %v2736 = vsel %vm2608, %v1232, -inf
        %v2737 = vsel %vm2609, %v1233, -inf
        %v2738 = vsel %vm2610, %v1234, -inf
        %v2739 = vsel %vm2611, %v1235, -inf
        %v2740 = vsel %vm2612, %v1236, -inf
        %v2741 = vsel %vm2613, %v1237, -inf
        %v2742 = vsel %vm2614, %v1238, -inf
        %v2743 = vsel %vm2615, %v1239, -inf
        %v2744 = vsel %vm2616, %v1240, -inf
        %v2745 = vsel %vm2617, %v1241, -inf
        %v2746 = vsel %vm2618, %v1242, -inf
        %v2747 = vsel %vm2619, %v1243, -inf
        %v2748 = vsel %vm2620, %v1244, -inf
        %v2749 = vsel %vm2621, %v1245, -inf
        %v2750 = vsel %vm2622, %v1246, -inf
        %v2751 = vsel %vm2623, %v1247, -inf
        %v2752 = vsel %vm2624, %v1248, -inf
        %v2753 = vsel %vm2625, %v1249, -inf
        %v2754 = vsel %vm2626, %v1250, -inf
        %v2755 = vsel %vm2627, %v1251, -inf
        %v2756 = vsel %vm2628, %v1252, -inf
        %v2757 = vsel %vm2629, %v1253, -inf
        %v2758 = vsel %vm2630, %v1254, -inf
        %v2759 = vsel %vm2631, %v1255, -inf
        %v2760 = vsel %vm2632, %v1256, -inf
        %v2761 = vsel %vm2633, %v1257, -inf
        %v2762 = vsel %vm2634, %v1258, -inf
        %v2763 = vsel %vm2635, %v1259, -inf
        %v2764 = vsel %vm2636, %v1260, -inf
        %v2765 = vsel %vm2637, %v1261, -inf
        %v2766 = vsel %vm2638, %v1262, -inf
        %v2767 = vsel %vm2639, %v1263, -inf
        %v2768 = vsel %vm2640, %v1264, -inf
        %v2769 = vsel %vm2641, %v1265, -inf
        %v2770 = vsel %vm2642, %v1266, -inf
        %v2771 = vsel %vm2643, %v1267, -inf
        %v2772 = vsel %vm2644, %v1268, -inf
        %v2773 = vmax.f32 %v2645, %v2646
        %v2774 = vmax.f32 %v2773, %v2647
        %v2775 = vmax.f32 %v2774, %v2648
        %2776 = vmax.xlane.f32.xlu0 %v2775
        %v2777 = vpop.xlane.xlu0 %2776
        %v2778 = vmax.f32 %v2649, %v2650
        %v2779 = vmax.f32 %v2778, %v2651
        %v2780 = vmax.f32 %v2779, %v2652
        %2781 = vmax.xlane.f32.xlu0 %v2780
        %v2782 = vpop.xlane.xlu0 %2781
        %v2783 = vmax.f32 %v2653, %v2654
        %v2784 = vmax.f32 %v2783, %v2655
        %v2785 = vmax.f32 %v2784, %v2656
        %2786 = vmax.xlane.f32.xlu0 %v2785
        %v2787 = vpop.xlane.xlu0 %2786
        %v2788 = vmax.f32 %v2657, %v2658
        %v2789 = vmax.f32 %v2788, %v2659
        %v2790 = vmax.f32 %v2789, %v2660
        %2791 = vmax.xlane.f32.xlu0 %v2790
        %v2792 = vpop.xlane.xlu0 %2791
        %v2793 = vmax.f32 %v2661, %v2662
        %v2794 = vmax.f32 %v2793, %v2663
        %v2795 = vmax.f32 %v2794, %v2664
        %2796 = vmax.xlane.f32.xlu0 %v2795
        %v2797 = vpop.xlane.xlu0 %2796
        %v2798 = vmax.f32 %v2665, %v2666
        %v2799 = vmax.f32 %v2798, %v2667
        %v2800 = vmax.f32 %v2799, %v2668
        %2801 = vmax.xlane.f32.xlu0 %v2800
        %v2802 = vpop.xlane.xlu0 %2801
        %v2803 = vmax.f32 %v2669, %v2670
        %v2804 = vmax.f32 %v2803, %v2671
        %v2805 = vmax.f32 %v2804, %v2672
        %2806 = vmax.xlane.f32.xlu0 %v2805
        %v2807 = vpop.xlane.xlu0 %2806
        %v2808 = vmax.f32 %v2673, %v2674
        %v2809 = vmax.f32 %v2808, %v2675
        %v2810 = vmax.f32 %v2809, %v2676
        %2811 = vmax.xlane.f32.xlu0 %v2810
        %v2812 = vpop.xlane.xlu0 %2811
        %v2813 = vmax.f32 %v2677, %v2678
        %v2814 = vmax.f32 %v2813, %v2679
        %v2815 = vmax.f32 %v2814, %v2680
        %2816 = vmax.xlane.f32.xlu0 %v2815
        %v2817 = vpop.xlane.xlu0 %2816
        %v2818 = vmax.f32 %v2681, %v2682
        %v2819 = vmax.f32 %v2818, %v2683
        %v2820 = vmax.f32 %v2819, %v2684
        %2821 = vmax.xlane.f32.xlu0 %v2820
        %v2822 = vpop.xlane.xlu0 %2821
        %v2823 = vmax.f32 %v2685, %v2686
        %v2824 = vmax.f32 %v2823, %v2687
        %v2825 = vmax.f32 %v2824, %v2688
        %2826 = vmax.xlane.f32.xlu0 %v2825
        %v2827 = vpop.xlane.xlu0 %2826
        %v2828 = vmax.f32 %v2689, %v2690
        %v2829 = vmax.f32 %v2828, %v2691
        %v2830 = vmax.f32 %v2829, %v2692
        %2831 = vmax.xlane.f32.xlu0 %v2830
        %v2832 = vpop.xlane.xlu0 %2831
        %v2833 = vmax.f32 %v2693, %v2694
        %v2834 = vmax.f32 %v2833, %v2695
        %v2835 = vmax.f32 %v2834, %v2696
        %2836 = vmax.xlane.f32.xlu0 %v2835
        %v2837 = vpop.xlane.xlu0 %2836
        %v2838 = vmax.f32 %v2697, %v2698
        %v2839 = vmax.f32 %v2838, %v2699
        %v2840 = vmax.f32 %v2839, %v2700
        %2841 = vmax.xlane.f32.xlu0 %v2840
        %v2842 = vpop.xlane.xlu0 %2841
        %v2843 = vmax.f32 %v2701, %v2702
        %v2844 = vmax.f32 %v2843, %v2703
        %v2845 = vmax.f32 %v2844, %v2704
        %2846 = vmax.xlane.f32.xlu0 %v2845
        %v2847 = vpop.xlane.xlu0 %2846
        %v2848 = vmax.f32 %v2705, %v2706
        %v2849 = vmax.f32 %v2848, %v2707
        %v2850 = vmax.f32 %v2849, %v2708
        %2851 = vmax.xlane.f32.xlu0 %v2850
        %v2852 = vpop.xlane.xlu0 %2851
        %v2853 = vmax.f32 %v2709, %v2710
        %v2854 = vmax.f32 %v2853, %v2711
        %v2855 = vmax.f32 %v2854, %v2712
        %2856 = vmax.xlane.f32.xlu0 %v2855
        %v2857 = vpop.xlane.xlu0 %2856
        %v2858 = vmax.f32 %v2713, %v2714
        %v2859 = vmax.f32 %v2858, %v2715
        %v2860 = vmax.f32 %v2859, %v2716
        %2861 = vmax.xlane.f32.xlu0 %v2860
        %v2862 = vpop.xlane.xlu0 %2861
        %v2863 = vmax.f32 %v2717, %v2718
        %v2864 = vmax.f32 %v2863, %v2719
        %v2865 = vmax.f32 %v2864, %v2720
        %2866 = vmax.xlane.f32.xlu0 %v2865
        %v2867 = vpop.xlane.xlu0 %2866
        %v2868 = vmax.f32 %v2721, %v2722
        %v2869 = vmax.f32 %v2868, %v2723
        %v2870 = vmax.f32 %v2869, %v2724
        %2871 = vmax.xlane.f32.xlu0 %v2870
        %v2872 = vpop.xlane.xlu0 %2871
        %v2873 = vmax.f32 %v2725, %v2726
        %v2874 = vmax.f32 %v2873, %v2727
        %v2875 = vmax.f32 %v2874, %v2728
        %2876 = vmax.xlane.f32.xlu0 %v2875
        %v2877 = vpop.xlane.xlu0 %2876
        %v2878 = vmax.f32 %v2729, %v2730
        %v2879 = vmax.f32 %v2878, %v2731
        %v2880 = vmax.f32 %v2879, %v2732
        %2881 = vmax.xlane.f32.xlu0 %v2880
        %v2882 = vpop.xlane.xlu0 %2881
        %v2883 = vmax.f32 %v2733, %v2734
        %v2884 = vmax.f32 %v2883, %v2735
        %v2885 = vmax.f32 %v2884, %v2736
        %2886 = vmax.xlane.f32.xlu0 %v2885
        %v2887 = vpop.xlane.xlu0 %2886
        %v2888 = vmax.f32 %v2737, %v2738
        %v2889 = vmax.f32 %v2888, %v2739
        %v2890 = vmax.f32 %v2889, %v2740
        %2891 = vmax.xlane.f32.xlu0 %v2890
        %v2892 = vpop.xlane.xlu0 %2891
        %v2893 = vmax.f32 %v2741, %v2742
        %v2894 = vmax.f32 %v2893, %v2743
        %v2895 = vmax.f32 %v2894, %v2744
        %2896 = vmax.xlane.f32.xlu0 %v2895
        %v2897 = vpop.xlane.xlu0 %2896
        %v2898 = vmax.f32 %v2745, %v2746
        %v2899 = vmax.f32 %v2898, %v2747
        %v2900 = vmax.f32 %v2899, %v2748
        %2901 = vmax.xlane.f32.xlu0 %v2900
        %v2902 = vpop.xlane.xlu0 %2901
        %v2903 = vmax.f32 %v2749, %v2750
        %v2904 = vmax.f32 %v2903, %v2751
        %v2905 = vmax.f32 %v2904, %v2752
        %2906 = vmax.xlane.f32.xlu0 %v2905
        %v2907 = vpop.xlane.xlu0 %2906
        %v2908 = vmax.f32 %v2753, %v2754
        %v2909 = vmax.f32 %v2908, %v2755
        %v2910 = vmax.f32 %v2909, %v2756
        %2911 = vmax.xlane.f32.xlu0 %v2910
        %v2912 = vpop.xlane.xlu0 %2911
        %v2913 = vmax.f32 %v2757, %v2758
        %v2914 = vmax.f32 %v2913, %v2759
        %v2915 = vmax.f32 %v2914, %v2760
        %2916 = vmax.xlane.f32.xlu0 %v2915
        %v2917 = vpop.xlane.xlu0 %2916
        %v2918 = vmax.f32 %v2761, %v2762
        %v2919 = vmax.f32 %v2918, %v2763
        %v2920 = vmax.f32 %v2919, %v2764
        %2921 = vmax.xlane.f32.xlu0 %v2920
        %v2922 = vpop.xlane.xlu0 %2921
        %v2923 = vmax.f32 %v2765, %v2766
        %v2924 = vmax.f32 %v2923, %v2767
        %v2925 = vmax.f32 %v2924, %v2768
        %2926 = vmax.xlane.f32.xlu0 %v2925
        %v2927 = vpop.xlane.xlu0 %2926
        %v2928 = vmax.f32 %v2769, %v2770
        %v2929 = vmax.f32 %v2928, %v2771
        %v2930 = vmax.f32 %v2929, %v2772
        %2931 = vmax.xlane.f32.xlu0 %v2930
        %v2932 = vpop.xlane.xlu0 %2931
        %vm2933 = vcmp.lt.f32.partialorder %v1141, %v2777
        %vm2934 = vcmp.lt.f32.partialorder %v1142, %v2777
        %vm2935 = vcmp.lt.f32.partialorder %v1143, %v2777
        %vm2936 = vcmp.lt.f32.partialorder %v1144, %v2777
        %vm2937 = vcmp.lt.f32.partialorder %v1145, %v2782
        %vm2938 = vcmp.lt.f32.partialorder %v1146, %v2782
        %vm2939 = vcmp.lt.f32.partialorder %v1147, %v2782
        %vm2940 = vcmp.lt.f32.partialorder %v1148, %v2782
        %vm2941 = vcmp.lt.f32.partialorder %v1149, %v2787
        %vm2942 = vcmp.lt.f32.partialorder %v1150, %v2787
        %vm2943 = vcmp.lt.f32.partialorder %v1151, %v2787
        %vm2944 = vcmp.lt.f32.partialorder %v1152, %v2787
        %vm2945 = vcmp.lt.f32.partialorder %v1153, %v2792
        %vm2946 = vcmp.lt.f32.partialorder %v1154, %v2792
        %vm2947 = vcmp.lt.f32.partialorder %v1155, %v2792
        %vm2948 = vcmp.lt.f32.partialorder %v1156, %v2792
        %vm2949 = vcmp.lt.f32.partialorder %v1157, %v2797
        %vm2950 = vcmp.lt.f32.partialorder %v1158, %v2797
        %vm2951 = vcmp.lt.f32.partialorder %v1159, %v2797
        %vm2952 = vcmp.lt.f32.partialorder %v1160, %v2797
        %vm2953 = vcmp.lt.f32.partialorder %v1161, %v2802
        %vm2954 = vcmp.lt.f32.partialorder %v1162, %v2802
        %vm2955 = vcmp.lt.f32.partialorder %v1163, %v2802
        %vm2956 = vcmp.lt.f32.partialorder %v1164, %v2802
        %vm2957 = vcmp.lt.f32.partialorder %v1165, %v2807
        %vm2958 = vcmp.lt.f32.partialorder %v1166, %v2807
        %vm2959 = vcmp.lt.f32.partialorder %v1167, %v2807
        %vm2960 = vcmp.lt.f32.partialorder %v1168, %v2807
        %vm2961 = vcmp.lt.f32.partialorder %v1169, %v2812
        %vm2962 = vcmp.lt.f32.partialorder %v1170, %v2812
        %vm2963 = vcmp.lt.f32.partialorder %v1171, %v2812
        %vm2964 = vcmp.lt.f32.partialorder %v1172, %v2812
        %vm2965 = vcmp.lt.f32.partialorder %v1173, %v2817
        %vm2966 = vcmp.lt.f32.partialorder %v1174, %v2817
        %vm2967 = vcmp.lt.f32.partialorder %v1175, %v2817
        %vm2968 = vcmp.lt.f32.partialorder %v1176, %v2817
        %vm2969 = vcmp.lt.f32.partialorder %v1177, %v2822
        %vm2970 = vcmp.lt.f32.partialorder %v1178, %v2822
        %vm2971 = vcmp.lt.f32.partialorder %v1179, %v2822
        %vm2972 = vcmp.lt.f32.partialorder %v1180, %v2822
        %vm2973 = vcmp.lt.f32.partialorder %v1181, %v2827
        %vm2974 = vcmp.lt.f32.partialorder %v1182, %v2827
        %vm2975 = vcmp.lt.f32.partialorder %v1183, %v2827
        %vm2976 = vcmp.lt.f32.partialorder %v1184, %v2827
        %vm2977 = vcmp.lt.f32.partialorder %v1185, %v2832
        %vm2978 = vcmp.lt.f32.partialorder %v1186, %v2832
        %vm2979 = vcmp.lt.f32.partialorder %v1187, %v2832
        %vm2980 = vcmp.lt.f32.partialorder %v1188, %v2832
        %vm2981 = vcmp.lt.f32.partialorder %v1189, %v2837
        %vm2982 = vcmp.lt.f32.partialorder %v1190, %v2837
        %vm2983 = vcmp.lt.f32.partialorder %v1191, %v2837
        %vm2984 = vcmp.lt.f32.partialorder %v1192, %v2837
        %vm2985 = vcmp.lt.f32.partialorder %v1193, %v2842
        %vm2986 = vcmp.lt.f32.partialorder %v1194, %v2842
        %vm2987 = vcmp.lt.f32.partialorder %v1195, %v2842
        %vm2988 = vcmp.lt.f32.partialorder %v1196, %v2842
        %vm2989 = vcmp.lt.f32.partialorder %v1197, %v2847
        %vm2990 = vcmp.lt.f32.partialorder %v1198, %v2847
        %vm2991 = vcmp.lt.f32.partialorder %v1199, %v2847
        %vm2992 = vcmp.lt.f32.partialorder %v1200, %v2847
        %vm2993 = vcmp.lt.f32.partialorder %v1201, %v2852
        %vm2994 = vcmp.lt.f32.partialorder %v1202, %v2852
        %vm2995 = vcmp.lt.f32.partialorder %v1203, %v2852
        %vm2996 = vcmp.lt.f32.partialorder %v1204, %v2852
        %vm2997 = vcmp.lt.f32.partialorder %v1205, %v2857
        %vm2998 = vcmp.lt.f32.partialorder %v1206, %v2857
        %vm2999 = vcmp.lt.f32.partialorder %v1207, %v2857
        %vm3000 = vcmp.lt.f32.partialorder %v1208, %v2857
        %vm3001 = vcmp.lt.f32.partialorder %v1209, %v2862
        %vm3002 = vcmp.lt.f32.partialorder %v1210, %v2862
        %vm3003 = vcmp.lt.f32.partialorder %v1211, %v2862
        %vm3004 = vcmp.lt.f32.partialorder %v1212, %v2862
        %vm3005 = vcmp.lt.f32.partialorder %v1213, %v2867
        %vm3006 = vcmp.lt.f32.partialorder %v1214, %v2867
        %vm3007 = vcmp.lt.f32.partialorder %v1215, %v2867
        %vm3008 = vcmp.lt.f32.partialorder %v1216, %v2867
        %vm3009 = vcmp.lt.f32.partialorder %v1217, %v2872
        %vm3010 = vcmp.lt.f32.partialorder %v1218, %v2872
        %vm3011 = vcmp.lt.f32.partialorder %v1219, %v2872
        %vm3012 = vcmp.lt.f32.partialorder %v1220, %v2872
        %vm3013 = vcmp.lt.f32.partialorder %v1221, %v2877
        %vm3014 = vcmp.lt.f32.partialorder %v1222, %v2877
        %vm3015 = vcmp.lt.f32.partialorder %v1223, %v2877
        %vm3016 = vcmp.lt.f32.partialorder %v1224, %v2877
        %vm3017 = vcmp.lt.f32.partialorder %v1225, %v2882
        %vm3018 = vcmp.lt.f32.partialorder %v1226, %v2882
        %vm3019 = vcmp.lt.f32.partialorder %v1227, %v2882
        %vm3020 = vcmp.lt.f32.partialorder %v1228, %v2882
        %vm3021 = vcmp.lt.f32.partialorder %v1229, %v2887
        %vm3022 = vcmp.lt.f32.partialorder %v1230, %v2887
        %vm3023 = vcmp.lt.f32.partialorder %v1231, %v2887
        %vm3024 = vcmp.lt.f32.partialorder %v1232, %v2887
        %vm3025 = vcmp.lt.f32.partialorder %v1233, %v2892
        %vm3026 = vcmp.lt.f32.partialorder %v1234, %v2892
        %vm3027 = vcmp.lt.f32.partialorder %v1235, %v2892
        %vm3028 = vcmp.lt.f32.partialorder %v1236, %v2892
        %vm3029 = vcmp.lt.f32.partialorder %v1237, %v2897
        %vm3030 = vcmp.lt.f32.partialorder %v1238, %v2897
        %vm3031 = vcmp.lt.f32.partialorder %v1239, %v2897
        %vm3032 = vcmp.lt.f32.partialorder %v1240, %v2897
        %vm3033 = vcmp.lt.f32.partialorder %v1241, %v2902
        %vm3034 = vcmp.lt.f32.partialorder %v1242, %v2902
        %vm3035 = vcmp.lt.f32.partialorder %v1243, %v2902
        %vm3036 = vcmp.lt.f32.partialorder %v1244, %v2902
        %vm3037 = vcmp.lt.f32.partialorder %v1245, %v2907
        %vm3038 = vcmp.lt.f32.partialorder %v1246, %v2907
        %vm3039 = vcmp.lt.f32.partialorder %v1247, %v2907
        %vm3040 = vcmp.lt.f32.partialorder %v1248, %v2907
        %vm3041 = vcmp.lt.f32.partialorder %v1249, %v2912
        %vm3042 = vcmp.lt.f32.partialorder %v1250, %v2912
        %vm3043 = vcmp.lt.f32.partialorder %v1251, %v2912
        %vm3044 = vcmp.lt.f32.partialorder %v1252, %v2912
        %vm3045 = vcmp.lt.f32.partialorder %v1253, %v2917
        %vm3046 = vcmp.lt.f32.partialorder %v1254, %v2917
        %vm3047 = vcmp.lt.f32.partialorder %v1255, %v2917
        %vm3048 = vcmp.lt.f32.partialorder %v1256, %v2917
        %vm3049 = vcmp.lt.f32.partialorder %v1257, %v2922
        %vm3050 = vcmp.lt.f32.partialorder %v1258, %v2922
        %vm3051 = vcmp.lt.f32.partialorder %v1259, %v2922
        %vm3052 = vcmp.lt.f32.partialorder %v1260, %v2922
        %vm3053 = vcmp.lt.f32.partialorder %v1261, %v2927
        %vm3054 = vcmp.lt.f32.partialorder %v1262, %v2927
        %vm3055 = vcmp.lt.f32.partialorder %v1263, %v2927
        %vm3056 = vcmp.lt.f32.partialorder %v1264, %v2927
        %vm3057 = vcmp.lt.f32.partialorder %v1265, %v2932
        %vm3058 = vcmp.lt.f32.partialorder %v1266, %v2932
        %vm3059 = vcmp.lt.f32.partialorder %v1267, %v2932
        %vm3060 = vcmp.lt.f32.partialorder %v1268, %v2932
        %v3061 = vsel %vm2933, %v1141, -inf
        %v3062 = vsel %vm2934, %v1142, -inf
        %v3063 = vsel %vm2935, %v1143, -inf
        %v3064 = vsel %vm2936, %v1144, -inf
        %v3065 = vsel %vm2937, %v1145, -inf
        %v3066 = vsel %vm2938, %v1146, -inf
        %v3067 = vsel %vm2939, %v1147, -inf
        %v3068 = vsel %vm2940, %v1148, -inf
        %v3069 = vsel %vm2941, %v1149, -inf
        %v3070 = vsel %vm2942, %v1150, -inf
        %v3071 = vsel %vm2943, %v1151, -inf
        %v3072 = vsel %vm2944, %v1152, -inf
        %v3073 = vsel %vm2945, %v1153, -inf
        %v3074 = vsel %vm2946, %v1154, -inf
        %v3075 = vsel %vm2947, %v1155, -inf
        %v3076 = vsel %vm2948, %v1156, -inf
        %v3077 = vsel %vm2949, %v1157, -inf
        %v3078 = vsel %vm2950, %v1158, -inf
        %v3079 = vsel %vm2951, %v1159, -inf
        %v3080 = vsel %vm2952, %v1160, -inf
        %v3081 = vsel %vm2953, %v1161, -inf
        %v3082 = vsel %vm2954, %v1162, -inf
        %v3083 = vsel %vm2955, %v1163, -inf
        %v3084 = vsel %vm2956, %v1164, -inf
        %v3085 = vsel %vm2957, %v1165, -inf
        %v3086 = vsel %vm2958, %v1166, -inf
        %v3087 = vsel %vm2959, %v1167, -inf
        %v3088 = vsel %vm2960, %v1168, -inf
        %v3089 = vsel %vm2961, %v1169, -inf
        %v3090 = vsel %vm2962, %v1170, -inf
        %v3091 = vsel %vm2963, %v1171, -inf
        %v3092 = vsel %vm2964, %v1172, -inf
        %v3093 = vsel %vm2965, %v1173, -inf
        %v3094 = vsel %vm2966, %v1174, -inf
        %v3095 = vsel %vm2967, %v1175, -inf
        %v3096 = vsel %vm2968, %v1176, -inf
        %v3097 = vsel %vm2969, %v1177, -inf
        %v3098 = vsel %vm2970, %v1178, -inf
        %v3099 = vsel %vm2971, %v1179, -inf
        %v3100 = vsel %vm2972, %v1180, -inf
        %v3101 = vsel %vm2973, %v1181, -inf
        %v3102 = vsel %vm2974, %v1182, -inf
        %v3103 = vsel %vm2975, %v1183, -inf
        %v3104 = vsel %vm2976, %v1184, -inf
        %v3105 = vsel %vm2977, %v1185, -inf
        %v3106 = vsel %vm2978, %v1186, -inf
        %v3107 = vsel %vm2979, %v1187, -inf
        %v3108 = vsel %vm2980, %v1188, -inf
        %v3109 = vsel %vm2981, %v1189, -inf
        %v3110 = vsel %vm2982, %v1190, -inf
        %v3111 = vsel %vm2983, %v1191, -inf
        %v3112 = vsel %vm2984, %v1192, -inf
        %v3113 = vsel %vm2985, %v1193, -inf
        %v3114 = vsel %vm2986, %v1194, -inf
        %v3115 = vsel %vm2987, %v1195, -inf
        %v3116 = vsel %vm2988, %v1196, -inf
        %v3117 = vsel %vm2989, %v1197, -inf
        %v3118 = vsel %vm2990, %v1198, -inf
        %v3119 = vsel %vm2991, %v1199, -inf
        %v3120 = vsel %vm2992, %v1200, -inf
        %v3121 = vsel %vm2993, %v1201, -inf
        %v3122 = vsel %vm2994, %v1202, -inf
        %v3123 = vsel %vm2995, %v1203, -inf
        %v3124 = vsel %vm2996, %v1204, -inf
        %v3125 = vsel %vm2997, %v1205, -inf
        %v3126 = vsel %vm2998, %v1206, -inf
        %v3127 = vsel %vm2999, %v1207, -inf
        %v3128 = vsel %vm3000, %v1208, -inf
        %v3129 = vsel %vm3001, %v1209, -inf
        %v3130 = vsel %vm3002, %v1210, -inf
        %v3131 = vsel %vm3003, %v1211, -inf
        %v3132 = vsel %vm3004, %v1212, -inf
        %v3133 = vsel %vm3005, %v1213, -inf
        %v3134 = vsel %vm3006, %v1214, -inf
        %v3135 = vsel %vm3007, %v1215, -inf
        %v3136 = vsel %vm3008, %v1216, -inf
        %v3137 = vsel %vm3009, %v1217, -inf
        %v3138 = vsel %vm3010, %v1218, -inf
        %v3139 = vsel %vm3011, %v1219, -inf
        %v3140 = vsel %vm3012, %v1220, -inf
        %v3141 = vsel %vm3013, %v1221, -inf
        %v3142 = vsel %vm3014, %v1222, -inf
        %v3143 = vsel %vm3015, %v1223, -inf
        %v3144 = vsel %vm3016, %v1224, -inf
        %v3145 = vsel %vm3017, %v1225, -inf
        %v3146 = vsel %vm3018, %v1226, -inf
        %v3147 = vsel %vm3019, %v1227, -inf
        %v3148 = vsel %vm3020, %v1228, -inf
        %v3149 = vsel %vm3021, %v1229, -inf
        %v3150 = vsel %vm3022, %v1230, -inf
        %v3151 = vsel %vm3023, %v1231, -inf
        %v3152 = vsel %vm3024, %v1232, -inf
        %v3153 = vsel %vm3025, %v1233, -inf
        %v3154 = vsel %vm3026, %v1234, -inf
        %v3155 = vsel %vm3027, %v1235, -inf
        %v3156 = vsel %vm3028, %v1236, -inf
        %v3157 = vsel %vm3029, %v1237, -inf
        %v3158 = vsel %vm3030, %v1238, -inf
        %v3159 = vsel %vm3031, %v1239, -inf
        %v3160 = vsel %vm3032, %v1240, -inf
        %v3161 = vsel %vm3033, %v1241, -inf
        %v3162 = vsel %vm3034, %v1242, -inf
        %v3163 = vsel %vm3035, %v1243, -inf
        %v3164 = vsel %vm3036, %v1244, -inf
        %v3165 = vsel %vm3037, %v1245, -inf
        %v3166 = vsel %vm3038, %v1246, -inf
        %v3167 = vsel %vm3039, %v1247, -inf
        %v3168 = vsel %vm3040, %v1248, -inf
        %v3169 = vsel %vm3041, %v1249, -inf
        %v3170 = vsel %vm3042, %v1250, -inf
        %v3171 = vsel %vm3043, %v1251, -inf
        %v3172 = vsel %vm3044, %v1252, -inf
        %v3173 = vsel %vm3045, %v1253, -inf
        %v3174 = vsel %vm3046, %v1254, -inf
        %v3175 = vsel %vm3047, %v1255, -inf
        %v3176 = vsel %vm3048, %v1256, -inf
        %v3177 = vsel %vm3049, %v1257, -inf
        %v3178 = vsel %vm3050, %v1258, -inf
        %v3179 = vsel %vm3051, %v1259, -inf
        %v3180 = vsel %vm3052, %v1260, -inf
        %v3181 = vsel %vm3053, %v1261, -inf
        %v3182 = vsel %vm3054, %v1262, -inf
        %v3183 = vsel %vm3055, %v1263, -inf
        %v3184 = vsel %vm3056, %v1264, -inf
        %v3185 = vsel %vm3057, %v1265, -inf
        %v3186 = vsel %vm3058, %v1266, -inf
        %v3187 = vsel %vm3059, %v1267, -inf
        %v3188 = vsel %vm3060, %v1268, -inf
        %v3189 = vmax.f32 %v3061, %v3062
        %v3190 = vmax.f32 %v3189, %v3063
        %v3191 = vmax.f32 %v3190, %v3064
        %3192 = vmax.xlane.f32.xlu0 %v3191
        %v3193 = vpop.xlane.xlu0 %3192
        %v3194 = vmax.f32 %v3065, %v3066
        %v3195 = vmax.f32 %v3194, %v3067
        %v3196 = vmax.f32 %v3195, %v3068
        %3197 = vmax.xlane.f32.xlu0 %v3196
        %v3198 = vpop.xlane.xlu0 %3197
        %v3199 = vmax.f32 %v3069, %v3070
        %v3200 = vmax.f32 %v3199, %v3071
        %v3201 = vmax.f32 %v3200, %v3072
        %3202 = vmax.xlane.f32.xlu0 %v3201
        %v3203 = vpop.xlane.xlu0 %3202
        %v3204 = vmax.f32 %v3073, %v3074
        %v3205 = vmax.f32 %v3204, %v3075
        %v3206 = vmax.f32 %v3205, %v3076
        %3207 = vmax.xlane.f32.xlu0 %v3206
        %v3208 = vpop.xlane.xlu0 %3207
        %v3209 = vmax.f32 %v3077, %v3078
        %v3210 = vmax.f32 %v3209, %v3079
        %v3211 = vmax.f32 %v3210, %v3080
        %3212 = vmax.xlane.f32.xlu0 %v3211
        %v3213 = vpop.xlane.xlu0 %3212
        %v3214 = vmax.f32 %v3081, %v3082
        %v3215 = vmax.f32 %v3214, %v3083
        %v3216 = vmax.f32 %v3215, %v3084
        %3217 = vmax.xlane.f32.xlu0 %v3216
        %v3218 = vpop.xlane.xlu0 %3217
        %v3219 = vmax.f32 %v3085, %v3086
        %v3220 = vmax.f32 %v3219, %v3087
        %v3221 = vmax.f32 %v3220, %v3088
        %3222 = vmax.xlane.f32.xlu0 %v3221
        %v3223 = vpop.xlane.xlu0 %3222
        %v3224 = vmax.f32 %v3089, %v3090
        %v3225 = vmax.f32 %v3224, %v3091
        %v3226 = vmax.f32 %v3225, %v3092
        %3227 = vmax.xlane.f32.xlu0 %v3226
        %v3228 = vpop.xlane.xlu0 %3227
        %v3229 = vmax.f32 %v3093, %v3094
        %v3230 = vmax.f32 %v3229, %v3095
        %v3231 = vmax.f32 %v3230, %v3096
        %3232 = vmax.xlane.f32.xlu0 %v3231
        %v3233 = vpop.xlane.xlu0 %3232
        %v3234 = vmax.f32 %v3097, %v3098
        %v3235 = vmax.f32 %v3234, %v3099
        %v3236 = vmax.f32 %v3235, %v3100
        %3237 = vmax.xlane.f32.xlu0 %v3236
        %v3238 = vpop.xlane.xlu0 %3237
        %v3239 = vmax.f32 %v3101, %v3102
        %v3240 = vmax.f32 %v3239, %v3103
        %v3241 = vmax.f32 %v3240, %v3104
        %3242 = vmax.xlane.f32.xlu0 %v3241
        %v3243 = vpop.xlane.xlu0 %3242
        %v3244 = vmax.f32 %v3105, %v3106
        %v3245 = vmax.f32 %v3244, %v3107
        %v3246 = vmax.f32 %v3245, %v3108
        %3247 = vmax.xlane.f32.xlu0 %v3246
        %v3248 = vpop.xlane.xlu0 %3247
        %v3249 = vmax.f32 %v3109, %v3110
        %v3250 = vmax.f32 %v3249, %v3111
        %v3251 = vmax.f32 %v3250, %v3112
        %3252 = vmax.xlane.f32.xlu0 %v3251
        %v3253 = vpop.xlane.xlu0 %3252
        %v3254 = vmax.f32 %v3113, %v3114
        %v3255 = vmax.f32 %v3254, %v3115
        %v3256 = vmax.f32 %v3255, %v3116
        %3257 = vmax.xlane.f32.xlu0 %v3256
        %v3258 = vpop.xlane.xlu0 %3257
        %v3259 = vmax.f32 %v3117, %v3118
        %v3260 = vmax.f32 %v3259, %v3119
        %v3261 = vmax.f32 %v3260, %v3120
        %3262 = vmax.xlane.f32.xlu0 %v3261
        %v3263 = vpop.xlane.xlu0 %3262
        %v3264 = vmax.f32 %v3121, %v3122
        %v3265 = vmax.f32 %v3264, %v3123
        %v3266 = vmax.f32 %v3265, %v3124
        %3267 = vmax.xlane.f32.xlu0 %v3266
        %v3268 = vpop.xlane.xlu0 %3267
        %v3269 = vmax.f32 %v3125, %v3126
        %v3270 = vmax.f32 %v3269, %v3127
        %v3271 = vmax.f32 %v3270, %v3128
        %3272 = vmax.xlane.f32.xlu0 %v3271
        %v3273 = vpop.xlane.xlu0 %3272
        %v3274 = vmax.f32 %v3129, %v3130
        %v3275 = vmax.f32 %v3274, %v3131
        %v3276 = vmax.f32 %v3275, %v3132
        %3277 = vmax.xlane.f32.xlu0 %v3276
        %v3278 = vpop.xlane.xlu0 %3277
        %v3279 = vmax.f32 %v3133, %v3134
        %v3280 = vmax.f32 %v3279, %v3135
        %v3281 = vmax.f32 %v3280, %v3136
        %3282 = vmax.xlane.f32.xlu0 %v3281
        %v3283 = vpop.xlane.xlu0 %3282
        %v3284 = vmax.f32 %v3137, %v3138
        %v3285 = vmax.f32 %v3284, %v3139
        %v3286 = vmax.f32 %v3285, %v3140
        %3287 = vmax.xlane.f32.xlu0 %v3286
        %v3288 = vpop.xlane.xlu0 %3287
        %v3289 = vmax.f32 %v3141, %v3142
        %v3290 = vmax.f32 %v3289, %v3143
        %v3291 = vmax.f32 %v3290, %v3144
        %3292 = vmax.xlane.f32.xlu0 %v3291
        %v3293 = vpop.xlane.xlu0 %3292
        %v3294 = vmax.f32 %v3145, %v3146
        %v3295 = vmax.f32 %v3294, %v3147
        %v3296 = vmax.f32 %v3295, %v3148
        %3297 = vmax.xlane.f32.xlu0 %v3296
        %v3298 = vpop.xlane.xlu0 %3297
        %v3299 = vmax.f32 %v3149, %v3150
        %v3300 = vmax.f32 %v3299, %v3151
        %v3301 = vmax.f32 %v3300, %v3152
        %3302 = vmax.xlane.f32.xlu0 %v3301
        %v3303 = vpop.xlane.xlu0 %3302
        %v3304 = vmax.f32 %v3153, %v3154
        %v3305 = vmax.f32 %v3304, %v3155
        %v3306 = vmax.f32 %v3305, %v3156
        %3307 = vmax.xlane.f32.xlu0 %v3306
        %v3308 = vpop.xlane.xlu0 %3307
        %v3309 = vmax.f32 %v3157, %v3158
        %v3310 = vmax.f32 %v3309, %v3159
        %v3311 = vmax.f32 %v3310, %v3160
        %3312 = vmax.xlane.f32.xlu0 %v3311
        %v3313 = vpop.xlane.xlu0 %3312
        %v3314 = vmax.f32 %v3161, %v3162
        %v3315 = vmax.f32 %v3314, %v3163
        %v3316 = vmax.f32 %v3315, %v3164
        %3317 = vmax.xlane.f32.xlu0 %v3316
        %v3318 = vpop.xlane.xlu0 %3317
        %v3319 = vmax.f32 %v3165, %v3166
        %v3320 = vmax.f32 %v3319, %v3167
        %v3321 = vmax.f32 %v3320, %v3168
        %3322 = vmax.xlane.f32.xlu0 %v3321
        %v3323 = vpop.xlane.xlu0 %3322
        %v3324 = vmax.f32 %v3169, %v3170
        %v3325 = vmax.f32 %v3324, %v3171
        %v3326 = vmax.f32 %v3325, %v3172
        %3327 = vmax.xlane.f32.xlu0 %v3326
        %v3328 = vpop.xlane.xlu0 %3327
        %v3329 = vmax.f32 %v3173, %v3174
        %v3330 = vmax.f32 %v3329, %v3175
        %v3331 = vmax.f32 %v3330, %v3176
        %3332 = vmax.xlane.f32.xlu0 %v3331
        %v3333 = vpop.xlane.xlu0 %3332
        %v3334 = vmax.f32 %v3177, %v3178
        %v3335 = vmax.f32 %v3334, %v3179
        %v3336 = vmax.f32 %v3335, %v3180
        %3337 = vmax.xlane.f32.xlu0 %v3336
        %v3338 = vpop.xlane.xlu0 %3337
        %v3339 = vmax.f32 %v3181, %v3182
        %v3340 = vmax.f32 %v3339, %v3183
        %v3341 = vmax.f32 %v3340, %v3184
        %3342 = vmax.xlane.f32.xlu0 %v3341
        %v3343 = vpop.xlane.xlu0 %3342
        %v3344 = vmax.f32 %v3185, %v3186
        %v3345 = vmax.f32 %v3344, %v3187
        %v3346 = vmax.f32 %v3345, %v3188
        %3347 = vmax.xlane.f32.xlu0 %v3346
        %v3348 = vpop.xlane.xlu0 %3347
        %vm3349 = vcmp.lt.f32.partialorder %v1141, %v3193
        %vm3350 = vcmp.lt.f32.partialorder %v1142, %v3193
        %vm3351 = vcmp.lt.f32.partialorder %v1143, %v3193
        %vm3352 = vcmp.lt.f32.partialorder %v1144, %v3193
        %vm3353 = vcmp.lt.f32.partialorder %v1145, %v3198
        %vm3354 = vcmp.lt.f32.partialorder %v1146, %v3198
        %vm3355 = vcmp.lt.f32.partialorder %v1147, %v3198
        %vm3356 = vcmp.lt.f32.partialorder %v1148, %v3198
        %vm3357 = vcmp.lt.f32.partialorder %v1149, %v3203
        %vm3358 = vcmp.lt.f32.partialorder %v1150, %v3203
        %vm3359 = vcmp.lt.f32.partialorder %v1151, %v3203
        %vm3360 = vcmp.lt.f32.partialorder %v1152, %v3203
        %vm3361 = vcmp.lt.f32.partialorder %v1153, %v3208
        %vm3362 = vcmp.lt.f32.partialorder %v1154, %v3208
        %vm3363 = vcmp.lt.f32.partialorder %v1155, %v3208
        %vm3364 = vcmp.lt.f32.partialorder %v1156, %v3208
        %vm3365 = vcmp.lt.f32.partialorder %v1157, %v3213
        %vm3366 = vcmp.lt.f32.partialorder %v1158, %v3213
        %vm3367 = vcmp.lt.f32.partialorder %v1159, %v3213
        %vm3368 = vcmp.lt.f32.partialorder %v1160, %v3213
        %vm3369 = vcmp.lt.f32.partialorder %v1161, %v3218
        %vm3370 = vcmp.lt.f32.partialorder %v1162, %v3218
        %vm3371 = vcmp.lt.f32.partialorder %v1163, %v3218
        %vm3372 = vcmp.lt.f32.partialorder %v1164, %v3218
        %vm3373 = vcmp.lt.f32.partialorder %v1165, %v3223
        %vm3374 = vcmp.lt.f32.partialorder %v1166, %v3223
        %vm3375 = vcmp.lt.f32.partialorder %v1167, %v3223
        %vm3376 = vcmp.lt.f32.partialorder %v1168, %v3223
        %vm3377 = vcmp.lt.f32.partialorder %v1169, %v3228
        %vm3378 = vcmp.lt.f32.partialorder %v1170, %v3228
        %vm3379 = vcmp.lt.f32.partialorder %v1171, %v3228
        %vm3380 = vcmp.lt.f32.partialorder %v1172, %v3228
        %vm3381 = vcmp.lt.f32.partialorder %v1173, %v3233
        %vm3382 = vcmp.lt.f32.partialorder %v1174, %v3233
        %vm3383 = vcmp.lt.f32.partialorder %v1175, %v3233
        %vm3384 = vcmp.lt.f32.partialorder %v1176, %v3233
        %vm3385 = vcmp.lt.f32.partialorder %v1177, %v3238
        %vm3386 = vcmp.lt.f32.partialorder %v1178, %v3238
        %vm3387 = vcmp.lt.f32.partialorder %v1179, %v3238
        %vm3388 = vcmp.lt.f32.partialorder %v1180, %v3238
        %vm3389 = vcmp.lt.f32.partialorder %v1181, %v3243
        %vm3390 = vcmp.lt.f32.partialorder %v1182, %v3243
        %vm3391 = vcmp.lt.f32.partialorder %v1183, %v3243
        %vm3392 = vcmp.lt.f32.partialorder %v1184, %v3243
        %vm3393 = vcmp.lt.f32.partialorder %v1185, %v3248
        %vm3394 = vcmp.lt.f32.partialorder %v1186, %v3248
        %vm3395 = vcmp.lt.f32.partialorder %v1187, %v3248
        %vm3396 = vcmp.lt.f32.partialorder %v1188, %v3248
        %vm3397 = vcmp.lt.f32.partialorder %v1189, %v3253
        %vm3398 = vcmp.lt.f32.partialorder %v1190, %v3253
        %vm3399 = vcmp.lt.f32.partialorder %v1191, %v3253
        %vm3400 = vcmp.lt.f32.partialorder %v1192, %v3253
        %vm3401 = vcmp.lt.f32.partialorder %v1193, %v3258
        %vm3402 = vcmp.lt.f32.partialorder %v1194, %v3258
        %vm3403 = vcmp.lt.f32.partialorder %v1195, %v3258
        %vm3404 = vcmp.lt.f32.partialorder %v1196, %v3258
        %vm3405 = vcmp.lt.f32.partialorder %v1197, %v3263
        %vm3406 = vcmp.lt.f32.partialorder %v1198, %v3263
        %vm3407 = vcmp.lt.f32.partialorder %v1199, %v3263
        %vm3408 = vcmp.lt.f32.partialorder %v1200, %v3263
        %vm3409 = vcmp.lt.f32.partialorder %v1201, %v3268
        %vm3410 = vcmp.lt.f32.partialorder %v1202, %v3268
        %vm3411 = vcmp.lt.f32.partialorder %v1203, %v3268
        %vm3412 = vcmp.lt.f32.partialorder %v1204, %v3268
        %vm3413 = vcmp.lt.f32.partialorder %v1205, %v3273
        %vm3414 = vcmp.lt.f32.partialorder %v1206, %v3273
        %vm3415 = vcmp.lt.f32.partialorder %v1207, %v3273
        %vm3416 = vcmp.lt.f32.partialorder %v1208, %v3273
        %vm3417 = vcmp.lt.f32.partialorder %v1209, %v3278
        %vm3418 = vcmp.lt.f32.partialorder %v1210, %v3278
        %vm3419 = vcmp.lt.f32.partialorder %v1211, %v3278
        %vm3420 = vcmp.lt.f32.partialorder %v1212, %v3278
        %vm3421 = vcmp.lt.f32.partialorder %v1213, %v3283
        %vm3422 = vcmp.lt.f32.partialorder %v1214, %v3283
        %vm3423 = vcmp.lt.f32.partialorder %v1215, %v3283
        %vm3424 = vcmp.lt.f32.partialorder %v1216, %v3283
        %vm3425 = vcmp.lt.f32.partialorder %v1217, %v3288
        %vm3426 = vcmp.lt.f32.partialorder %v1218, %v3288
        %vm3427 = vcmp.lt.f32.partialorder %v1219, %v3288
        %vm3428 = vcmp.lt.f32.partialorder %v1220, %v3288
        %vm3429 = vcmp.lt.f32.partialorder %v1221, %v3293
        %vm3430 = vcmp.lt.f32.partialorder %v1222, %v3293
        %vm3431 = vcmp.lt.f32.partialorder %v1223, %v3293
        %vm3432 = vcmp.lt.f32.partialorder %v1224, %v3293
        %vm3433 = vcmp.lt.f32.partialorder %v1225, %v3298
        %vm3434 = vcmp.lt.f32.partialorder %v1226, %v3298
        %vm3435 = vcmp.lt.f32.partialorder %v1227, %v3298
        %vm3436 = vcmp.lt.f32.partialorder %v1228, %v3298
        %vm3437 = vcmp.lt.f32.partialorder %v1229, %v3303
        %vm3438 = vcmp.lt.f32.partialorder %v1230, %v3303
        %vm3439 = vcmp.lt.f32.partialorder %v1231, %v3303
        %vm3440 = vcmp.lt.f32.partialorder %v1232, %v3303
        %vm3441 = vcmp.lt.f32.partialorder %v1233, %v3308
        %vm3442 = vcmp.lt.f32.partialorder %v1234, %v3308
        %vm3443 = vcmp.lt.f32.partialorder %v1235, %v3308
        %vm3444 = vcmp.lt.f32.partialorder %v1236, %v3308
        %vm3445 = vcmp.lt.f32.partialorder %v1237, %v3313
        %vm3446 = vcmp.lt.f32.partialorder %v1238, %v3313
        %vm3447 = vcmp.lt.f32.partialorder %v1239, %v3313
        %vm3448 = vcmp.lt.f32.partialorder %v1240, %v3313
        %vm3449 = vcmp.lt.f32.partialorder %v1241, %v3318
        %vm3450 = vcmp.lt.f32.partialorder %v1242, %v3318
        %vm3451 = vcmp.lt.f32.partialorder %v1243, %v3318
        %vm3452 = vcmp.lt.f32.partialorder %v1244, %v3318
        %vm3453 = vcmp.lt.f32.partialorder %v1245, %v3323
        %vm3454 = vcmp.lt.f32.partialorder %v1246, %v3323
        %vm3455 = vcmp.lt.f32.partialorder %v1247, %v3323
        %vm3456 = vcmp.lt.f32.partialorder %v1248, %v3323
        %vm3457 = vcmp.lt.f32.partialorder %v1249, %v3328
        %vm3458 = vcmp.lt.f32.partialorder %v1250, %v3328
        %vm3459 = vcmp.lt.f32.partialorder %v1251, %v3328
        %vm3460 = vcmp.lt.f32.partialorder %v1252, %v3328
        %vm3461 = vcmp.lt.f32.partialorder %v1253, %v3333
        %vm3462 = vcmp.lt.f32.partialorder %v1254, %v3333
        %vm3463 = vcmp.lt.f32.partialorder %v1255, %v3333
        %vm3464 = vcmp.lt.f32.partialorder %v1256, %v3333
        %vm3465 = vcmp.lt.f32.partialorder %v1257, %v3338
        %vm3466 = vcmp.lt.f32.partialorder %v1258, %v3338
        %vm3467 = vcmp.lt.f32.partialorder %v1259, %v3338
        %vm3468 = vcmp.lt.f32.partialorder %v1260, %v3338
        %vm3469 = vcmp.lt.f32.partialorder %v1261, %v3343
        %vm3470 = vcmp.lt.f32.partialorder %v1262, %v3343
        %vm3471 = vcmp.lt.f32.partialorder %v1263, %v3343
        %vm3472 = vcmp.lt.f32.partialorder %v1264, %v3343
        %vm3473 = vcmp.lt.f32.partialorder %v1265, %v3348
        %vm3474 = vcmp.lt.f32.partialorder %v1266, %v3348
        %vm3475 = vcmp.lt.f32.partialorder %v1267, %v3348
        %vm3476 = vcmp.lt.f32.partialorder %v1268, %v3348
        %v3477 = vsel %vm3349, %v1141, -inf
        %v3478 = vsel %vm3350, %v1142, -inf
        %v3479 = vsel %vm3351, %v1143, -inf
        %v3480 = vsel %vm3352, %v1144, -inf
        %v3481 = vsel %vm3353, %v1145, -inf
        %v3482 = vsel %vm3354, %v1146, -inf
        %v3483 = vsel %vm3355, %v1147, -inf
        %v3484 = vsel %vm3356, %v1148, -inf
        %v3485 = vsel %vm3357, %v1149, -inf
        %v3486 = vsel %vm3358, %v1150, -inf
        %v3487 = vsel %vm3359, %v1151, -inf
        %v3488 = vsel %vm3360, %v1152, -inf
        %v3489 = vsel %vm3361, %v1153, -inf
        %v3490 = vsel %vm3362, %v1154, -inf
        %v3491 = vsel %vm3363, %v1155, -inf
        %v3492 = vsel %vm3364, %v1156, -inf
        %v3493 = vsel %vm3365, %v1157, -inf
        %v3494 = vsel %vm3366, %v1158, -inf
        %v3495 = vsel %vm3367, %v1159, -inf
        %v3496 = vsel %vm3368, %v1160, -inf
        %v3497 = vsel %vm3369, %v1161, -inf
        %v3498 = vsel %vm3370, %v1162, -inf
        %v3499 = vsel %vm3371, %v1163, -inf
        %v3500 = vsel %vm3372, %v1164, -inf
        %v3501 = vsel %vm3373, %v1165, -inf
        %v3502 = vsel %vm3374, %v1166, -inf
        %v3503 = vsel %vm3375, %v1167, -inf
        %v3504 = vsel %vm3376, %v1168, -inf
        %v3505 = vsel %vm3377, %v1169, -inf
        %v3506 = vsel %vm3378, %v1170, -inf
        %v3507 = vsel %vm3379, %v1171, -inf
        %v3508 = vsel %vm3380, %v1172, -inf
        %v3509 = vsel %vm3381, %v1173, -inf
        %v3510 = vsel %vm3382, %v1174, -inf
        %v3511 = vsel %vm3383, %v1175, -inf
        %v3512 = vsel %vm3384, %v1176, -inf
        %v3513 = vsel %vm3385, %v1177, -inf
        %v3514 = vsel %vm3386, %v1178, -inf
        %v3515 = vsel %vm3387, %v1179, -inf
        %v3516 = vsel %vm3388, %v1180, -inf
        %v3517 = vsel %vm3389, %v1181, -inf
        %v3518 = vsel %vm3390, %v1182, -inf
        %v3519 = vsel %vm3391, %v1183, -inf
        %v3520 = vsel %vm3392, %v1184, -inf
        %v3521 = vsel %vm3393, %v1185, -inf
        %v3522 = vsel %vm3394, %v1186, -inf
        %v3523 = vsel %vm3395, %v1187, -inf
        %v3524 = vsel %vm3396, %v1188, -inf
        %v3525 = vsel %vm3397, %v1189, -inf
        %v3526 = vsel %vm3398, %v1190, -inf
        %v3527 = vsel %vm3399, %v1191, -inf
        %v3528 = vsel %vm3400, %v1192, -inf
        %v3529 = vsel %vm3401, %v1193, -inf
        %v3530 = vsel %vm3402, %v1194, -inf
        %v3531 = vsel %vm3403, %v1195, -inf
        %v3532 = vsel %vm3404, %v1196, -inf
        %v3533 = vsel %vm3405, %v1197, -inf
        %v3534 = vsel %vm3406, %v1198, -inf
        %v3535 = vsel %vm3407, %v1199, -inf
        %v3536 = vsel %vm3408, %v1200, -inf
        %v3537 = vsel %vm3409, %v1201, -inf
        %v3538 = vsel %vm3410, %v1202, -inf
        %v3539 = vsel %vm3411, %v1203, -inf
        %v3540 = vsel %vm3412, %v1204, -inf
        %v3541 = vsel %vm3413, %v1205, -inf
        %v3542 = vsel %vm3414, %v1206, -inf
        %v3543 = vsel %vm3415, %v1207, -inf
        %v3544 = vsel %vm3416, %v1208, -inf
        %v3545 = vsel %vm3417, %v1209, -inf
        %v3546 = vsel %vm3418, %v1210, -inf
        %v3547 = vsel %vm3419, %v1211, -inf
        %v3548 = vsel %vm3420, %v1212, -inf
        %v3549 = vsel %vm3421, %v1213, -inf
        %v3550 = vsel %vm3422, %v1214, -inf
        %v3551 = vsel %vm3423, %v1215, -inf
        %v3552 = vsel %vm3424, %v1216, -inf
        %v3553 = vsel %vm3425, %v1217, -inf
        %v3554 = vsel %vm3426, %v1218, -inf
        %v3555 = vsel %vm3427, %v1219, -inf
        %v3556 = vsel %vm3428, %v1220, -inf
        %v3557 = vsel %vm3429, %v1221, -inf
        %v3558 = vsel %vm3430, %v1222, -inf
        %v3559 = vsel %vm3431, %v1223, -inf
        %v3560 = vsel %vm3432, %v1224, -inf
        %v3561 = vsel %vm3433, %v1225, -inf
        %v3562 = vsel %vm3434, %v1226, -inf
        %v3563 = vsel %vm3435, %v1227, -inf
        %v3564 = vsel %vm3436, %v1228, -inf
        %v3565 = vsel %vm3437, %v1229, -inf
        %v3566 = vsel %vm3438, %v1230, -inf
        %v3567 = vsel %vm3439, %v1231, -inf
        %v3568 = vsel %vm3440, %v1232, -inf
        %v3569 = vsel %vm3441, %v1233, -inf
        %v3570 = vsel %vm3442, %v1234, -inf
        %v3571 = vsel %vm3443, %v1235, -inf
        %v3572 = vsel %vm3444, %v1236, -inf
        %v3573 = vsel %vm3445, %v1237, -inf
        %v3574 = vsel %vm3446, %v1238, -inf
        %v3575 = vsel %vm3447, %v1239, -inf
        %v3576 = vsel %vm3448, %v1240, -inf
        %v3577 = vsel %vm3449, %v1241, -inf
        %v3578 = vsel %vm3450, %v1242, -inf
        %v3579 = vsel %vm3451, %v1243, -inf
        %v3580 = vsel %vm3452, %v1244, -inf
        %v3581 = vsel %vm3453, %v1245, -inf
        %v3582 = vsel %vm3454, %v1246, -inf
        %v3583 = vsel %vm3455, %v1247, -inf
        %v3584 = vsel %vm3456, %v1248, -inf
        %v3585 = vsel %vm3457, %v1249, -inf
        %v3586 = vsel %vm3458, %v1250, -inf
        %v3587 = vsel %vm3459, %v1251, -inf
        %v3588 = vsel %vm3460, %v1252, -inf
        %v3589 = vsel %vm3461, %v1253, -inf
        %v3590 = vsel %vm3462, %v1254, -inf
        %v3591 = vsel %vm3463, %v1255, -inf
        %v3592 = vsel %vm3464, %v1256, -inf
        %v3593 = vsel %vm3465, %v1257, -inf
        %v3594 = vsel %vm3466, %v1258, -inf
        %v3595 = vsel %vm3467, %v1259, -inf
        %v3596 = vsel %vm3468, %v1260, -inf
        %v3597 = vsel %vm3469, %v1261, -inf
        %v3598 = vsel %vm3470, %v1262, -inf
        %v3599 = vsel %vm3471, %v1263, -inf
        %v3600 = vsel %vm3472, %v1264, -inf
        %v3601 = vsel %vm3473, %v1265, -inf
        %v3602 = vsel %vm3474, %v1266, -inf
        %v3603 = vsel %vm3475, %v1267, -inf
        %v3604 = vsel %vm3476, %v1268, -inf
        %v3605 = vmax.f32 %v3477, %v3478
        %v3606 = vmax.f32 %v3605, %v3479
        %v3607 = vmax.f32 %v3606, %v3480
        %3608 = vmax.xlane.f32.xlu0 %v3607
        %v3609 = vpop.xlane.xlu0 %3608
        %v3610 = vmax.f32 %v3481, %v3482
        %v3611 = vmax.f32 %v3610, %v3483
        %v3612 = vmax.f32 %v3611, %v3484
        %3613 = vmax.xlane.f32.xlu0 %v3612
        %v3614 = vpop.xlane.xlu0 %3613
        %v3615 = vmax.f32 %v3485, %v3486
        %v3616 = vmax.f32 %v3615, %v3487
        %v3617 = vmax.f32 %v3616, %v3488
        %3618 = vmax.xlane.f32.xlu0 %v3617
        %v3619 = vpop.xlane.xlu0 %3618
        %v3620 = vmax.f32 %v3489, %v3490
        %v3621 = vmax.f32 %v3620, %v3491
        %v3622 = vmax.f32 %v3621, %v3492
        %3623 = vmax.xlane.f32.xlu0 %v3622
        %v3624 = vpop.xlane.xlu0 %3623
        %v3625 = vmax.f32 %v3493, %v3494
        %v3626 = vmax.f32 %v3625, %v3495
        %v3627 = vmax.f32 %v3626, %v3496
        %3628 = vmax.xlane.f32.xlu0 %v3627
        %v3629 = vpop.xlane.xlu0 %3628
        %v3630 = vmax.f32 %v3497, %v3498
        %v3631 = vmax.f32 %v3630, %v3499
        %v3632 = vmax.f32 %v3631, %v3500
        %3633 = vmax.xlane.f32.xlu0 %v3632
        %v3634 = vpop.xlane.xlu0 %3633
        %v3635 = vmax.f32 %v3501, %v3502
        %v3636 = vmax.f32 %v3635, %v3503
        %v3637 = vmax.f32 %v3636, %v3504
        %3638 = vmax.xlane.f32.xlu0 %v3637
        %v3639 = vpop.xlane.xlu0 %3638
        %v3640 = vmax.f32 %v3505, %v3506
        %v3641 = vmax.f32 %v3640, %v3507
        %v3642 = vmax.f32 %v3641, %v3508
        %3643 = vmax.xlane.f32.xlu0 %v3642
        %v3644 = vpop.xlane.xlu0 %3643
        %v3645 = vmax.f32 %v3509, %v3510
        %v3646 = vmax.f32 %v3645, %v3511
        %v3647 = vmax.f32 %v3646, %v3512
        %3648 = vmax.xlane.f32.xlu0 %v3647
        %v3649 = vpop.xlane.xlu0 %3648
        %v3650 = vmax.f32 %v3513, %v3514
        %v3651 = vmax.f32 %v3650, %v3515
        %v3652 = vmax.f32 %v3651, %v3516
        %3653 = vmax.xlane.f32.xlu0 %v3652
        %v3654 = vpop.xlane.xlu0 %3653
        %v3655 = vmax.f32 %v3517, %v3518
        %v3656 = vmax.f32 %v3655, %v3519
        %v3657 = vmax.f32 %v3656, %v3520
        %3658 = vmax.xlane.f32.xlu0 %v3657
        %v3659 = vpop.xlane.xlu0 %3658
        %v3660 = vmax.f32 %v3521, %v3522
        %v3661 = vmax.f32 %v3660, %v3523
        %v3662 = vmax.f32 %v3661, %v3524
        %3663 = vmax.xlane.f32.xlu0 %v3662
        %v3664 = vpop.xlane.xlu0 %3663
        %v3665 = vmax.f32 %v3525, %v3526
        %v3666 = vmax.f32 %v3665, %v3527
        %v3667 = vmax.f32 %v3666, %v3528
        %3668 = vmax.xlane.f32.xlu0 %v3667
        %v3669 = vpop.xlane.xlu0 %3668
        %v3670 = vmax.f32 %v3529, %v3530
        %v3671 = vmax.f32 %v3670, %v3531
        %v3672 = vmax.f32 %v3671, %v3532
        %3673 = vmax.xlane.f32.xlu0 %v3672
        %v3674 = vpop.xlane.xlu0 %3673
        %v3675 = vmax.f32 %v3533, %v3534
        %v3676 = vmax.f32 %v3675, %v3535
        %v3677 = vmax.f32 %v3676, %v3536
        %3678 = vmax.xlane.f32.xlu0 %v3677
        %v3679 = vpop.xlane.xlu0 %3678
        %v3680 = vmax.f32 %v3537, %v3538
        %v3681 = vmax.f32 %v3680, %v3539
        %v3682 = vmax.f32 %v3681, %v3540
        %3683 = vmax.xlane.f32.xlu0 %v3682
        %v3684 = vpop.xlane.xlu0 %3683
        %v3685 = vmax.f32 %v3541, %v3542
        %v3686 = vmax.f32 %v3685, %v3543
        %v3687 = vmax.f32 %v3686, %v3544
        %3688 = vmax.xlane.f32.xlu0 %v3687
        %v3689 = vpop.xlane.xlu0 %3688
        %v3690 = vmax.f32 %v3545, %v3546
        %v3691 = vmax.f32 %v3690, %v3547
        %v3692 = vmax.f32 %v3691, %v3548
        %3693 = vmax.xlane.f32.xlu0 %v3692
        %v3694 = vpop.xlane.xlu0 %3693
        %v3695 = vmax.f32 %v3549, %v3550
        %v3696 = vmax.f32 %v3695, %v3551
        %v3697 = vmax.f32 %v3696, %v3552
        %3698 = vmax.xlane.f32.xlu0 %v3697
        %v3699 = vpop.xlane.xlu0 %3698
        %v3700 = vmax.f32 %v3553, %v3554
        %v3701 = vmax.f32 %v3700, %v3555
        %v3702 = vmax.f32 %v3701, %v3556
        %3703 = vmax.xlane.f32.xlu0 %v3702
        %v3704 = vpop.xlane.xlu0 %3703
        %v3705 = vmax.f32 %v3557, %v3558
        %v3706 = vmax.f32 %v3705, %v3559
        %v3707 = vmax.f32 %v3706, %v3560
        %3708 = vmax.xlane.f32.xlu0 %v3707
        %v3709 = vpop.xlane.xlu0 %3708
        %v3710 = vmax.f32 %v3561, %v3562
        %v3711 = vmax.f32 %v3710, %v3563
        %v3712 = vmax.f32 %v3711, %v3564
        %3713 = vmax.xlane.f32.xlu0 %v3712
        %v3714 = vpop.xlane.xlu0 %3713
        %v3715 = vmax.f32 %v3565, %v3566
        %v3716 = vmax.f32 %v3715, %v3567
        %v3717 = vmax.f32 %v3716, %v3568
        %3718 = vmax.xlane.f32.xlu0 %v3717
        %v3719 = vpop.xlane.xlu0 %3718
        %v3720 = vmax.f32 %v3569, %v3570
        %v3721 = vmax.f32 %v3720, %v3571
        %v3722 = vmax.f32 %v3721, %v3572
        %3723 = vmax.xlane.f32.xlu0 %v3722
        %v3724 = vpop.xlane.xlu0 %3723
        %v3725 = vmax.f32 %v3573, %v3574
        %v3726 = vmax.f32 %v3725, %v3575
        %v3727 = vmax.f32 %v3726, %v3576
        %3728 = vmax.xlane.f32.xlu0 %v3727
        %v3729 = vpop.xlane.xlu0 %3728
        %v3730 = vmax.f32 %v3577, %v3578
        %v3731 = vmax.f32 %v3730, %v3579
        %v3732 = vmax.f32 %v3731, %v3580
        %3733 = vmax.xlane.f32.xlu0 %v3732
        %v3734 = vpop.xlane.xlu0 %3733
        %v3735 = vmax.f32 %v3581, %v3582
        %v3736 = vmax.f32 %v3735, %v3583
        %v3737 = vmax.f32 %v3736, %v3584
        %3738 = vmax.xlane.f32.xlu0 %v3737
        %v3739 = vpop.xlane.xlu0 %3738
        %v3740 = vmax.f32 %v3585, %v3586
        %v3741 = vmax.f32 %v3740, %v3587
        %v3742 = vmax.f32 %v3741, %v3588
        %3743 = vmax.xlane.f32.xlu0 %v3742
        %v3744 = vpop.xlane.xlu0 %3743
        %v3745 = vmax.f32 %v3589, %v3590
        %v3746 = vmax.f32 %v3745, %v3591
        %v3747 = vmax.f32 %v3746, %v3592
        %3748 = vmax.xlane.f32.xlu0 %v3747
        %v3749 = vpop.xlane.xlu0 %3748
        %v3750 = vmax.f32 %v3593, %v3594
        %v3751 = vmax.f32 %v3750, %v3595
        %v3752 = vmax.f32 %v3751, %v3596
        %3753 = vmax.xlane.f32.xlu0 %v3752
        %v3754 = vpop.xlane.xlu0 %3753
        %v3755 = vmax.f32 %v3597, %v3598
        %v3756 = vmax.f32 %v3755, %v3599
        %v3757 = vmax.f32 %v3756, %v3600
        %3758 = vmax.xlane.f32.xlu0 %v3757
        %v3759 = vpop.xlane.xlu0 %3758
        %v3760 = vmax.f32 %v3601, %v3602
        %v3761 = vmax.f32 %v3760, %v3603
        %v3762 = vmax.f32 %v3761, %v3604
        %3763 = vmax.xlane.f32.xlu0 %v3762
        %v3764 = vpop.xlane.xlu0 %3763
        %vm3765 = vcmp.lt.f32.partialorder %v1141, %v3609
        %vm3766 = vcmp.lt.f32.partialorder %v1142, %v3609
        %vm3767 = vcmp.lt.f32.partialorder %v1143, %v3609
        %vm3768 = vcmp.lt.f32.partialorder %v1144, %v3609
        %vm3769 = vcmp.lt.f32.partialorder %v1145, %v3614
        %vm3770 = vcmp.lt.f32.partialorder %v1146, %v3614
        %vm3771 = vcmp.lt.f32.partialorder %v1147, %v3614
        %vm3772 = vcmp.lt.f32.partialorder %v1148, %v3614
        %vm3773 = vcmp.lt.f32.partialorder %v1149, %v3619
        %vm3774 = vcmp.lt.f32.partialorder %v1150, %v3619
        %vm3775 = vcmp.lt.f32.partialorder %v1151, %v3619
        %vm3776 = vcmp.lt.f32.partialorder %v1152, %v3619
        %vm3777 = vcmp.lt.f32.partialorder %v1153, %v3624
        %vm3778 = vcmp.lt.f32.partialorder %v1154, %v3624
        %vm3779 = vcmp.lt.f32.partialorder %v1155, %v3624
        %vm3780 = vcmp.lt.f32.partialorder %v1156, %v3624
        %vm3781 = vcmp.lt.f32.partialorder %v1157, %v3629
        %vm3782 = vcmp.lt.f32.partialorder %v1158, %v3629
        %vm3783 = vcmp.lt.f32.partialorder %v1159, %v3629
        %vm3784 = vcmp.lt.f32.partialorder %v1160, %v3629
        %vm3785 = vcmp.lt.f32.partialorder %v1161, %v3634
        %vm3786 = vcmp.lt.f32.partialorder %v1162, %v3634
        %vm3787 = vcmp.lt.f32.partialorder %v1163, %v3634
        %vm3788 = vcmp.lt.f32.partialorder %v1164, %v3634
        %vm3789 = vcmp.lt.f32.partialorder %v1165, %v3639
        %vm3790 = vcmp.lt.f32.partialorder %v1166, %v3639
        %vm3791 = vcmp.lt.f32.partialorder %v1167, %v3639
        %vm3792 = vcmp.lt.f32.partialorder %v1168, %v3639
        %vm3793 = vcmp.lt.f32.partialorder %v1169, %v3644
        %vm3794 = vcmp.lt.f32.partialorder %v1170, %v3644
        %vm3795 = vcmp.lt.f32.partialorder %v1171, %v3644
        %vm3796 = vcmp.lt.f32.partialorder %v1172, %v3644
        %vm3797 = vcmp.lt.f32.partialorder %v1173, %v3649
        %vm3798 = vcmp.lt.f32.partialorder %v1174, %v3649
        %vm3799 = vcmp.lt.f32.partialorder %v1175, %v3649
        %vm3800 = vcmp.lt.f32.partialorder %v1176, %v3649
        %vm3801 = vcmp.lt.f32.partialorder %v1177, %v3654
        %vm3802 = vcmp.lt.f32.partialorder %v1178, %v3654
        %vm3803 = vcmp.lt.f32.partialorder %v1179, %v3654
        %vm3804 = vcmp.lt.f32.partialorder %v1180, %v3654
        %vm3805 = vcmp.lt.f32.partialorder %v1181, %v3659
        %vm3806 = vcmp.lt.f32.partialorder %v1182, %v3659
        %vm3807 = vcmp.lt.f32.partialorder %v1183, %v3659
        %vm3808 = vcmp.lt.f32.partialorder %v1184, %v3659
        %vm3809 = vcmp.lt.f32.partialorder %v1185, %v3664
        %vm3810 = vcmp.lt.f32.partialorder %v1186, %v3664
        %vm3811 = vcmp.lt.f32.partialorder %v1187, %v3664
        %vm3812 = vcmp.lt.f32.partialorder %v1188, %v3664
        %vm3813 = vcmp.lt.f32.partialorder %v1189, %v3669
        %vm3814 = vcmp.lt.f32.partialorder %v1190, %v3669
        %vm3815 = vcmp.lt.f32.partialorder %v1191, %v3669
        %vm3816 = vcmp.lt.f32.partialorder %v1192, %v3669
        %vm3817 = vcmp.lt.f32.partialorder %v1193, %v3674
        %vm3818 = vcmp.lt.f32.partialorder %v1194, %v3674
        %vm3819 = vcmp.lt.f32.partialorder %v1195, %v3674
        %vm3820 = vcmp.lt.f32.partialorder %v1196, %v3674
        %vm3821 = vcmp.lt.f32.partialorder %v1197, %v3679
        %vm3822 = vcmp.lt.f32.partialorder %v1198, %v3679
        %vm3823 = vcmp.lt.f32.partialorder %v1199, %v3679
        %vm3824 = vcmp.lt.f32.partialorder %v1200, %v3679
        %vm3825 = vcmp.lt.f32.partialorder %v1201, %v3684
        %vm3826 = vcmp.lt.f32.partialorder %v1202, %v3684
        %vm3827 = vcmp.lt.f32.partialorder %v1203, %v3684
        %vm3828 = vcmp.lt.f32.partialorder %v1204, %v3684
        %vm3829 = vcmp.lt.f32.partialorder %v1205, %v3689
        %vm3830 = vcmp.lt.f32.partialorder %v1206, %v3689
        %vm3831 = vcmp.lt.f32.partialorder %v1207, %v3689
        %vm3832 = vcmp.lt.f32.partialorder %v1208, %v3689
        %vm3833 = vcmp.lt.f32.partialorder %v1209, %v3694
        %vm3834 = vcmp.lt.f32.partialorder %v1210, %v3694
        %vm3835 = vcmp.lt.f32.partialorder %v1211, %v3694
        %vm3836 = vcmp.lt.f32.partialorder %v1212, %v3694
        %vm3837 = vcmp.lt.f32.partialorder %v1213, %v3699
        %vm3838 = vcmp.lt.f32.partialorder %v1214, %v3699
        %vm3839 = vcmp.lt.f32.partialorder %v1215, %v3699
        %vm3840 = vcmp.lt.f32.partialorder %v1216, %v3699
        %vm3841 = vcmp.lt.f32.partialorder %v1217, %v3704
        %vm3842 = vcmp.lt.f32.partialorder %v1218, %v3704
        %vm3843 = vcmp.lt.f32.partialorder %v1219, %v3704
        %vm3844 = vcmp.lt.f32.partialorder %v1220, %v3704
        %vm3845 = vcmp.lt.f32.partialorder %v1221, %v3709
        %vm3846 = vcmp.lt.f32.partialorder %v1222, %v3709
        %vm3847 = vcmp.lt.f32.partialorder %v1223, %v3709
        %vm3848 = vcmp.lt.f32.partialorder %v1224, %v3709
        %vm3849 = vcmp.lt.f32.partialorder %v1225, %v3714
        %vm3850 = vcmp.lt.f32.partialorder %v1226, %v3714
        %vm3851 = vcmp.lt.f32.partialorder %v1227, %v3714
        %vm3852 = vcmp.lt.f32.partialorder %v1228, %v3714
        %vm3853 = vcmp.lt.f32.partialorder %v1229, %v3719
        %vm3854 = vcmp.lt.f32.partialorder %v1230, %v3719
        %vm3855 = vcmp.lt.f32.partialorder %v1231, %v3719
        %vm3856 = vcmp.lt.f32.partialorder %v1232, %v3719
        %vm3857 = vcmp.lt.f32.partialorder %v1233, %v3724
        %vm3858 = vcmp.lt.f32.partialorder %v1234, %v3724
        %vm3859 = vcmp.lt.f32.partialorder %v1235, %v3724
        %vm3860 = vcmp.lt.f32.partialorder %v1236, %v3724
        %vm3861 = vcmp.lt.f32.partialorder %v1237, %v3729
        %vm3862 = vcmp.lt.f32.partialorder %v1238, %v3729
        %vm3863 = vcmp.lt.f32.partialorder %v1239, %v3729
        %vm3864 = vcmp.lt.f32.partialorder %v1240, %v3729
        %vm3865 = vcmp.lt.f32.partialorder %v1241, %v3734
        %vm3866 = vcmp.lt.f32.partialorder %v1242, %v3734
        %vm3867 = vcmp.lt.f32.partialorder %v1243, %v3734
        %vm3868 = vcmp.lt.f32.partialorder %v1244, %v3734
        %vm3869 = vcmp.lt.f32.partialorder %v1245, %v3739
        %vm3870 = vcmp.lt.f32.partialorder %v1246, %v3739
        %vm3871 = vcmp.lt.f32.partialorder %v1247, %v3739
        %vm3872 = vcmp.lt.f32.partialorder %v1248, %v3739
        %vm3873 = vcmp.lt.f32.partialorder %v1249, %v3744
        %vm3874 = vcmp.lt.f32.partialorder %v1250, %v3744
        %vm3875 = vcmp.lt.f32.partialorder %v1251, %v3744
        %vm3876 = vcmp.lt.f32.partialorder %v1252, %v3744
        %vm3877 = vcmp.lt.f32.partialorder %v1253, %v3749
        %vm3878 = vcmp.lt.f32.partialorder %v1254, %v3749
        %vm3879 = vcmp.lt.f32.partialorder %v1255, %v3749
        %vm3880 = vcmp.lt.f32.partialorder %v1256, %v3749
        %vm3881 = vcmp.lt.f32.partialorder %v1257, %v3754
        %vm3882 = vcmp.lt.f32.partialorder %v1258, %v3754
        %vm3883 = vcmp.lt.f32.partialorder %v1259, %v3754
        %vm3884 = vcmp.lt.f32.partialorder %v1260, %v3754
        %vm3885 = vcmp.lt.f32.partialorder %v1261, %v3759
        %vm3886 = vcmp.lt.f32.partialorder %v1262, %v3759
        %vm3887 = vcmp.lt.f32.partialorder %v1263, %v3759
        %vm3888 = vcmp.lt.f32.partialorder %v1264, %v3759
        %vm3889 = vcmp.lt.f32.partialorder %v1265, %v3764
        %vm3890 = vcmp.lt.f32.partialorder %v1266, %v3764
        %vm3891 = vcmp.lt.f32.partialorder %v1267, %v3764
        %vm3892 = vcmp.lt.f32.partialorder %v1268, %v3764
        %v3893 = vsel %vm3765, %v1141, -inf
        %v3894 = vsel %vm3766, %v1142, -inf
        %v3895 = vsel %vm3767, %v1143, -inf
        %v3896 = vsel %vm3768, %v1144, -inf
        %v3897 = vsel %vm3769, %v1145, -inf
        %v3898 = vsel %vm3770, %v1146, -inf
        %v3899 = vsel %vm3771, %v1147, -inf
        %v3900 = vsel %vm3772, %v1148, -inf
        %v3901 = vsel %vm3773, %v1149, -inf
        %v3902 = vsel %vm3774, %v1150, -inf
        %v3903 = vsel %vm3775, %v1151, -inf
        %v3904 = vsel %vm3776, %v1152, -inf
        %v3905 = vsel %vm3777, %v1153, -inf
        %v3906 = vsel %vm3778, %v1154, -inf
        %v3907 = vsel %vm3779, %v1155, -inf
        %v3908 = vsel %vm3780, %v1156, -inf
        %v3909 = vsel %vm3781, %v1157, -inf
        %v3910 = vsel %vm3782, %v1158, -inf
        %v3911 = vsel %vm3783, %v1159, -inf
        %v3912 = vsel %vm3784, %v1160, -inf
        %v3913 = vsel %vm3785, %v1161, -inf
        %v3914 = vsel %vm3786, %v1162, -inf
        %v3915 = vsel %vm3787, %v1163, -inf
        %v3916 = vsel %vm3788, %v1164, -inf
        %v3917 = vsel %vm3789, %v1165, -inf
        %v3918 = vsel %vm3790, %v1166, -inf
        %v3919 = vsel %vm3791, %v1167, -inf
        %v3920 = vsel %vm3792, %v1168, -inf
        %v3921 = vsel %vm3793, %v1169, -inf
        %v3922 = vsel %vm3794, %v1170, -inf
        %v3923 = vsel %vm3795, %v1171, -inf
        %v3924 = vsel %vm3796, %v1172, -inf
        %v3925 = vsel %vm3797, %v1173, -inf
        %v3926 = vsel %vm3798, %v1174, -inf
        %v3927 = vsel %vm3799, %v1175, -inf
        %v3928 = vsel %vm3800, %v1176, -inf
        %v3929 = vsel %vm3801, %v1177, -inf
        %v3930 = vsel %vm3802, %v1178, -inf
        %v3931 = vsel %vm3803, %v1179, -inf
        %v3932 = vsel %vm3804, %v1180, -inf
        %v3933 = vsel %vm3805, %v1181, -inf
        %v3934 = vsel %vm3806, %v1182, -inf
        %v3935 = vsel %vm3807, %v1183, -inf
        %v3936 = vsel %vm3808, %v1184, -inf
        %v3937 = vsel %vm3809, %v1185, -inf
        %v3938 = vsel %vm3810, %v1186, -inf
        %v3939 = vsel %vm3811, %v1187, -inf
        %v3940 = vsel %vm3812, %v1188, -inf
        %v3941 = vsel %vm3813, %v1189, -inf
        %v3942 = vsel %vm3814, %v1190, -inf
        %v3943 = vsel %vm3815, %v1191, -inf
        %v3944 = vsel %vm3816, %v1192, -inf
        %v3945 = vsel %vm3817, %v1193, -inf
        %v3946 = vsel %vm3818, %v1194, -inf
        %v3947 = vsel %vm3819, %v1195, -inf
        %v3948 = vsel %vm3820, %v1196, -inf
        %v3949 = vsel %vm3821, %v1197, -inf
        %v3950 = vsel %vm3822, %v1198, -inf
        %v3951 = vsel %vm3823, %v1199, -inf
        %v3952 = vsel %vm3824, %v1200, -inf
        %v3953 = vsel %vm3825, %v1201, -inf
        %v3954 = vsel %vm3826, %v1202, -inf
        %v3955 = vsel %vm3827, %v1203, -inf
        %v3956 = vsel %vm3828, %v1204, -inf
        %v3957 = vsel %vm3829, %v1205, -inf
        %v3958 = vsel %vm3830, %v1206, -inf
        %v3959 = vsel %vm3831, %v1207, -inf
        %v3960 = vsel %vm3832, %v1208, -inf
        %v3961 = vsel %vm3833, %v1209, -inf
        %v3962 = vsel %vm3834, %v1210, -inf
        %v3963 = vsel %vm3835, %v1211, -inf
        %v3964 = vsel %vm3836, %v1212, -inf
        %v3965 = vsel %vm3837, %v1213, -inf
        %v3966 = vsel %vm3838, %v1214, -inf
        %v3967 = vsel %vm3839, %v1215, -inf
        %v3968 = vsel %vm3840, %v1216, -inf
        %v3969 = vsel %vm3841, %v1217, -inf
        %v3970 = vsel %vm3842, %v1218, -inf
        %v3971 = vsel %vm3843, %v1219, -inf
        %v3972 = vsel %vm3844, %v1220, -inf
        %v3973 = vsel %vm3845, %v1221, -inf
        %v3974 = vsel %vm3846, %v1222, -inf
        %v3975 = vsel %vm3847, %v1223, -inf
        %v3976 = vsel %vm3848, %v1224, -inf
        %v3977 = vsel %vm3849, %v1225, -inf
        %v3978 = vsel %vm3850, %v1226, -inf
        %v3979 = vsel %vm3851, %v1227, -inf
        %v3980 = vsel %vm3852, %v1228, -inf
        %v3981 = vsel %vm3853, %v1229, -inf
        %v3982 = vsel %vm3854, %v1230, -inf
        %v3983 = vsel %vm3855, %v1231, -inf
        %v3984 = vsel %vm3856, %v1232, -inf
        %v3985 = vsel %vm3857, %v1233, -inf
        %v3986 = vsel %vm3858, %v1234, -inf
        %v3987 = vsel %vm3859, %v1235, -inf
        %v3988 = vsel %vm3860, %v1236, -inf
        %v3989 = vsel %vm3861, %v1237, -inf
        %v3990 = vsel %vm3862, %v1238, -inf
        %v3991 = vsel %vm3863, %v1239, -inf
        %v3992 = vsel %vm3864, %v1240, -inf
        %v3993 = vsel %vm3865, %v1241, -inf
        %v3994 = vsel %vm3866, %v1242, -inf
        %v3995 = vsel %vm3867, %v1243, -inf
        %v3996 = vsel %vm3868, %v1244, -inf
        %v3997 = vsel %vm3869, %v1245, -inf
        %v3998 = vsel %vm3870, %v1246, -inf
        %v3999 = vsel %vm3871, %v1247, -inf
        %v4000 = vsel %vm3872, %v1248, -inf
        %v4001 = vsel %vm3873, %v1249, -inf
        %v4002 = vsel %vm3874, %v1250, -inf
        %v4003 = vsel %vm3875, %v1251, -inf
        %v4004 = vsel %vm3876, %v1252, -inf
        %v4005 = vsel %vm3877, %v1253, -inf
        %v4006 = vsel %vm3878, %v1254, -inf
        %v4007 = vsel %vm3879, %v1255, -inf
        %v4008 = vsel %vm3880, %v1256, -inf
        %v4009 = vsel %vm3881, %v1257, -inf
        %v4010 = vsel %vm3882, %v1258, -inf
        %v4011 = vsel %vm3883, %v1259, -inf
        %v4012 = vsel %vm3884, %v1260, -inf
        %v4013 = vsel %vm3885, %v1261, -inf
        %v4014 = vsel %vm3886, %v1262, -inf
        %v4015 = vsel %vm3887, %v1263, -inf
        %v4016 = vsel %vm3888, %v1264, -inf
        %v4017 = vsel %vm3889, %v1265, -inf
        %v4018 = vsel %vm3890, %v1266, -inf
        %v4019 = vsel %vm3891, %v1267, -inf
        %v4020 = vsel %vm3892, %v1268, -inf
        %v4021 = vmax.f32 %v3893, %v3894
        %v4022 = vmax.f32 %v4021, %v3895
        %v4023 = vmax.f32 %v4022, %v3896
        %4024 = vmax.xlane.f32.xlu0 %v4023
        %v4025 = vpop.xlane.xlu0 %4024
        %v4026 = vmax.f32 %v3897, %v3898
        %v4027 = vmax.f32 %v4026, %v3899
        %v4028 = vmax.f32 %v4027, %v3900
        %4029 = vmax.xlane.f32.xlu0 %v4028
        %v4030 = vpop.xlane.xlu0 %4029
        %v4031 = vmax.f32 %v3901, %v3902
        %v4032 = vmax.f32 %v4031, %v3903
        %v4033 = vmax.f32 %v4032, %v3904
        %4034 = vmax.xlane.f32.xlu0 %v4033
        %v4035 = vpop.xlane.xlu0 %4034
        %v4036 = vmax.f32 %v3905, %v3906
        %v4037 = vmax.f32 %v4036, %v3907
        %v4038 = vmax.f32 %v4037, %v3908
        %4039 = vmax.xlane.f32.xlu0 %v4038
        %v4040 = vpop.xlane.xlu0 %4039
        %v4041 = vmax.f32 %v3909, %v3910
        %v4042 = vmax.f32 %v4041, %v3911
        %v4043 = vmax.f32 %v4042, %v3912
        %4044 = vmax.xlane.f32.xlu0 %v4043
        %v4045 = vpop.xlane.xlu0 %4044
        %v4046 = vmax.f32 %v3913, %v3914
        %v4047 = vmax.f32 %v4046, %v3915
        %v4048 = vmax.f32 %v4047, %v3916
        %4049 = vmax.xlane.f32.xlu0 %v4048
        %v4050 = vpop.xlane.xlu0 %4049
        %v4051 = vmax.f32 %v3917, %v3918
        %v4052 = vmax.f32 %v4051, %v3919
        %v4053 = vmax.f32 %v4052, %v3920
        %4054 = vmax.xlane.f32.xlu0 %v4053
        %v4055 = vpop.xlane.xlu0 %4054
        %v4056 = vmax.f32 %v3921, %v3922
        %v4057 = vmax.f32 %v4056, %v3923
        %v4058 = vmax.f32 %v4057, %v3924
        %4059 = vmax.xlane.f32.xlu0 %v4058
        %v4060 = vpop.xlane.xlu0 %4059
        %v4061 = vmax.f32 %v3925, %v3926
        %v4062 = vmax.f32 %v4061, %v3927
        %v4063 = vmax.f32 %v4062, %v3928
        %4064 = vmax.xlane.f32.xlu0 %v4063
        %v4065 = vpop.xlane.xlu0 %4064
        %v4066 = vmax.f32 %v3929, %v3930
        %v4067 = vmax.f32 %v4066, %v3931
        %v4068 = vmax.f32 %v4067, %v3932
        %4069 = vmax.xlane.f32.xlu0 %v4068
        %v4070 = vpop.xlane.xlu0 %4069
        %v4071 = vmax.f32 %v3933, %v3934
        %v4072 = vmax.f32 %v4071, %v3935
        %v4073 = vmax.f32 %v4072, %v3936
        %4074 = vmax.xlane.f32.xlu0 %v4073
        %v4075 = vpop.xlane.xlu0 %4074
        %v4076 = vmax.f32 %v3937, %v3938
        %v4077 = vmax.f32 %v4076, %v3939
        %v4078 = vmax.f32 %v4077, %v3940
        %4079 = vmax.xlane.f32.xlu0 %v4078
        %v4080 = vpop.xlane.xlu0 %4079
        %v4081 = vmax.f32 %v3941, %v3942
        %v4082 = vmax.f32 %v4081, %v3943
        %v4083 = vmax.f32 %v4082, %v3944
        %4084 = vmax.xlane.f32.xlu0 %v4083
        %v4085 = vpop.xlane.xlu0 %4084
        %v4086 = vmax.f32 %v3945, %v3946
        %v4087 = vmax.f32 %v4086, %v3947
        %v4088 = vmax.f32 %v4087, %v3948
        %4089 = vmax.xlane.f32.xlu0 %v4088
        %v4090 = vpop.xlane.xlu0 %4089
        %v4091 = vmax.f32 %v3949, %v3950
        %v4092 = vmax.f32 %v4091, %v3951
        %v4093 = vmax.f32 %v4092, %v3952
        %4094 = vmax.xlane.f32.xlu0 %v4093
        %v4095 = vpop.xlane.xlu0 %4094
        %v4096 = vmax.f32 %v3953, %v3954
        %v4097 = vmax.f32 %v4096, %v3955
        %v4098 = vmax.f32 %v4097, %v3956
        %4099 = vmax.xlane.f32.xlu0 %v4098
        %v4100 = vpop.xlane.xlu0 %4099
        %v4101 = vmax.f32 %v3957, %v3958
        %v4102 = vmax.f32 %v4101, %v3959
        %v4103 = vmax.f32 %v4102, %v3960
        %4104 = vmax.xlane.f32.xlu0 %v4103
        %v4105 = vpop.xlane.xlu0 %4104
        %v4106 = vmax.f32 %v3961, %v3962
        %v4107 = vmax.f32 %v4106, %v3963
        %v4108 = vmax.f32 %v4107, %v3964
        %4109 = vmax.xlane.f32.xlu0 %v4108
        %v4110 = vpop.xlane.xlu0 %4109
        %v4111 = vmax.f32 %v3965, %v3966
        %v4112 = vmax.f32 %v4111, %v3967
        %v4113 = vmax.f32 %v4112, %v3968
        %4114 = vmax.xlane.f32.xlu0 %v4113
        %v4115 = vpop.xlane.xlu0 %4114
        %v4116 = vmax.f32 %v3969, %v3970
        %v4117 = vmax.f32 %v4116, %v3971
        %v4118 = vmax.f32 %v4117, %v3972
        %4119 = vmax.xlane.f32.xlu0 %v4118
        %v4120 = vpop.xlane.xlu0 %4119
        %v4121 = vmax.f32 %v3973, %v3974
        %v4122 = vmax.f32 %v4121, %v3975
        %v4123 = vmax.f32 %v4122, %v3976
        %4124 = vmax.xlane.f32.xlu0 %v4123
        %v4125 = vpop.xlane.xlu0 %4124
        %v4126 = vmax.f32 %v3977, %v3978
        %v4127 = vmax.f32 %v4126, %v3979
        %v4128 = vmax.f32 %v4127, %v3980
        %4129 = vmax.xlane.f32.xlu0 %v4128
        %v4130 = vpop.xlane.xlu0 %4129
        %v4131 = vmax.f32 %v3981, %v3982
        %v4132 = vmax.f32 %v4131, %v3983
        %v4133 = vmax.f32 %v4132, %v3984
        %4134 = vmax.xlane.f32.xlu0 %v4133
        %v4135 = vpop.xlane.xlu0 %4134
        %v4136 = vmax.f32 %v3985, %v3986
        %v4137 = vmax.f32 %v4136, %v3987
        %v4138 = vmax.f32 %v4137, %v3988
        %4139 = vmax.xlane.f32.xlu0 %v4138
        %v4140 = vpop.xlane.xlu0 %4139
        %v4141 = vmax.f32 %v3989, %v3990
        %v4142 = vmax.f32 %v4141, %v3991
        %v4143 = vmax.f32 %v4142, %v3992
        %4144 = vmax.xlane.f32.xlu0 %v4143
        %v4145 = vpop.xlane.xlu0 %4144
        %v4146 = vmax.f32 %v3993, %v3994
        %v4147 = vmax.f32 %v4146, %v3995
        %v4148 = vmax.f32 %v4147, %v3996
        %4149 = vmax.xlane.f32.xlu0 %v4148
        %v4150 = vpop.xlane.xlu0 %4149
        %v4151 = vmax.f32 %v3997, %v3998
        %v4152 = vmax.f32 %v4151, %v3999
        %v4153 = vmax.f32 %v4152, %v4000
        %4154 = vmax.xlane.f32.xlu0 %v4153
        %v4155 = vpop.xlane.xlu0 %4154
        %v4156 = vmax.f32 %v4001, %v4002
        %v4157 = vmax.f32 %v4156, %v4003
        %v4158 = vmax.f32 %v4157, %v4004
        %4159 = vmax.xlane.f32.xlu0 %v4158
        %v4160 = vpop.xlane.xlu0 %4159
        %v4161 = vmax.f32 %v4005, %v4006
        %v4162 = vmax.f32 %v4161, %v4007
        %v4163 = vmax.f32 %v4162, %v4008
        %4164 = vmax.xlane.f32.xlu0 %v4163
        %v4165 = vpop.xlane.xlu0 %4164
        %v4166 = vmax.f32 %v4009, %v4010
        %v4167 = vmax.f32 %v4166, %v4011
        %v4168 = vmax.f32 %v4167, %v4012
        %4169 = vmax.xlane.f32.xlu0 %v4168
        %v4170 = vpop.xlane.xlu0 %4169
        %v4171 = vmax.f32 %v4013, %v4014
        %v4172 = vmax.f32 %v4171, %v4015
        %v4173 = vmax.f32 %v4172, %v4016
        %4174 = vmax.xlane.f32.xlu0 %v4173
        %v4175 = vpop.xlane.xlu0 %4174
        %v4176 = vmax.f32 %v4017, %v4018
        %v4177 = vmax.f32 %v4176, %v4019
        %v4178 = vmax.f32 %v4177, %v4020
        %4179 = vmax.xlane.f32.xlu0 %v4178
        %v4180 = vpop.xlane.xlu0 %4179
        %vm4181 = vcmp.lt.f32.partialorder %v1141, %v4025
        %vm4182 = vcmp.lt.f32.partialorder %v1142, %v4025
        %vm4183 = vcmp.lt.f32.partialorder %v1143, %v4025
        %vm4184 = vcmp.lt.f32.partialorder %v1144, %v4025
        %vm4185 = vcmp.lt.f32.partialorder %v1145, %v4030
        %vm4186 = vcmp.lt.f32.partialorder %v1146, %v4030
        %vm4187 = vcmp.lt.f32.partialorder %v1147, %v4030
        %vm4188 = vcmp.lt.f32.partialorder %v1148, %v4030
        %vm4189 = vcmp.lt.f32.partialorder %v1149, %v4035
        %vm4190 = vcmp.lt.f32.partialorder %v1150, %v4035
        %vm4191 = vcmp.lt.f32.partialorder %v1151, %v4035
        %vm4192 = vcmp.lt.f32.partialorder %v1152, %v4035
        %vm4193 = vcmp.lt.f32.partialorder %v1153, %v4040
        %vm4194 = vcmp.lt.f32.partialorder %v1154, %v4040
        %vm4195 = vcmp.lt.f32.partialorder %v1155, %v4040
        %vm4196 = vcmp.lt.f32.partialorder %v1156, %v4040
        %vm4197 = vcmp.lt.f32.partialorder %v1157, %v4045
        %vm4198 = vcmp.lt.f32.partialorder %v1158, %v4045
        %vm4199 = vcmp.lt.f32.partialorder %v1159, %v4045
        %vm4200 = vcmp.lt.f32.partialorder %v1160, %v4045
        %vm4201 = vcmp.lt.f32.partialorder %v1161, %v4050
        %vm4202 = vcmp.lt.f32.partialorder %v1162, %v4050
        %vm4203 = vcmp.lt.f32.partialorder %v1163, %v4050
        %vm4204 = vcmp.lt.f32.partialorder %v1164, %v4050
        %vm4205 = vcmp.lt.f32.partialorder %v1165, %v4055
        %vm4206 = vcmp.lt.f32.partialorder %v1166, %v4055
        %vm4207 = vcmp.lt.f32.partialorder %v1167, %v4055
        %vm4208 = vcmp.lt.f32.partialorder %v1168, %v4055
        %vm4209 = vcmp.lt.f32.partialorder %v1169, %v4060
        %vm4210 = vcmp.lt.f32.partialorder %v1170, %v4060
        %vm4211 = vcmp.lt.f32.partialorder %v1171, %v4060
        %vm4212 = vcmp.lt.f32.partialorder %v1172, %v4060
        %vm4213 = vcmp.lt.f32.partialorder %v1173, %v4065
        %vm4214 = vcmp.lt.f32.partialorder %v1174, %v4065
        %vm4215 = vcmp.lt.f32.partialorder %v1175, %v4065
        %vm4216 = vcmp.lt.f32.partialorder %v1176, %v4065
        %vm4217 = vcmp.lt.f32.partialorder %v1177, %v4070
        %vm4218 = vcmp.lt.f32.partialorder %v1178, %v4070
        %vm4219 = vcmp.lt.f32.partialorder %v1179, %v4070
        %vm4220 = vcmp.lt.f32.partialorder %v1180, %v4070
        %vm4221 = vcmp.lt.f32.partialorder %v1181, %v4075
        %vm4222 = vcmp.lt.f32.partialorder %v1182, %v4075
        %vm4223 = vcmp.lt.f32.partialorder %v1183, %v4075
        %vm4224 = vcmp.lt.f32.partialorder %v1184, %v4075
        %vm4225 = vcmp.lt.f32.partialorder %v1185, %v4080
        %vm4226 = vcmp.lt.f32.partialorder %v1186, %v4080
        %vm4227 = vcmp.lt.f32.partialorder %v1187, %v4080
        %vm4228 = vcmp.lt.f32.partialorder %v1188, %v4080
        %vm4229 = vcmp.lt.f32.partialorder %v1189, %v4085
        %vm4230 = vcmp.lt.f32.partialorder %v1190, %v4085
        %vm4231 = vcmp.lt.f32.partialorder %v1191, %v4085
        %vm4232 = vcmp.lt.f32.partialorder %v1192, %v4085
        %vm4233 = vcmp.lt.f32.partialorder %v1193, %v4090
        %vm4234 = vcmp.lt.f32.partialorder %v1194, %v4090
        %vm4235 = vcmp.lt.f32.partialorder %v1195, %v4090
        %vm4236 = vcmp.lt.f32.partialorder %v1196, %v4090
        %vm4237 = vcmp.lt.f32.partialorder %v1197, %v4095
        %vm4238 = vcmp.lt.f32.partialorder %v1198, %v4095
        %vm4239 = vcmp.lt.f32.partialorder %v1199, %v4095
        %vm4240 = vcmp.lt.f32.partialorder %v1200, %v4095
        %vm4241 = vcmp.lt.f32.partialorder %v1201, %v4100
        %vm4242 = vcmp.lt.f32.partialorder %v1202, %v4100
        %vm4243 = vcmp.lt.f32.partialorder %v1203, %v4100
        %vm4244 = vcmp.lt.f32.partialorder %v1204, %v4100
        %vm4245 = vcmp.lt.f32.partialorder %v1205, %v4105
        %vm4246 = vcmp.lt.f32.partialorder %v1206, %v4105
        %vm4247 = vcmp.lt.f32.partialorder %v1207, %v4105
        %vm4248 = vcmp.lt.f32.partialorder %v1208, %v4105
        %vm4249 = vcmp.lt.f32.partialorder %v1209, %v4110
        %vm4250 = vcmp.lt.f32.partialorder %v1210, %v4110
        %vm4251 = vcmp.lt.f32.partialorder %v1211, %v4110
        %vm4252 = vcmp.lt.f32.partialorder %v1212, %v4110
        %vm4253 = vcmp.lt.f32.partialorder %v1213, %v4115
        %vm4254 = vcmp.lt.f32.partialorder %v1214, %v4115
        %vm4255 = vcmp.lt.f32.partialorder %v1215, %v4115
        %vm4256 = vcmp.lt.f32.partialorder %v1216, %v4115
        %vm4257 = vcmp.lt.f32.partialorder %v1217, %v4120
        %vm4258 = vcmp.lt.f32.partialorder %v1218, %v4120
        %vm4259 = vcmp.lt.f32.partialorder %v1219, %v4120
        %vm4260 = vcmp.lt.f32.partialorder %v1220, %v4120
        %vm4261 = vcmp.lt.f32.partialorder %v1221, %v4125
        %vm4262 = vcmp.lt.f32.partialorder %v1222, %v4125
        %vm4263 = vcmp.lt.f32.partialorder %v1223, %v4125
        %vm4264 = vcmp.lt.f32.partialorder %v1224, %v4125
        %vm4265 = vcmp.lt.f32.partialorder %v1225, %v4130
        %vm4266 = vcmp.lt.f32.partialorder %v1226, %v4130
        %vm4267 = vcmp.lt.f32.partialorder %v1227, %v4130
        %vm4268 = vcmp.lt.f32.partialorder %v1228, %v4130
        %vm4269 = vcmp.lt.f32.partialorder %v1229, %v4135
        %vm4270 = vcmp.lt.f32.partialorder %v1230, %v4135
        %vm4271 = vcmp.lt.f32.partialorder %v1231, %v4135
        %vm4272 = vcmp.lt.f32.partialorder %v1232, %v4135
        %vm4273 = vcmp.lt.f32.partialorder %v1233, %v4140
        %vm4274 = vcmp.lt.f32.partialorder %v1234, %v4140
        %vm4275 = vcmp.lt.f32.partialorder %v1235, %v4140
        %vm4276 = vcmp.lt.f32.partialorder %v1236, %v4140
        %vm4277 = vcmp.lt.f32.partialorder %v1237, %v4145
        %vm4278 = vcmp.lt.f32.partialorder %v1238, %v4145
        %vm4279 = vcmp.lt.f32.partialorder %v1239, %v4145
        %vm4280 = vcmp.lt.f32.partialorder %v1240, %v4145
        %vm4281 = vcmp.lt.f32.partialorder %v1241, %v4150
        %vm4282 = vcmp.lt.f32.partialorder %v1242, %v4150
        %vm4283 = vcmp.lt.f32.partialorder %v1243, %v4150
        %vm4284 = vcmp.lt.f32.partialorder %v1244, %v4150
        %vm4285 = vcmp.lt.f32.partialorder %v1245, %v4155
        %vm4286 = vcmp.lt.f32.partialorder %v1246, %v4155
        %vm4287 = vcmp.lt.f32.partialorder %v1247, %v4155
        %vm4288 = vcmp.lt.f32.partialorder %v1248, %v4155
        %vm4289 = vcmp.lt.f32.partialorder %v1249, %v4160
        %vm4290 = vcmp.lt.f32.partialorder %v1250, %v4160
        %vm4291 = vcmp.lt.f32.partialorder %v1251, %v4160
        %vm4292 = vcmp.lt.f32.partialorder %v1252, %v4160
        %vm4293 = vcmp.lt.f32.partialorder %v1253, %v4165
        %vm4294 = vcmp.lt.f32.partialorder %v1254, %v4165
        %vm4295 = vcmp.lt.f32.partialorder %v1255, %v4165
        %vm4296 = vcmp.lt.f32.partialorder %v1256, %v4165
        %vm4297 = vcmp.lt.f32.partialorder %v1257, %v4170
        %vm4298 = vcmp.lt.f32.partialorder %v1258, %v4170
        %vm4299 = vcmp.lt.f32.partialorder %v1259, %v4170
        %vm4300 = vcmp.lt.f32.partialorder %v1260, %v4170
        %vm4301 = vcmp.lt.f32.partialorder %v1261, %v4175
        %vm4302 = vcmp.lt.f32.partialorder %v1262, %v4175
        %vm4303 = vcmp.lt.f32.partialorder %v1263, %v4175
        %vm4304 = vcmp.lt.f32.partialorder %v1264, %v4175
        %vm4305 = vcmp.lt.f32.partialorder %v1265, %v4180
        %vm4306 = vcmp.lt.f32.partialorder %v1266, %v4180
        %vm4307 = vcmp.lt.f32.partialorder %v1267, %v4180
        %vm4308 = vcmp.lt.f32.partialorder %v1268, %v4180
        %v4309 = vsel %vm4181, %v1141, -inf
        %v4310 = vsel %vm4182, %v1142, -inf
        %v4311 = vsel %vm4183, %v1143, -inf
        %v4312 = vsel %vm4184, %v1144, -inf
        %v4313 = vsel %vm4185, %v1145, -inf
        %v4314 = vsel %vm4186, %v1146, -inf
        %v4315 = vsel %vm4187, %v1147, -inf
        %v4316 = vsel %vm4188, %v1148, -inf
        %v4317 = vsel %vm4189, %v1149, -inf
        %v4318 = vsel %vm4190, %v1150, -inf
        %v4319 = vsel %vm4191, %v1151, -inf
        %v4320 = vsel %vm4192, %v1152, -inf
        %v4321 = vsel %vm4193, %v1153, -inf
        %v4322 = vsel %vm4194, %v1154, -inf
        %v4323 = vsel %vm4195, %v1155, -inf
        %v4324 = vsel %vm4196, %v1156, -inf
        %v4325 = vsel %vm4197, %v1157, -inf
        %v4326 = vsel %vm4198, %v1158, -inf
        %v4327 = vsel %vm4199, %v1159, -inf
        %v4328 = vsel %vm4200, %v1160, -inf
        %v4329 = vsel %vm4201, %v1161, -inf
        %v4330 = vsel %vm4202, %v1162, -inf
        %v4331 = vsel %vm4203, %v1163, -inf
        %v4332 = vsel %vm4204, %v1164, -inf
        %v4333 = vsel %vm4205, %v1165, -inf
        %v4334 = vsel %vm4206, %v1166, -inf
        %v4335 = vsel %vm4207, %v1167, -inf
        %v4336 = vsel %vm4208, %v1168, -inf
        %v4337 = vsel %vm4209, %v1169, -inf
        %v4338 = vsel %vm4210, %v1170, -inf
        %v4339 = vsel %vm4211, %v1171, -inf
        %v4340 = vsel %vm4212, %v1172, -inf
        %v4341 = vsel %vm4213, %v1173, -inf
        %v4342 = vsel %vm4214, %v1174, -inf
        %v4343 = vsel %vm4215, %v1175, -inf
        %v4344 = vsel %vm4216, %v1176, -inf
        %v4345 = vsel %vm4217, %v1177, -inf
        %v4346 = vsel %vm4218, %v1178, -inf
        %v4347 = vsel %vm4219, %v1179, -inf
        %v4348 = vsel %vm4220, %v1180, -inf
        %v4349 = vsel %vm4221, %v1181, -inf
        %v4350 = vsel %vm4222, %v1182, -inf
        %v4351 = vsel %vm4223, %v1183, -inf
        %v4352 = vsel %vm4224, %v1184, -inf
        %v4353 = vsel %vm4225, %v1185, -inf
        %v4354 = vsel %vm4226, %v1186, -inf
        %v4355 = vsel %vm4227, %v1187, -inf
        %v4356 = vsel %vm4228, %v1188, -inf
        %v4357 = vsel %vm4229, %v1189, -inf
        %v4358 = vsel %vm4230, %v1190, -inf
        %v4359 = vsel %vm4231, %v1191, -inf
        %v4360 = vsel %vm4232, %v1192, -inf
        %v4361 = vsel %vm4233, %v1193, -inf
        %v4362 = vsel %vm4234, %v1194, -inf
        %v4363 = vsel %vm4235, %v1195, -inf
        %v4364 = vsel %vm4236, %v1196, -inf
        %v4365 = vsel %vm4237, %v1197, -inf
        %v4366 = vsel %vm4238, %v1198, -inf
        %v4367 = vsel %vm4239, %v1199, -inf
        %v4368 = vsel %vm4240, %v1200, -inf
        %v4369 = vsel %vm4241, %v1201, -inf
        %v4370 = vsel %vm4242, %v1202, -inf
        %v4371 = vsel %vm4243, %v1203, -inf
        %v4372 = vsel %vm4244, %v1204, -inf
        %v4373 = vsel %vm4245, %v1205, -inf
        %v4374 = vsel %vm4246, %v1206, -inf
        %v4375 = vsel %vm4247, %v1207, -inf
        %v4376 = vsel %vm4248, %v1208, -inf
        %v4377 = vsel %vm4249, %v1209, -inf
        %v4378 = vsel %vm4250, %v1210, -inf
        %v4379 = vsel %vm4251, %v1211, -inf
        %v4380 = vsel %vm4252, %v1212, -inf
        %v4381 = vsel %vm4253, %v1213, -inf
        %v4382 = vsel %vm4254, %v1214, -inf
        %v4383 = vsel %vm4255, %v1215, -inf
        %v4384 = vsel %vm4256, %v1216, -inf
        %v4385 = vsel %vm4257, %v1217, -inf
        %v4386 = vsel %vm4258, %v1218, -inf
        %v4387 = vsel %vm4259, %v1219, -inf
        %v4388 = vsel %vm4260, %v1220, -inf
        %v4389 = vsel %vm4261, %v1221, -inf
        %v4390 = vsel %vm4262, %v1222, -inf
        %v4391 = vsel %vm4263, %v1223, -inf
        %v4392 = vsel %vm4264, %v1224, -inf
        %v4393 = vsel %vm4265, %v1225, -inf
        %v4394 = vsel %vm4266, %v1226, -inf
        %v4395 = vsel %vm4267, %v1227, -inf
        %v4396 = vsel %vm4268, %v1228, -inf
        %v4397 = vsel %vm4269, %v1229, -inf
        %v4398 = vsel %vm4270, %v1230, -inf
        %v4399 = vsel %vm4271, %v1231, -inf
        %v4400 = vsel %vm4272, %v1232, -inf
        %v4401 = vsel %vm4273, %v1233, -inf
        %v4402 = vsel %vm4274, %v1234, -inf
        %v4403 = vsel %vm4275, %v1235, -inf
        %v4404 = vsel %vm4276, %v1236, -inf
        %v4405 = vsel %vm4277, %v1237, -inf
        %v4406 = vsel %vm4278, %v1238, -inf
        %v4407 = vsel %vm4279, %v1239, -inf
        %v4408 = vsel %vm4280, %v1240, -inf
        %v4409 = vsel %vm4281, %v1241, -inf
        %v4410 = vsel %vm4282, %v1242, -inf
        %v4411 = vsel %vm4283, %v1243, -inf
        %v4412 = vsel %vm4284, %v1244, -inf
        %v4413 = vsel %vm4285, %v1245, -inf
        %v4414 = vsel %vm4286, %v1246, -inf
        %v4415 = vsel %vm4287, %v1247, -inf
        %v4416 = vsel %vm4288, %v1248, -inf
        %v4417 = vsel %vm4289, %v1249, -inf
        %v4418 = vsel %vm4290, %v1250, -inf
        %v4419 = vsel %vm4291, %v1251, -inf
        %v4420 = vsel %vm4292, %v1252, -inf
        %v4421 = vsel %vm4293, %v1253, -inf
        %v4422 = vsel %vm4294, %v1254, -inf
        %v4423 = vsel %vm4295, %v1255, -inf
        %v4424 = vsel %vm4296, %v1256, -inf
        %v4425 = vsel %vm4297, %v1257, -inf
        %v4426 = vsel %vm4298, %v1258, -inf
        %v4427 = vsel %vm4299, %v1259, -inf
        %v4428 = vsel %vm4300, %v1260, -inf
        %v4429 = vsel %vm4301, %v1261, -inf
        %v4430 = vsel %vm4302, %v1262, -inf
        %v4431 = vsel %vm4303, %v1263, -inf
        %v4432 = vsel %vm4304, %v1264, -inf
        %v4433 = vsel %vm4305, %v1265, -inf
        %v4434 = vsel %vm4306, %v1266, -inf
        %v4435 = vsel %vm4307, %v1267, -inf
        %v4436 = vsel %vm4308, %v1268, -inf
        %v4437 = vmax.f32 %v4309, %v4310
        %v4438 = vmax.f32 %v4437, %v4311
        %v4439 = vmax.f32 %v4438, %v4312
        %4440 = vmax.xlane.f32.xlu0 %v4439
        %v4441 = vpop.xlane.xlu0 %4440
        %v4442 = vmax.f32 %v4313, %v4314
        %v4443 = vmax.f32 %v4442, %v4315
        %v4444 = vmax.f32 %v4443, %v4316
        %4445 = vmax.xlane.f32.xlu0 %v4444
        %v4446 = vpop.xlane.xlu0 %4445
        %v4447 = vmax.f32 %v4317, %v4318
        %v4448 = vmax.f32 %v4447, %v4319
        %v4449 = vmax.f32 %v4448, %v4320
        %4450 = vmax.xlane.f32.xlu0 %v4449
        %v4451 = vpop.xlane.xlu0 %4450
        %v4452 = vmax.f32 %v4321, %v4322
        %v4453 = vmax.f32 %v4452, %v4323
        %v4454 = vmax.f32 %v4453, %v4324
        %4455 = vmax.xlane.f32.xlu0 %v4454
        %v4456 = vpop.xlane.xlu0 %4455
        %v4457 = vmax.f32 %v4325, %v4326
        %v4458 = vmax.f32 %v4457, %v4327
        %v4459 = vmax.f32 %v4458, %v4328
        %4460 = vmax.xlane.f32.xlu0 %v4459
        %v4461 = vpop.xlane.xlu0 %4460
        %v4462 = vmax.f32 %v4329, %v4330
        %v4463 = vmax.f32 %v4462, %v4331
        %v4464 = vmax.f32 %v4463, %v4332
        %4465 = vmax.xlane.f32.xlu0 %v4464
        %v4466 = vpop.xlane.xlu0 %4465
        %v4467 = vmax.f32 %v4333, %v4334
        %v4468 = vmax.f32 %v4467, %v4335
        %v4469 = vmax.f32 %v4468, %v4336
        %4470 = vmax.xlane.f32.xlu0 %v4469
        %v4471 = vpop.xlane.xlu0 %4470
        %v4472 = vmax.f32 %v4337, %v4338
        %v4473 = vmax.f32 %v4472, %v4339
        %v4474 = vmax.f32 %v4473, %v4340
        %4475 = vmax.xlane.f32.xlu0 %v4474
        %v4476 = vpop.xlane.xlu0 %4475
        %v4477 = vmax.f32 %v4341, %v4342
        %v4478 = vmax.f32 %v4477, %v4343
        %v4479 = vmax.f32 %v4478, %v4344
        %4480 = vmax.xlane.f32.xlu0 %v4479
        %v4481 = vpop.xlane.xlu0 %4480
        %v4482 = vmax.f32 %v4345, %v4346
        %v4483 = vmax.f32 %v4482, %v4347
        %v4484 = vmax.f32 %v4483, %v4348
        %4485 = vmax.xlane.f32.xlu0 %v4484
        %v4486 = vpop.xlane.xlu0 %4485
        %v4487 = vmax.f32 %v4349, %v4350
        %v4488 = vmax.f32 %v4487, %v4351
        %v4489 = vmax.f32 %v4488, %v4352
        %4490 = vmax.xlane.f32.xlu0 %v4489
        %v4491 = vpop.xlane.xlu0 %4490
        %v4492 = vmax.f32 %v4353, %v4354
        %v4493 = vmax.f32 %v4492, %v4355
        %v4494 = vmax.f32 %v4493, %v4356
        %4495 = vmax.xlane.f32.xlu0 %v4494
        %v4496 = vpop.xlane.xlu0 %4495
        %v4497 = vmax.f32 %v4357, %v4358
        %v4498 = vmax.f32 %v4497, %v4359
        %v4499 = vmax.f32 %v4498, %v4360
        %4500 = vmax.xlane.f32.xlu0 %v4499
        %v4501 = vpop.xlane.xlu0 %4500
        %v4502 = vmax.f32 %v4361, %v4362
        %v4503 = vmax.f32 %v4502, %v4363
        %v4504 = vmax.f32 %v4503, %v4364
        %4505 = vmax.xlane.f32.xlu0 %v4504
        %v4506 = vpop.xlane.xlu0 %4505
        %v4507 = vmax.f32 %v4365, %v4366
        %v4508 = vmax.f32 %v4507, %v4367
        %v4509 = vmax.f32 %v4508, %v4368
        %4510 = vmax.xlane.f32.xlu0 %v4509
        %v4511 = vpop.xlane.xlu0 %4510
        %v4512 = vmax.f32 %v4369, %v4370
        %v4513 = vmax.f32 %v4512, %v4371
        %v4514 = vmax.f32 %v4513, %v4372
        %4515 = vmax.xlane.f32.xlu0 %v4514
        %v4516 = vpop.xlane.xlu0 %4515
        %v4517 = vmax.f32 %v4373, %v4374
        %v4518 = vmax.f32 %v4517, %v4375
        %v4519 = vmax.f32 %v4518, %v4376
        %4520 = vmax.xlane.f32.xlu0 %v4519
        %v4521 = vpop.xlane.xlu0 %4520
        %v4522 = vmax.f32 %v4377, %v4378
        %v4523 = vmax.f32 %v4522, %v4379
        %v4524 = vmax.f32 %v4523, %v4380
        %4525 = vmax.xlane.f32.xlu0 %v4524
        %v4526 = vpop.xlane.xlu0 %4525
        %v4527 = vmax.f32 %v4381, %v4382
        %v4528 = vmax.f32 %v4527, %v4383
        %v4529 = vmax.f32 %v4528, %v4384
        %4530 = vmax.xlane.f32.xlu0 %v4529
        %v4531 = vpop.xlane.xlu0 %4530
        %v4532 = vmax.f32 %v4385, %v4386
        %v4533 = vmax.f32 %v4532, %v4387
        %v4534 = vmax.f32 %v4533, %v4388
        %4535 = vmax.xlane.f32.xlu0 %v4534
        %v4536 = vpop.xlane.xlu0 %4535
        %v4537 = vmax.f32 %v4389, %v4390
        %v4538 = vmax.f32 %v4537, %v4391
        %v4539 = vmax.f32 %v4538, %v4392
        %4540 = vmax.xlane.f32.xlu0 %v4539
        %v4541 = vpop.xlane.xlu0 %4540
        %v4542 = vmax.f32 %v4393, %v4394
        %v4543 = vmax.f32 %v4542, %v4395
        %v4544 = vmax.f32 %v4543, %v4396
        %4545 = vmax.xlane.f32.xlu0 %v4544
        %v4546 = vpop.xlane.xlu0 %4545
        %v4547 = vmax.f32 %v4397, %v4398
        %v4548 = vmax.f32 %v4547, %v4399
        %v4549 = vmax.f32 %v4548, %v4400
        %4550 = vmax.xlane.f32.xlu0 %v4549
        %v4551 = vpop.xlane.xlu0 %4550
        %v4552 = vmax.f32 %v4401, %v4402
        %v4553 = vmax.f32 %v4552, %v4403
        %v4554 = vmax.f32 %v4553, %v4404
        %4555 = vmax.xlane.f32.xlu0 %v4554
        %v4556 = vpop.xlane.xlu0 %4555
        %v4557 = vmax.f32 %v4405, %v4406
        %v4558 = vmax.f32 %v4557, %v4407
        %v4559 = vmax.f32 %v4558, %v4408
        %4560 = vmax.xlane.f32.xlu0 %v4559
        %v4561 = vpop.xlane.xlu0 %4560
        %v4562 = vmax.f32 %v4409, %v4410
        %v4563 = vmax.f32 %v4562, %v4411
        %v4564 = vmax.f32 %v4563, %v4412
        %4565 = vmax.xlane.f32.xlu0 %v4564
        %v4566 = vpop.xlane.xlu0 %4565
        %v4567 = vmax.f32 %v4413, %v4414
        %v4568 = vmax.f32 %v4567, %v4415
        %v4569 = vmax.f32 %v4568, %v4416
        %4570 = vmax.xlane.f32.xlu0 %v4569
        %v4571 = vpop.xlane.xlu0 %4570
        %v4572 = vmax.f32 %v4417, %v4418
        %v4573 = vmax.f32 %v4572, %v4419
        %v4574 = vmax.f32 %v4573, %v4420
        %4575 = vmax.xlane.f32.xlu0 %v4574
        %v4576 = vpop.xlane.xlu0 %4575
        %v4577 = vmax.f32 %v4421, %v4422
        %v4578 = vmax.f32 %v4577, %v4423
        %v4579 = vmax.f32 %v4578, %v4424
        %4580 = vmax.xlane.f32.xlu0 %v4579
        %v4581 = vpop.xlane.xlu0 %4580
        %v4582 = vmax.f32 %v4425, %v4426
        %v4583 = vmax.f32 %v4582, %v4427
        %v4584 = vmax.f32 %v4583, %v4428
        %4585 = vmax.xlane.f32.xlu0 %v4584
        %v4586 = vpop.xlane.xlu0 %4585
        %v4587 = vmax.f32 %v4429, %v4430
        %v4588 = vmax.f32 %v4587, %v4431
        %v4589 = vmax.f32 %v4588, %v4432
        %4590 = vmax.xlane.f32.xlu0 %v4589
        %v4591 = vpop.xlane.xlu0 %4590
        %v4592 = vmax.f32 %v4433, %v4434
        %v4593 = vmax.f32 %v4592, %v4435
        %v4594 = vmax.f32 %v4593, %v4436
        %4595 = vmax.xlane.f32.xlu0 %v4594
        %v4596 = vpop.xlane.xlu0 %4595
        %v4597 = vmax.f32 %v4441, 0.0
        %v4598 = vmax.f32 %v4446, 0.0
        %v4599 = vmax.f32 %v4451, 0.0
        %v4600 = vmax.f32 %v4456, 0.0
        %v4601 = vmax.f32 %v4461, 0.0
        %v4602 = vmax.f32 %v4466, 0.0
        %v4603 = vmax.f32 %v4471, 0.0
        %v4604 = vmax.f32 %v4476, 0.0
        %v4605 = vmax.f32 %v4481, 0.0
        %v4606 = vmax.f32 %v4486, 0.0
        %v4607 = vmax.f32 %v4491, 0.0
        %v4608 = vmax.f32 %v4496, 0.0
        %v4609 = vmax.f32 %v4501, 0.0
        %v4610 = vmax.f32 %v4506, 0.0
        %v4611 = vmax.f32 %v4511, 0.0
        %v4612 = vmax.f32 %v4516, 0.0
        %v4613 = vmax.f32 %v4521, 0.0
        %v4614 = vmax.f32 %v4526, 0.0
        %v4615 = vmax.f32 %v4531, 0.0
        %v4616 = vmax.f32 %v4536, 0.0
        %v4617 = vmax.f32 %v4541, 0.0
        %v4618 = vmax.f32 %v4546, 0.0
        %v4619 = vmax.f32 %v4551, 0.0
        %v4620 = vmax.f32 %v4556, 0.0
        %v4621 = vmax.f32 %v4561, 0.0
        %v4622 = vmax.f32 %v4566, 0.0
        %v4623 = vmax.f32 %v4571, 0.0
        %v4624 = vmax.f32 %v4576, 0.0
        %v4625 = vmax.f32 %v4581, 0.0
        %v4626 = vmax.f32 %v4586, 0.0
        %v4627 = vmax.f32 %v4591, 0.0
        %v4628 = vmax.f32 %v4596, 0.0
        %vm4629 = vcmp.ge.f32.partialorder %v1141, %v4597
        %vm4630 = vcmp.ge.f32.partialorder %v1142, %v4597
        %vm4631 = vcmp.ge.f32.partialorder %v1143, %v4597
        %vm4632 = vcmp.ge.f32.partialorder %v1144, %v4597
        %vm4633 = vcmp.ge.f32.partialorder %v1145, %v4598
        %vm4634 = vcmp.ge.f32.partialorder %v1146, %v4598
        %vm4635 = vcmp.ge.f32.partialorder %v1147, %v4598
        %vm4636 = vcmp.ge.f32.partialorder %v1148, %v4598
        %vm4637 = vcmp.ge.f32.partialorder %v1149, %v4599
        %vm4638 = vcmp.ge.f32.partialorder %v1150, %v4599
        %vm4639 = vcmp.ge.f32.partialorder %v1151, %v4599
        %vm4640 = vcmp.ge.f32.partialorder %v1152, %v4599
        %vm4641 = vcmp.ge.f32.partialorder %v1153, %v4600
        %vm4642 = vcmp.ge.f32.partialorder %v1154, %v4600
        %vm4643 = vcmp.ge.f32.partialorder %v1155, %v4600
        %vm4644 = vcmp.ge.f32.partialorder %v1156, %v4600
        %vm4645 = vcmp.ge.f32.partialorder %v1157, %v4601
        %vm4646 = vcmp.ge.f32.partialorder %v1158, %v4601
        %vm4647 = vcmp.ge.f32.partialorder %v1159, %v4601
        %vm4648 = vcmp.ge.f32.partialorder %v1160, %v4601
        %vm4649 = vcmp.ge.f32.partialorder %v1161, %v4602
        %vm4650 = vcmp.ge.f32.partialorder %v1162, %v4602
        %vm4651 = vcmp.ge.f32.partialorder %v1163, %v4602
        %vm4652 = vcmp.ge.f32.partialorder %v1164, %v4602
        %vm4653 = vcmp.ge.f32.partialorder %v1165, %v4603
        %vm4654 = vcmp.ge.f32.partialorder %v1166, %v4603
        %vm4655 = vcmp.ge.f32.partialorder %v1167, %v4603
        %vm4656 = vcmp.ge.f32.partialorder %v1168, %v4603
        %vm4657 = vcmp.ge.f32.partialorder %v1169, %v4604
        %vm4658 = vcmp.ge.f32.partialorder %v1170, %v4604
        %vm4659 = vcmp.ge.f32.partialorder %v1171, %v4604
        %vm4660 = vcmp.ge.f32.partialorder %v1172, %v4604
        %vm4661 = vcmp.ge.f32.partialorder %v1173, %v4605
        %vm4662 = vcmp.ge.f32.partialorder %v1174, %v4605
        %vm4663 = vcmp.ge.f32.partialorder %v1175, %v4605
        %vm4664 = vcmp.ge.f32.partialorder %v1176, %v4605
        %vm4665 = vcmp.ge.f32.partialorder %v1177, %v4606
        %vm4666 = vcmp.ge.f32.partialorder %v1178, %v4606
        %vm4667 = vcmp.ge.f32.partialorder %v1179, %v4606
        %vm4668 = vcmp.ge.f32.partialorder %v1180, %v4606
        %vm4669 = vcmp.ge.f32.partialorder %v1181, %v4607
        %vm4670 = vcmp.ge.f32.partialorder %v1182, %v4607
        %vm4671 = vcmp.ge.f32.partialorder %v1183, %v4607
        %vm4672 = vcmp.ge.f32.partialorder %v1184, %v4607
        %vm4673 = vcmp.ge.f32.partialorder %v1185, %v4608
        %vm4674 = vcmp.ge.f32.partialorder %v1186, %v4608
        %vm4675 = vcmp.ge.f32.partialorder %v1187, %v4608
        %vm4676 = vcmp.ge.f32.partialorder %v1188, %v4608
        %vm4677 = vcmp.ge.f32.partialorder %v1189, %v4609
        %vm4678 = vcmp.ge.f32.partialorder %v1190, %v4609
        %vm4679 = vcmp.ge.f32.partialorder %v1191, %v4609
        %vm4680 = vcmp.ge.f32.partialorder %v1192, %v4609
        %vm4681 = vcmp.ge.f32.partialorder %v1193, %v4610
        %vm4682 = vcmp.ge.f32.partialorder %v1194, %v4610
        %vm4683 = vcmp.ge.f32.partialorder %v1195, %v4610
        %vm4684 = vcmp.ge.f32.partialorder %v1196, %v4610
        %vm4685 = vcmp.ge.f32.partialorder %v1197, %v4611
        %vm4686 = vcmp.ge.f32.partialorder %v1198, %v4611
        %vm4687 = vcmp.ge.f32.partialorder %v1199, %v4611
        %vm4688 = vcmp.ge.f32.partialorder %v1200, %v4611
        %vm4689 = vcmp.ge.f32.partialorder %v1201, %v4612
        %vm4690 = vcmp.ge.f32.partialorder %v1202, %v4612
        %vm4691 = vcmp.ge.f32.partialorder %v1203, %v4612
        %vm4692 = vcmp.ge.f32.partialorder %v1204, %v4612
        %vm4693 = vcmp.ge.f32.partialorder %v1205, %v4613
        %vm4694 = vcmp.ge.f32.partialorder %v1206, %v4613
        %vm4695 = vcmp.ge.f32.partialorder %v1207, %v4613
        %vm4696 = vcmp.ge.f32.partialorder %v1208, %v4613
        %vm4697 = vcmp.ge.f32.partialorder %v1209, %v4614
        %vm4698 = vcmp.ge.f32.partialorder %v1210, %v4614
        %vm4699 = vcmp.ge.f32.partialorder %v1211, %v4614
        %vm4700 = vcmp.ge.f32.partialorder %v1212, %v4614
        %vm4701 = vcmp.ge.f32.partialorder %v1213, %v4615
        %vm4702 = vcmp.ge.f32.partialorder %v1214, %v4615
        %vm4703 = vcmp.ge.f32.partialorder %v1215, %v4615
        %vm4704 = vcmp.ge.f32.partialorder %v1216, %v4615
        %vm4705 = vcmp.ge.f32.partialorder %v1217, %v4616
        %vm4706 = vcmp.ge.f32.partialorder %v1218, %v4616
        %vm4707 = vcmp.ge.f32.partialorder %v1219, %v4616
        %vm4708 = vcmp.ge.f32.partialorder %v1220, %v4616
        %vm4709 = vcmp.ge.f32.partialorder %v1221, %v4617
        %vm4710 = vcmp.ge.f32.partialorder %v1222, %v4617
        %vm4711 = vcmp.ge.f32.partialorder %v1223, %v4617
        %vm4712 = vcmp.ge.f32.partialorder %v1224, %v4617
        %vm4713 = vcmp.ge.f32.partialorder %v1225, %v4618
        %vm4714 = vcmp.ge.f32.partialorder %v1226, %v4618
        %vm4715 = vcmp.ge.f32.partialorder %v1227, %v4618
        %vm4716 = vcmp.ge.f32.partialorder %v1228, %v4618
        %vm4717 = vcmp.ge.f32.partialorder %v1229, %v4619
        %vm4718 = vcmp.ge.f32.partialorder %v1230, %v4619
        %vm4719 = vcmp.ge.f32.partialorder %v1231, %v4619
        %vm4720 = vcmp.ge.f32.partialorder %v1232, %v4619
        %vm4721 = vcmp.ge.f32.partialorder %v1233, %v4620
        %vm4722 = vcmp.ge.f32.partialorder %v1234, %v4620
        %vm4723 = vcmp.ge.f32.partialorder %v1235, %v4620
        %vm4724 = vcmp.ge.f32.partialorder %v1236, %v4620
        %vm4725 = vcmp.ge.f32.partialorder %v1237, %v4621
        %vm4726 = vcmp.ge.f32.partialorder %v1238, %v4621
        %vm4727 = vcmp.ge.f32.partialorder %v1239, %v4621
        %vm4728 = vcmp.ge.f32.partialorder %v1240, %v4621
        %vm4729 = vcmp.ge.f32.partialorder %v1241, %v4622
        %vm4730 = vcmp.ge.f32.partialorder %v1242, %v4622
        %vm4731 = vcmp.ge.f32.partialorder %v1243, %v4622
        %vm4732 = vcmp.ge.f32.partialorder %v1244, %v4622
        %vm4733 = vcmp.ge.f32.partialorder %v1245, %v4623
        %vm4734 = vcmp.ge.f32.partialorder %v1246, %v4623
        %vm4735 = vcmp.ge.f32.partialorder %v1247, %v4623
        %vm4736 = vcmp.ge.f32.partialorder %v1248, %v4623
        %vm4737 = vcmp.ge.f32.partialorder %v1249, %v4624
        %vm4738 = vcmp.ge.f32.partialorder %v1250, %v4624
        %vm4739 = vcmp.ge.f32.partialorder %v1251, %v4624
        %vm4740 = vcmp.ge.f32.partialorder %v1252, %v4624
        %vm4741 = vcmp.ge.f32.partialorder %v1253, %v4625
        %vm4742 = vcmp.ge.f32.partialorder %v1254, %v4625
        %vm4743 = vcmp.ge.f32.partialorder %v1255, %v4625
        %vm4744 = vcmp.ge.f32.partialorder %v1256, %v4625
        %vm4745 = vcmp.ge.f32.partialorder %v1257, %v4626
        %vm4746 = vcmp.ge.f32.partialorder %v1258, %v4626
        %vm4747 = vcmp.ge.f32.partialorder %v1259, %v4626
        %vm4748 = vcmp.ge.f32.partialorder %v1260, %v4626
        %vm4749 = vcmp.ge.f32.partialorder %v1261, %v4627
        %vm4750 = vcmp.ge.f32.partialorder %v1262, %v4627
        %vm4751 = vcmp.ge.f32.partialorder %v1263, %v4627
        %vm4752 = vcmp.ge.f32.partialorder %v1264, %v4627
        %vm4753 = vcmp.ge.f32.partialorder %v1265, %v4628
        %vm4754 = vcmp.ge.f32.partialorder %v1266, %v4628
        %vm4755 = vcmp.ge.f32.partialorder %v1267, %v4628
        %vm4756 = vcmp.ge.f32.partialorder %v1268, %v4628
        %v4757 = vsel %vm4629, %v1141, 0.0
        %v4758 = vsel %vm4630, %v1142, 0.0
        %v4759 = vsel %vm4631, %v1143, 0.0
        %v4760 = vsel %vm4632, %v1144, 0.0
        %v4761 = vsel %vm4633, %v1145, 0.0
        %v4762 = vsel %vm4634, %v1146, 0.0
        %v4763 = vsel %vm4635, %v1147, 0.0
        %v4764 = vsel %vm4636, %v1148, 0.0
        %v4765 = vsel %vm4637, %v1149, 0.0
        %v4766 = vsel %vm4638, %v1150, 0.0
        %v4767 = vsel %vm4639, %v1151, 0.0
        %v4768 = vsel %vm4640, %v1152, 0.0
        %v4769 = vsel %vm4641, %v1153, 0.0
        %v4770 = vsel %vm4642, %v1154, 0.0
        %v4771 = vsel %vm4643, %v1155, 0.0
        %v4772 = vsel %vm4644, %v1156, 0.0
        %v4773 = vsel %vm4645, %v1157, 0.0
        %v4774 = vsel %vm4646, %v1158, 0.0
        %v4775 = vsel %vm4647, %v1159, 0.0
        %v4776 = vsel %vm4648, %v1160, 0.0
        %v4777 = vsel %vm4649, %v1161, 0.0
        %v4778 = vsel %vm4650, %v1162, 0.0
        %v4779 = vsel %vm4651, %v1163, 0.0
        %v4780 = vsel %vm4652, %v1164, 0.0
        %v4781 = vsel %vm4653, %v1165, 0.0
        %v4782 = vsel %vm4654, %v1166, 0.0
        %v4783 = vsel %vm4655, %v1167, 0.0
        %v4784 = vsel %vm4656, %v1168, 0.0
        %v4785 = vsel %vm4657, %v1169, 0.0
        %v4786 = vsel %vm4658, %v1170, 0.0
        %v4787 = vsel %vm4659, %v1171, 0.0
        %v4788 = vsel %vm4660, %v1172, 0.0
        %v4789 = vsel %vm4661, %v1173, 0.0
        %v4790 = vsel %vm4662, %v1174, 0.0
        %v4791 = vsel %vm4663, %v1175, 0.0
        %v4792 = vsel %vm4664, %v1176, 0.0
        %v4793 = vsel %vm4665, %v1177, 0.0
        %v4794 = vsel %vm4666, %v1178, 0.0
        %v4795 = vsel %vm4667, %v1179, 0.0
        %v4796 = vsel %vm4668, %v1180, 0.0
        %v4797 = vsel %vm4669, %v1181, 0.0
        %v4798 = vsel %vm4670, %v1182, 0.0
        %v4799 = vsel %vm4671, %v1183, 0.0
        %v4800 = vsel %vm4672, %v1184, 0.0
        %v4801 = vsel %vm4673, %v1185, 0.0
        %v4802 = vsel %vm4674, %v1186, 0.0
        %v4803 = vsel %vm4675, %v1187, 0.0
        %v4804 = vsel %vm4676, %v1188, 0.0
        %v4805 = vsel %vm4677, %v1189, 0.0
        %v4806 = vsel %vm4678, %v1190, 0.0
        %v4807 = vsel %vm4679, %v1191, 0.0
        %v4808 = vsel %vm4680, %v1192, 0.0
        %v4809 = vsel %vm4681, %v1193, 0.0
        %v4810 = vsel %vm4682, %v1194, 0.0
        %v4811 = vsel %vm4683, %v1195, 0.0
        %v4812 = vsel %vm4684, %v1196, 0.0
        %v4813 = vsel %vm4685, %v1197, 0.0
        %v4814 = vsel %vm4686, %v1198, 0.0
        %v4815 = vsel %vm4687, %v1199, 0.0
        %v4816 = vsel %vm4688, %v1200, 0.0
        %v4817 = vsel %vm4689, %v1201, 0.0
        %v4818 = vsel %vm4690, %v1202, 0.0
        %v4819 = vsel %vm4691, %v1203, 0.0
        %v4820 = vsel %vm4692, %v1204, 0.0
        %v4821 = vsel %vm4693, %v1205, 0.0
        %v4822 = vsel %vm4694, %v1206, 0.0
        %v4823 = vsel %vm4695, %v1207, 0.0
        %v4824 = vsel %vm4696, %v1208, 0.0
        %v4825 = vsel %vm4697, %v1209, 0.0
        %v4826 = vsel %vm4698, %v1210, 0.0
        %v4827 = vsel %vm4699, %v1211, 0.0
        %v4828 = vsel %vm4700, %v1212, 0.0
        %v4829 = vsel %vm4701, %v1213, 0.0
        %v4830 = vsel %vm4702, %v1214, 0.0
        %v4831 = vsel %vm4703, %v1215, 0.0
        %v4832 = vsel %vm4704, %v1216, 0.0
        %v4833 = vsel %vm4705, %v1217, 0.0
        %v4834 = vsel %vm4706, %v1218, 0.0
        %v4835 = vsel %vm4707, %v1219, 0.0
        %v4836 = vsel %vm4708, %v1220, 0.0
        %v4837 = vsel %vm4709, %v1221, 0.0
        %v4838 = vsel %vm4710, %v1222, 0.0
        %v4839 = vsel %vm4711, %v1223, 0.0
        %v4840 = vsel %vm4712, %v1224, 0.0
        %v4841 = vsel %vm4713, %v1225, 0.0
        %v4842 = vsel %vm4714, %v1226, 0.0
        %v4843 = vsel %vm4715, %v1227, 0.0
        %v4844 = vsel %vm4716, %v1228, 0.0
        %v4845 = vsel %vm4717, %v1229, 0.0
        %v4846 = vsel %vm4718, %v1230, 0.0
        %v4847 = vsel %vm4719, %v1231, 0.0
        %v4848 = vsel %vm4720, %v1232, 0.0
        %v4849 = vsel %vm4721, %v1233, 0.0
        %v4850 = vsel %vm4722, %v1234, 0.0
        %v4851 = vsel %vm4723, %v1235, 0.0
        %v4852 = vsel %vm4724, %v1236, 0.0
        %v4853 = vsel %vm4725, %v1237, 0.0
        %v4854 = vsel %vm4726, %v1238, 0.0
        %v4855 = vsel %vm4727, %v1239, 0.0
        %v4856 = vsel %vm4728, %v1240, 0.0
        %v4857 = vsel %vm4729, %v1241, 0.0
        %v4858 = vsel %vm4730, %v1242, 0.0
        %v4859 = vsel %vm4731, %v1243, 0.0
        %v4860 = vsel %vm4732, %v1244, 0.0
        %v4861 = vsel %vm4733, %v1245, 0.0
        %v4862 = vsel %vm4734, %v1246, 0.0
        %v4863 = vsel %vm4735, %v1247, 0.0
        %v4864 = vsel %vm4736, %v1248, 0.0
        %v4865 = vsel %vm4737, %v1249, 0.0
        %v4866 = vsel %vm4738, %v1250, 0.0
        %v4867 = vsel %vm4739, %v1251, 0.0
        %v4868 = vsel %vm4740, %v1252, 0.0
        %v4869 = vsel %vm4741, %v1253, 0.0
        %v4870 = vsel %vm4742, %v1254, 0.0
        %v4871 = vsel %vm4743, %v1255, 0.0
        %v4872 = vsel %vm4744, %v1256, 0.0
        %v4873 = vsel %vm4745, %v1257, 0.0
        %v4874 = vsel %vm4746, %v1258, 0.0
        %v4875 = vsel %vm4747, %v1259, 0.0
        %v4876 = vsel %vm4748, %v1260, 0.0
        %v4877 = vsel %vm4749, %v1261, 0.0
        %v4878 = vsel %vm4750, %v1262, 0.0
        %v4879 = vsel %vm4751, %v1263, 0.0
        %v4880 = vsel %vm4752, %v1264, 0.0
        %v4881 = vsel %vm4753, %v1265, 0.0
        %v4882 = vsel %vm4754, %v1266, 0.0
        %v4883 = vsel %vm4755, %v1267, 0.0
        %v4884 = vsel %vm4756, %v1268, 0.0
        %v4885 = vld [vmem:[#allocation7] sm:$0xff]
        %v4886 = vld [vmem:[#allocation7 + $0x8] sm:$0xff]
        %v4887 = vld [vmem:[#allocation7 + $0x10] sm:$0xff]
        %v4888 = vld [vmem:[#allocation7 + $0x18] sm:$0xff]
        %v4889 = vld [vmem:[#allocation7 + $0x20] sm:$0xff]
        %v4890 = vld [vmem:[#allocation7 + $0x28] sm:$0xff]
        %v4891 = vld [vmem:[#allocation7 + $0x30] sm:$0xff]
        %v4892 = vld [vmem:[#allocation7 + $0x38] sm:$0xff]
        %v4893 = vld [vmem:[#allocation7 + $0x40] sm:$0xff]
        %v4894 = vld [vmem:[#allocation7 + $0x48] sm:$0xff]
        %v4895 = vld [vmem:[#allocation7 + $0x50] sm:$0xff]
        %v4896 = vld [vmem:[#allocation7 + $0x58] sm:$0xff]
        %v4897 = vld [vmem:[#allocation7 + $0x60] sm:$0xff]
        %v4898 = vld [vmem:[#allocation7 + $0x68] sm:$0xff]
        %v4899 = vld [vmem:[#allocation7 + $0x70] sm:$0xff]
        %v4900 = vld [vmem:[#allocation7 + $0x78] sm:$0xff]
        %v4901 = vld [vmem:[#allocation7 + $0x80] sm:$0xff]
        %v4902 = vld [vmem:[#allocation7 + $0x88] sm:$0xff]
        %v4903 = vld [vmem:[#allocation7 + $0x90] sm:$0xff]
        %v4904 = vld [vmem:[#allocation7 + $0x98] sm:$0xff]
        %v4905 = vld [vmem:[#allocation7 + $0xa0] sm:$0xff]
        %v4906 = vld [vmem:[#allocation7 + $0xa8] sm:$0xff]
        %v4907 = vld [vmem:[#allocation7 + $0xb0] sm:$0xff]
        %v4908 = vld [vmem:[#allocation7 + $0xb8] sm:$0xff]
        %v4909 = vld [vmem:[#allocation7 + $0xc0] sm:$0xff]
        %v4910 = vld [vmem:[#allocation7 + $0xc8] sm:$0xff]
        %v4911 = vld [vmem:[#allocation7 + $0xd0] sm:$0xff]
        %v4912 = vld [vmem:[#allocation7 + $0xd8] sm:$0xff]
        %v4913 = vld [vmem:[#allocation7 + $0xe0] sm:$0xff]
        %v4914 = vld [vmem:[#allocation7 + $0xe8] sm:$0xff]
        %v4915 = vld [vmem:[#allocation7 + $0xf0] sm:$0xff]
        %v4916 = vld [vmem:[#allocation7 + $0xf8] sm:$0xff]
        %v4917 = vld [vmem:[#allocation7 + $0x100] sm:$0xff]
        %v4918 = vld [vmem:[#allocation7 + $0x108] sm:$0xff]
        %v4919 = vld [vmem:[#allocation7 + $0x110] sm:$0xff]
        %v4920 = vld [vmem:[#allocation7 + $0x118] sm:$0xff]
        %v4921 = vld [vmem:[#allocation7 + $0x120] sm:$0xff]
        %v4922 = vld [vmem:[#allocation7 + $0x128] sm:$0xff]
        %v4923 = vld [vmem:[#allocation7 + $0x130] sm:$0xff]
        %v4924 = vld [vmem:[#allocation7 + $0x138] sm:$0xff]
        %v4925 = vld [vmem:[#allocation7 + $0x140] sm:$0xff]
        %v4926 = vld [vmem:[#allocation7 + $0x148] sm:$0xff]
        %v4927 = vld [vmem:[#allocation7 + $0x150] sm:$0xff]
        %v4928 = vld [vmem:[#allocation7 + $0x158] sm:$0xff]
        %v4929 = vld [vmem:[#allocation7 + $0x160] sm:$0xff]
        %v4930 = vld [vmem:[#allocation7 + $0x168] sm:$0xff]
        %v4931 = vld [vmem:[#allocation7 + $0x170] sm:$0xff]
        %v4932 = vld [vmem:[#allocation7 + $0x178] sm:$0xff]
        %v4933 = vld [vmem:[#allocation7 + $0x180] sm:$0xff]
        %v4934 = vld [vmem:[#allocation7 + $0x188] sm:$0xff]
        %v4935 = vld [vmem:[#allocation7 + $0x190] sm:$0xff]
        %v4936 = vld [vmem:[#allocation7 + $0x198] sm:$0xff]
        %v4937 = vld [vmem:[#allocation7 + $0x1a0] sm:$0xff]
        %v4938 = vld [vmem:[#allocation7 + $0x1a8] sm:$0xff]
        %v4939 = vld [vmem:[#allocation7 + $0x1b0] sm:$0xff]
        %v4940 = vld [vmem:[#allocation7 + $0x1b8] sm:$0xff]
        %v4941 = vld [vmem:[#allocation7 + $0x1c0] sm:$0xff]
        %v4942 = vld [vmem:[#allocation7 + $0x1c8] sm:$0xff]
        %v4943 = vld [vmem:[#allocation7 + $0x1d0] sm:$0xff]
        %v4944 = vld [vmem:[#allocation7 + $0x1d8] sm:$0xff]
        %v4945 = vld [vmem:[#allocation7 + $0x1e0] sm:$0xff]
        %v4946 = vld [vmem:[#allocation7 + $0x1e8] sm:$0xff]
        %v4947 = vld [vmem:[#allocation7 + $0x1f0] sm:$0xff]
        %v4948 = vld [vmem:[#allocation7 + $0x1f8] sm:$0xff]
        %v4949 = vld [vmem:[#allocation7 + $0x200] sm:$0xff]
        %v4950 = vld [vmem:[#allocation7 + $0x208] sm:$0xff]
        %v4951 = vld [vmem:[#allocation7 + $0x210] sm:$0xff]
        %v4952 = vld [vmem:[#allocation7 + $0x218] sm:$0xff]
        %v4953 = vld [vmem:[#allocation7 + $0x220] sm:$0xff]
        %v4954 = vld [vmem:[#allocation7 + $0x228] sm:$0xff]
        %v4955 = vld [vmem:[#allocation7 + $0x230] sm:$0xff]
        %v4956 = vld [vmem:[#allocation7 + $0x238] sm:$0xff]
        %v4957 = vld [vmem:[#allocation7 + $0x240] sm:$0xff]
        %v4958 = vld [vmem:[#allocation7 + $0x248] sm:$0xff]
        %v4959 = vld [vmem:[#allocation7 + $0x250] sm:$0xff]
        %v4960 = vld [vmem:[#allocation7 + $0x258] sm:$0xff]
        %v4961 = vld [vmem:[#allocation7 + $0x260] sm:$0xff]
        %v4962 = vld [vmem:[#allocation7 + $0x268] sm:$0xff]
        %v4963 = vld [vmem:[#allocation7 + $0x270] sm:$0xff]
        %v4964 = vld [vmem:[#allocation7 + $0x278] sm:$0xff]
        %v4965 = vld [vmem:[#allocation7 + $0x280] sm:$0xff]
        %v4966 = vld [vmem:[#allocation7 + $0x288] sm:$0xff]
        %v4967 = vld [vmem:[#allocation7 + $0x290] sm:$0xff]
        %v4968 = vld [vmem:[#allocation7 + $0x298] sm:$0xff]
        %v4969 = vld [vmem:[#allocation7 + $0x2a0] sm:$0xff]
        %v4970 = vld [vmem:[#allocation7 + $0x2a8] sm:$0xff]
        %v4971 = vld [vmem:[#allocation7 + $0x2b0] sm:$0xff]
        %v4972 = vld [vmem:[#allocation7 + $0x2b8] sm:$0xff]
        %v4973 = vld [vmem:[#allocation7 + $0x2c0] sm:$0xff]
        %v4974 = vld [vmem:[#allocation7 + $0x2c8] sm:$0xff]
        %v4975 = vld [vmem:[#allocation7 + $0x2d0] sm:$0xff]
        %v4976 = vld [vmem:[#allocation7 + $0x2d8] sm:$0xff]
        %v4977 = vld [vmem:[#allocation7 + $0x2e0] sm:$0xff]
        %v4978 = vld [vmem:[#allocation7 + $0x2e8] sm:$0xff]
        %v4979 = vld [vmem:[#allocation7 + $0x2f0] sm:$0xff]
        %v4980 = vld [vmem:[#allocation7 + $0x2f8] sm:$0xff]
        %v4981 = vld [vmem:[#allocation7 + $0x300] sm:$0xff]
        %v4982 = vld [vmem:[#allocation7 + $0x308] sm:$0xff]
        %v4983 = vld [vmem:[#allocation7 + $0x310] sm:$0xff]
        %v4984 = vld [vmem:[#allocation7 + $0x318] sm:$0xff]
        %v4985 = vld [vmem:[#allocation7 + $0x320] sm:$0xff]
        %v4986 = vld [vmem:[#allocation7 + $0x328] sm:$0xff]
        %v4987 = vld [vmem:[#allocation7 + $0x330] sm:$0xff]
        %v4988 = vld [vmem:[#allocation7 + $0x338] sm:$0xff]
        %v4989 = vld [vmem:[#allocation7 + $0x340] sm:$0xff]
        %v4990 = vld [vmem:[#allocation7 + $0x348] sm:$0xff]
        %v4991 = vld [vmem:[#allocation7 + $0x350] sm:$0xff]
        %v4992 = vld [vmem:[#allocation7 + $0x358] sm:$0xff]
        %v4993 = vld [vmem:[#allocation7 + $0x360] sm:$0xff]
        %v4994 = vld [vmem:[#allocation7 + $0x368] sm:$0xff]
        %v4995 = vld [vmem:[#allocation7 + $0x370] sm:$0xff]
        %v4996 = vld [vmem:[#allocation7 + $0x378] sm:$0xff]
        %v4997 = vld [vmem:[#allocation7 + $0x380] sm:$0xff]
        %v4998 = vld [vmem:[#allocation7 + $0x388] sm:$0xff]
        %v4999 = vld [vmem:[#allocation7 + $0x390] sm:$0xff]
        %v5000 = vld [vmem:[#allocation7 + $0x398] sm:$0xff]
        %v5001 = vld [vmem:[#allocation7 + $0x3a0] sm:$0xff]
        %v5002 = vld [vmem:[#allocation7 + $0x3a8] sm:$0xff]
        %v5003 = vld [vmem:[#allocation7 + $0x3b0] sm:$0xff]
        %v5004 = vld [vmem:[#allocation7 + $0x3b8] sm:$0xff]
        %v5005 = vld [vmem:[#allocation7 + $0x3c0] sm:$0xff]
        %v5006 = vld [vmem:[#allocation7 + $0x3c8] sm:$0xff]
        %v5007 = vld [vmem:[#allocation7 + $0x3d0] sm:$0xff]
        %v5008 = vld [vmem:[#allocation7 + $0x3d8] sm:$0xff]
        %v5009 = vld [vmem:[#allocation7 + $0x3e0] sm:$0xff]
        %v5010 = vld [vmem:[#allocation7 + $0x3e8] sm:$0xff]
        %v5011 = vld [vmem:[#allocation7 + $0x3f0] sm:$0xff]
        %v5012 = vld [vmem:[#allocation7 + $0x3f8] sm:$0xff]
        %5013 = vmatprep.subr.mxu0 %v4916
        %5014 = vmatpush1.msra.mxu0 %v4915
        %5015 = vmatprep.subr.mxu0 %v4914
        %5016 = vmatpush1.msra.mxu0 %v4913
        %5017 = vmatprep.subr.mxu0 %v4912
        %5018 = vmatpush1.msra.mxu0 %v4911
        %5019 = vmatprep.subr.mxu0 %v4910
        %5020 = vmatpush1.msra.mxu0 %v4909
        %5021 = vmatprep.subr.mxu0 %v4908
        %5022 = vmatpush1.msra.mxu0 %v4907
        %5023 = vmatprep.subr.mxu0 %v4906
        %5024 = vmatpush1.msra.mxu0 %v4905
        %5025 = vmatprep.subr.mxu0 %v4904
        %5026 = vmatpush1.msra.mxu0 %v4903
        %5027 = vmatprep.subr.mxu0 %v4902
        %5028 = vmatpush1.msra.mxu0 %v4901
        %5029 = vmatprep.subr.mxu0 %v4900
        %5030 = vmatpush1.msra.mxu0 %v4899
        %5031 = vmatprep.subr.mxu0 %v4898
        %5032 = vmatpush1.msra.mxu0 %v4897
        %5033 = vmatprep.subr.mxu0 %v4896
        %5034 = vmatpush1.msra.mxu0 %v4895
        %5035 = vmatprep.subr.mxu0 %v4894
        %5036 = vmatpush1.msra.mxu0 %v4893
        %5037 = vmatprep.subr.mxu0 %v4892
        %5038 = vmatpush1.msra.mxu0 %v4891
        %5039 = vmatprep.subr.mxu0 %v4890
        %5040 = vmatpush1.msra.mxu0 %v4889
        %5041 = vmatprep.subr.mxu0 %v4888
        %5042 = vmatpush1.msra.mxu0 %v4887
        %5043 = vmatprep.subr.mxu0 %v4886
        %5044 = vmatpush1.msra.mxu0 %v4885
        %5045 = vmatprep.subr.mxu0 %v4948
        %5046 = vmatpush2.msra.mxu0 %v4947
        %5047 = vmatprep.subr.mxu0 %v4946
        %5048 = vmatpush2.msra.mxu0 %v4945
        %5049 = vmatprep.subr.mxu0 %v4944
        %5050 = vmatpush2.msra.mxu0 %v4943
        %5051 = vmatprep.subr.mxu0 %v4942
        %5052 = vmatpush2.msra.mxu0 %v4941
        %5053 = vmatprep.subr.mxu0 %v4940
        %5054 = vmatpush2.msra.mxu0 %v4939
        %5055 = vmatprep.subr.mxu0 %v4938
        %5056 = vmatpush2.msra.mxu0 %v4937
        %5057 = vmatprep.subr.mxu0 %v4936
        %5058 = vmatpush2.msra.mxu0 %v4935
        %5059 = vmatprep.subr.mxu0 %v4934
        %5060 = vmatpush2.msra.mxu0 %v4933
        %5061 = vmatprep.subr.mxu0 %v4932
        %5062 = vmatpush2.msra.mxu0 %v4931
        %5063 = vmatprep.subr.mxu0 %v4930
        %5064 = vmatpush2.msra.mxu0 %v4929
        %5065 = vmatprep.subr.mxu0 %v4928
        %5066 = vmatpush2.msra.mxu0 %v4927
        %5067 = vmatprep.subr.mxu0 %v4926
        %5068 = vmatpush2.msra.mxu0 %v4925
        %5069 = vmatprep.subr.mxu0 %v4924
        %5070 = vmatpush2.msra.mxu0 %v4923
        %5071 = vmatprep.subr.mxu0 %v4922
        %5072 = vmatpush2.msra.mxu0 %v4921
        %5073 = vmatprep.subr.mxu0 %v4920
        %5074 = vmatpush2.msra.mxu0 %v4919
        %5075 = vmatprep.subr.mxu0 %v4918
        %5076 = vmatpush2.msra.mxu0 %v4917
        %5077 = vmatprep.mubr.f32.mxu0 %v4758
        %5078 = vmatmul.mubr.f32.gmra.mxu0 %v4757
        %v5079 = vpop.f32.mrf.mxu0
        %v5080 = vadd.f32 %v428, %v5079
        %v5081 = vpop.f32.mrf.mxu0
        %v5082 = vadd.f32 %v432, %v5081
        %5083 = vmatprep.mubr.f32.mxu0 %v4762
        %5084 = vmatmul.mubr.f32.gmra.mxu0 %v4761
        %v5085 = vpop.f32.mrf.mxu0
        %v5086 = vadd.f32 %v428, %v5085
        %v5087 = vpop.f32.mrf.mxu0
        %v5088 = vadd.f32 %v432, %v5087
        %5089 = vmatprep.mubr.f32.mxu0 %v4766
        %5090 = vmatmul.mubr.f32.gmra.mxu0 %v4765
        %v5091 = vpop.f32.mrf.mxu0
        %v5092 = vadd.f32 %v428, %v5091
        %v5093 = vpop.f32.mrf.mxu0
        %v5094 = vadd.f32 %v432, %v5093
        %5095 = vmatprep.mubr.f32.mxu0 %v4770
        %5096 = vmatmul.mubr.f32.gmra.mxu0 %v4769
        %v5097 = vpop.f32.mrf.mxu0
        %v5098 = vadd.f32 %v428, %v5097
        %v5099 = vpop.f32.mrf.mxu0
        %v5100 = vadd.f32 %v432, %v5099
        %5101 = vmatprep.mubr.f32.mxu0 %v4774
        %5102 = vmatmul.mubr.f32.gmra.mxu0 %v4773
        %v5103 = vpop.f32.mrf.mxu0
        %v5104 = vadd.f32 %v428, %v5103
        %v5105 = vpop.f32.mrf.mxu0
        %v5106 = vadd.f32 %v432, %v5105
        %5107 = vmatprep.mubr.f32.mxu0 %v4778
        %5108 = vmatmul.mubr.f32.gmra.mxu0 %v4777
        %v5109 = vpop.f32.mrf.mxu0
        %v5110 = vadd.f32 %v428, %v5109
        %v5111 = vpop.f32.mrf.mxu0
        %v5112 = vadd.f32 %v432, %v5111
        %5113 = vmatprep.mubr.f32.mxu0 %v4782
        %5114 = vmatmul.mubr.f32.gmra.mxu0 %v4781
        %v5115 = vpop.f32.mrf.mxu0
        %v5116 = vadd.f32 %v428, %v5115
        %v5117 = vpop.f32.mrf.mxu0
        %v5118 = vadd.f32 %v432, %v5117
        %5119 = vmatprep.mubr.f32.mxu0 %v4786
        %5120 = vmatmul.mubr.f32.gmra.mxu0 %v4785
        %v5121 = vpop.f32.mrf.mxu0
        %v5122 = vadd.f32 %v428, %v5121
        %v5123 = vpop.f32.mrf.mxu0
        %v5124 = vadd.f32 %v432, %v5123
        %5125 = vmatprep.mubr.f32.mxu0 %v4790
        %5126 = vmatmul.mubr.f32.gmra.mxu0 %v4789
        %v5127 = vpop.f32.mrf.mxu0
        %v5128 = vadd.f32 %v428, %v5127
        %v5129 = vpop.f32.mrf.mxu0
        %v5130 = vadd.f32 %v432, %v5129
        %5131 = vmatprep.mubr.f32.mxu0 %v4794
        %5132 = vmatmul.mubr.f32.gmra.mxu0 %v4793
        %v5133 = vpop.f32.mrf.mxu0
        %v5134 = vadd.f32 %v428, %v5133
        %v5135 = vpop.f32.mrf.mxu0
        %v5136 = vadd.f32 %v432, %v5135
        %5137 = vmatprep.mubr.f32.mxu0 %v4798
        %5138 = vmatmul.mubr.f32.gmra.mxu0 %v4797
        %v5139 = vpop.f32.mrf.mxu0
        %v5140 = vadd.f32 %v428, %v5139
        %v5141 = vpop.f32.mrf.mxu0
        %v5142 = vadd.f32 %v432, %v5141
        %5143 = vmatprep.mubr.f32.mxu0 %v4802
        %5144 = vmatmul.mubr.f32.gmra.mxu0 %v4801
        %v5145 = vpop.f32.mrf.mxu0
        %v5146 = vadd.f32 %v428, %v5145
        %v5147 = vpop.f32.mrf.mxu0
        %v5148 = vadd.f32 %v432, %v5147
        %5149 = vmatprep.mubr.f32.mxu0 %v4806
        %5150 = vmatmul.mubr.f32.gmra.mxu0 %v4805
        %v5151 = vpop.f32.mrf.mxu0
        %v5152 = vadd.f32 %v428, %v5151
        %v5153 = vpop.f32.mrf.mxu0
        %v5154 = vadd.f32 %v432, %v5153
        %5155 = vmatprep.mubr.f32.mxu0 %v4810
        %5156 = vmatmul.mubr.f32.gmra.mxu0 %v4809
        %v5157 = vpop.f32.mrf.mxu0
        %v5158 = vadd.f32 %v428, %v5157
        %v5159 = vpop.f32.mrf.mxu0
        %v5160 = vadd.f32 %v432, %v5159
        %5161 = vmatprep.mubr.f32.mxu0 %v4814
        %5162 = vmatmul.mubr.f32.gmra.mxu0 %v4813
        %v5163 = vpop.f32.mrf.mxu0
        %v5164 = vadd.f32 %v428, %v5163
        %v5165 = vpop.f32.mrf.mxu0
        %v5166 = vadd.f32 %v432, %v5165
        %5167 = vmatprep.mubr.f32.mxu0 %v4818
        %5168 = vmatmul.mubr.f32.gmra.mxu0 %v4817
        %v5169 = vpop.f32.mrf.mxu0
        %v5170 = vadd.f32 %v428, %v5169
        %v5171 = vpop.f32.mrf.mxu0
        %v5172 = vadd.f32 %v432, %v5171
        %5173 = vmatprep.mubr.f32.mxu0 %v4822
        %5174 = vmatmul.mubr.f32.gmra.mxu0 %v4821
        %v5175 = vpop.f32.mrf.mxu0
        %v5176 = vadd.f32 %v428, %v5175
        %v5177 = vpop.f32.mrf.mxu0
        %v5178 = vadd.f32 %v432, %v5177
        %5179 = vmatprep.mubr.f32.mxu0 %v4826
        %5180 = vmatmul.mubr.f32.gmra.mxu0 %v4825
        %v5181 = vpop.f32.mrf.mxu0
        %v5182 = vadd.f32 %v428, %v5181
        %v5183 = vpop.f32.mrf.mxu0
        %v5184 = vadd.f32 %v432, %v5183
        %5185 = vmatprep.mubr.f32.mxu0 %v4830
        %5186 = vmatmul.mubr.f32.gmra.mxu0 %v4829
        %v5187 = vpop.f32.mrf.mxu0
        %v5188 = vadd.f32 %v428, %v5187
        %v5189 = vpop.f32.mrf.mxu0
        %v5190 = vadd.f32 %v432, %v5189
        %5191 = vmatprep.mubr.f32.mxu0 %v4834
        %5192 = vmatmul.mubr.f32.gmra.mxu0 %v4833
        %v5193 = vpop.f32.mrf.mxu0
        %v5194 = vadd.f32 %v428, %v5193
        %v5195 = vpop.f32.mrf.mxu0
        %v5196 = vadd.f32 %v432, %v5195
        %5197 = vmatprep.mubr.f32.mxu0 %v4838
        %5198 = vmatmul.mubr.f32.gmra.mxu0 %v4837
        %v5199 = vpop.f32.mrf.mxu0
        %v5200 = vadd.f32 %v428, %v5199
        %v5201 = vpop.f32.mrf.mxu0
        %v5202 = vadd.f32 %v432, %v5201
        %5203 = vmatprep.mubr.f32.mxu0 %v4842
        %5204 = vmatmul.mubr.f32.gmra.mxu0 %v4841
        %v5205 = vpop.f32.mrf.mxu0
        %v5206 = vadd.f32 %v428, %v5205
        %v5207 = vpop.f32.mrf.mxu0
        %v5208 = vadd.f32 %v432, %v5207
        %5209 = vmatprep.mubr.f32.mxu0 %v4846
        %5210 = vmatmul.mubr.f32.gmra.mxu0 %v4845
        %v5211 = vpop.f32.mrf.mxu0
        %v5212 = vadd.f32 %v428, %v5211
        %v5213 = vpop.f32.mrf.mxu0
        %v5214 = vadd.f32 %v432, %v5213
        %5215 = vmatprep.mubr.f32.mxu0 %v4850
        %5216 = vmatmul.mubr.f32.gmra.mxu0 %v4849
        %v5217 = vpop.f32.mrf.mxu0
        %v5218 = vadd.f32 %v428, %v5217
        %v5219 = vpop.f32.mrf.mxu0
        %v5220 = vadd.f32 %v432, %v5219
        %5221 = vmatprep.mubr.f32.mxu0 %v4854
        %5222 = vmatmul.mubr.f32.gmra.mxu0 %v4853
        %v5223 = vpop.f32.mrf.mxu0
        %v5224 = vadd.f32 %v428, %v5223
        %v5225 = vpop.f32.mrf.mxu0
        %v5226 = vadd.f32 %v432, %v5225
        %5227 = vmatprep.mubr.f32.mxu0 %v4858
        %5228 = vmatmul.mubr.f32.gmra.mxu0 %v4857
        %v5229 = vpop.f32.mrf.mxu0
        %v5230 = vadd.f32 %v428, %v5229
        %v5231 = vpop.f32.mrf.mxu0
        %v5232 = vadd.f32 %v432, %v5231
        %5233 = vmatprep.mubr.f32.mxu0 %v4862
        %5234 = vmatmul.mubr.f32.gmra.mxu0 %v4861
        %v5235 = vpop.f32.mrf.mxu0
        %v5236 = vadd.f32 %v428, %v5235
        %v5237 = vpop.f32.mrf.mxu0
        %v5238 = vadd.f32 %v432, %v5237
        %5239 = vmatprep.mubr.f32.mxu0 %v4866
        %5240 = vmatmul.mubr.f32.gmra.mxu0 %v4865
        %v5241 = vpop.f32.mrf.mxu0
        %v5242 = vadd.f32 %v428, %v5241
        %v5243 = vpop.f32.mrf.mxu0
        %v5244 = vadd.f32 %v432, %v5243
        %5245 = vmatprep.mubr.f32.mxu0 %v4870
        %5246 = vmatmul.mubr.f32.gmra.mxu0 %v4869
        %v5247 = vpop.f32.mrf.mxu0
        %v5248 = vadd.f32 %v428, %v5247
        %v5249 = vpop.f32.mrf.mxu0
        %v5250 = vadd.f32 %v432, %v5249
        %5251 = vmatprep.mubr.f32.mxu0 %v4874
        %5252 = vmatmul.mubr.f32.gmra.mxu0 %v4873
        %v5253 = vpop.f32.mrf.mxu0
        %v5254 = vadd.f32 %v428, %v5253
        %v5255 = vpop.f32.mrf.mxu0
        %v5256 = vadd.f32 %v432, %v5255
        %5257 = vmatprep.mubr.f32.mxu0 %v4878
        %5258 = vmatmul.mubr.f32.gmra.mxu0 %v4877
        %v5259 = vpop.f32.mrf.mxu0
        %v5260 = vadd.f32 %v428, %v5259
        %v5261 = vpop.f32.mrf.mxu0
        %v5262 = vadd.f32 %v432, %v5261
        %5263 = vmatprep.mubr.f32.mxu0 %v4882
        %5264 = vmatmul.mubr.f32.gmra.mxu0 %v4881
        %v5265 = vpop.f32.mrf.mxu0
        %v5266 = vadd.f32 %v428, %v5265
        %v5267 = vpop.f32.mrf.mxu0
        %v5268 = vadd.f32 %v432, %v5267
        %5269 = vdwg.mxu0
        %5270 = vmatprep.subr.mxu0 %v4980
        %5271 = vmatpush1.msra.mxu0 %v4979
        %5272 = vmatprep.subr.mxu0 %v4978
        %5273 = vmatpush1.msra.mxu0 %v4977
        %5274 = vmatprep.subr.mxu0 %v4976
        %5275 = vmatpush1.msra.mxu0 %v4975
        %5276 = vmatprep.subr.mxu0 %v4974
        %5277 = vmatpush1.msra.mxu0 %v4973
        %5278 = vmatprep.subr.mxu0 %v4972
        %5279 = vmatpush1.msra.mxu0 %v4971
        %5280 = vmatprep.subr.mxu0 %v4970
        %5281 = vmatpush1.msra.mxu0 %v4969
        %5282 = vmatprep.subr.mxu0 %v4968
        %5283 = vmatpush1.msra.mxu0 %v4967
        %5284 = vmatprep.subr.mxu0 %v4966
        %5285 = vmatpush1.msra.mxu0 %v4965
        %5286 = vmatprep.subr.mxu0 %v4964
        %5287 = vmatpush1.msra.mxu0 %v4963
        %5288 = vmatprep.subr.mxu0 %v4962
        %5289 = vmatpush1.msra.mxu0 %v4961
        %5290 = vmatprep.subr.mxu0 %v4960
        %5291 = vmatpush1.msra.mxu0 %v4959
        %5292 = vmatprep.subr.mxu0 %v4958
        %5293 = vmatpush1.msra.mxu0 %v4957
        %5294 = vmatprep.subr.mxu0 %v4956
        %5295 = vmatpush1.msra.mxu0 %v4955
        %5296 = vmatprep.subr.mxu0 %v4954
        %5297 = vmatpush1.msra.mxu0 %v4953
        %5298 = vmatprep.subr.mxu0 %v4952
        %5299 = vmatpush1.msra.mxu0 %v4951
        %5300 = vmatprep.subr.mxu0 %v4950
        %5301 = vmatpush1.msra.mxu0 %v4949
        %5302 = vmatprep.subr.mxu0 %v5012
        %5303 = vmatpush2.msra.mxu0 %v5011
        %5304 = vmatprep.subr.mxu0 %v5010
        %5305 = vmatpush2.msra.mxu0 %v5009
        %5306 = vmatprep.subr.mxu0 %v5008
        %5307 = vmatpush2.msra.mxu0 %v5007
        %5308 = vmatprep.subr.mxu0 %v5006
        %5309 = vmatpush2.msra.mxu0 %v5005
        %5310 = vmatprep.subr.mxu0 %v5004
        %5311 = vmatpush2.msra.mxu0 %v5003
        %5312 = vmatprep.subr.mxu0 %v5002
        %5313 = vmatpush2.msra.mxu0 %v5001
        %5314 = vmatprep.subr.mxu0 %v5000
        %5315 = vmatpush2.msra.mxu0 %v4999
        %5316 = vmatprep.subr.mxu0 %v4998
        %5317 = vmatpush2.msra.mxu0 %v4997
        %5318 = vmatprep.subr.mxu0 %v4996
        %5319 = vmatpush2.msra.mxu0 %v4995
        %5320 = vmatprep.subr.mxu0 %v4994
        %5321 = vmatpush2.msra.mxu0 %v4993
        %5322 = vmatprep.subr.mxu0 %v4992
        %5323 = vmatpush2.msra.mxu0 %v4991
        %5324 = vmatprep.subr.mxu0 %v4990
        %5325 = vmatpush2.msra.mxu0 %v4989
        %5326 = vmatprep.subr.mxu0 %v4988
        %5327 = vmatpush2.msra.mxu0 %v4987
        %5328 = vmatprep.subr.mxu0 %v4986
        %5329 = vmatpush2.msra.mxu0 %v4985
        %5330 = vmatprep.subr.mxu0 %v4984
        %5331 = vmatpush2.msra.mxu0 %v4983
        %5332 = vmatprep.subr.mxu0 %v4982
        %5333 = vmatpush2.msra.mxu0 %v4981
        %5334 = vmatprep.mubr.f32.mxu0 %v4760
        %5335 = vmatmul.mubr.f32.gmra.mxu0 %v4759
        %v5336 = vpop.f32.mrf.mxu0
        %v5337 = vadd.f32 %v5080, %v5336
        %v5338 = vpop.f32.mrf.mxu0
        %v5339 = vadd.f32 %v5082, %v5338
        %5340 = vmatprep.mubr.f32.mxu0 %v4764
        %5341 = vmatmul.mubr.f32.gmra.mxu0 %v4763
        %v5342 = vpop.f32.mrf.mxu0
        %v5343 = vadd.f32 %v5086, %v5342
        %v5344 = vpop.f32.mrf.mxu0
        %v5345 = vadd.f32 %v5088, %v5344
        %5346 = vmatprep.mubr.f32.mxu0 %v4768
        %5347 = vmatmul.mubr.f32.gmra.mxu0 %v4767
        %v5348 = vpop.f32.mrf.mxu0
        %v5349 = vadd.f32 %v5092, %v5348
        %v5350 = vpop.f32.mrf.mxu0
        %v5351 = vadd.f32 %v5094, %v5350
        %5352 = vmatprep.mubr.f32.mxu0 %v4772
        %5353 = vmatmul.mubr.f32.gmra.mxu0 %v4771
        %v5354 = vpop.f32.mrf.mxu0
        %v5355 = vadd.f32 %v5098, %v5354
        %v5356 = vpop.f32.mrf.mxu0
        %v5357 = vadd.f32 %v5100, %v5356
        %5358 = vmatprep.mubr.f32.mxu0 %v4776
        %5359 = vmatmul.mubr.f32.gmra.mxu0 %v4775
        %v5360 = vpop.f32.mrf.mxu0
        %v5361 = vadd.f32 %v5104, %v5360
        %v5362 = vpop.f32.mrf.mxu0
        %v5363 = vadd.f32 %v5106, %v5362
        %5364 = vmatprep.mubr.f32.mxu0 %v4780
        %5365 = vmatmul.mubr.f32.gmra.mxu0 %v4779
        %v5366 = vpop.f32.mrf.mxu0
        %v5367 = vadd.f32 %v5110, %v5366
        %v5368 = vpop.f32.mrf.mxu0
        %v5369 = vadd.f32 %v5112, %v5368
        %5370 = vmatprep.mubr.f32.mxu0 %v4784
        %5371 = vmatmul.mubr.f32.gmra.mxu0 %v4783
        %v5372 = vpop.f32.mrf.mxu0
        %v5373 = vadd.f32 %v5116, %v5372
        %v5374 = vpop.f32.mrf.mxu0
        %v5375 = vadd.f32 %v5118, %v5374
        %5376 = vmatprep.mubr.f32.mxu0 %v4788
        %5377 = vmatmul.mubr.f32.gmra.mxu0 %v4787
        %v5378 = vpop.f32.mrf.mxu0
        %v5379 = vadd.f32 %v5122, %v5378
        %v5380 = vpop.f32.mrf.mxu0
        %v5381 = vadd.f32 %v5124, %v5380
        %5382 = vmatprep.mubr.f32.mxu0 %v4792
        %5383 = vmatmul.mubr.f32.gmra.mxu0 %v4791
        %v5384 = vpop.f32.mrf.mxu0
        %v5385 = vadd.f32 %v5128, %v5384
        %v5386 = vpop.f32.mrf.mxu0
        %v5387 = vadd.f32 %v5130, %v5386
        %5388 = vmatprep.mubr.f32.mxu0 %v4796
        %5389 = vmatmul.mubr.f32.gmra.mxu0 %v4795
        %v5390 = vpop.f32.mrf.mxu0
        %v5391 = vadd.f32 %v5134, %v5390
        %v5392 = vpop.f32.mrf.mxu0
        %v5393 = vadd.f32 %v5136, %v5392
        %5394 = vmatprep.mubr.f32.mxu0 %v4800
        %5395 = vmatmul.mubr.f32.gmra.mxu0 %v4799
        %v5396 = vpop.f32.mrf.mxu0
        %v5397 = vadd.f32 %v5140, %v5396
        %v5398 = vpop.f32.mrf.mxu0
        %v5399 = vadd.f32 %v5142, %v5398
        %5400 = vmatprep.mubr.f32.mxu0 %v4804
        %5401 = vmatmul.mubr.f32.gmra.mxu0 %v4803
        %v5402 = vpop.f32.mrf.mxu0
        %v5403 = vadd.f32 %v5146, %v5402
        %v5404 = vpop.f32.mrf.mxu0
        %v5405 = vadd.f32 %v5148, %v5404
        %5406 = vmatprep.mubr.f32.mxu0 %v4808
        %5407 = vmatmul.mubr.f32.gmra.mxu0 %v4807
        %v5408 = vpop.f32.mrf.mxu0
        %v5409 = vadd.f32 %v5152, %v5408
        %v5410 = vpop.f32.mrf.mxu0
        %v5411 = vadd.f32 %v5154, %v5410
        %5412 = vmatprep.mubr.f32.mxu0 %v4812
        %5413 = vmatmul.mubr.f32.gmra.mxu0 %v4811
        %v5414 = vpop.f32.mrf.mxu0
        %v5415 = vadd.f32 %v5158, %v5414
        %v5416 = vpop.f32.mrf.mxu0
        %v5417 = vadd.f32 %v5160, %v5416
        %5418 = vmatprep.mubr.f32.mxu0 %v4816
        %5419 = vmatmul.mubr.f32.gmra.mxu0 %v4815
        %v5420 = vpop.f32.mrf.mxu0
        %v5421 = vadd.f32 %v5164, %v5420
        %v5422 = vpop.f32.mrf.mxu0
        %v5423 = vadd.f32 %v5166, %v5422
        %5424 = vmatprep.mubr.f32.mxu0 %v4820
        %5425 = vmatmul.mubr.f32.gmra.mxu0 %v4819
        %v5426 = vpop.f32.mrf.mxu0
        %v5427 = vadd.f32 %v5170, %v5426
        %v5428 = vpop.f32.mrf.mxu0
        %v5429 = vadd.f32 %v5172, %v5428
        %5430 = vmatprep.mubr.f32.mxu0 %v4824
        %5431 = vmatmul.mubr.f32.gmra.mxu0 %v4823
        %v5432 = vpop.f32.mrf.mxu0
        %v5433 = vadd.f32 %v5176, %v5432
        %v5434 = vpop.f32.mrf.mxu0
        %v5435 = vadd.f32 %v5178, %v5434
        %5436 = vmatprep.mubr.f32.mxu0 %v4828
        %5437 = vmatmul.mubr.f32.gmra.mxu0 %v4827
        %v5438 = vpop.f32.mrf.mxu0
        %v5439 = vadd.f32 %v5182, %v5438
        %v5440 = vpop.f32.mrf.mxu0
        %v5441 = vadd.f32 %v5184, %v5440
        %5442 = vmatprep.mubr.f32.mxu0 %v4832
        %5443 = vmatmul.mubr.f32.gmra.mxu0 %v4831
        %v5444 = vpop.f32.mrf.mxu0
        %v5445 = vadd.f32 %v5188, %v5444
        %v5446 = vpop.f32.mrf.mxu0
        %v5447 = vadd.f32 %v5190, %v5446
        %5448 = vmatprep.mubr.f32.mxu0 %v4836
        %5449 = vmatmul.mubr.f32.gmra.mxu0 %v4835
        %v5450 = vpop.f32.mrf.mxu0
        %v5451 = vadd.f32 %v5194, %v5450
        %v5452 = vpop.f32.mrf.mxu0
        %v5453 = vadd.f32 %v5196, %v5452
        %5454 = vmatprep.mubr.f32.mxu0 %v4840
        %5455 = vmatmul.mubr.f32.gmra.mxu0 %v4839
        %v5456 = vpop.f32.mrf.mxu0
        %v5457 = vadd.f32 %v5200, %v5456
        %v5458 = vpop.f32.mrf.mxu0
        %v5459 = vadd.f32 %v5202, %v5458
        %5460 = vmatprep.mubr.f32.mxu0 %v4844
        %5461 = vmatmul.mubr.f32.gmra.mxu0 %v4843
        %v5462 = vpop.f32.mrf.mxu0
        %v5463 = vadd.f32 %v5206, %v5462
        %v5464 = vpop.f32.mrf.mxu0
        %v5465 = vadd.f32 %v5208, %v5464
        %5466 = vmatprep.mubr.f32.mxu0 %v4848
        %5467 = vmatmul.mubr.f32.gmra.mxu0 %v4847
        %v5468 = vpop.f32.mrf.mxu0
        %v5469 = vadd.f32 %v5212, %v5468
        %v5470 = vpop.f32.mrf.mxu0
        %v5471 = vadd.f32 %v5214, %v5470
        %5472 = vmatprep.mubr.f32.mxu0 %v4852
        %5473 = vmatmul.mubr.f32.gmra.mxu0 %v4851
        %v5474 = vpop.f32.mrf.mxu0
        %v5475 = vadd.f32 %v5218, %v5474
        %v5476 = vpop.f32.mrf.mxu0
        %v5477 = vadd.f32 %v5220, %v5476
        %5478 = vmatprep.mubr.f32.mxu0 %v4856
        %5479 = vmatmul.mubr.f32.gmra.mxu0 %v4855
        %v5480 = vpop.f32.mrf.mxu0
        %v5481 = vadd.f32 %v5224, %v5480
        %v5482 = vpop.f32.mrf.mxu0
        %v5483 = vadd.f32 %v5226, %v5482
        %5484 = vmatprep.mubr.f32.mxu0 %v4860
        %5485 = vmatmul.mubr.f32.gmra.mxu0 %v4859
        %v5486 = vpop.f32.mrf.mxu0
        %v5487 = vadd.f32 %v5230, %v5486
        %v5488 = vpop.f32.mrf.mxu0
        %v5489 = vadd.f32 %v5232, %v5488
        %5490 = vmatprep.mubr.f32.mxu0 %v4864
        %5491 = vmatmul.mubr.f32.gmra.mxu0 %v4863
        %v5492 = vpop.f32.mrf.mxu0
        %v5493 = vadd.f32 %v5236, %v5492
        %v5494 = vpop.f32.mrf.mxu0
        %v5495 = vadd.f32 %v5238, %v5494
        %5496 = vmatprep.mubr.f32.mxu0 %v4868
        %5497 = vmatmul.mubr.f32.gmra.mxu0 %v4867
        %v5498 = vpop.f32.mrf.mxu0
        %v5499 = vadd.f32 %v5242, %v5498
        %v5500 = vpop.f32.mrf.mxu0
        %v5501 = vadd.f32 %v5244, %v5500
        %5502 = vmatprep.mubr.f32.mxu0 %v4872
        %5503 = vmatmul.mubr.f32.gmra.mxu0 %v4871
        %v5504 = vpop.f32.mrf.mxu0
        %v5505 = vadd.f32 %v5248, %v5504
        %v5506 = vpop.f32.mrf.mxu0
        %v5507 = vadd.f32 %v5250, %v5506
        %5508 = vmatprep.mubr.f32.mxu0 %v4876
        %5509 = vmatmul.mubr.f32.gmra.mxu0 %v4875
        %v5510 = vpop.f32.mrf.mxu0
        %v5511 = vadd.f32 %v5254, %v5510
        %v5512 = vpop.f32.mrf.mxu0
        %v5513 = vadd.f32 %v5256, %v5512
        %5514 = vmatprep.mubr.f32.mxu0 %v4880
        %5515 = vmatmul.mubr.f32.gmra.mxu0 %v4879
        %v5516 = vpop.f32.mrf.mxu0
        %v5517 = vadd.f32 %v5260, %v5516
        %v5518 = vpop.f32.mrf.mxu0
        %v5519 = vadd.f32 %v5262, %v5518
        %5520 = vmatprep.mubr.f32.mxu0 %v4884
        %5521 = vmatmul.mubr.f32.gmra.mxu0 %v4883
        %v5522 = vpop.f32.mrf.mxu0
        %v5523 = vadd.f32 %v5266, %v5522
        %v5524 = vpop.f32.mrf.mxu0
        %v5525 = vadd.f32 %v5268, %v5524
        %5526 = vdwg.mxu0
        %5527 = vst [vmem:[%s333] sm:$0xff] %v5337
        %5528 = vst [vmem:[%s333 + $0x8] sm:$0xff] %v5339
        %5529 = vst [vmem:[%s333 + $0x10] sm:$0xff] %v5343
        %5530 = vst [vmem:[%s333 + $0x18] sm:$0xff] %v5345
        %5531 = vst [vmem:[%s333 + $0x20] sm:$0xff] %v5349
        %5532 = vst [vmem:[%s333 + $0x28] sm:$0xff] %v5351
        %5533 = vst [vmem:[%s333 + $0x30] sm:$0xff] %v5355
        %5534 = vst [vmem:[%s333 + $0x38] sm:$0xff] %v5357
        %5535 = vst [vmem:[%s333 + $0x40] sm:$0xff] %v5361
        %5536 = vst [vmem:[%s333 + $0x48] sm:$0xff] %v5363
        %5537 = vst [vmem:[%s333 + $0x50] sm:$0xff] %v5367
        %5538 = vst [vmem:[%s333 + $0x58] sm:$0xff] %v5369
        %5539 = vst [vmem:[%s333 + $0x60] sm:$0xff] %v5373
        %5540 = vst [vmem:[%s333 + $0x68] sm:$0xff] %v5375
        %5541 = vst [vmem:[%s333 + $0x70] sm:$0xff] %v5379
        %5542 = vst [vmem:[%s333 + $0x78] sm:$0xff] %v5381
        %5543 = vst [vmem:[%s333 + $0x80] sm:$0xff] %v5385
        %5544 = vst [vmem:[%s333 + $0x88] sm:$0xff] %v5387
        %5545 = vst [vmem:[%s333 + $0x90] sm:$0xff] %v5391
        %5546 = vst [vmem:[%s333 + $0x98] sm:$0xff] %v5393
        %5547 = vst [vmem:[%s333 + $0xa0] sm:$0xff] %v5397
        %5548 = vst [vmem:[%s333 + $0xa8] sm:$0xff] %v5399
        %5549 = vst [vmem:[%s333 + $0xb0] sm:$0xff] %v5403
        %5550 = vst [vmem:[%s333 + $0xb8] sm:$0xff] %v5405
        %5551 = vst [vmem:[%s333 + $0xc0] sm:$0xff] %v5409
        %5552 = vst [vmem:[%s333 + $0xc8] sm:$0xff] %v5411
        %5553 = vst [vmem:[%s333 + $0xd0] sm:$0xff] %v5415
        %5554 = vst [vmem:[%s333 + $0xd8] sm:$0xff] %v5417
        %5555 = vst [vmem:[%s333 + $0xe0] sm:$0xff] %v5421
        %5556 = vst [vmem:[%s333 + $0xe8] sm:$0xff] %v5423
        %5557 = vst [vmem:[%s333 + $0xf0] sm:$0xff] %v5427
        %5558 = vst [vmem:[%s333 + $0xf8] sm:$0xff] %v5429
        %5559 = vst [vmem:[%s333 + $0x100] sm:$0xff] %v5433
        %5560 = vst [vmem:[%s333 + $0x108] sm:$0xff] %v5435
        %5561 = vst [vmem:[%s333 + $0x110] sm:$0xff] %v5439
        %5562 = vst [vmem:[%s333 + $0x118] sm:$0xff] %v5441
        %5563 = vst [vmem:[%s333 + $0x120] sm:$0xff] %v5445
        %5564 = vst [vmem:[%s333 + $0x128] sm:$0xff] %v5447
        %5565 = vst [vmem:[%s333 + $0x130] sm:$0xff] %v5451
        %5566 = vst [vmem:[%s333 + $0x138] sm:$0xff] %v5453
        %5567 = vst [vmem:[%s333 + $0x140] sm:$0xff] %v5457
        %5568 = vst [vmem:[%s333 + $0x148] sm:$0xff] %v5459
        %5569 = vst [vmem:[%s333 + $0x150] sm:$0xff] %v5463
        %5570 = vst [vmem:[%s333 + $0x158] sm:$0xff] %v5465
        %5571 = vst [vmem:[%s333 + $0x160] sm:$0xff] %v5469
        %5572 = vst [vmem:[%s333 + $0x168] sm:$0xff] %v5471
        %5573 = vst [vmem:[%s333 + $0x170] sm:$0xff] %v5475
        %5574 = vst [vmem:[%s333 + $0x178] sm:$0xff] %v5477
        %5575 = vst [vmem:[%s333 + $0x180] sm:$0xff] %v5481
        %5576 = vst [vmem:[%s333 + $0x188] sm:$0xff] %v5483
        %5577 = vst [vmem:[%s333 + $0x190] sm:$0xff] %v5487
        %5578 = vst [vmem:[%s333 + $0x198] sm:$0xff] %v5489
        %5579 = vst [vmem:[%s333 + $0x1a0] sm:$0xff] %v5493
        %5580 = vst [vmem:[%s333 + $0x1a8] sm:$0xff] %v5495
        %5581 = vst [vmem:[%s333 + $0x1b0] sm:$0xff] %v5499
        %5582 = vst [vmem:[%s333 + $0x1b8] sm:$0xff] %v5501
        %5583 = vst [vmem:[%s333 + $0x1c0] sm:$0xff] %v5505
        %5584 = vst [vmem:[%s333 + $0x1c8] sm:$0xff] %v5507
        %5585 = vst [vmem:[%s333 + $0x1d0] sm:$0xff] %v5511
        %5586 = vst [vmem:[%s333 + $0x1d8] sm:$0xff] %v5513
        %5587 = vst [vmem:[%s333 + $0x1e0] sm:$0xff] %v5517
        %5588 = vst [vmem:[%s333 + $0x1e8] sm:$0xff] %v5519
        %5589 = vst [vmem:[%s333 + $0x1f0] sm:$0xff] %v5523
        %5590 = vst [vmem:[%s333 + $0x1f8] sm:$0xff] %v5525
        %5591 = vst [vmem:[%s340] sm:$0xff] %v4757
        %5592 = vst [vmem:[%s340 + $0x8] sm:$0xff] %v4758
        %5593 = vst [vmem:[%s340 + $0x10] sm:$0xff] %v4759
        %5594 = vst [vmem:[%s340 + $0x18] sm:$0xff] %v4760
        %5595 = vst [vmem:[%s340 + $0x20] sm:$0xff] %v4761
        %5596 = vst [vmem:[%s340 + $0x28] sm:$0xff] %v4762
        %5597 = vst [vmem:[%s340 + $0x30] sm:$0xff] %v4763
        %5598 = vst [vmem:[%s340 + $0x38] sm:$0xff] %v4764
        %5599 = vst [vmem:[%s340 + $0x40] sm:$0xff] %v4765
        %5600 = vst [vmem:[%s340 + $0x48] sm:$0xff] %v4766
        %5601 = vst [vmem:[%s340 + $0x50] sm:$0xff] %v4767
        %5602 = vst [vmem:[%s340 + $0x58] sm:$0xff] %v4768
        %5603 = vst [vmem:[%s340 + $0x60] sm:$0xff] %v4769
        %5604 = vst [vmem:[%s340 + $0x68] sm:$0xff] %v4770
        %5605 = vst [vmem:[%s340 + $0x70] sm:$0xff] %v4771
        %5606 = vst [vmem:[%s340 + $0x78] sm:$0xff] %v4772
        %5607 = vst [vmem:[%s340 + $0x80] sm:$0xff] %v4773
        %5608 = vst [vmem:[%s340 + $0x88] sm:$0xff] %v4774
        %5609 = vst [vmem:[%s340 + $0x90] sm:$0xff] %v4775
        %5610 = vst [vmem:[%s340 + $0x98] sm:$0xff] %v4776
        %5611 = vst [vmem:[%s340 + $0xa0] sm:$0xff] %v4777
        %5612 = vst [vmem:[%s340 + $0xa8] sm:$0xff] %v4778
        %5613 = vst [vmem:[%s340 + $0xb0] sm:$0xff] %v4779
        %5614 = vst [vmem:[%s340 + $0xb8] sm:$0xff] %v4780
        %5615 = vst [vmem:[%s340 + $0xc0] sm:$0xff] %v4781
        %5616 = vst [vmem:[%s340 + $0xc8] sm:$0xff] %v4782
        %5617 = vst [vmem:[%s340 + $0xd0] sm:$0xff] %v4783
        %5618 = vst [vmem:[%s340 + $0xd8] sm:$0xff] %v4784
        %5619 = vst [vmem:[%s340 + $0xe0] sm:$0xff] %v4785
        %5620 = vst [vmem:[%s340 + $0xe8] sm:$0xff] %v4786
        %5621 = vst [vmem:[%s340 + $0xf0] sm:$0xff] %v4787
        %5622 = vst [vmem:[%s340 + $0xf8] sm:$0xff] %v4788
        %5623 = vst [vmem:[%s340 + $0x100] sm:$0xff] %v4789
        %5624 = vst [vmem:[%s340 + $0x108] sm:$0xff] %v4790
        %5625 = vst [vmem:[%s340 + $0x110] sm:$0xff] %v4791
        %5626 = vst [vmem:[%s340 + $0x118] sm:$0xff] %v4792
        %5627 = vst [vmem:[%s340 + $0x120] sm:$0xff] %v4793
        %5628 = vst [vmem:[%s340 + $0x128] sm:$0xff] %v4794
        %5629 = vst [vmem:[%s340 + $0x130] sm:$0xff] %v4795
        %5630 = vst [vmem:[%s340 + $0x138] sm:$0xff] %v4796
        %5631 = vst [vmem:[%s340 + $0x140] sm:$0xff] %v4797
        %5632 = vst [vmem:[%s340 + $0x148] sm:$0xff] %v4798
        %5633 = vst [vmem:[%s340 + $0x150] sm:$0xff] %v4799
        %5634 = vst [vmem:[%s340 + $0x158] sm:$0xff] %v4800
        %5635 = vst [vmem:[%s340 + $0x160] sm:$0xff] %v4801
        %5636 = vst [vmem:[%s340 + $0x168] sm:$0xff] %v4802
        %5637 = vst [vmem:[%s340 + $0x170] sm:$0xff] %v4803
        %5638 = vst [vmem:[%s340 + $0x178] sm:$0xff] %v4804
        %5639 = vst [vmem:[%s340 + $0x180] sm:$0xff] %v4805
        %5640 = vst [vmem:[%s340 + $0x188] sm:$0xff] %v4806
        %5641 = vst [vmem:[%s340 + $0x190] sm:$0xff] %v4807
        %5642 = vst [vmem:[%s340 + $0x198] sm:$0xff] %v4808
        %5643 = vst [vmem:[%s340 + $0x1a0] sm:$0xff] %v4809
        %5644 = vst [vmem:[%s340 + $0x1a8] sm:$0xff] %v4810
        %5645 = vst [vmem:[%s340 + $0x1b0] sm:$0xff] %v4811
        %5646 = vst [vmem:[%s340 + $0x1b8] sm:$0xff] %v4812
        %5647 = vst [vmem:[%s340 + $0x1c0] sm:$0xff] %v4813
        %5648 = vst [vmem:[%s340 + $0x1c8] sm:$0xff] %v4814
        %5649 = vst [vmem:[%s340 + $0x1d0] sm:$0xff] %v4815
        %5650 = vst [vmem:[%s340 + $0x1d8] sm:$0xff] %v4816
        %5651 = vst [vmem:[%s340 + $0x1e0] sm:$0xff] %v4817
        %5652 = vst [vmem:[%s340 + $0x1e8] sm:$0xff] %v4818
        %5653 = vst [vmem:[%s340 + $0x1f0] sm:$0xff] %v4819
        %5654 = vst [vmem:[%s340 + $0x1f8] sm:$0xff] %v4820
        %5655 = vst [vmem:[%s340 + $0x200] sm:$0xff] %v4821
        %5656 = vst [vmem:[%s340 + $0x208] sm:$0xff] %v4822
        %5657 = vst [vmem:[%s340 + $0x210] sm:$0xff] %v4823
        %5658 = vst [vmem:[%s340 + $0x218] sm:$0xff] %v4824
        %5659 = vst [vmem:[%s340 + $0x220] sm:$0xff] %v4825
        %5660 = vst [vmem:[%s340 + $0x228] sm:$0xff] %v4826
        %5661 = vst [vmem:[%s340 + $0x230] sm:$0xff] %v4827
        %5662 = vst [vmem:[%s340 + $0x238] sm:$0xff] %v4828
        %5663 = vst [vmem:[%s340 + $0x240] sm:$0xff] %v4829
        %5664 = vst [vmem:[%s340 + $0x248] sm:$0xff] %v4830
        %5665 = vst [vmem:[%s340 + $0x250] sm:$0xff] %v4831
        %5666 = vst [vmem:[%s340 + $0x258] sm:$0xff] %v4832
        %5667 = vst [vmem:[%s340 + $0x260] sm:$0xff] %v4833
        %5668 = vst [vmem:[%s340 + $0x268] sm:$0xff] %v4834
        %5669 = vst [vmem:[%s340 + $0x270] sm:$0xff] %v4835
        %5670 = vst [vmem:[%s340 + $0x278] sm:$0xff] %v4836
        %5671 = vst [vmem:[%s340 + $0x280] sm:$0xff] %v4837
        %5672 = vst [vmem:[%s340 + $0x288] sm:$0xff] %v4838
        %5673 = vst [vmem:[%s340 + $0x290] sm:$0xff] %v4839
        %5674 = vst [vmem:[%s340 + $0x298] sm:$0xff] %v4840
        %5675 = vst [vmem:[%s340 + $0x2a0] sm:$0xff] %v4841
        %5676 = vst [vmem:[%s340 + $0x2a8] sm:$0xff] %v4842
        %5677 = vst [vmem:[%s340 + $0x2b0] sm:$0xff] %v4843
        %5678 = vst [vmem:[%s340 + $0x2b8] sm:$0xff] %v4844
        %5679 = vst [vmem:[%s340 + $0x2c0] sm:$0xff] %v4845
        %5680 = vst [vmem:[%s340 + $0x2c8] sm:$0xff] %v4846
        %5681 = vst [vmem:[%s340 + $0x2d0] sm:$0xff] %v4847
        %5682 = vst [vmem:[%s340 + $0x2d8] sm:$0xff] %v4848
        %5683 = vst [vmem:[%s340 + $0x2e0] sm:$0xff] %v4849
        %5684 = vst [vmem:[%s340 + $0x2e8] sm:$0xff] %v4850
        %5685 = vst [vmem:[%s340 + $0x2f0] sm:$0xff] %v4851
        %5686 = vst [vmem:[%s340 + $0x2f8] sm:$0xff] %v4852
        %5687 = vst [vmem:[%s340 + $0x300] sm:$0xff] %v4853
        %5688 = vst [vmem:[%s340 + $0x308] sm:$0xff] %v4854
        %5689 = vst [vmem:[%s340 + $0x310] sm:$0xff] %v4855
        %5690 = vst [vmem:[%s340 + $0x318] sm:$0xff] %v4856
        %5691 = vst [vmem:[%s340 + $0x320] sm:$0xff] %v4857
        %5692 = vst [vmem:[%s340 + $0x328] sm:$0xff] %v4858
        %5693 = vst [vmem:[%s340 + $0x330] sm:$0xff] %v4859
        %5694 = vst [vmem:[%s340 + $0x338] sm:$0xff] %v4860
        %5695 = vst [vmem:[%s340 + $0x340] sm:$0xff] %v4861
        %5696 = vst [vmem:[%s340 + $0x348] sm:$0xff] %v4862
        %5697 = vst [vmem:[%s340 + $0x350] sm:$0xff] %v4863
        %5698 = vst [vmem:[%s340 + $0x358] sm:$0xff] %v4864
        %5699 = vst [vmem:[%s340 + $0x360] sm:$0xff] %v4865
        %5700 = vst [vmem:[%s340 + $0x368] sm:$0xff] %v4866
        %5701 = vst [vmem:[%s340 + $0x370] sm:$0xff] %v4867
        %5702 = vst [vmem:[%s340 + $0x378] sm:$0xff] %v4868
        %5703 = vst [vmem:[%s340 + $0x380] sm:$0xff] %v4869
        %5704 = vst [vmem:[%s340 + $0x388] sm:$0xff] %v4870
        %5705 = vst [vmem:[%s340 + $0x390] sm:$0xff] %v4871
        %5706 = vst [vmem:[%s340 + $0x398] sm:$0xff] %v4872
        %5707 = vst [vmem:[%s340 + $0x3a0] sm:$0xff] %v4873
        %5708 = vst [vmem:[%s340 + $0x3a8] sm:$0xff] %v4874
        %5709 = vst [vmem:[%s340 + $0x3b0] sm:$0xff] %v4875
        %5710 = vst [vmem:[%s340 + $0x3b8] sm:$0xff] %v4876
        %5711 = vst [vmem:[%s340 + $0x3c0] sm:$0xff] %v4877
        %5712 = vst [vmem:[%s340 + $0x3c8] sm:$0xff] %v4878
        %5713 = vst [vmem:[%s340 + $0x3d0] sm:$0xff] %v4879
        %5714 = vst [vmem:[%s340 + $0x3d8] sm:$0xff] %v4880
        %5715 = vst [vmem:[%s340 + $0x3e0] sm:$0xff] %v4881
        %5716 = vst [vmem:[%s340 + $0x3e8] sm:$0xff] %v4882
        %5717 = vst [vmem:[%s340 + $0x3f0] sm:$0xff] %v4883
        %5718 = vst [vmem:[%s340 + $0x3f8] sm:$0xff] %v4884
        %v5719 = vmax.f32 %v4757, %v4761
        %v5720 = vmax.f32 %v5719, %v4765
        %v5721 = vmax.f32 %v5720, %v4769
        %v5722 = vmax.f32 %v5721, %v4773
        %v5723 = vmax.f32 %v5722, %v4777
        %v5724 = vmax.f32 %v5723, %v4781
        %v5725 = vmax.f32 %v5724, %v4785
        %v5726 = vmax.f32 %v5725, %v4789
        %v5727 = vmax.f32 %v5726, %v4793
        %v5728 = vmax.f32 %v5727, %v4797
        %v5729 = vmax.f32 %v5728, %v4801
        %v5730 = vmax.f32 %v5729, %v4805
        %v5731 = vmax.f32 %v5730, %v4809
        %v5732 = vmax.f32 %v5731, %v4813
        %v5733 = vmax.f32 %v5732, %v4817
        %v5734 = vmax.f32 %v5733, %v4821
        %v5735 = vmax.f32 %v5734, %v4825
        %v5736 = vmax.f32 %v5735, %v4829
        %v5737 = vmax.f32 %v5736, %v4833
        %v5738 = vmax.f32 %v5737, %v4837
        %v5739 = vmax.f32 %v5738, %v4841
        %v5740 = vmax.f32 %v5739, %v4845
        %v5741 = vmax.f32 %v5740, %v4849
        %v5742 = vmax.f32 %v5741, %v4853
        %v5743 = vmax.f32 %v5742, %v4857
        %v5744 = vmax.f32 %v5743, %v4861
        %v5745 = vmax.f32 %v5744, %v4865
        %v5746 = vmax.f32 %v5745, %v4869
        %v5747 = vmax.f32 %v5746, %v4873
        %v5748 = vmax.f32 %v5747, %v4877
        %v5749 = vmax.f32 %v5748, %v4881
        %v5750 = vrot.slane %v5749, 4
        %v5751 = vmax.f32 %v5749, %v5750
        %v5752 = vrot.slane %v5751, 2
        %v5753 = vmax.f32 %v5751, %v5752
        %v5754 = vrot.slane %v5753, 1
        %v5755 = vmax.f32 %v5753, %v5754
        %v5756 = vmax.f32 %v4758, %v4762
        %v5757 = vmax.f32 %v5756, %v4766
        %v5758 = vmax.f32 %v5757, %v4770
        %v5759 = vmax.f32 %v5758, %v4774
        %v5760 = vmax.f32 %v5759, %v4778
        %v5761 = vmax.f32 %v5760, %v4782
        %v5762 = vmax.f32 %v5761, %v4786
        %v5763 = vmax.f32 %v5762, %v4790
        %v5764 = vmax.f32 %v5763, %v4794
        %v5765 = vmax.f32 %v5764, %v4798
        %v5766 = vmax.f32 %v5765, %v4802
        %v5767 = vmax.f32 %v5766, %v4806
        %v5768 = vmax.f32 %v5767, %v4810
        %v5769 = vmax.f32 %v5768, %v4814
        %v5770 = vmax.f32 %v5769, %v4818
        %v5771 = vmax.f32 %v5770, %v4822
        %v5772 = vmax.f32 %v5771, %v4826
        %v5773 = vmax.f32 %v5772, %v4830
        %v5774 = vmax.f32 %v5773, %v4834
        %v5775 = vmax.f32 %v5774, %v4838
        %v5776 = vmax.f32 %v5775, %v4842
        %v5777 = vmax.f32 %v5776, %v4846
        %v5778 = vmax.f32 %v5777, %v4850
        %v5779 = vmax.f32 %v5778, %v4854
        %v5780 = vmax.f32 %v5779, %v4858
        %v5781 = vmax.f32 %v5780, %v4862
        %v5782 = vmax.f32 %v5781, %v4866
        %v5783 = vmax.f32 %v5782, %v4870
        %v5784 = vmax.f32 %v5783, %v4874
        %v5785 = vmax.f32 %v5784, %v4878
        %v5786 = vmax.f32 %v5785, %v4882
        %v5787 = vrot.slane %v5786, 4
        %v5788 = vmax.f32 %v5786, %v5787
        %v5789 = vrot.slane %v5788, 2
        %v5790 = vmax.f32 %v5788, %v5789
        %v5791 = vrot.slane %v5790, 1
        %v5792 = vmax.f32 %v5790, %v5791
        %v5793 = vmax.f32 %v4759, %v4763
        %v5794 = vmax.f32 %v5793, %v4767
        %v5795 = vmax.f32 %v5794, %v4771
        %v5796 = vmax.f32 %v5795, %v4775
        %v5797 = vmax.f32 %v5796, %v4779
        %v5798 = vmax.f32 %v5797, %v4783
        %v5799 = vmax.f32 %v5798, %v4787
        %v5800 = vmax.f32 %v5799, %v4791
        %v5801 = vmax.f32 %v5800, %v4795
        %v5802 = vmax.f32 %v5801, %v4799
        %v5803 = vmax.f32 %v5802, %v4803
        %v5804 = vmax.f32 %v5803, %v4807
        %v5805 = vmax.f32 %v5804, %v4811
        %v5806 = vmax.f32 %v5805, %v4815
        %v5807 = vmax.f32 %v5806, %v4819
        %v5808 = vmax.f32 %v5807, %v4823
        %v5809 = vmax.f32 %v5808, %v4827
        %v5810 = vmax.f32 %v5809, %v4831
        %v5811 = vmax.f32 %v5810, %v4835
        %v5812 = vmax.f32 %v5811, %v4839
        %v5813 = vmax.f32 %v5812, %v4843
        %v5814 = vmax.f32 %v5813, %v4847
        %v5815 = vmax.f32 %v5814, %v4851
        %v5816 = vmax.f32 %v5815, %v4855
        %v5817 = vmax.f32 %v5816, %v4859
        %v5818 = vmax.f32 %v5817, %v4863
        %v5819 = vmax.f32 %v5818, %v4867
        %v5820 = vmax.f32 %v5819, %v4871
        %v5821 = vmax.f32 %v5820, %v4875
        %v5822 = vmax.f32 %v5821, %v4879
        %v5823 = vmax.f32 %v5822, %v4883
        %v5824 = vrot.slane %v5823, 4
        %v5825 = vmax.f32 %v5823, %v5824
        %v5826 = vrot.slane %v5825, 2
        %v5827 = vmax.f32 %v5825, %v5826
        %v5828 = vrot.slane %v5827, 1
        %v5829 = vmax.f32 %v5827, %v5828
        %v5830 = vmax.f32 %v4760, %v4764
        %v5831 = vmax.f32 %v5830, %v4768
        %v5832 = vmax.f32 %v5831, %v4772
        %v5833 = vmax.f32 %v5832, %v4776
        %v5834 = vmax.f32 %v5833, %v4780
        %v5835 = vmax.f32 %v5834, %v4784
        %v5836 = vmax.f32 %v5835, %v4788
        %v5837 = vmax.f32 %v5836, %v4792
        %v5838 = vmax.f32 %v5837, %v4796
        %v5839 = vmax.f32 %v5838, %v4800
        %v5840 = vmax.f32 %v5839, %v4804
        %v5841 = vmax.f32 %v5840, %v4808
        %v5842 = vmax.f32 %v5841, %v4812
        %v5843 = vmax.f32 %v5842, %v4816
        %v5844 = vmax.f32 %v5843, %v4820
        %v5845 = vmax.f32 %v5844, %v4824
        %v5846 = vmax.f32 %v5845, %v4828
        %v5847 = vmax.f32 %v5846, %v4832
        %v5848 = vmax.f32 %v5847, %v4836
        %v5849 = vmax.f32 %v5848, %v4840
        %v5850 = vmax.f32 %v5849, %v4844
        %v5851 = vmax.f32 %v5850, %v4848
        %v5852 = vmax.f32 %v5851, %v4852
        %v5853 = vmax.f32 %v5852, %v4856
        %v5854 = vmax.f32 %v5853, %v4860
        %v5855 = vmax.f32 %v5854, %v4864
        %v5856 = vmax.f32 %v5855, %v4868
        %v5857 = vmax.f32 %v5856, %v4872
        %v5858 = vmax.f32 %v5857, %v4876
        %v5859 = vmax.f32 %v5858, %v4880
        %v5860 = vmax.f32 %v5859, %v4884
        %v5861 = vrot.slane %v5860, 4
        %v5862 = vmax.f32 %v5860, %v5861
        %v5863 = vrot.slane %v5862, 2
        %v5864 = vmax.f32 %v5862, %v5863
        %v5865 = vrot.slane %v5864, 1
        %v5866 = vmax.f32 %v5864, %v5865
        %5867 = vst [vmem:[%s354] sm:$0xff] %v5755
        %5868 = vst [vmem:[%s354 + $0x8] sm:$0xff] %v5792
        %5869 = vst [vmem:[%s354 + $0x10] sm:$0xff] %v5829
        %5870 = vst [vmem:[%s354 + $0x18] sm:$0xff] %v5866
        %v5871 = vsub.f32 %v5337, %v359
        %v5872 = vsub.f32 %v5339, %v360
        %v5873 = vsub.f32 %v5343, %v361
        %v5874 = vsub.f32 %v5345, %v362
        %v5875 = vsub.f32 %v5349, %v363
        %v5876 = vsub.f32 %v5351, %v364
        %v5877 = vsub.f32 %v5355, %v365
        %v5878 = vsub.f32 %v5357, %v366
        %v5879 = vsub.f32 %v5361, %v367
        %v5880 = vsub.f32 %v5363, %v368
        %v5881 = vsub.f32 %v5367, %v369
        %v5882 = vsub.f32 %v5369, %v370
        %v5883 = vsub.f32 %v5373, %v371
        %v5884 = vsub.f32 %v5375, %v372
        %v5885 = vsub.f32 %v5379, %v373
        %v5886 = vsub.f32 %v5381, %v374
        %v5887 = vsub.f32 %v5385, %v375
        %v5888 = vsub.f32 %v5387, %v376
        %v5889 = vsub.f32 %v5391, %v377
        %v5890 = vsub.f32 %v5393, %v378
        %v5891 = vsub.f32 %v5397, %v379
        %v5892 = vsub.f32 %v5399, %v380
        %v5893 = vsub.f32 %v5403, %v381
        %v5894 = vsub.f32 %v5405, %v382
        %v5895 = vsub.f32 %v5409, %v383
        %v5896 = vsub.f32 %v5411, %v384
        %v5897 = vsub.f32 %v5415, %v385
        %v5898 = vsub.f32 %v5417, %v386
        %v5899 = vsub.f32 %v5421, %v387
        %v5900 = vsub.f32 %v5423, %v388
        %v5901 = vsub.f32 %v5427, %v389
        %v5902 = vsub.f32 %v5429, %v390
        %v5903 = vsub.f32 %v5433, %v391
        %v5904 = vsub.f32 %v5435, %v392
        %v5905 = vsub.f32 %v5439, %v393
        %v5906 = vsub.f32 %v5441, %v394
        %v5907 = vsub.f32 %v5445, %v395
        %v5908 = vsub.f32 %v5447, %v396
        %v5909 = vsub.f32 %v5451, %v397
        %v5910 = vsub.f32 %v5453, %v398
        %v5911 = vsub.f32 %v5457, %v399
        %v5912 = vsub.f32 %v5459, %v400
        %v5913 = vsub.f32 %v5463, %v401
        %v5914 = vsub.f32 %v5465, %v402
        %v5915 = vsub.f32 %v5469, %v403
        %v5916 = vsub.f32 %v5471, %v404
        %v5917 = vsub.f32 %v5475, %v405
        %v5918 = vsub.f32 %v5477, %v406
        %v5919 = vsub.f32 %v5481, %v407
        %v5920 = vsub.f32 %v5483, %v408
        %v5921 = vsub.f32 %v5487, %v409
        %v5922 = vsub.f32 %v5489, %v410
        %v5923 = vsub.f32 %v5493, %v411
        %v5924 = vsub.f32 %v5495, %v412
        %v5925 = vsub.f32 %v5499, %v413
        %v5926 = vsub.f32 %v5501, %v414
        %v5927 = vsub.f32 %v5505, %v415
        %v5928 = vsub.f32 %v5507, %v416
        %v5929 = vsub.f32 %v5511, %v417
        %v5930 = vsub.f32 %v5513, %v418
        %v5931 = vsub.f32 %v5517, %v419
        %v5932 = vsub.f32 %v5519, %v420
        %v5933 = vsub.f32 %v5523, %v421
        %v5934 = vsub.f32 %v5525, %v422
        %v5935 = vmul.f32 %v5871, %v5871
        %v5936 = vmul.f32 %v5872, %v5872
        %v5937 = vmul.f32 %v5873, %v5873
        %v5938 = vmul.f32 %v5874, %v5874
        %v5939 = vmul.f32 %v5875, %v5875
        %v5940 = vmul.f32 %v5876, %v5876
        %v5941 = vmul.f32 %v5877, %v5877
        %v5942 = vmul.f32 %v5878, %v5878
        %v5943 = vmul.f32 %v5879, %v5879
        %v5944 = vmul.f32 %v5880, %v5880
        %v5945 = vmul.f32 %v5881, %v5881
        %v5946 = vmul.f32 %v5882, %v5882
        %v5947 = vmul.f32 %v5883, %v5883
        %v5948 = vmul.f32 %v5884, %v5884
        %v5949 = vmul.f32 %v5885, %v5885
        %v5950 = vmul.f32 %v5886, %v5886
        %v5951 = vmul.f32 %v5887, %v5887
        %v5952 = vmul.f32 %v5888, %v5888
        %v5953 = vmul.f32 %v5889, %v5889
        %v5954 = vmul.f32 %v5890, %v5890
        %v5955 = vmul.f32 %v5891, %v5891
        %v5956 = vmul.f32 %v5892, %v5892
        %v5957 = vmul.f32 %v5893, %v5893
        %v5958 = vmul.f32 %v5894, %v5894
        %v5959 = vmul.f32 %v5895, %v5895
        %v5960 = vmul.f32 %v5896, %v5896
        %v5961 = vmul.f32 %v5897, %v5897
        %v5962 = vmul.f32 %v5898, %v5898
        %v5963 = vmul.f32 %v5899, %v5899
        %v5964 = vmul.f32 %v5900, %v5900
        %v5965 = vmul.f32 %v5901, %v5901
        %v5966 = vmul.f32 %v5902, %v5902
        %v5967 = vmul.f32 %v5903, %v5903
        %v5968 = vmul.f32 %v5904, %v5904
        %v5969 = vmul.f32 %v5905, %v5905
        %v5970 = vmul.f32 %v5906, %v5906
        %v5971 = vmul.f32 %v5907, %v5907
        %v5972 = vmul.f32 %v5908, %v5908
        %v5973 = vmul.f32 %v5909, %v5909
        %v5974 = vmul.f32 %v5910, %v5910
        %v5975 = vmul.f32 %v5911, %v5911
        %v5976 = vmul.f32 %v5912, %v5912
        %v5977 = vmul.f32 %v5913, %v5913
        %v5978 = vmul.f32 %v5914, %v5914
        %v5979 = vmul.f32 %v5915, %v5915
        %v5980 = vmul.f32 %v5916, %v5916
        %v5981 = vmul.f32 %v5917, %v5917
        %v5982 = vmul.f32 %v5918, %v5918
        %v5983 = vmul.f32 %v5919, %v5919
        %v5984 = vmul.f32 %v5920, %v5920
        %v5985 = vmul.f32 %v5921, %v5921
        %v5986 = vmul.f32 %v5922, %v5922
        %v5987 = vmul.f32 %v5923, %v5923
        %v5988 = vmul.f32 %v5924, %v5924
        %v5989 = vmul.f32 %v5925, %v5925
        %v5990 = vmul.f32 %v5926, %v5926
        %v5991 = vmul.f32 %v5927, %v5927
        %v5992 = vmul.f32 %v5928, %v5928
        %v5993 = vmul.f32 %v5929, %v5929
        %v5994 = vmul.f32 %v5930, %v5930
        %v5995 = vmul.f32 %v5931, %v5931
        %v5996 = vmul.f32 %v5932, %v5932
        %v5997 = vmul.f32 %v5933, %v5933
        %v5998 = vmul.f32 %v5934, %v5934
        %v5999 = vadd.f32 %v5935, %v5936
        %6000 = vadd.xlane.f32.xlu0 %v5999
        %v6001 = vpop.xlane.xlu0 %6000
        %v6002 = vadd.f32 %v5937, %v5938
        %6003 = vadd.xlane.f32.xlu0 %v6002
        %v6004 = vpop.xlane.xlu0 %6003
        %v6005 = vadd.f32 %v5939, %v5940
        %6006 = vadd.xlane.f32.xlu0 %v6005
        %v6007 = vpop.xlane.xlu0 %6006
        %v6008 = vadd.f32 %v5941, %v5942
        %6009 = vadd.xlane.f32.xlu0 %v6008
        %v6010 = vpop.xlane.xlu0 %6009
        %v6011 = vadd.f32 %v5943, %v5944
        %6012 = vadd.xlane.f32.xlu0 %v6011
        %v6013 = vpop.xlane.xlu0 %6012
        %v6014 = vadd.f32 %v5945, %v5946
        %6015 = vadd.xlane.f32.xlu0 %v6014
        %v6016 = vpop.xlane.xlu0 %6015
        %v6017 = vadd.f32 %v5947, %v5948
        %6018 = vadd.xlane.f32.xlu0 %v6017
        %v6019 = vpop.xlane.xlu0 %6018
        %v6020 = vadd.f32 %v5949, %v5950
        %6021 = vadd.xlane.f32.xlu0 %v6020
        %v6022 = vpop.xlane.xlu0 %6021
        %v6023 = vadd.f32 %v5951, %v5952
        %6024 = vadd.xlane.f32.xlu0 %v6023
        %v6025 = vpop.xlane.xlu0 %6024
        %v6026 = vadd.f32 %v5953, %v5954
        %6027 = vadd.xlane.f32.xlu0 %v6026
        %v6028 = vpop.xlane.xlu0 %6027
        %v6029 = vadd.f32 %v5955, %v5956
        %6030 = vadd.xlane.f32.xlu0 %v6029
        %v6031 = vpop.xlane.xlu0 %6030
        %v6032 = vadd.f32 %v5957, %v5958
        %6033 = vadd.xlane.f32.xlu0 %v6032
        %v6034 = vpop.xlane.xlu0 %6033
        %v6035 = vadd.f32 %v5959, %v5960
        %6036 = vadd.xlane.f32.xlu0 %v6035
        %v6037 = vpop.xlane.xlu0 %6036
        %v6038 = vadd.f32 %v5961, %v5962
        %6039 = vadd.xlane.f32.xlu0 %v6038
        %v6040 = vpop.xlane.xlu0 %6039
        %v6041 = vadd.f32 %v5963, %v5964
        %6042 = vadd.xlane.f32.xlu0 %v6041
        %v6043 = vpop.xlane.xlu0 %6042
        %v6044 = vadd.f32 %v5965, %v5966
        %6045 = vadd.xlane.f32.xlu0 %v6044
        %v6046 = vpop.xlane.xlu0 %6045
        %v6047 = vadd.f32 %v5967, %v5968
        %6048 = vadd.xlane.f32.xlu0 %v6047
        %v6049 = vpop.xlane.xlu0 %6048
        %v6050 = vadd.f32 %v5969, %v5970
        %6051 = vadd.xlane.f32.xlu0 %v6050
        %v6052 = vpop.xlane.xlu0 %6051
        %v6053 = vadd.f32 %v5971, %v5972
        %6054 = vadd.xlane.f32.xlu0 %v6053
        %v6055 = vpop.xlane.xlu0 %6054
        %v6056 = vadd.f32 %v5973, %v5974
        %6057 = vadd.xlane.f32.xlu0 %v6056
        %v6058 = vpop.xlane.xlu0 %6057
        %v6059 = vadd.f32 %v5975, %v5976
        %6060 = vadd.xlane.f32.xlu0 %v6059
        %v6061 = vpop.xlane.xlu0 %6060
        %v6062 = vadd.f32 %v5977, %v5978
        %6063 = vadd.xlane.f32.xlu0 %v6062
        %v6064 = vpop.xlane.xlu0 %6063
        %v6065 = vadd.f32 %v5979, %v5980
        %6066 = vadd.xlane.f32.xlu0 %v6065
        %v6067 = vpop.xlane.xlu0 %6066
        %v6068 = vadd.f32 %v5981, %v5982
        %6069 = vadd.xlane.f32.xlu0 %v6068
        %v6070 = vpop.xlane.xlu0 %6069
        %v6071 = vadd.f32 %v5983, %v5984
        %6072 = vadd.xlane.f32.xlu0 %v6071
        %v6073 = vpop.xlane.xlu0 %6072
        %v6074 = vadd.f32 %v5985, %v5986
        %6075 = vadd.xlane.f32.xlu0 %v6074
        %v6076 = vpop.xlane.xlu0 %6075
        %v6077 = vadd.f32 %v5987, %v5988
        %6078 = vadd.xlane.f32.xlu0 %v6077
        %v6079 = vpop.xlane.xlu0 %6078
        %v6080 = vadd.f32 %v5989, %v5990
        %6081 = vadd.xlane.f32.xlu0 %v6080
        %v6082 = vpop.xlane.xlu0 %6081
        %v6083 = vadd.f32 %v5991, %v5992
        %6084 = vadd.xlane.f32.xlu0 %v6083
        %v6085 = vpop.xlane.xlu0 %6084
        %v6086 = vadd.f32 %v5993, %v5994
        %6087 = vadd.xlane.f32.xlu0 %v6086
        %v6088 = vpop.xlane.xlu0 %6087
        %v6089 = vadd.f32 %v5995, %v5996
        %6090 = vadd.xlane.f32.xlu0 %v6089
        %v6091 = vpop.xlane.xlu0 %6090
        %v6092 = vadd.f32 %v5997, %v5998
        %6093 = vadd.xlane.f32.xlu0 %v6092
        %v6094 = vpop.xlane.xlu0 %6093
        %v6095 = vadd.f32 %v4757, %v4758
        %v6096 = vadd.f32 %v6095, %v4759
        %v6097 = vadd.f32 %v6096, %v4760
        %6098 = vadd.xlane.f32.xlu0 %v6097
        %v6099 = vpop.xlane.xlu0 %6098
        %v6100 = vadd.f32 %v4761, %v4762
        %v6101 = vadd.f32 %v6100, %v4763
        %v6102 = vadd.f32 %v6101, %v4764
        %6103 = vadd.xlane.f32.xlu0 %v6102
        %v6104 = vpop.xlane.xlu0 %6103
        %v6105 = vadd.f32 %v4765, %v4766
        %v6106 = vadd.f32 %v6105, %v4767
        %v6107 = vadd.f32 %v6106, %v4768
        %6108 = vadd.xlane.f32.xlu0 %v6107
        %v6109 = vpop.xlane.xlu0 %6108
        %v6110 = vadd.f32 %v4769, %v4770
        %v6111 = vadd.f32 %v6110, %v4771
        %v6112 = vadd.f32 %v6111, %v4772
        %6113 = vadd.xlane.f32.xlu0 %v6112
        %v6114 = vpop.xlane.xlu0 %6113
        %v6115 = vadd.f32 %v4773, %v4774
        %v6116 = vadd.f32 %v6115, %v4775
        %v6117 = vadd.f32 %v6116, %v4776
        %6118 = vadd.xlane.f32.xlu0 %v6117
        %v6119 = vpop.xlane.xlu0 %6118
        %v6120 = vadd.f32 %v4777, %v4778
        %v6121 = vadd.f32 %v6120, %v4779
        %v6122 = vadd.f32 %v6121, %v4780
        %6123 = vadd.xlane.f32.xlu0 %v6122
        %v6124 = vpop.xlane.xlu0 %6123
        %v6125 = vadd.f32 %v4781, %v4782
        %v6126 = vadd.f32 %v6125, %v4783
        %v6127 = vadd.f32 %v6126, %v4784
        %6128 = vadd.xlane.f32.xlu0 %v6127
        %v6129 = vpop.xlane.xlu0 %6128
        %v6130 = vadd.f32 %v4785, %v4786
        %v6131 = vadd.f32 %v6130, %v4787
        %v6132 = vadd.f32 %v6131, %v4788
        %6133 = vadd.xlane.f32.xlu0 %v6132
        %v6134 = vpop.xlane.xlu0 %6133
        %v6135 = vadd.f32 %v4789, %v4790
        %v6136 = vadd.f32 %v6135, %v4791
        %v6137 = vadd.f32 %v6136, %v4792
        %6138 = vadd.xlane.f32.xlu0 %v6137
        %v6139 = vpop.xlane.xlu0 %6138
        %v6140 = vadd.f32 %v4793, %v4794
        %v6141 = vadd.f32 %v6140, %v4795
        %v6142 = vadd.f32 %v6141, %v4796
        %6143 = vadd.xlane.f32.xlu0 %v6142
        %v6144 = vpop.xlane.xlu0 %6143
        %v6145 = vadd.f32 %v4797, %v4798
        %v6146 = vadd.f32 %v6145, %v4799
        %v6147 = vadd.f32 %v6146, %v4800
        %6148 = vadd.xlane.f32.xlu0 %v6147
        %v6149 = vpop.xlane.xlu0 %6148
        %v6150 = vadd.f32 %v4801, %v4802
        %v6151 = vadd.f32 %v6150, %v4803
        %v6152 = vadd.f32 %v6151, %v4804
        %6153 = vadd.xlane.f32.xlu0 %v6152
        %v6154 = vpop.xlane.xlu0 %6153
        %v6155 = vadd.f32 %v4805, %v4806
        %v6156 = vadd.f32 %v6155, %v4807
        %v6157 = vadd.f32 %v6156, %v4808
        %6158 = vadd.xlane.f32.xlu0 %v6157
        %v6159 = vpop.xlane.xlu0 %6158
        %v6160 = vadd.f32 %v4809, %v4810
        %v6161 = vadd.f32 %v6160, %v4811
        %v6162 = vadd.f32 %v6161, %v4812
        %6163 = vadd.xlane.f32.xlu0 %v6162
        %v6164 = vpop.xlane.xlu0 %6163
        %v6165 = vadd.f32 %v4813, %v4814
        %v6166 = vadd.f32 %v6165, %v4815
        %v6167 = vadd.f32 %v6166, %v4816
        %6168 = vadd.xlane.f32.xlu0 %v6167
        %v6169 = vpop.xlane.xlu0 %6168
        %v6170 = vadd.f32 %v4817, %v4818
        %v6171 = vadd.f32 %v6170, %v4819
        %v6172 = vadd.f32 %v6171, %v4820
        %6173 = vadd.xlane.f32.xlu0 %v6172
        %v6174 = vpop.xlane.xlu0 %6173
        %v6175 = vadd.f32 %v4821, %v4822
        %v6176 = vadd.f32 %v6175, %v4823
        %v6177 = vadd.f32 %v6176, %v4824
        %6178 = vadd.xlane.f32.xlu0 %v6177
        %v6179 = vpop.xlane.xlu0 %6178
        %v6180 = vadd.f32 %v4825, %v4826
        %v6181 = vadd.f32 %v6180, %v4827
        %v6182 = vadd.f32 %v6181, %v4828
        %6183 = vadd.xlane.f32.xlu0 %v6182
        %v6184 = vpop.xlane.xlu0 %6183
        %v6185 = vadd.f32 %v4829, %v4830
        %v6186 = vadd.f32 %v6185, %v4831
        %v6187 = vadd.f32 %v6186, %v4832
        %6188 = vadd.xlane.f32.xlu0 %v6187
        %v6189 = vpop.xlane.xlu0 %6188
        %v6190 = vadd.f32 %v4833, %v4834
        %v6191 = vadd.f32 %v6190, %v4835
        %v6192 = vadd.f32 %v6191, %v4836
        %6193 = vadd.xlane.f32.xlu0 %v6192
        %v6194 = vpop.xlane.xlu0 %6193
        %v6195 = vadd.f32 %v4837, %v4838
        %v6196 = vadd.f32 %v6195, %v4839
        %v6197 = vadd.f32 %v6196, %v4840
        %6198 = vadd.xlane.f32.xlu0 %v6197
        %v6199 = vpop.xlane.xlu0 %6198
        %v6200 = vadd.f32 %v4841, %v4842
        %v6201 = vadd.f32 %v6200, %v4843
        %v6202 = vadd.f32 %v6201, %v4844
        %6203 = vadd.xlane.f32.xlu0 %v6202
        %v6204 = vpop.xlane.xlu0 %6203
        %v6205 = vadd.f32 %v4845, %v4846
        %v6206 = vadd.f32 %v6205, %v4847
        %v6207 = vadd.f32 %v6206, %v4848
        %6208 = vadd.xlane.f32.xlu0 %v6207
        %v6209 = vpop.xlane.xlu0 %6208
        %v6210 = vadd.f32 %v4849, %v4850
        %v6211 = vadd.f32 %v6210, %v4851
        %v6212 = vadd.f32 %v6211, %v4852
        %6213 = vadd.xlane.f32.xlu0 %v6212
        %v6214 = vpop.xlane.xlu0 %6213
        %v6215 = vadd.f32 %v4853, %v4854
        %v6216 = vadd.f32 %v6215, %v4855
        %v6217 = vadd.f32 %v6216, %v4856
        %6218 = vadd.xlane.f32.xlu0 %v6217
        %v6219 = vpop.xlane.xlu0 %6218
        %v6220 = vadd.f32 %v4857, %v4858
        %v6221 = vadd.f32 %v6220, %v4859
        %v6222 = vadd.f32 %v6221, %v4860
        %6223 = vadd.xlane.f32.xlu0 %v6222
        %v6224 = vpop.xlane.xlu0 %6223
        %v6225 = vadd.f32 %v4861, %v4862
        %v6226 = vadd.f32 %v6225, %v4863
        %v6227 = vadd.f32 %v6226, %v4864
        %6228 = vadd.xlane.f32.xlu0 %v6227
        %v6229 = vpop.xlane.xlu0 %6228
        %v6230 = vadd.f32 %v4865, %v4866
        %v6231 = vadd.f32 %v6230, %v4867
        %v6232 = vadd.f32 %v6231, %v4868
        %6233 = vadd.xlane.f32.xlu0 %v6232
        %v6234 = vpop.xlane.xlu0 %6233
        %v6235 = vadd.f32 %v4869, %v4870
        %v6236 = vadd.f32 %v6235, %v4871
        %v6237 = vadd.f32 %v6236, %v4872
        %6238 = vadd.xlane.f32.xlu0 %v6237
        %v6239 = vpop.xlane.xlu0 %6238
        %v6240 = vadd.f32 %v4873, %v4874
        %v6241 = vadd.f32 %v6240, %v4875
        %v6242 = vadd.f32 %v6241, %v4876
        %6243 = vadd.xlane.f32.xlu0 %v6242
        %v6244 = vpop.xlane.xlu0 %6243
        %v6245 = vadd.f32 %v4877, %v4878
        %v6246 = vadd.f32 %v6245, %v4879
        %v6247 = vadd.f32 %v6246, %v4880
        %6248 = vadd.xlane.f32.xlu0 %v6247
        %v6249 = vpop.xlane.xlu0 %6248
        %v6250 = vadd.f32 %v4881, %v4882
        %v6251 = vadd.f32 %v6250, %v4883
        %v6252 = vadd.f32 %v6251, %v4884
        %6253 = vadd.xlane.f32.xlu0 %v6252
        %v6254 = vpop.xlane.xlu0 %6253
        %vm6255 = vcmp.gt.f32.partialorder %v4757, 0.0
        %vm6256 = vcmp.gt.f32.partialorder %v4758, 0.0
        %vm6257 = vcmp.gt.f32.partialorder %v4759, 0.0
        %vm6258 = vcmp.gt.f32.partialorder %v4760, 0.0
        %vm6259 = vcmp.gt.f32.partialorder %v4761, 0.0
        %vm6260 = vcmp.gt.f32.partialorder %v4762, 0.0
        %vm6261 = vcmp.gt.f32.partialorder %v4763, 0.0
        %vm6262 = vcmp.gt.f32.partialorder %v4764, 0.0
        %vm6263 = vcmp.gt.f32.partialorder %v4765, 0.0
        %vm6264 = vcmp.gt.f32.partialorder %v4766, 0.0
        %vm6265 = vcmp.gt.f32.partialorder %v4767, 0.0
        %vm6266 = vcmp.gt.f32.partialorder %v4768, 0.0
        %vm6267 = vcmp.gt.f32.partialorder %v4769, 0.0
        %vm6268 = vcmp.gt.f32.partialorder %v4770, 0.0
        %vm6269 = vcmp.gt.f32.partialorder %v4771, 0.0
        %vm6270 = vcmp.gt.f32.partialorder %v4772, 0.0
        %vm6271 = vcmp.gt.f32.partialorder %v4773, 0.0
        %vm6272 = vcmp.gt.f32.partialorder %v4774, 0.0
        %vm6273 = vcmp.gt.f32.partialorder %v4775, 0.0
        %vm6274 = vcmp.gt.f32.partialorder %v4776, 0.0
        %vm6275 = vcmp.gt.f32.partialorder %v4777, 0.0
        %vm6276 = vcmp.gt.f32.partialorder %v4778, 0.0
        %vm6277 = vcmp.gt.f32.partialorder %v4779, 0.0
        %vm6278 = vcmp.gt.f32.partialorder %v4780, 0.0
        %vm6279 = vcmp.gt.f32.partialorder %v4781, 0.0
        %vm6280 = vcmp.gt.f32.partialorder %v4782, 0.0
        %vm6281 = vcmp.gt.f32.partialorder %v4783, 0.0
        %vm6282 = vcmp.gt.f32.partialorder %v4784, 0.0
        %vm6283 = vcmp.gt.f32.partialorder %v4785, 0.0
        %vm6284 = vcmp.gt.f32.partialorder %v4786, 0.0
        %vm6285 = vcmp.gt.f32.partialorder %v4787, 0.0
        %vm6286 = vcmp.gt.f32.partialorder %v4788, 0.0
        %vm6287 = vcmp.gt.f32.partialorder %v4789, 0.0
        %vm6288 = vcmp.gt.f32.partialorder %v4790, 0.0
        %vm6289 = vcmp.gt.f32.partialorder %v4791, 0.0
        %vm6290 = vcmp.gt.f32.partialorder %v4792, 0.0
        %vm6291 = vcmp.gt.f32.partialorder %v4793, 0.0
        %vm6292 = vcmp.gt.f32.partialorder %v4794, 0.0
        %vm6293 = vcmp.gt.f32.partialorder %v4795, 0.0
        %vm6294 = vcmp.gt.f32.partialorder %v4796, 0.0
        %vm6295 = vcmp.gt.f32.partialorder %v4797, 0.0
        %vm6296 = vcmp.gt.f32.partialorder %v4798, 0.0
        %vm6297 = vcmp.gt.f32.partialorder %v4799, 0.0
        %vm6298 = vcmp.gt.f32.partialorder %v4800, 0.0
        %vm6299 = vcmp.gt.f32.partialorder %v4801, 0.0
        %vm6300 = vcmp.gt.f32.partialorder %v4802, 0.0
        %vm6301 = vcmp.gt.f32.partialorder %v4803, 0.0
        %vm6302 = vcmp.gt.f32.partialorder %v4804, 0.0
        %vm6303 = vcmp.gt.f32.partialorder %v4805, 0.0
        %vm6304 = vcmp.gt.f32.partialorder %v4806, 0.0
        %vm6305 = vcmp.gt.f32.partialorder %v4807, 0.0
        %vm6306 = vcmp.gt.f32.partialorder %v4808, 0.0
        %vm6307 = vcmp.gt.f32.partialorder %v4809, 0.0
        %vm6308 = vcmp.gt.f32.partialorder %v4810, 0.0
        %vm6309 = vcmp.gt.f32.partialorder %v4811, 0.0
        %vm6310 = vcmp.gt.f32.partialorder %v4812, 0.0
        %vm6311 = vcmp.gt.f32.partialorder %v4813, 0.0
        %vm6312 = vcmp.gt.f32.partialorder %v4814, 0.0
        %vm6313 = vcmp.gt.f32.partialorder %v4815, 0.0
        %vm6314 = vcmp.gt.f32.partialorder %v4816, 0.0
        %vm6315 = vcmp.gt.f32.partialorder %v4817, 0.0
        %vm6316 = vcmp.gt.f32.partialorder %v4818, 0.0
        %vm6317 = vcmp.gt.f32.partialorder %v4819, 0.0
        %vm6318 = vcmp.gt.f32.partialorder %v4820, 0.0
        %vm6319 = vcmp.gt.f32.partialorder %v4821, 0.0
        %vm6320 = vcmp.gt.f32.partialorder %v4822, 0.0
        %vm6321 = vcmp.gt.f32.partialorder %v4823, 0.0
        %vm6322 = vcmp.gt.f32.partialorder %v4824, 0.0
        %vm6323 = vcmp.gt.f32.partialorder %v4825, 0.0
        %vm6324 = vcmp.gt.f32.partialorder %v4826, 0.0
        %vm6325 = vcmp.gt.f32.partialorder %v4827, 0.0
        %vm6326 = vcmp.gt.f32.partialorder %v4828, 0.0
        %vm6327 = vcmp.gt.f32.partialorder %v4829, 0.0
        %vm6328 = vcmp.gt.f32.partialorder %v4830, 0.0
        %vm6329 = vcmp.gt.f32.partialorder %v4831, 0.0
        %vm6330 = vcmp.gt.f32.partialorder %v4832, 0.0
        %vm6331 = vcmp.gt.f32.partialorder %v4833, 0.0
        %vm6332 = vcmp.gt.f32.partialorder %v4834, 0.0
        %vm6333 = vcmp.gt.f32.partialorder %v4835, 0.0
        %vm6334 = vcmp.gt.f32.partialorder %v4836, 0.0
        %vm6335 = vcmp.gt.f32.partialorder %v4837, 0.0
        %vm6336 = vcmp.gt.f32.partialorder %v4838, 0.0
        %vm6337 = vcmp.gt.f32.partialorder %v4839, 0.0
        %vm6338 = vcmp.gt.f32.partialorder %v4840, 0.0
        %vm6339 = vcmp.gt.f32.partialorder %v4841, 0.0
        %vm6340 = vcmp.gt.f32.partialorder %v4842, 0.0
        %vm6341 = vcmp.gt.f32.partialorder %v4843, 0.0
        %vm6342 = vcmp.gt.f32.partialorder %v4844, 0.0
        %vm6343 = vcmp.gt.f32.partialorder %v4845, 0.0
        %vm6344 = vcmp.gt.f32.partialorder %v4846, 0.0
        %vm6345 = vcmp.gt.f32.partialorder %v4847, 0.0
        %vm6346 = vcmp.gt.f32.partialorder %v4848, 0.0
        %vm6347 = vcmp.gt.f32.partialorder %v4849, 0.0
        %vm6348 = vcmp.gt.f32.partialorder %v4850, 0.0
        %vm6349 = vcmp.gt.f32.partialorder %v4851, 0.0
        %vm6350 = vcmp.gt.f32.partialorder %v4852, 0.0
        %vm6351 = vcmp.gt.f32.partialorder %v4853, 0.0
        %vm6352 = vcmp.gt.f32.partialorder %v4854, 0.0
        %vm6353 = vcmp.gt.f32.partialorder %v4855, 0.0
        %vm6354 = vcmp.gt.f32.partialorder %v4856, 0.0
        %vm6355 = vcmp.gt.f32.partialorder %v4857, 0.0
        %vm6356 = vcmp.gt.f32.partialorder %v4858, 0.0
        %vm6357 = vcmp.gt.f32.partialorder %v4859, 0.0
        %vm6358 = vcmp.gt.f32.partialorder %v4860, 0.0
        %vm6359 = vcmp.gt.f32.partialorder %v4861, 0.0
        %vm6360 = vcmp.gt.f32.partialorder %v4862, 0.0
        %vm6361 = vcmp.gt.f32.partialorder %v4863, 0.0
        %vm6362 = vcmp.gt.f32.partialorder %v4864, 0.0
        %vm6363 = vcmp.gt.f32.partialorder %v4865, 0.0
        %vm6364 = vcmp.gt.f32.partialorder %v4866, 0.0
        %vm6365 = vcmp.gt.f32.partialorder %v4867, 0.0
        %vm6366 = vcmp.gt.f32.partialorder %v4868, 0.0
        %vm6367 = vcmp.gt.f32.partialorder %v4869, 0.0
        %vm6368 = vcmp.gt.f32.partialorder %v4870, 0.0
        %vm6369 = vcmp.gt.f32.partialorder %v4871, 0.0
        %vm6370 = vcmp.gt.f32.partialorder %v4872, 0.0
        %vm6371 = vcmp.gt.f32.partialorder %v4873, 0.0
        %vm6372 = vcmp.gt.f32.partialorder %v4874, 0.0
        %vm6373 = vcmp.gt.f32.partialorder %v4875, 0.0
        %vm6374 = vcmp.gt.f32.partialorder %v4876, 0.0
        %vm6375 = vcmp.gt.f32.partialorder %v4877, 0.0
        %vm6376 = vcmp.gt.f32.partialorder %v4878, 0.0
        %vm6377 = vcmp.gt.f32.partialorder %v4879, 0.0
        %vm6378 = vcmp.gt.f32.partialorder %v4880, 0.0
        %vm6379 = vcmp.gt.f32.partialorder %v4881, 0.0
        %vm6380 = vcmp.gt.f32.partialorder %v4882, 0.0
        %vm6381 = vcmp.gt.f32.partialorder %v4883, 0.0
        %vm6382 = vcmp.gt.f32.partialorder %v4884, 0.0
        %v6383 = vsel %vm6255, 1.0, 0.0
        %v6384 = vsel %vm6256, 1.0, 0.0
        %v6385 = vsel %vm6257, 1.0, 0.0
        %v6386 = vsel %vm6258, 1.0, 0.0
        %v6387 = vsel %vm6259, 1.0, 0.0
        %v6388 = vsel %vm6260, 1.0, 0.0
        %v6389 = vsel %vm6261, 1.0, 0.0
        %v6390 = vsel %vm6262, 1.0, 0.0
        %v6391 = vsel %vm6263, 1.0, 0.0
        %v6392 = vsel %vm6264, 1.0, 0.0
        %v6393 = vsel %vm6265, 1.0, 0.0
        %v6394 = vsel %vm6266, 1.0, 0.0
        %v6395 = vsel %vm6267, 1.0, 0.0
        %v6396 = vsel %vm6268, 1.0, 0.0
        %v6397 = vsel %vm6269, 1.0, 0.0
        %v6398 = vsel %vm6270, 1.0, 0.0
        %v6399 = vsel %vm6271, 1.0, 0.0
        %v6400 = vsel %vm6272, 1.0, 0.0
        %v6401 = vsel %vm6273, 1.0, 0.0
        %v6402 = vsel %vm6274, 1.0, 0.0
        %v6403 = vsel %vm6275, 1.0, 0.0
        %v6404 = vsel %vm6276, 1.0, 0.0
        %v6405 = vsel %vm6277, 1.0, 0.0
        %v6406 = vsel %vm6278, 1.0, 0.0
        %v6407 = vsel %vm6279, 1.0, 0.0
        %v6408 = vsel %vm6280, 1.0, 0.0
        %v6409 = vsel %vm6281, 1.0, 0.0
        %v6410 = vsel %vm6282, 1.0, 0.0
        %v6411 = vsel %vm6283, 1.0, 0.0
        %v6412 = vsel %vm6284, 1.0, 0.0
        %v6413 = vsel %vm6285, 1.0, 0.0
        %v6414 = vsel %vm6286, 1.0, 0.0
        %v6415 = vsel %vm6287, 1.0, 0.0
        %v6416 = vsel %vm6288, 1.0, 0.0
        %v6417 = vsel %vm6289, 1.0, 0.0
        %v6418 = vsel %vm6290, 1.0, 0.0
        %v6419 = vsel %vm6291, 1.0, 0.0
        %v6420 = vsel %vm6292, 1.0, 0.0
        %v6421 = vsel %vm6293, 1.0, 0.0
        %v6422 = vsel %vm6294, 1.0, 0.0
        %v6423 = vsel %vm6295, 1.0, 0.0
        %v6424 = vsel %vm6296, 1.0, 0.0
        %v6425 = vsel %vm6297, 1.0, 0.0
        %v6426 = vsel %vm6298, 1.0, 0.0
        %v6427 = vsel %vm6299, 1.0, 0.0
        %v6428 = vsel %vm6300, 1.0, 0.0
        %v6429 = vsel %vm6301, 1.0, 0.0
        %v6430 = vsel %vm6302, 1.0, 0.0
        %v6431 = vsel %vm6303, 1.0, 0.0
        %v6432 = vsel %vm6304, 1.0, 0.0
        %v6433 = vsel %vm6305, 1.0, 0.0
        %v6434 = vsel %vm6306, 1.0, 0.0
        %v6435 = vsel %vm6307, 1.0, 0.0
        %v6436 = vsel %vm6308, 1.0, 0.0
        %v6437 = vsel %vm6309, 1.0, 0.0
        %v6438 = vsel %vm6310, 1.0, 0.0
        %v6439 = vsel %vm6311, 1.0, 0.0
        %v6440 = vsel %vm6312, 1.0, 0.0
        %v6441 = vsel %vm6313, 1.0, 0.0
        %v6442 = vsel %vm6314, 1.0, 0.0
        %v6443 = vsel %vm6315, 1.0, 0.0
        %v6444 = vsel %vm6316, 1.0, 0.0
        %v6445 = vsel %vm6317, 1.0, 0.0
        %v6446 = vsel %vm6318, 1.0, 0.0
        %v6447 = vsel %vm6319, 1.0, 0.0
        %v6448 = vsel %vm6320, 1.0, 0.0
        %v6449 = vsel %vm6321, 1.0, 0.0
        %v6450 = vsel %vm6322, 1.0, 0.0
        %v6451 = vsel %vm6323, 1.0, 0.0
        %v6452 = vsel %vm6324, 1.0, 0.0
        %v6453 = vsel %vm6325, 1.0, 0.0
        %v6454 = vsel %vm6326, 1.0, 0.0
        %v6455 = vsel %vm6327, 1.0, 0.0
        %v6456 = vsel %vm6328, 1.0, 0.0
        %v6457 = vsel %vm6329, 1.0, 0.0
        %v6458 = vsel %vm6330, 1.0, 0.0
        %v6459 = vsel %vm6331, 1.0, 0.0
        %v6460 = vsel %vm6332, 1.0, 0.0
        %v6461 = vsel %vm6333, 1.0, 0.0
        %v6462 = vsel %vm6334, 1.0, 0.0
        %v6463 = vsel %vm6335, 1.0, 0.0
        %v6464 = vsel %vm6336, 1.0, 0.0
        %v6465 = vsel %vm6337, 1.0, 0.0
        %v6466 = vsel %vm6338, 1.0, 0.0
        %v6467 = vsel %vm6339, 1.0, 0.0
        %v6468 = vsel %vm6340, 1.0, 0.0
        %v6469 = vsel %vm6341, 1.0, 0.0
        %v6470 = vsel %vm6342, 1.0, 0.0
        %v6471 = vsel %vm6343, 1.0, 0.0
        %v6472 = vsel %vm6344, 1.0, 0.0
        %v6473 = vsel %vm6345, 1.0, 0.0
        %v6474 = vsel %vm6346, 1.0, 0.0
        %v6475 = vsel %vm6347, 1.0, 0.0
        %v6476 = vsel %vm6348, 1.0, 0.0
        %v6477 = vsel %vm6349, 1.0, 0.0
        %v6478 = vsel %vm6350, 1.0, 0.0
        %v6479 = vsel %vm6351, 1.0, 0.0
        %v6480 = vsel %vm6352, 1.0, 0.0
        %v6481 = vsel %vm6353, 1.0, 0.0
        %v6482 = vsel %vm6354, 1.0, 0.0
        %v6483 = vsel %vm6355, 1.0, 0.0
        %v6484 = vsel %vm6356, 1.0, 0.0
        %v6485 = vsel %vm6357, 1.0, 0.0
        %v6486 = vsel %vm6358, 1.0, 0.0
        %v6487 = vsel %vm6359, 1.0, 0.0
        %v6488 = vsel %vm6360, 1.0, 0.0
        %v6489 = vsel %vm6361, 1.0, 0.0
        %v6490 = vsel %vm6362, 1.0, 0.0
        %v6491 = vsel %vm6363, 1.0, 0.0
        %v6492 = vsel %vm6364, 1.0, 0.0
        %v6493 = vsel %vm6365, 1.0, 0.0
        %v6494 = vsel %vm6366, 1.0, 0.0
        %v6495 = vsel %vm6367, 1.0, 0.0
        %v6496 = vsel %vm6368, 1.0, 0.0
        %v6497 = vsel %vm6369, 1.0, 0.0
        %v6498 = vsel %vm6370, 1.0, 0.0
        %v6499 = vsel %vm6371, 1.0, 0.0
        %v6500 = vsel %vm6372, 1.0, 0.0
        %v6501 = vsel %vm6373, 1.0, 0.0
        %v6502 = vsel %vm6374, 1.0, 0.0
        %v6503 = vsel %vm6375, 1.0, 0.0
        %v6504 = vsel %vm6376, 1.0, 0.0
        %v6505 = vsel %vm6377, 1.0, 0.0
        %v6506 = vsel %vm6378, 1.0, 0.0
        %v6507 = vsel %vm6379, 1.0, 0.0
        %v6508 = vsel %vm6380, 1.0, 0.0
        %v6509 = vsel %vm6381, 1.0, 0.0
        %v6510 = vsel %vm6382, 1.0, 0.0
        %v6511 = vadd.f32 %v6383, %v6384
        %v6512 = vadd.f32 %v6511, %v6385
        %v6513 = vadd.f32 %v6512, %v6386
        %6514 = vadd.xlane.f32.xlu0 %v6513
        %v6515 = vpop.xlane.xlu0 %6514
        %v6516 = vadd.f32 %v6387, %v6388
        %v6517 = vadd.f32 %v6516, %v6389
        %v6518 = vadd.f32 %v6517, %v6390
        %6519 = vadd.xlane.f32.xlu0 %v6518
        %v6520 = vpop.xlane.xlu0 %6519
        %v6521 = vadd.f32 %v6391, %v6392
        %v6522 = vadd.f32 %v6521, %v6393
        %v6523 = vadd.f32 %v6522, %v6394
        %6524 = vadd.xlane.f32.xlu0 %v6523
        %v6525 = vpop.xlane.xlu0 %6524
        %v6526 = vadd.f32 %v6395, %v6396
        %v6527 = vadd.f32 %v6526, %v6397
        %v6528 = vadd.f32 %v6527, %v6398
        %6529 = vadd.xlane.f32.xlu0 %v6528
        %v6530 = vpop.xlane.xlu0 %6529
        %v6531 = vadd.f32 %v6399, %v6400
        %v6532 = vadd.f32 %v6531, %v6401
        %v6533 = vadd.f32 %v6532, %v6402
        %6534 = vadd.xlane.f32.xlu0 %v6533
        %v6535 = vpop.xlane.xlu0 %6534
        %v6536 = vadd.f32 %v6403, %v6404
        %v6537 = vadd.f32 %v6536, %v6405
        %v6538 = vadd.f32 %v6537, %v6406
        %6539 = vadd.xlane.f32.xlu0 %v6538
        %v6540 = vpop.xlane.xlu0 %6539
        %v6541 = vadd.f32 %v6407, %v6408
        %v6542 = vadd.f32 %v6541, %v6409
        %v6543 = vadd.f32 %v6542, %v6410
        %6544 = vadd.xlane.f32.xlu0 %v6543
        %v6545 = vpop.xlane.xlu0 %6544
        %v6546 = vadd.f32 %v6411, %v6412
        %v6547 = vadd.f32 %v6546, %v6413
        %v6548 = vadd.f32 %v6547, %v6414
        %6549 = vadd.xlane.f32.xlu0 %v6548
        %v6550 = vpop.xlane.xlu0 %6549
        %v6551 = vadd.f32 %v6415, %v6416
        %v6552 = vadd.f32 %v6551, %v6417
        %v6553 = vadd.f32 %v6552, %v6418
        %6554 = vadd.xlane.f32.xlu0 %v6553
        %v6555 = vpop.xlane.xlu0 %6554
        %v6556 = vadd.f32 %v6419, %v6420
        %v6557 = vadd.f32 %v6556, %v6421
        %v6558 = vadd.f32 %v6557, %v6422
        %6559 = vadd.xlane.f32.xlu0 %v6558
        %v6560 = vpop.xlane.xlu0 %6559
        %v6561 = vadd.f32 %v6423, %v6424
        %v6562 = vadd.f32 %v6561, %v6425
        %v6563 = vadd.f32 %v6562, %v6426
        %6564 = vadd.xlane.f32.xlu0 %v6563
        %v6565 = vpop.xlane.xlu0 %6564
        %v6566 = vadd.f32 %v6427, %v6428
        %v6567 = vadd.f32 %v6566, %v6429
        %v6568 = vadd.f32 %v6567, %v6430
        %6569 = vadd.xlane.f32.xlu0 %v6568
        %v6570 = vpop.xlane.xlu0 %6569
        %v6571 = vadd.f32 %v6431, %v6432
        %v6572 = vadd.f32 %v6571, %v6433
        %v6573 = vadd.f32 %v6572, %v6434
        %6574 = vadd.xlane.f32.xlu0 %v6573
        %v6575 = vpop.xlane.xlu0 %6574
        %v6576 = vadd.f32 %v6435, %v6436
        %v6577 = vadd.f32 %v6576, %v6437
        %v6578 = vadd.f32 %v6577, %v6438
        %6579 = vadd.xlane.f32.xlu0 %v6578
        %v6580 = vpop.xlane.xlu0 %6579
        %v6581 = vadd.f32 %v6439, %v6440
        %v6582 = vadd.f32 %v6581, %v6441
        %v6583 = vadd.f32 %v6582, %v6442
        %6584 = vadd.xlane.f32.xlu0 %v6583
        %v6585 = vpop.xlane.xlu0 %6584
        %v6586 = vadd.f32 %v6443, %v6444
        %v6587 = vadd.f32 %v6586, %v6445
        %v6588 = vadd.f32 %v6587, %v6446
        %6589 = vadd.xlane.f32.xlu0 %v6588
        %v6590 = vpop.xlane.xlu0 %6589
        %v6591 = vadd.f32 %v6447, %v6448
        %v6592 = vadd.f32 %v6591, %v6449
        %v6593 = vadd.f32 %v6592, %v6450
        %6594 = vadd.xlane.f32.xlu0 %v6593
        %v6595 = vpop.xlane.xlu0 %6594
        %v6596 = vadd.f32 %v6451, %v6452
        %v6597 = vadd.f32 %v6596, %v6453
        %v6598 = vadd.f32 %v6597, %v6454
        %6599 = vadd.xlane.f32.xlu0 %v6598
        %v6600 = vpop.xlane.xlu0 %6599
        %v6601 = vadd.f32 %v6455, %v6456
        %v6602 = vadd.f32 %v6601, %v6457
        %v6603 = vadd.f32 %v6602, %v6458
        %6604 = vadd.xlane.f32.xlu0 %v6603
        %v6605 = vpop.xlane.xlu0 %6604
        %v6606 = vadd.f32 %v6459, %v6460
        %v6607 = vadd.f32 %v6606, %v6461
        %v6608 = vadd.f32 %v6607, %v6462
        %6609 = vadd.xlane.f32.xlu0 %v6608
        %v6610 = vpop.xlane.xlu0 %6609
        %v6611 = vadd.f32 %v6463, %v6464
        %v6612 = vadd.f32 %v6611, %v6465
        %v6613 = vadd.f32 %v6612, %v6466
        %6614 = vadd.xlane.f32.xlu0 %v6613
        %v6615 = vpop.xlane.xlu0 %6614
        %v6616 = vadd.f32 %v6467, %v6468
        %v6617 = vadd.f32 %v6616, %v6469
        %v6618 = vadd.f32 %v6617, %v6470
        %6619 = vadd.xlane.f32.xlu0 %v6618
        %v6620 = vpop.xlane.xlu0 %6619
        %v6621 = vadd.f32 %v6471, %v6472
        %v6622 = vadd.f32 %v6621, %v6473
        %v6623 = vadd.f32 %v6622, %v6474
        %6624 = vadd.xlane.f32.xlu0 %v6623
        %v6625 = vpop.xlane.xlu0 %6624
        %v6626 = vadd.f32 %v6475, %v6476
        %v6627 = vadd.f32 %v6626, %v6477
        %v6628 = vadd.f32 %v6627, %v6478
        %6629 = vadd.xlane.f32.xlu0 %v6628
        %v6630 = vpop.xlane.xlu0 %6629
        %v6631 = vadd.f32 %v6479, %v6480
        %v6632 = vadd.f32 %v6631, %v6481
        %v6633 = vadd.f32 %v6632, %v6482
        %6634 = vadd.xlane.f32.xlu0 %v6633
        %v6635 = vpop.xlane.xlu0 %6634
        %v6636 = vadd.f32 %v6483, %v6484
        %v6637 = vadd.f32 %v6636, %v6485
        %v6638 = vadd.f32 %v6637, %v6486
        %6639 = vadd.xlane.f32.xlu0 %v6638
        %v6640 = vpop.xlane.xlu0 %6639
        %v6641 = vadd.f32 %v6487, %v6488
        %v6642 = vadd.f32 %v6641, %v6489
        %v6643 = vadd.f32 %v6642, %v6490
        %6644 = vadd.xlane.f32.xlu0 %v6643
        %v6645 = vpop.xlane.xlu0 %6644
        %v6646 = vadd.f32 %v6491, %v6492
        %v6647 = vadd.f32 %v6646, %v6493
        %v6648 = vadd.f32 %v6647, %v6494
        %6649 = vadd.xlane.f32.xlu0 %v6648
        %v6650 = vpop.xlane.xlu0 %6649
        %v6651 = vadd.f32 %v6495, %v6496
        %v6652 = vadd.f32 %v6651, %v6497
        %v6653 = vadd.f32 %v6652, %v6498
        %6654 = vadd.xlane.f32.xlu0 %v6653
        %v6655 = vpop.xlane.xlu0 %6654
        %v6656 = vadd.f32 %v6499, %v6500
        %v6657 = vadd.f32 %v6656, %v6501
        %v6658 = vadd.f32 %v6657, %v6502
        %6659 = vadd.xlane.f32.xlu0 %v6658
        %v6660 = vpop.xlane.xlu0 %6659
        %v6661 = vadd.f32 %v6503, %v6504
        %v6662 = vadd.f32 %v6661, %v6505
        %v6663 = vadd.f32 %v6662, %v6506
        %6664 = vadd.xlane.f32.xlu0 %v6663
        %v6665 = vpop.xlane.xlu0 %6664
        %v6666 = vadd.f32 %v6507, %v6508
        %v6667 = vadd.f32 %v6666, %v6509
        %v6668 = vadd.f32 %v6667, %v6510
        %6669 = vadd.xlane.f32.xlu0 %v6668
        %v6670 = vpop.xlane.xlu0 %6669
        %v6671 = vlaneseq
        %v6672 = vand.u32 %v6671, 127
        %vm6673 = vcmp.eq.s32.totalorder %v6672, 0
        %v6674 = vsel %vm6673, %v6001, 0.0
        %v6675 = vsel %vm6673, %v6004, 0.0
        %v6676 = vsel %vm6673, %v6007, 0.0
        %v6677 = vsel %vm6673, %v6010, 0.0
        %v6678 = vsel %vm6673, %v6013, 0.0
        %v6679 = vsel %vm6673, %v6016, 0.0
        %v6680 = vsel %vm6673, %v6019, 0.0
        %v6681 = vsel %vm6673, %v6022, 0.0
        %v6682 = vsel %vm6673, %v6025, 0.0
        %v6683 = vsel %vm6673, %v6028, 0.0
        %v6684 = vsel %vm6673, %v6031, 0.0
        %v6685 = vsel %vm6673, %v6034, 0.0
        %v6686 = vsel %vm6673, %v6037, 0.0
        %v6687 = vsel %vm6673, %v6040, 0.0
        %v6688 = vsel %vm6673, %v6043, 0.0
        %v6689 = vsel %vm6673, %v6046, 0.0
        %v6690 = vsel %vm6673, %v6049, 0.0
        %v6691 = vsel %vm6673, %v6052, 0.0
        %v6692 = vsel %vm6673, %v6055, 0.0
        %v6693 = vsel %vm6673, %v6058, 0.0
        %v6694 = vsel %vm6673, %v6061, 0.0
        %v6695 = vsel %vm6673, %v6064, 0.0
        %v6696 = vsel %vm6673, %v6067, 0.0
        %v6697 = vsel %vm6673, %v6070, 0.0
        %v6698 = vsel %vm6673, %v6073, 0.0
        %v6699 = vsel %vm6673, %v6076, 0.0
        %v6700 = vsel %vm6673, %v6079, 0.0
        %v6701 = vsel %vm6673, %v6082, 0.0
        %v6702 = vsel %vm6673, %v6085, 0.0
        %v6703 = vsel %vm6673, %v6088, 0.0
        %v6704 = vsel %vm6673, %v6091, 0.0
        %v6705 = vsel %vm6673, %v6094, 0.0
        %vm6706 = vcmp.eq.s32.totalorder %v6672, 1
        %v6707 = vsel %vm6706, %v6099, 0.0
        %v6708 = vsel %vm6706, %v6104, 0.0
        %v6709 = vsel %vm6706, %v6109, 0.0
        %v6710 = vsel %vm6706, %v6114, 0.0
        %v6711 = vsel %vm6706, %v6119, 0.0
        %v6712 = vsel %vm6706, %v6124, 0.0
        %v6713 = vsel %vm6706, %v6129, 0.0
        %v6714 = vsel %vm6706, %v6134, 0.0
        %v6715 = vsel %vm6706, %v6139, 0.0
        %v6716 = vsel %vm6706, %v6144, 0.0
        %v6717 = vsel %vm6706, %v6149, 0.0
        %v6718 = vsel %vm6706, %v6154, 0.0
        %v6719 = vsel %vm6706, %v6159, 0.0
        %v6720 = vsel %vm6706, %v6164, 0.0
        %v6721 = vsel %vm6706, %v6169, 0.0
        %v6722 = vsel %vm6706, %v6174, 0.0
        %v6723 = vsel %vm6706, %v6179, 0.0
        %v6724 = vsel %vm6706, %v6184, 0.0
        %v6725 = vsel %vm6706, %v6189, 0.0
        %v6726 = vsel %vm6706, %v6194, 0.0
        %v6727 = vsel %vm6706, %v6199, 0.0
        %v6728 = vsel %vm6706, %v6204, 0.0
        %v6729 = vsel %vm6706, %v6209, 0.0
        %v6730 = vsel %vm6706, %v6214, 0.0
        %v6731 = vsel %vm6706, %v6219, 0.0
        %v6732 = vsel %vm6706, %v6224, 0.0
        %v6733 = vsel %vm6706, %v6229, 0.0
        %v6734 = vsel %vm6706, %v6234, 0.0
        %v6735 = vsel %vm6706, %v6239, 0.0
        %v6736 = vsel %vm6706, %v6244, 0.0
        %v6737 = vsel %vm6706, %v6249, 0.0
        %v6738 = vsel %vm6706, %v6254, 0.0
        %v6739 = vadd.f32 %v6674, %v6707
        %v6740 = vadd.f32 %v6675, %v6708
        %v6741 = vadd.f32 %v6676, %v6709
        %v6742 = vadd.f32 %v6677, %v6710
        %v6743 = vadd.f32 %v6678, %v6711
        %v6744 = vadd.f32 %v6679, %v6712
        %v6745 = vadd.f32 %v6680, %v6713
        %v6746 = vadd.f32 %v6681, %v6714
        %v6747 = vadd.f32 %v6682, %v6715
        %v6748 = vadd.f32 %v6683, %v6716
        %v6749 = vadd.f32 %v6684, %v6717
        %v6750 = vadd.f32 %v6685, %v6718
        %v6751 = vadd.f32 %v6686, %v6719
        %v6752 = vadd.f32 %v6687, %v6720
        %v6753 = vadd.f32 %v6688, %v6721
        %v6754 = vadd.f32 %v6689, %v6722
        %v6755 = vadd.f32 %v6690, %v6723
        %v6756 = vadd.f32 %v6691, %v6724
        %v6757 = vadd.f32 %v6692, %v6725
        %v6758 = vadd.f32 %v6693, %v6726
        %v6759 = vadd.f32 %v6694, %v6727
        %v6760 = vadd.f32 %v6695, %v6728
        %v6761 = vadd.f32 %v6696, %v6729
        %v6762 = vadd.f32 %v6697, %v6730
        %v6763 = vadd.f32 %v6698, %v6731
        %v6764 = vadd.f32 %v6699, %v6732
        %v6765 = vadd.f32 %v6700, %v6733
        %v6766 = vadd.f32 %v6701, %v6734
        %v6767 = vadd.f32 %v6702, %v6735
        %v6768 = vadd.f32 %v6703, %v6736
        %v6769 = vadd.f32 %v6704, %v6737
        %v6770 = vadd.f32 %v6705, %v6738
        %vm6771 = vcmp.eq.s32.totalorder %v6672, 2
        %v6772 = vsel %vm6771, %v6515, 0.0
        %v6773 = vsel %vm6771, %v6520, 0.0
        %v6774 = vsel %vm6771, %v6525, 0.0
        %v6775 = vsel %vm6771, %v6530, 0.0
        %v6776 = vsel %vm6771, %v6535, 0.0
        %v6777 = vsel %vm6771, %v6540, 0.0
        %v6778 = vsel %vm6771, %v6545, 0.0
        %v6779 = vsel %vm6771, %v6550, 0.0
        %v6780 = vsel %vm6771, %v6555, 0.0
        %v6781 = vsel %vm6771, %v6560, 0.0
        %v6782 = vsel %vm6771, %v6565, 0.0
        %v6783 = vsel %vm6771, %v6570, 0.0
        %v6784 = vsel %vm6771, %v6575, 0.0
        %v6785 = vsel %vm6771, %v6580, 0.0
        %v6786 = vsel %vm6771, %v6585, 0.0
        %v6787 = vsel %vm6771, %v6590, 0.0
        %v6788 = vsel %vm6771, %v6595, 0.0
        %v6789 = vsel %vm6771, %v6600, 0.0
        %v6790 = vsel %vm6771, %v6605, 0.0
        %v6791 = vsel %vm6771, %v6610, 0.0
        %v6792 = vsel %vm6771, %v6615, 0.0
        %v6793 = vsel %vm6771, %v6620, 0.0
        %v6794 = vsel %vm6771, %v6625, 0.0
        %v6795 = vsel %vm6771, %v6630, 0.0
        %v6796 = vsel %vm6771, %v6635, 0.0
        %v6797 = vsel %vm6771, %v6640, 0.0
        %v6798 = vsel %vm6771, %v6645, 0.0
        %v6799 = vsel %vm6771, %v6650, 0.0
        %v6800 = vsel %vm6771, %v6655, 0.0
        %v6801 = vsel %vm6771, %v6660, 0.0
        %v6802 = vsel %vm6771, %v6665, 0.0
        %v6803 = vsel %vm6771, %v6670, 0.0
        %v6804 = vadd.f32 %v6739, %v6772
        %v6805 = vadd.f32 %v6740, %v6773
        %v6806 = vadd.f32 %v6741, %v6774
        %v6807 = vadd.f32 %v6742, %v6775
        %v6808 = vadd.f32 %v6743, %v6776
        %v6809 = vadd.f32 %v6744, %v6777
        %v6810 = vadd.f32 %v6745, %v6778
        %v6811 = vadd.f32 %v6746, %v6779
        %v6812 = vadd.f32 %v6747, %v6780
        %v6813 = vadd.f32 %v6748, %v6781
        %v6814 = vadd.f32 %v6749, %v6782
        %v6815 = vadd.f32 %v6750, %v6783
        %v6816 = vadd.f32 %v6751, %v6784
        %v6817 = vadd.f32 %v6752, %v6785
        %v6818 = vadd.f32 %v6753, %v6786
        %v6819 = vadd.f32 %v6754, %v6787
        %v6820 = vadd.f32 %v6755, %v6788
        %v6821 = vadd.f32 %v6756, %v6789
        %v6822 = vadd.f32 %v6757, %v6790
        %v6823 = vadd.f32 %v6758, %v6791
        %v6824 = vadd.f32 %v6759, %v6792
        %v6825 = vadd.f32 %v6760, %v6793
        %v6826 = vadd.f32 %v6761, %v6794
        %v6827 = vadd.f32 %v6762, %v6795
        %v6828 = vadd.f32 %v6763, %v6796
        %v6829 = vadd.f32 %v6764, %v6797
        %v6830 = vadd.f32 %v6765, %v6798
        %v6831 = vadd.f32 %v6766, %v6799
        %v6832 = vadd.f32 %v6767, %v6800
        %v6833 = vadd.f32 %v6768, %v6801
        %v6834 = vadd.f32 %v6769, %v6802
        %v6835 = vadd.f32 %v6770, %v6803
        %6836 = vst [vmem:[%s347] sm:$0xff] %v6804
        %6837 = vst [vmem:[%s347 + $0x8] sm:$0xff] %v6805
        %6838 = vst [vmem:[%s347 + $0x10] sm:$0xff] %v6806
        %6839 = vst [vmem:[%s347 + $0x18] sm:$0xff] %v6807
        %6840 = vst [vmem:[%s347 + $0x20] sm:$0xff] %v6808
        %6841 = vst [vmem:[%s347 + $0x28] sm:$0xff] %v6809
        %6842 = vst [vmem:[%s347 + $0x30] sm:$0xff] %v6810
        %6843 = vst [vmem:[%s347 + $0x38] sm:$0xff] %v6811
        %6844 = vst [vmem:[%s347 + $0x40] sm:$0xff] %v6812
        %6845 = vst [vmem:[%s347 + $0x48] sm:$0xff] %v6813
        %6846 = vst [vmem:[%s347 + $0x50] sm:$0xff] %v6814
        %6847 = vst [vmem:[%s347 + $0x58] sm:$0xff] %v6815
        %6848 = vst [vmem:[%s347 + $0x60] sm:$0xff] %v6816
        %6849 = vst [vmem:[%s347 + $0x68] sm:$0xff] %v6817
        %6850 = vst [vmem:[%s347 + $0x70] sm:$0xff] %v6818
        %6851 = vst [vmem:[%s347 + $0x78] sm:$0xff] %v6819
        %6852 = vst [vmem:[%s347 + $0x80] sm:$0xff] %v6820
        %6853 = vst [vmem:[%s347 + $0x88] sm:$0xff] %v6821
        %6854 = vst [vmem:[%s347 + $0x90] sm:$0xff] %v6822
        %6855 = vst [vmem:[%s347 + $0x98] sm:$0xff] %v6823
        %6856 = vst [vmem:[%s347 + $0xa0] sm:$0xff] %v6824
        %6857 = vst [vmem:[%s347 + $0xa8] sm:$0xff] %v6825
        %6858 = vst [vmem:[%s347 + $0xb0] sm:$0xff] %v6826
        %6859 = vst [vmem:[%s347 + $0xb8] sm:$0xff] %v6827
        %6860 = vst [vmem:[%s347 + $0xc0] sm:$0xff] %v6828
        %6861 = vst [vmem:[%s347 + $0xc8] sm:$0xff] %v6829
        %6862 = vst [vmem:[%s347 + $0xd0] sm:$0xff] %v6830
        %6863 = vst [vmem:[%s347 + $0xd8] sm:$0xff] %v6831
        %6864 = vst [vmem:[%s347 + $0xe0] sm:$0xff] %v6832
        %6865 = vst [vmem:[%s347 + $0xe8] sm:$0xff] %v6833
        %6866 = vst [vmem:[%s347 + $0xf0] sm:$0xff] %v6834
        %6867 = vst [vmem:[%s347 + $0xf8] sm:$0xff] %v6835
        %s6868 = sand.u32 %s129, 1
        %s6869 = scalar_lea.sflag [#allocation4], %s6868
        %s6870 = sand.u32 %s129, 1
        %s6871 = smul.addr %s6870, 512
        %s6872 = scalar_lea.vmem [#allocation8], %s6871
        %s6873 = sand.u32 %s32, 1
        %s6874 = scalar_lea.sflag [#allocation10], %s6873
        %s6875 = sand.u32 %s155, 1
        %s6876 = smul.addr %s6875, 1024
        %s6877 = scalar_lea.vmem [#allocation9], %s6876
        %s6878 = sand.u32 %s32, 1
        %s6879 = scalar_lea.sflag [#allocation10], %s6878
        %s6880 = sand.u32 %s181, 1
        %s6881 = smul.addr %s6880, 256
        %s6882 = scalar_lea.vmem [#allocation11], %s6881
        %s6883 = sand.u32 %s207, 1
        %s6884 = scalar_lea.sflag [#allocation13], %s6883
        %s6885 = sand.u32 %s207, 1
        %s6886 = smul.addr %s6885, 32
        %s6887 = scalar_lea.vmem [#allocation12], %s6886
        // Predicated region
        $region49: #{tpu_custom_call.1} parent=35 // pred_check
          %p6888 = pneg %p139
        $region50: #{tpu_custom_call.1} parent=35 // pred_check_branch
          %6890 = sbr.rel (%p6888) target = $region52
        $region51: #{tpu_custom_call.1} parent=35 // pred_region
          %s6891 = smul.u32 32, %s32
          %s6893 = ssub.s32 8192, 8192
          %6894 = vsyncadd %s6869, %s6893
          %s6895 = smul.addr %s6891, 2
          %s6896 = smul.addr %s6895, 128
          %s6897 = scalar_lea.hbm %s4, %s6896
          %s6898 = sshll.u32 %s6872, 4
          %s6899 = int_to_ptr.vmem [resolvable:$true] %s6898
          %6904 = dma.vmem_to_hbm [thread:$0]  %s6899, 8192, %s6897, %s6869, 256, 256, 16
        $region52: #{tpu_custom_call.1} parent=35 // pred_fallthru
          _
        // Predicated region
        $region53: #{tpu_custom_call.1} parent=35 // pred_check
          %p6905 = pneg %p165
        $region54: #{tpu_custom_call.1} parent=35 // pred_check_branch
          %6907 = sbr.rel (%p6905) target = $region56
        $region55: #{tpu_custom_call.1} parent=35 // pred_region
          %s6908 = smul.u32 32, %s32
          %s6910 = ssub.s32 16384, 16384
          %6911 = vsyncadd %s6874, %s6910
          %s6912 = smul.addr %s6908, 4
          %s6913 = smul.addr %s6912, 128
          %s6914 = scalar_lea.hbm %s5, %s6913
          %s6915 = sshll.u32 %s6877, 4
          %s6916 = int_to_ptr.vmem [resolvable:$true] %s6915
          %6921 = dma.vmem_to_hbm [thread:$0]  %s6916, 16384, %s6914, %s6874, 512, 512, 32
        $region56: #{tpu_custom_call.1} parent=35 // pred_fallthru
          _
        // Predicated region
        $region57: #{tpu_custom_call.1} parent=35 // pred_check
          %p6922 = pneg %p191
        $region58: #{tpu_custom_call.1} parent=35 // pred_check_branch
          %6924 = sbr.rel (%p6922) target = $region60
        $region59: #{tpu_custom_call.1} parent=35 // pred_region
          %s6925 = smul.u32 32, %s32
          %s6927 = ssub.s32 4096, 4096
          %6928 = vsyncadd %s6879, %s6927
          %s6929 = smul.addr %s6925, 128
          %s6930 = scalar_lea.hbm %s6, %s6929
          %s6931 = sshll.u32 %s6882, 4
          %s6932 = int_to_ptr.vmem [resolvable:$true] %s6931
          %6937 = dma.vmem_to_hbm [thread:$0]  %s6932, 4096, %s6930, %s6879, 128, 128, 8
        $region60: #{tpu_custom_call.1} parent=35 // pred_fallthru
          _
        // Predicated region
        $region61: #{tpu_custom_call.1} parent=35 // pred_check
          %p6938 = pneg %p217
        $region62: #{tpu_custom_call.1} parent=35 // pred_check_branch
          %6940 = sbr.rel (%p6938) target = $region64
        $region63: #{tpu_custom_call.1} parent=35 // pred_region
          %s6942 = ssub.s32 512, 512
          %6943 = vsyncadd %s6884, %s6942
          %s6944 = smul.addr %s32, 4
          %s6945 = smul.addr %s6944, 128
          %s6946 = scalar_lea.hbm %s7, %s6945
          %s6948 = sshll.u32 %s6887, 4
          %s6949 = int_to_ptr.vmem [resolvable:$true] %s6948
          %6951 = dma.vmem_to_hbm [thread:$0]  %s6949, 512, %s6946, %s6884
        $region64: #{tpu_custom_call.1} parent=35 // pred_fallthru
          _
      $region36: #{tpu_custom_call.1} parent=5 // pred_fallthru
        _
      %p6952 = scmp.le.s32.totalorder 2, %s27
      // Predicated region
      $region65: #{tpu_custom_call.1} parent=5 // pred_check
        %p6953 = pneg %p6952
      $region66: #{tpu_custom_call.1} parent=5 // pred_check_branch
        %6955 = sbr.rel (%p6953) target = $region68
      $region67: #{tpu_custom_call.1} parent=5 // pred_region
        %s6956 = ssub.s32 %s27, 2
        // Predicated region
        $region69: #{tpu_custom_call.1} parent=67 // pred_check
          %p6957 = pneg %p145
        $region70: #{tpu_custom_call.1} parent=67 // pred_check_branch
          %6959 = sbr.rel (%p6957) target = $region72
        $region71: #{tpu_custom_call.1} parent=67 // pred_region
          %s6960 = sand.u32 %s130, 1
          %s6961 = scalar_lea.sflag [#allocation4], %s6960
          %s6962 = sand.u32 %s130, 1
          %s6963 = smul.addr %s6962, 512
          %s6964 = scalar_lea.vmem [#allocation8], %s6963
          %6965 = dma.done %s6961, 8192
        $region72: #{tpu_custom_call.1} parent=67 // pred_fallthru
          _
        // Predicated region
        $region73: #{tpu_custom_call.1} parent=67 // pred_check
          %p6966 = pneg %p171
        $region74: #{tpu_custom_call.1} parent=67 // pred_check_branch
          %6968 = sbr.rel (%p6966) target = $region76
        $region75: #{tpu_custom_call.1} parent=67 // pred_region
          %s6969 = sand.u32 %s33, 1
          %s6970 = scalar_lea.sflag [#allocation10], %s6969
          %s6971 = sand.u32 %s156, 1
          %s6972 = smul.addr %s6971, 1024
          %s6973 = scalar_lea.vmem [#allocation9], %s6972
          %6974 = dma.done %s6970, 16384
        $region76: #{tpu_custom_call.1} parent=67 // pred_fallthru
          _
        // Predicated region
        $region77: #{tpu_custom_call.1} parent=67 // pred_check
          %p6975 = pneg %p197
        $region78: #{tpu_custom_call.1} parent=67 // pred_check_branch
          %6977 = sbr.rel (%p6975) target = $region80
        $region79: #{tpu_custom_call.1} parent=67 // pred_region
          %s6978 = sand.u32 %s33, 1
          %s6979 = scalar_lea.sflag [#allocation10], %s6978
          %s6980 = sand.u32 %s182, 1
          %s6981 = smul.addr %s6980, 256
          %s6982 = scalar_lea.vmem [#allocation11], %s6981
          %6983 = dma.done %s6979, 4096
        $region80: #{tpu_custom_call.1} parent=67 // pred_fallthru
          _
        // Predicated region
        $region81: #{tpu_custom_call.1} parent=67 // pred_check
          %p6984 = pneg %p223
        $region82: #{tpu_custom_call.1} parent=67 // pred_check_branch
          %6986 = sbr.rel (%p6984) target = $region84
        $region83: #{tpu_custom_call.1} parent=67 // pred_region
          %s6987 = sand.u32 %s208, 1
          %s6988 = scalar_lea.sflag [#allocation13], %s6987
          %s6989 = sand.u32 %s208, 1
          %s6990 = smul.addr %s6989, 32
          %s6991 = scalar_lea.vmem [#allocation12], %s6990
          %6992 = dma.done %s6988, 512
        $region84: #{tpu_custom_call.1} parent=67 // pred_fallthru
          _
      $region68: #{tpu_custom_call.1} parent=5 // pred_fallthru
        _
    $region6: #{tpu_custom_call.1} parent=1 // loop_footer
      %s31 = sadd.s32 1, %s27
    $region7: #{tpu_custom_call.1} parent=1 // loop_footer_branch
      %26 = sbr.rel target = $region3
    $region8: #{tpu_custom_call.1} parent=1 // loop_exit
      _
    %6993 = vsyncpa [#allocation3], 1
    %s6994 = scalar_lea.sflag [#allocation3], 1
    %6995 = vsyncpa %s6994, 1
    %6996 = vsyncpa [#allocation6], 1
    %6997 = vsyncpa [#allocation4], 1
    %s6998 = scalar_lea.sflag [#allocation4], 1
    %6999 = vsyncpa %s6998, 1
    %7000 = vsyncpa [#allocation10], 1
    %s7001 = scalar_lea.sflag [#allocation10], 1
    %7002 = vsyncpa %s7001, 1
    %7003 = vsyncpa [#allocation13], 1
    %s7004 = scalar_lea.sflag [#allocation13], 1
    %7005 = vsyncpa %s7004, 1

</llo_original>
